<compile_context>
chip_gen: v7x
topology: tpu7x:2x2x1
jax: 0.10.0
libtpu: 0.0.40
codegen_flags: <defaults>
</compile_context>

<pallas_src>
import functools

import jax
import jax.numpy as jnp
from jax import lax
from jax.experimental import pallas as pl
from jax.experimental.pallas import tpu as pltpu

K = 3  # 3x3 partial conv, stride 1, pad 1


def _pcb_kernel(w_ref, x_ref, m_ref, h_ref, nm_ref, xm_pad, m_pad, *,
                cin, cout, h, w, bb, use_mxu):
    # w_ref  : VPU path -> SMEM (K*K*Cout*Cin,) f32, flattened (kh, kw, o, c)
    #          MXU path -> VMEM (K*K, Cout, Cin) bf16 per-tap weight matrices
    # x_ref  : VMEM (bb, Cin, H, W)  unpadded input (NCHW)
    # m_ref  : VMEM (bb, 1,   H, W)  single-channel mask (replicated over Cin)
    # h_ref  : VMEM (bb, Cout, H, W) activated output
    # nm_ref : VMEM (bb, 1,   H, W)  new mask (channel-shared)
    # xm_pad : VMEM scratch (Cin, H+2, W+2) zero-padded x*mask
    # m_pad  : VMEM scratch (1,   H+2, W+2) zero-padded mask

    # Zero once per grid step: interiors are fully overwritten per image and
    # the 1-pixel border is never written, so it stays 0 (= Conv2d zero pad).
    xm_pad[...] = jnp.zeros_like(xm_pad)
    m_pad[...] = jnp.zeros_like(m_pad)

    for bi in range(bb):
        m_img = m_ref[bi, 0]                           # (H, W)
        x_img = x_ref[bi]                              # (Cin, H, W)

        # In-kernel halo: write the interior of the padded scratches.
        xm_pad[:, 1:h + 1, 1:w + 1] = x_img * m_img[None, :, :]
        m_pad[0, 1:h + 1, 1:w + 1] = m_img

        # mask_conv (all-ones weights) on a channel-replicated mask is
        # Cin * (single-channel 3x3 window sum); only "== 0" matters.
        msum = jnp.zeros((h, w), jnp.float32)
        for kh in range(K):
            m_rows = m_pad[0, kh:kh + h, :]            # hoisted per-kh slab
            for kw in range(K):
                msum = msum + m_rows[:, kw:kw + w]
        holes = msum == 0.0                            # no_update_holes
        nm_ref[bi, 0] = jnp.where(holes, 0.0, 1.0)

        if use_mxu:
            # Large-channel path: per-tap MXU contraction, bf16 operands with
            # f32 accumulation (v6e/v7x friendly).
            acc = jnp.zeros((cout, h * w), jnp.float32)
            for kh in range(K):
                xm_rows = xm_pad[:, kh:kh + h, :]      # (Cin, H, W+2)
                for kw in range(K):
                    x_tap = xm_rows[:, :, kw:kw + w].reshape(cin, h * w)
                    w_tap = w_ref[kh * K + kw]         # (Cout, Cin) bf16
                    acc = acc + jnp.dot(w_tap, x_tap.astype(w_tap.dtype),
                                        preferred_element_type=jnp.float32)
            out = acc.reshape(cout, h, w)
            h_ref[bi] = jnp.where(holes[None, :, :], 0.0, jnp.maximum(out, 0.0))
        else:
            # Small-channel path: scalar-broadcast FMAs on the VPU, all f32.
            accs = [jnp.zeros((h, w), jnp.float32) for _ in range(cout)]
            for kh in range(K):
                xm_rows = xm_pad[:, kh:kh + h, :]      # hoisted per-kh slab
                for kw in range(K):
                    t = kh * K + kw
                    xm_t = xm_rows[:, :, kw:kw + w]    # (Cin, H, W)
                    for c in range(cin):
                        xc = xm_t[c]
                        for o in range(cout):
                            wv = w_ref[(t * cout + o) * cin + c]   # SMEM scalar
                            accs[o] = accs[o] + wv * xc
            # masked_fill(holes, 0) fused with ReLU.
            for o in range(cout):
                h_ref[bi, o] = jnp.where(holes, 0.0, jnp.maximum(accs[o], 0.0))


def pcbactiv_forward(x, mask, weight):
    """PCBActiv forward (PartialConv 3x3 / stride 1 / pad 1, no bias, ReLU).

    x      : (B, Cin, H, W) f32 (NCHW, unpadded; halo handled in-kernel).
    mask   : (B, 1, H, W) f32 0/1 mask. PCBActiv's mask is identical across
             channels; a channel-replicated (B, Cin, H, W) mask is accepted
             and only channel 0 is read (documented assumption).
    weight : (Cout, Cin, 3, 3) f32 (OIHW), conv_bias=False.

    Returns (h, new_mask): h is (B, Cout, H, W); new_mask is (B, 1, H, W)
    (channel-identical — broadcast lazily if a consumer needs the full shape).
    """
    B, Cin, H, W = x.shape
    Cout = weight.shape[0]
    if mask.shape[1] != 1:
        mask = mask[:, :1]   # assumes channel-replicated mask (PCBActiv usage)

    # Contraction path selection.
    use_mxu = (Cin * Cout) >= 64
    # TODO(synk): lower the MXU switchover (~Cin>=32) on v5e (no f32 FMA).

    if use_mxu:
        w_arg = (jnp.transpose(weight, (2, 3, 0, 1))
                 .reshape(K * K, Cout, Cin).astype(jnp.bfloat16))
        w_spec = pl.BlockSpec((K * K, Cout, Cin), lambda i: (0, 0, 0))
    else:
        w_arg = jnp.transpose(weight, (2, 3, 0, 1)).reshape(-1).astype(jnp.float32)
        w_spec = pl.BlockSpec(memory_space=pltpu.MemorySpace.SMEM)

    # Batch fusion: amortize per-grid-step overhead at tiny sizes; bb=1 at
    # real image sizes so the batch axis parallelizes across TensorCores.
    per_batch_bytes = 4 * (Cin * H * W + H * W + Cout * H * W + H * W)
    bb = 1
    for cand in range(1, B + 1):
        if B % cand == 0 and cand * per_batch_bytes <= 512 * 1024:
            bb = cand
    grid = (B // bb,)

    kernel = functools.partial(_pcb_kernel, cin=Cin, cout=Cout, h=H, w=W,
                               bb=bb, use_mxu=use_mxu)

    # Derived VMEM budget (double-buffered blocks + scratch + slack).
    block_bytes = bb * per_batch_bytes
    scratch_bytes = 4 * (Cin + 1) * (H + 2) * (W + 2)
    vmem_limit = int(min(max(4 * block_bytes + scratch_bytes + (1 << 20),
                             8 * 1024 * 1024), 64 * 1024 * 1024))

    flops = 2 * B * H * W * K * K * Cin * Cout + 2 * B * H * W * K * K
    bytes_accessed = 4 * (B * Cin * H * W + B * H * W        # x + 1-channel mask
                          + B * Cout * H * W + B * H * W)    # h + new-mask
    bytes_accessed += int(w_arg.size) * (2 if use_mxu else 4)

    h_out, nm = pl.pallas_call(
        kernel,
        out_shape=(jax.ShapeDtypeStruct((B, Cout, H, W), jnp.float32),
                   jax.ShapeDtypeStruct((B, 1, H, W), jnp.float32)),
        grid=grid,
        in_specs=[
            w_spec,
            pl.BlockSpec((bb, Cin, H, W), lambda i: (i, 0, 0, 0)),
            pl.BlockSpec((bb, 1, H, W), lambda i: (i, 0, 0, 0)),
        ],
        out_specs=(
            pl.BlockSpec((bb, Cout, H, W), lambda i: (i, 0, 0, 0)),
            pl.BlockSpec((bb, 1, H, W), lambda i: (i, 0, 0, 0)),
        ),
        scratch_shapes=[
            pltpu.VMEM((Cin, H + 2, W + 2), jnp.float32),
            pltpu.VMEM((1, H + 2, W + 2), jnp.float32),
        ],
        compiler_params=pltpu.CompilerParams(
            dimension_semantics=("parallel",),
            vmem_limit_bytes=vmem_limit),
        cost_estimate=pl.CostEstimate(flops=int(flops), transcendentals=0,
                                      bytes_accessed=int(bytes_accessed)),
    )(w_arg, x, mask)

    return h_out, nm


def pcbactiv_reference(x, mask_full, weight):
    """Pure-JAX reference mirroring the PyTorch forward (conv_bias=False)."""
    dn = ('NCHW', 'OIHW', 'NCHW')
    out = lax.conv_general_dilated(x * mask_full, weight, (1, 1),
                                   ((1, 1), (1, 1)), dimension_numbers=dn)
    out_mask = lax.conv_general_dilated(mask_full, jnp.ones_like(weight), (1, 1),
                                        ((1, 1), (1, 1)), dimension_numbers=dn)
    holes = out_mask == 0.0
    out = jnp.where(holes, 0.0, out)
    return jnp.maximum(out, 0.0), jnp.where(holes, 0.0, 1.0)


if __name__ == "__main__":
    B, Cin, Cout, H, W = 2, 4, 8, 16, 16
    key = jax.random.PRNGKey(0)
    kx, km, kw = jax.random.split(key, 3)

    x = jax.random.normal(kx, (B, Cin, H, W), dtype=jnp.float32)
    mask = (jax.random.uniform(km, (B, 1, H, W)) > 0.3).astype(jnp.float32)
    mask = mask.at[:, :, :6, :6].set(0.0)   # guaranteed hole region
    # Deterministic conv weight (stand-in for kaiming init), no bias.
    weight = 0.02 * jax.random.normal(kw, (Cout, Cin, 3, 3), dtype=jnp.float32)

    h, nm = pcbactiv_forward(x, mask, weight)
    jax.block_until_ready((h, nm))

    # The PyTorch module sees the mask replicated over input channels.
    mask_full = jnp.broadcast_to(mask, (B, Cin, H, W))
    h_ref, nm_ref = pcbactiv_reference(x, mask_full, weight)

    assert h.shape == (B, Cout, H, W) and nm.shape == (B, 1, H, W)
    assert jnp.allclose(h, h_ref, atol=1e-5, rtol=1e-5)
    # new_mask is channel-identical; broadcast only for this test comparison.
    assert jnp.allclose(jnp.broadcast_to(nm, (B, Cout, H, W)), nm_ref,
                        atol=1e-5, rtol=1e-5)
    print("KERNEL_OK")
</pallas_src>

<mosaic_0001>
module attributes {stable_mosaic.version = 11 : i64} {
  func.func @_pcb_kernel(%arg0: i32, %arg1: memref<288xf32, #tpu.memory_space<smem>>, %arg2: memref<2x4x16x16xf32, #tpu.memory_space<vmem>>, %arg3: memref<2x1x16x16xf32, #tpu.memory_space<vmem>>, %arg4: memref<2x8x16x16xf32, #tpu.memory_space<vmem>>, %arg5: memref<2x1x16x16xf32, #tpu.memory_space<vmem>>, %arg6: memref<4x18x18xf32, #tpu.memory_space<vmem>>, %arg7: memref<1x18x18xf32, #tpu.memory_space<vmem>>) attributes {dimension_semantics = [#tpu.dimension_semantics<parallel>], iteration_bounds = array<i64: 1>, scalar_prefetch = 0 : i64, scratch_operands = 2 : i64, tpu.core_type = #tpu.core_type<tc>, window_params = [{transform_indices = @transform_0, window_bounds = array<i64: 288>}, {transform_indices = @transform_1, window_bounds = array<i64: 2, 4, 16, 16>}, {transform_indices = @transform_2, window_bounds = array<i64: 2, 1, 16, 16>}, {transform_indices = @transform_3, window_bounds = array<i64: 2, 8, 16, 16>}, {transform_indices = @transform_4, window_bounds = array<i64: 2, 1, 16, 16>}]} {
    %cst = arith.constant 0.000000e+00 : f32
    %0 = vector.broadcast %cst : f32 to vector<4x18x18xf32>
    %c0 = arith.constant 0 : index
    %c0_0 = arith.constant 0 : index
    %c0_1 = arith.constant 0 : index
    %1 = vector.load %arg6[%c0, %c0_0, %c0_1] : memref<4x18x18xf32, #tpu.memory_space<vmem>>, vector<4x18x18xf32>
    tpu.vector_store %arg6[%c0, %c0_0, %c0_1], %0 {strides = array<i32>} : memref<4x18x18xf32, #tpu.memory_space<vmem>>, vector<4x18x18xf32>,
    %cst_2 = arith.constant 0.000000e+00 : f32
    %2 = vector.broadcast %cst_2 : f32 to vector<1x18x18xf32>
    %c0_3 = arith.constant 0 : index
    %c0_4 = arith.constant 0 : index
    %c0_5 = arith.constant 0 : index
    %3 = vector.load %arg7[%c0_3, %c0_4, %c0_5] : memref<1x18x18xf32, #tpu.memory_space<vmem>>, vector<1x18x18xf32>
    tpu.vector_store %arg7[%c0_3, %c0_4, %c0_5], %2 {strides = array<i32>} : memref<1x18x18xf32, #tpu.memory_space<vmem>>, vector<1x18x18xf32>,
    %c0_6 = arith.constant 0 : index
    %c0_7 = arith.constant 0 : index
    %c0_8 = arith.constant 0 : index
    %c0_9 = arith.constant 0 : index
    %4 = vector.load %arg3[%c0_6, %c0_7, %c0_8, %c0_9] : memref<2x1x16x16xf32, #tpu.memory_space<vmem>>, vector<1x1x16x16xf32>
    %5 = vector.shape_cast %4 : vector<1x1x16x16xf32> to vector<16x16xf32>
    %c0_10 = arith.constant 0 : index
    %c0_11 = arith.constant 0 : index
    %c0_12 = arith.constant 0 : index
    %c0_13 = arith.constant 0 : index
    %6 = vector.load %arg2[%c0_10, %c0_11, %c0_12, %c0_13] : memref<2x4x16x16xf32, #tpu.memory_space<vmem>>, vector<1x4x16x16xf32>
    %7 = vector.shape_cast %6 : vector<1x4x16x16xf32> to vector<4x16x16xf32>
    %8 = vector.shape_cast %5 : vector<16x16xf32> to vector<1x16x16xf32>
    %9 = vector.broadcast %8 : vector<1x16x16xf32> to vector<4x16x16xf32>
    %10 = arith.mulf %7, %9 : vector<4x16x16xf32>
    %c0_14 = arith.constant 0 : index
    %c1 = arith.constant 1 : index
    %c1_15 = arith.constant 1 : index
    %11 = vector.load %arg6[%c0_14, %c1, %c1_15] : memref<4x18x18xf32, #tpu.memory_space<vmem>>, vector<4x16x16xf32>
    tpu.vector_store %arg6[%c0_14, %c1, %c1_15], %10 {strides = array<i32>} : memref<4x18x18xf32, #tpu.memory_space<vmem>>, vector<4x16x16xf32>,
    %c0_16 = arith.constant 0 : index
    %c1_17 = arith.constant 1 : index
    %c1_18 = arith.constant 1 : index
    %12 = vector.load %arg7[%c0_16, %c1_17, %c1_18] : memref<1x18x18xf32, #tpu.memory_space<vmem>>, vector<1x16x16xf32>
    %13 = vector.shape_cast %12 : vector<1x16x16xf32> to vector<16x16xf32>
    %14 = vector.shape_cast %5 : vector<16x16xf32> to vector<1x16x16xf32>
    tpu.vector_store %arg7[%c0_16, %c1_17, %c1_18], %14 {strides = array<i32>} : memref<1x18x18xf32, #tpu.memory_space<vmem>>, vector<1x16x16xf32>,
    %cst_19 = arith.constant 0.000000e+00 : f32
    %15 = vector.broadcast %cst_19 : f32 to vector<16x16xf32>
    %c0_20 = arith.constant 0 : index
    %c0_21 = arith.constant 0 : index
    %c0_22 = arith.constant 0 : index
    %16 = vector.load %arg7[%c0_20, %c0_21, %c0_22] : memref<1x18x18xf32, #tpu.memory_space<vmem>>, vector<1x16x18xf32>
    %17 = vector.shape_cast %16 : vector<1x16x18xf32> to vector<16x18xf32>
    %18 = vector.extract_strided_slice %17 {offsets = [0, 0], sizes = [16, 16], strides = [1, 1]} : vector<16x18xf32> to vector<16x16xf32>
    %19 = arith.addf %15, %18 : vector<16x16xf32>
    %20 = vector.extract_strided_slice %17 {offsets = [0, 1], sizes = [16, 16], strides = [1, 1]} : vector<16x18xf32> to vector<16x16xf32>
    %21 = arith.addf %19, %20 : vector<16x16xf32>
    %22 = vector.extract_strided_slice %17 {offsets = [0, 2], sizes = [16, 16], strides = [1, 1]} : vector<16x18xf32> to vector<16x16xf32>
    %23 = arith.addf %21, %22 : vector<16x16xf32>
    %c0_23 = arith.constant 0 : index
    %c1_24 = arith.constant 1 : index
    %c0_25 = arith.constant 0 : index
    %24 = vector.load %arg7[%c0_23, %c1_24, %c0_25] : memref<1x18x18xf32, #tpu.memory_space<vmem>>, vector<1x16x18xf32>
    %25 = vector.shape_cast %24 : vector<1x16x18xf32> to vector<16x18xf32>
    %26 = vector.extract_strided_slice %25 {offsets = [0, 0], sizes = [16, 16], strides = [1, 1]} : vector<16x18xf32> to vector<16x16xf32>
    %27 = arith.addf %23, %26 : vector<16x16xf32>
    %28 = vector.extract_strided_slice %25 {offsets = [0, 1], sizes = [16, 16], strides = [1, 1]} : vector<16x18xf32> to vector<16x16xf32>
    %29 = arith.addf %27, %28 : vector<16x16xf32>
    %30 = vector.extract_strided_slice %25 {offsets = [0, 2], sizes = [16, 16], strides = [1, 1]} : vector<16x18xf32> to vector<16x16xf32>
    %31 = arith.addf %29, %30 : vector<16x16xf32>
    %c0_26 = arith.constant 0 : index
    %c2 = arith.constant 2 : index
    %c0_27 = arith.constant 0 : index
    %32 = vector.load %arg7[%c0_26, %c2, %c0_27] : memref<1x18x18xf32, #tpu.memory_space<vmem>>, vector<1x16x18xf32>
    %33 = vector.shape_cast %32 : vector<1x16x18xf32> to vector<16x18xf32>
    %34 = vector.extract_strided_slice %33 {offsets = [0, 0], sizes = [16, 16], strides = [1, 1]} : vector<16x18xf32> to vector<16x16xf32>
    %35 = arith.addf %31, %34 : vector<16x16xf32>
    %36 = vector.extract_strided_slice %33 {offsets = [0, 1], sizes = [16, 16], strides = [1, 1]} : vector<16x18xf32> to vector<16x16xf32>
    %37 = arith.addf %35, %36 : vector<16x16xf32>
    %38 = vector.extract_strided_slice %33 {offsets = [0, 2], sizes = [16, 16], strides = [1, 1]} : vector<16x18xf32> to vector<16x16xf32>
    %39 = arith.addf %37, %38 : vector<16x16xf32>
    %cst_28 = arith.constant 0.000000e+00 : f32
    %40 = vector.broadcast %cst_28 : f32 to vector<16x16xf32>
    %41 = arith.cmpf oeq, %39, %40 : vector<16x16xf32>
    %cst_29 = arith.constant 0.000000e+00 : f32
    %cst_30 = arith.constant 1.000000e+00 : f32
    %42 = vector.broadcast %cst_29 : f32 to vector<16x16xf32>
    %43 = vector.broadcast %cst_30 : f32 to vector<16x16xf32>
    %44 = arith.select %41, %42, %43 : vector<16x16xi1>, vector<16x16xf32>
    %c0_31 = arith.constant 0 : index
    %c0_32 = arith.constant 0 : index
    %c0_33 = arith.constant 0 : index
    %c0_34 = arith.constant 0 : index
    %45 = vector.load %arg5[%c0_31, %c0_32, %c0_33, %c0_34] : memref<2x1x16x16xf32, #tpu.memory_space<vmem>>, vector<1x1x16x16xf32>
    %46 = vector.shape_cast %45 : vector<1x1x16x16xf32> to vector<16x16xf32>
    %47 = vector.shape_cast %44 : vector<16x16xf32> to vector<1x1x16x16xf32>
    tpu.vector_store %arg5[%c0_31, %c0_32, %c0_33, %c0_34], %47 {strides = array<i32>} : memref<2x1x16x16xf32, #tpu.memory_space<vmem>>, vector<1x1x16x16xf32>,
    %cst_35 = arith.constant 0.000000e+00 : f32
    %48 = vector.broadcast %cst_35 : f32 to vector<16x16xf32>
    %cst_36 = arith.constant 0.000000e+00 : f32
    %49 = vector.broadcast %cst_36 : f32 to vector<16x16xf32>
    %cst_37 = arith.constant 0.000000e+00 : f32
    %50 = vector.broadcast %cst_37 : f32 to vector<16x16xf32>
    %cst_38 = arith.constant 0.000000e+00 : f32
    %51 = vector.broadcast %cst_38 : f32 to vector<16x16xf32>
    %cst_39 = arith.constant 0.000000e+00 : f32
    %52 = vector.broadcast %cst_39 : f32 to vector<16x16xf32>
    %cst_40 = arith.constant 0.000000e+00 : f32
    %53 = vector.broadcast %cst_40 : f32 to vector<16x16xf32>
    %cst_41 = arith.constant 0.000000e+00 : f32
    %54 = vector.broadcast %cst_41 : f32 to vector<16x16xf32>
    %cst_42 = arith.constant 0.000000e+00 : f32
    %55 = vector.broadcast %cst_42 : f32 to vector<16x16xf32>
    %c0_43 = arith.constant 0 : index
    %c0_44 = arith.constant 0 : index
    %c0_45 = arith.constant 0 : index
    %56 = vector.load %arg6[%c0_43, %c0_44, %c0_45] : memref<4x18x18xf32, #tpu.memory_space<vmem>>, vector<4x16x18xf32>
    %57 = vector.extract_strided_slice %56 {offsets = [0, 0, 0], sizes = [4, 16, 16], strides = [1, 1, 1]} : vector<4x16x18xf32> to vector<4x16x16xf32>
    %58 = vector.extract_strided_slice %57 {offsets = [0, 0, 0], sizes = [1, 16, 16], strides = [1, 1, 1]} : vector<4x16x16xf32> to vector<1x16x16xf32>
    %59 = vector.shape_cast %58 : vector<1x16x16xf32> to vector<16x16xf32>
    %c0_46 = arith.constant 0 : index
    %60 = memref.load %arg1[%c0_46] : memref<288xf32, #tpu.memory_space<smem>>
    %61 = vector.broadcast %60 : f32 to vector<16x16xf32>
    %62 = arith.mulf %61, %59 : vector<16x16xf32>
    %63 = arith.addf %48, %62 : vector<16x16xf32>
    %c4 = arith.constant 4 : index
    %64 = memref.load %arg1[%c4] : memref<288xf32, #tpu.memory_space<smem>>
    %65 = vector.broadcast %64 : f32 to vector<16x16xf32>
    %66 = arith.mulf %65, %59 : vector<16x16xf32>
    %67 = arith.addf %49, %66 : vector<16x16xf32>
    %c8 = arith.constant 8 : index
    %68 = memref.load %arg1[%c8] : memref<288xf32, #tpu.memory_space<smem>>
    %69 = vector.broadcast %68 : f32 to vector<16x16xf32>
    %70 = arith.mulf %69, %59 : vector<16x16xf32>
    %71 = arith.addf %50, %70 : vector<16x16xf32>
    %c12 = arith.constant 12 : index
    %72 = memref.load %arg1[%c12] : memref<288xf32, #tpu.memory_space<smem>>
    %73 = vector.broadcast %72 : f32 to vector<16x16xf32>
    %74 = arith.mulf %73, %59 : vector<16x16xf32>
    %75 = arith.addf %51, %74 : vector<16x16xf32>
    %c16 = arith.constant 16 : index
    %76 = memref.load %arg1[%c16] : memref<288xf32, #tpu.memory_space<smem>>
    %77 = vector.broadcast %76 : f32 to vector<16x16xf32>
    %78 = arith.mulf %77, %59 : vector<16x16xf32>
    %79 = arith.addf %52, %78 : vector<16x16xf32>
    %c20 = arith.constant 20 : index
    %80 = memref.load %arg1[%c20] : memref<288xf32, #tpu.memory_space<smem>>
    %81 = vector.broadcast %80 : f32 to vector<16x16xf32>
    %82 = arith.mulf %81, %59 : vector<16x16xf32>
    %83 = arith.addf %53, %82 : vector<16x16xf32>
    %c24 = arith.constant 24 : index
    %84 = memref.load %arg1[%c24] : memref<288xf32, #tpu.memory_space<smem>>
    %85 = vector.broadcast %84 : f32 to vector<16x16xf32>
    %86 = arith.mulf %85, %59 : vector<16x16xf32>
    %87 = arith.addf %54, %86 : vector<16x16xf32>
    %c28 = arith.constant 28 : index
    %88 = memref.load %arg1[%c28] : memref<288xf32, #tpu.memory_space<smem>>
    %89 = vector.broadcast %88 : f32 to vector<16x16xf32>
    %90 = arith.mulf %89, %59 : vector<16x16xf32>
    %91 = arith.addf %55, %90 : vector<16x16xf32>
    %92 = vector.extract_strided_slice %57 {offsets = [1, 0, 0], sizes = [1, 16, 16], strides = [1, 1, 1]} : vector<4x16x16xf32> to vector<1x16x16xf32>
    %93 = vector.shape_cast %92 : vector<1x16x16xf32> to vector<16x16xf32>
    %c1_47 = arith.constant 1 : index
    %94 = memref.load %arg1[%c1_47] : memref<288xf32, #tpu.memory_space<smem>>
    %95 = vector.broadcast %94 : f32 to vector<16x16xf32>
    %96 = arith.mulf %95, %93 : vector<16x16xf32>
    %97 = arith.addf %63, %96 : vector<16x16xf32>
    %c5 = arith.constant 5 : index
    %98 = memref.load %arg1[%c5] : memref<288xf32, #tpu.memory_space<smem>>
    %99 = vector.broadcast %98 : f32 to vector<16x16xf32>
    %100 = arith.mulf %99, %93 : vector<16x16xf32>
    %101 = arith.addf %67, %100 : vector<16x16xf32>
    %c9 = arith.constant 9 : index
    %102 = memref.load %arg1[%c9] : memref<288xf32, #tpu.memory_space<smem>>
    %103 = vector.broadcast %102 : f32 to vector<16x16xf32>
    %104 = arith.mulf %103, %93 : vector<16x16xf32>
    %105 = arith.addf %71, %104 : vector<16x16xf32>
    %c13 = arith.constant 13 : index
    %106 = memref.load %arg1[%c13] : memref<288xf32, #tpu.memory_space<smem>>
    %107 = vector.broadcast %106 : f32 to vector<16x16xf32>
    %108 = arith.mulf %107, %93 : vector<16x16xf32>
    %109 = arith.addf %75, %108 : vector<16x16xf32>
    %c17 = arith.constant 17 : index
    %110 = memref.load %arg1[%c17] : memref<288xf32, #tpu.memory_space<smem>>
    %111 = vector.broadcast %110 : f32 to vector<16x16xf32>
    %112 = arith.mulf %111, %93 : vector<16x16xf32>
    %113 = arith.addf %79, %112 : vector<16x16xf32>
    %c21 = arith.constant 21 : index
    %114 = memref.load %arg1[%c21] : memref<288xf32, #tpu.memory_space<smem>>
    %115 = vector.broadcast %114 : f32 to vector<16x16xf32>
    %116 = arith.mulf %115, %93 : vector<16x16xf32>
    %117 = arith.addf %83, %116 : vector<16x16xf32>
    %c25 = arith.constant 25 : index
    %118 = memref.load %arg1[%c25] : memref<288xf32, #tpu.memory_space<smem>>
    %119 = vector.broadcast %118 : f32 to vector<16x16xf32>
    %120 = arith.mulf %119, %93 : vector<16x16xf32>
    %121 = arith.addf %87, %120 : vector<16x16xf32>
    %c29 = arith.constant 29 : index
    %122 = memref.load %arg1[%c29] : memref<288xf32, #tpu.memory_space<smem>>
    %123 = vector.broadcast %122 : f32 to vector<16x16xf32>
    %124 = arith.mulf %123, %93 : vector<16x16xf32>
    %125 = arith.addf %91, %124 : vector<16x16xf32>
    %126 = vector.extract_strided_slice %57 {offsets = [2, 0, 0], sizes = [1, 16, 16], strides = [1, 1, 1]} : vector<4x16x16xf32> to vector<1x16x16xf32>
    %127 = vector.shape_cast %126 : vector<1x16x16xf32> to vector<16x16xf32>
    %c2_48 = arith.constant 2 : index
    %128 = memref.load %arg1[%c2_48] : memref<288xf32, #tpu.memory_space<smem>>
    %129 = vector.broadcast %128 : f32 to vector<16x16xf32>
    %130 = arith.mulf %129, %127 : vector<16x16xf32>
    %131 = arith.addf %97, %130 : vector<16x16xf32>
    %c6 = arith.constant 6 : index
    %132 = memref.load %arg1[%c6] : memref<288xf32, #tpu.memory_space<smem>>
    %133 = vector.broadcast %132 : f32 to vector<16x16xf32>
    %134 = arith.mulf %133, %127 : vector<16x16xf32>
    %135 = arith.addf %101, %134 : vector<16x16xf32>
    %c10 = arith.constant 10 : index
    %136 = memref.load %arg1[%c10] : memref<288xf32, #tpu.memory_space<smem>>
    %137 = vector.broadcast %136 : f32 to vector<16x16xf32>
    %138 = arith.mulf %137, %127 : vector<16x16xf32>
    %139 = arith.addf %105, %138 : vector<16x16xf32>
    %c14 = arith.constant 14 : index
    %140 = memref.load %arg1[%c14] : memref<288xf32, #tpu.memory_space<smem>>
    %141 = vector.broadcast %140 : f32 to vector<16x16xf32>
    %142 = arith.mulf %141, %127 : vector<16x16xf32>
    %143 = arith.addf %109, %142 : vector<16x16xf32>
    %c18 = arith.constant 18 : index
    %144 = memref.load %arg1[%c18] : memref<288xf32, #tpu.memory_space<smem>>
    %145 = vector.broadcast %144 : f32 to vector<16x16xf32>
    %146 = arith.mulf %145, %127 : vector<16x16xf32>
    %147 = arith.addf %113, %146 : vector<16x16xf32>
    %c22 = arith.constant 22 : index
    %148 = memref.load %arg1[%c22] : memref<288xf32, #tpu.memory_space<smem>>
    %149 = vector.broadcast %148 : f32 to vector<16x16xf32>
    %150 = arith.mulf %149, %127 : vector<16x16xf32>
    %151 = arith.addf %117, %150 : vector<16x16xf32>
    %c26 = arith.constant 26 : index
    %152 = memref.load %arg1[%c26] : memref<288xf32, #tpu.memory_space<smem>>
    %153 = vector.broadcast %152 : f32 to vector<16x16xf32>
    %154 = arith.mulf %153, %127 : vector<16x16xf32>
    %155 = arith.addf %121, %154 : vector<16x16xf32>
    %c30 = arith.constant 30 : index
    %156 = memref.load %arg1[%c30] : memref<288xf32, #tpu.memory_space<smem>>
    %157 = vector.broadcast %156 : f32 to vector<16x16xf32>
    %158 = arith.mulf %157, %127 : vector<16x16xf32>
    %159 = arith.addf %125, %158 : vector<16x16xf32>
    %160 = vector.extract_strided_slice %57 {offsets = [3, 0, 0], sizes = [1, 16, 16], strides = [1, 1, 1]} : vector<4x16x16xf32> to vector<1x16x16xf32>
    %161 = vector.shape_cast %160 : vector<1x16x16xf32> to vector<16x16xf32>
    %c3 = arith.constant 3 : index
    %162 = memref.load %arg1[%c3] : memref<288xf32, #tpu.memory_space<smem>>
    %163 = vector.broadcast %162 : f32 to vector<16x16xf32>
    %164 = arith.mulf %163, %161 : vector<16x16xf32>
    %165 = arith.addf %131, %164 : vector<16x16xf32>
    %c7 = arith.constant 7 : index
    %166 = memref.load %arg1[%c7] : memref<288xf32, #tpu.memory_space<smem>>
    %167 = vector.broadcast %166 : f32 to vector<16x16xf32>
    %168 = arith.mulf %167, %161 : vector<16x16xf32>
    %169 = arith.addf %135, %168 : vector<16x16xf32>
    %c11 = arith.constant 11 : index
    %170 = memref.load %arg1[%c11] : memref<288xf32, #tpu.memory_space<smem>>
    %171 = vector.broadcast %170 : f32 to vector<16x16xf32>
    %172 = arith.mulf %171, %161 : vector<16x16xf32>
    %173 = arith.addf %139, %172 : vector<16x16xf32>
    %c15 = arith.constant 15 : index
    %174 = memref.load %arg1[%c15] : memref<288xf32, #tpu.memory_space<smem>>
    %175 = vector.broadcast %174 : f32 to vector<16x16xf32>
    %176 = arith.mulf %175, %161 : vector<16x16xf32>
    %177 = arith.addf %143, %176 : vector<16x16xf32>
    %c19 = arith.constant 19 : index
    %178 = memref.load %arg1[%c19] : memref<288xf32, #tpu.memory_space<smem>>
    %179 = vector.broadcast %178 : f32 to vector<16x16xf32>
    %180 = arith.mulf %179, %161 : vector<16x16xf32>
    %181 = arith.addf %147, %180 : vector<16x16xf32>
    %c23 = arith.constant 23 : index
    %182 = memref.load %arg1[%c23] : memref<288xf32, #tpu.memory_space<smem>>
    %183 = vector.broadcast %182 : f32 to vector<16x16xf32>
    %184 = arith.mulf %183, %161 : vector<16x16xf32>
    %185 = arith.addf %151, %184 : vector<16x16xf32>
    %c27 = arith.constant 27 : index
    %186 = memref.load %arg1[%c27] : memref<288xf32, #tpu.memory_space<smem>>
    %187 = vector.broadcast %186 : f32 to vector<16x16xf32>
    %188 = arith.mulf %187, %161 : vector<16x16xf32>
    %189 = arith.addf %155, %188 : vector<16x16xf32>
    %c31 = arith.constant 31 : index
    %190 = memref.load %arg1[%c31] : memref<288xf32, #tpu.memory_space<smem>>
    %191 = vector.broadcast %190 : f32 to vector<16x16xf32>
    %192 = arith.mulf %191, %161 : vector<16x16xf32>
    %193 = arith.addf %159, %192 : vector<16x16xf32>
    %194 = vector.extract_strided_slice %56 {offsets = [0, 0, 1], sizes = [4, 16, 16], strides = [1, 1, 1]} : vector<4x16x18xf32> to vector<4x16x16xf32>
    %195 = vector.extract_strided_slice %194 {offsets = [0, 0, 0], sizes = [1, 16, 16], strides = [1, 1, 1]} : vector<4x16x16xf32> to vector<1x16x16xf32>
    %196 = vector.shape_cast %195 : vector<1x16x16xf32> to vector<16x16xf32>
    %c32 = arith.constant 32 : index
    %197 = memref.load %arg1[%c32] : memref<288xf32, #tpu.memory_space<smem>>
    %198 = vector.broadcast %197 : f32 to vector<16x16xf32>
    %199 = arith.mulf %198, %196 : vector<16x16xf32>
    %200 = arith.addf %165, %199 : vector<16x16xf32>
    %c36 = arith.constant 36 : index
    %201 = memref.load %arg1[%c36] : memref<288xf32, #tpu.memory_space<smem>>
    %202 = vector.broadcast %201 : f32 to vector<16x16xf32>
    %203 = arith.mulf %202, %196 : vector<16x16xf32>
    %204 = arith.addf %169, %203 : vector<16x16xf32>
    %c40 = arith.constant 40 : index
    %205 = memref.load %arg1[%c40] : memref<288xf32, #tpu.memory_space<smem>>
    %206 = vector.broadcast %205 : f32 to vector<16x16xf32>
    %207 = arith.mulf %206, %196 : vector<16x16xf32>
    %208 = arith.addf %173, %207 : vector<16x16xf32>
    %c44 = arith.constant 44 : index
    %209 = memref.load %arg1[%c44] : memref<288xf32, #tpu.memory_space<smem>>
    %210 = vector.broadcast %209 : f32 to vector<16x16xf32>
    %211 = arith.mulf %210, %196 : vector<16x16xf32>
    %212 = arith.addf %177, %211 : vector<16x16xf32>
    %c48 = arith.constant 48 : index
    %213 = memref.load %arg1[%c48] : memref<288xf32, #tpu.memory_space<smem>>
    %214 = vector.broadcast %213 : f32 to vector<16x16xf32>
    %215 = arith.mulf %214, %196 : vector<16x16xf32>
    %216 = arith.addf %181, %215 : vector<16x16xf32>
    %c52 = arith.constant 52 : index
    %217 = memref.load %arg1[%c52] : memref<288xf32, #tpu.memory_space<smem>>
    %218 = vector.broadcast %217 : f32 to vector<16x16xf32>
    %219 = arith.mulf %218, %196 : vector<16x16xf32>
    %220 = arith.addf %185, %219 : vector<16x16xf32>
    %c56 = arith.constant 56 : index
    %221 = memref.load %arg1[%c56] : memref<288xf32, #tpu.memory_space<smem>>
    %222 = vector.broadcast %221 : f32 to vector<16x16xf32>
    %223 = arith.mulf %222, %196 : vector<16x16xf32>
    %224 = arith.addf %189, %223 : vector<16x16xf32>
    %c60 = arith.constant 60 : index
    %225 = memref.load %arg1[%c60] : memref<288xf32, #tpu.memory_space<smem>>
    %226 = vector.broadcast %225 : f32 to vector<16x16xf32>
    %227 = arith.mulf %226, %196 : vector<16x16xf32>
    %228 = arith.addf %193, %227 : vector<16x16xf32>
    %229 = vector.extract_strided_slice %194 {offsets = [1, 0, 0], sizes = [1, 16, 16], strides = [1, 1, 1]} : vector<4x16x16xf32> to vector<1x16x16xf32>
    %230 = vector.shape_cast %229 : vector<1x16x16xf32> to vector<16x16xf32>
    %c33 = arith.constant 33 : index
    %231 = memref.load %arg1[%c33] : memref<288xf32, #tpu.memory_space<smem>>
    %232 = vector.broadcast %231 : f32 to vector<16x16xf32>
    %233 = arith.mulf %232, %230 : vector<16x16xf32>
    %234 = arith.addf %200, %233 : vector<16x16xf32>
    %c37 = arith.constant 37 : index
    %235 = memref.load %arg1[%c37] : memref<288xf32, #tpu.memory_space<smem>>
    %236 = vector.broadcast %235 : f32 to vector<16x16xf32>
    %237 = arith.mulf %236, %230 : vector<16x16xf32>
    %238 = arith.addf %204, %237 : vector<16x16xf32>
    %c41 = arith.constant 41 : index
    %239 = memref.load %arg1[%c41] : memref<288xf32, #tpu.memory_space<smem>>
    %240 = vector.broadcast %239 : f32 to vector<16x16xf32>
    %241 = arith.mulf %240, %230 : vector<16x16xf32>
    %242 = arith.addf %208, %241 : vector<16x16xf32>
    %c45 = arith.constant 45 : index
    %243 = memref.load %arg1[%c45] : memref<288xf32, #tpu.memory_space<smem>>
    %244 = vector.broadcast %243 : f32 to vector<16x16xf32>
    %245 = arith.mulf %244, %230 : vector<16x16xf32>
    %246 = arith.addf %212, %245 : vector<16x16xf32>
    %c49 = arith.constant 49 : index
    %247 = memref.load %arg1[%c49] : memref<288xf32, #tpu.memory_space<smem>>
    %248 = vector.broadcast %247 : f32 to vector<16x16xf32>
    %249 = arith.mulf %248, %230 : vector<16x16xf32>
    %250 = arith.addf %216, %249 : vector<16x16xf32>
    %c53 = arith.constant 53 : index
    %251 = memref.load %arg1[%c53] : memref<288xf32, #tpu.memory_space<smem>>
    %252 = vector.broadcast %251 : f32 to vector<16x16xf32>
    %253 = arith.mulf %252, %230 : vector<16x16xf32>
    %254 = arith.addf %220, %253 : vector<16x16xf32>
    %c57 = arith.constant 57 : index
    %255 = memref.load %arg1[%c57] : memref<288xf32, #tpu.memory_space<smem>>
    %256 = vector.broadcast %255 : f32 to vector<16x16xf32>
    %257 = arith.mulf %256, %230 : vector<16x16xf32>
    %258 = arith.addf %224, %257 : vector<16x16xf32>
    %c61 = arith.constant 61 : index
    %259 = memref.load %arg1[%c61] : memref<288xf32, #tpu.memory_space<smem>>
    %260 = vector.broadcast %259 : f32 to vector<16x16xf32>
    %261 = arith.mulf %260, %230 : vector<16x16xf32>
    %262 = arith.addf %228, %261 : vector<16x16xf32>
    %263 = vector.extract_strided_slice %194 {offsets = [2, 0, 0], sizes = [1, 16, 16], strides = [1, 1, 1]} : vector<4x16x16xf32> to vector<1x16x16xf32>
    %264 = vector.shape_cast %263 : vector<1x16x16xf32> to vector<16x16xf32>
    %c34 = arith.constant 34 : index
    %265 = memref.load %arg1[%c34] : memref<288xf32, #tpu.memory_space<smem>>
    %266 = vector.broadcast %265 : f32 to vector<16x16xf32>
    %267 = arith.mulf %266, %264 : vector<16x16xf32>
    %268 = arith.addf %234, %267 : vector<16x16xf32>
    %c38 = arith.constant 38 : index
    %269 = memref.load %arg1[%c38] : memref<288xf32, #tpu.memory_space<smem>>
    %270 = vector.broadcast %269 : f32 to vector<16x16xf32>
    %271 = arith.mulf %270, %264 : vector<16x16xf32>
    %272 = arith.addf %238, %271 : vector<16x16xf32>
    %c42 = arith.constant 42 : index
    %273 = memref.load %arg1[%c42] : memref<288xf32, #tpu.memory_space<smem>>
    %274 = vector.broadcast %273 : f32 to vector<16x16xf32>
    %275 = arith.mulf %274, %264 : vector<16x16xf32>
    %276 = arith.addf %242, %275 : vector<16x16xf32>
    %c46 = arith.constant 46 : index
    %277 = memref.load %arg1[%c46] : memref<288xf32, #tpu.memory_space<smem>>
    %278 = vector.broadcast %277 : f32 to vector<16x16xf32>
    %279 = arith.mulf %278, %264 : vector<16x16xf32>
    %280 = arith.addf %246, %279 : vector<16x16xf32>
    %c50 = arith.constant 50 : index
    %281 = memref.load %arg1[%c50] : memref<288xf32, #tpu.memory_space<smem>>
    %282 = vector.broadcast %281 : f32 to vector<16x16xf32>
    %283 = arith.mulf %282, %264 : vector<16x16xf32>
    %284 = arith.addf %250, %283 : vector<16x16xf32>
    %c54 = arith.constant 54 : index
    %285 = memref.load %arg1[%c54] : memref<288xf32, #tpu.memory_space<smem>>
    %286 = vector.broadcast %285 : f32 to vector<16x16xf32>
    %287 = arith.mulf %286, %264 : vector<16x16xf32>
    %288 = arith.addf %254, %287 : vector<16x16xf32>
    %c58 = arith.constant 58 : index
    %289 = memref.load %arg1[%c58] : memref<288xf32, #tpu.memory_space<smem>>
    %290 = vector.broadcast %289 : f32 to vector<16x16xf32>
    %291 = arith.mulf %290, %264 : vector<16x16xf32>
    %292 = arith.addf %258, %291 : vector<16x16xf32>
    %c62 = arith.constant 62 : index
    %293 = memref.load %arg1[%c62] : memref<288xf32, #tpu.memory_space<smem>>
    %294 = vector.broadcast %293 : f32 to vector<16x16xf32>
    %295 = arith.mulf %294, %264 : vector<16x16xf32>
    %296 = arith.addf %262, %295 : vector<16x16xf32>
    %297 = vector.extract_strided_slice %194 {offsets = [3, 0, 0], sizes = [1, 16, 16], strides = [1, 1, 1]} : vector<4x16x16xf32> to vector<1x16x16xf32>
    %298 = vector.shape_cast %297 : vector<1x16x16xf32> to vector<16x16xf32>
    %c35 = arith.constant 35 : index
    %299 = memref.load %arg1[%c35] : memref<288xf32, #tpu.memory_space<smem>>
    %300 = vector.broadcast %299 : f32 to vector<16x16xf32>
    %301 = arith.mulf %300, %298 : vector<16x16xf32>
    %302 = arith.addf %268, %301 : vector<16x16xf32>
    %c39 = arith.constant 39 : index
    %303 = memref.load %arg1[%c39] : memref<288xf32, #tpu.memory_space<smem>>
    %304 = vector.broadcast %303 : f32 to vector<16x16xf32>
    %305 = arith.mulf %304, %298 : vector<16x16xf32>
    %306 = arith.addf %272, %305 : vector<16x16xf32>
    %c43 = arith.constant 43 : index
    %307 = memref.load %arg1[%c43] : memref<288xf32, #tpu.memory_space<smem>>
    %308 = vector.broadcast %307 : f32 to vector<16x16xf32>
    %309 = arith.mulf %308, %298 : vector<16x16xf32>
    %310 = arith.addf %276, %309 : vector<16x16xf32>
    %c47 = arith.constant 47 : index
    %311 = memref.load %arg1[%c47] : memref<288xf32, #tpu.memory_space<smem>>
    %312 = vector.broadcast %311 : f32 to vector<16x16xf32>
    %313 = arith.mulf %312, %298 : vector<16x16xf32>
    %314 = arith.addf %280, %313 : vector<16x16xf32>
    %c51 = arith.constant 51 : index
    %315 = memref.load %arg1[%c51] : memref<288xf32, #tpu.memory_space<smem>>
    %316 = vector.broadcast %315 : f32 to vector<16x16xf32>
    %317 = arith.mulf %316, %298 : vector<16x16xf32>
    %318 = arith.addf %284, %317 : vector<16x16xf32>
    %c55 = arith.constant 55 : index
    %319 = memref.load %arg1[%c55] : memref<288xf32, #tpu.memory_space<smem>>
    %320 = vector.broadcast %319 : f32 to vector<16x16xf32>
    %321 = arith.mulf %320, %298 : vector<16x16xf32>
    %322 = arith.addf %288, %321 : vector<16x16xf32>
    %c59 = arith.constant 59 : index
    %323 = memref.load %arg1[%c59] : memref<288xf32, #tpu.memory_space<smem>>
    %324 = vector.broadcast %323 : f32 to vector<16x16xf32>
    %325 = arith.mulf %324, %298 : vector<16x16xf32>
    %326 = arith.addf %292, %325 : vector<16x16xf32>
    %c63 = arith.constant 63 : index
    %327 = memref.load %arg1[%c63] : memref<288xf32, #tpu.memory_space<smem>>
    %328 = vector.broadcast %327 : f32 to vector<16x16xf32>
    %329 = arith.mulf %328, %298 : vector<16x16xf32>
    %330 = arith.addf %296, %329 : vector<16x16xf32>
    %331 = vector.extract_strided_slice %56 {offsets = [0, 0, 2], sizes = [4, 16, 16], strides = [1, 1, 1]} : vector<4x16x18xf32> to vector<4x16x16xf32>
    %332 = vector.extract_strided_slice %331 {offsets = [0, 0, 0], sizes = [1, 16, 16], strides = [1, 1, 1]} : vector<4x16x16xf32> to vector<1x16x16xf32>
    %333 = vector.shape_cast %332 : vector<1x16x16xf32> to vector<16x16xf32>
    %c64 = arith.constant 64 : index
    %334 = memref.load %arg1[%c64] : memref<288xf32, #tpu.memory_space<smem>>
    %335 = vector.broadcast %334 : f32 to vector<16x16xf32>
    %336 = arith.mulf %335, %333 : vector<16x16xf32>
    %337 = arith.addf %302, %336 : vector<16x16xf32>
    %c68 = arith.constant 68 : index
    %338 = memref.load %arg1[%c68] : memref<288xf32, #tpu.memory_space<smem>>
    %339 = vector.broadcast %338 : f32 to vector<16x16xf32>
    %340 = arith.mulf %339, %333 : vector<16x16xf32>
    %341 = arith.addf %306, %340 : vector<16x16xf32>
    %c72 = arith.constant 72 : index
    %342 = memref.load %arg1[%c72] : memref<288xf32, #tpu.memory_space<smem>>
    %343 = vector.broadcast %342 : f32 to vector<16x16xf32>
    %344 = arith.mulf %343, %333 : vector<16x16xf32>
    %345 = arith.addf %310, %344 : vector<16x16xf32>
    %c76 = arith.constant 76 : index
    %346 = memref.load %arg1[%c76] : memref<288xf32, #tpu.memory_space<smem>>
    %347 = vector.broadcast %346 : f32 to vector<16x16xf32>
    %348 = arith.mulf %347, %333 : vector<16x16xf32>
    %349 = arith.addf %314, %348 : vector<16x16xf32>
    %c80 = arith.constant 80 : index
    %350 = memref.load %arg1[%c80] : memref<288xf32, #tpu.memory_space<smem>>
    %351 = vector.broadcast %350 : f32 to vector<16x16xf32>
    %352 = arith.mulf %351, %333 : vector<16x16xf32>
    %353 = arith.addf %318, %352 : vector<16x16xf32>
    %c84 = arith.constant 84 : index
    %354 = memref.load %arg1[%c84] : memref<288xf32, #tpu.memory_space<smem>>
    %355 = vector.broadcast %354 : f32 to vector<16x16xf32>
    %356 = arith.mulf %355, %333 : vector<16x16xf32>
    %357 = arith.addf %322, %356 : vector<16x16xf32>
    %c88 = arith.constant 88 : index
    %358 = memref.load %arg1[%c88] : memref<288xf32, #tpu.memory_space<smem>>
    %359 = vector.broadcast %358 : f32 to vector<16x16xf32>
    %360 = arith.mulf %359, %333 : vector<16x16xf32>
    %361 = arith.addf %326, %360 : vector<16x16xf32>
    %c92 = arith.constant 92 : index
    %362 = memref.load %arg1[%c92] : memref<288xf32, #tpu.memory_space<smem>>
    %363 = vector.broadcast %362 : f32 to vector<16x16xf32>
    %364 = arith.mulf %363, %333 : vector<16x16xf32>
    %365 = arith.addf %330, %364 : vector<16x16xf32>
    %366 = vector.extract_strided_slice %331 {offsets = [1, 0, 0], sizes = [1, 16, 16], strides = [1, 1, 1]} : vector<4x16x16xf32> to vector<1x16x16xf32>
    %367 = vector.shape_cast %366 : vector<1x16x16xf32> to vector<16x16xf32>
    %c65 = arith.constant 65 : index
    %368 = memref.load %arg1[%c65] : memref<288xf32, #tpu.memory_space<smem>>
    %369 = vector.broadcast %368 : f32 to vector<16x16xf32>
    %370 = arith.mulf %369, %367 : vector<16x16xf32>
    %371 = arith.addf %337, %370 : vector<16x16xf32>
    %c69 = arith.constant 69 : index
    %372 = memref.load %arg1[%c69] : memref<288xf32, #tpu.memory_space<smem>>
    %373 = vector.broadcast %372 : f32 to vector<16x16xf32>
    %374 = arith.mulf %373, %367 : vector<16x16xf32>
    %375 = arith.addf %341, %374 : vector<16x16xf32>
    %c73 = arith.constant 73 : index
    %376 = memref.load %arg1[%c73] : memref<288xf32, #tpu.memory_space<smem>>
    %377 = vector.broadcast %376 : f32 to vector<16x16xf32>
    %378 = arith.mulf %377, %367 : vector<16x16xf32>
    %379 = arith.addf %345, %378 : vector<16x16xf32>
    %c77 = arith.constant 77 : index
    %380 = memref.load %arg1[%c77] : memref<288xf32, #tpu.memory_space<smem>>
    %381 = vector.broadcast %380 : f32 to vector<16x16xf32>
    %382 = arith.mulf %381, %367 : vector<16x16xf32>
    %383 = arith.addf %349, %382 : vector<16x16xf32>
    %c81 = arith.constant 81 : index
    %384 = memref.load %arg1[%c81] : memref<288xf32, #tpu.memory_space<smem>>
    %385 = vector.broadcast %384 : f32 to vector<16x16xf32>
    %386 = arith.mulf %385, %367 : vector<16x16xf32>
    %387 = arith.addf %353, %386 : vector<16x16xf32>
    %c85 = arith.constant 85 : index
    %388 = memref.load %arg1[%c85] : memref<288xf32, #tpu.memory_space<smem>>
    %389 = vector.broadcast %388 : f32 to vector<16x16xf32>
    %390 = arith.mulf %389, %367 : vector<16x16xf32>
    %391 = arith.addf %357, %390 : vector<16x16xf32>
    %c89 = arith.constant 89 : index
    %392 = memref.load %arg1[%c89] : memref<288xf32, #tpu.memory_space<smem>>
    %393 = vector.broadcast %392 : f32 to vector<16x16xf32>
    %394 = arith.mulf %393, %367 : vector<16x16xf32>
    %395 = arith.addf %361, %394 : vector<16x16xf32>
    %c93 = arith.constant 93 : index
    %396 = memref.load %arg1[%c93] : memref<288xf32, #tpu.memory_space<smem>>
    %397 = vector.broadcast %396 : f32 to vector<16x16xf32>
    %398 = arith.mulf %397, %367 : vector<16x16xf32>
    %399 = arith.addf %365, %398 : vector<16x16xf32>
    %400 = vector.extract_strided_slice %331 {offsets = [2, 0, 0], sizes = [1, 16, 16], strides = [1, 1, 1]} : vector<4x16x16xf32> to vector<1x16x16xf32>
    %401 = vector.shape_cast %400 : vector<1x16x16xf32> to vector<16x16xf32>
    %c66 = arith.constant 66 : index
    %402 = memref.load %arg1[%c66] : memref<288xf32, #tpu.memory_space<smem>>
    %403 = vector.broadcast %402 : f32 to vector<16x16xf32>
    %404 = arith.mulf %403, %401 : vector<16x16xf32>
    %405 = arith.addf %371, %404 : vector<16x16xf32>
    %c70 = arith.constant 70 : index
    %406 = memref.load %arg1[%c70] : memref<288xf32, #tpu.memory_space<smem>>
    %407 = vector.broadcast %406 : f32 to vector<16x16xf32>
    %408 = arith.mulf %407, %401 : vector<16x16xf32>
    %409 = arith.addf %375, %408 : vector<16x16xf32>
    %c74 = arith.constant 74 : index
    %410 = memref.load %arg1[%c74] : memref<288xf32, #tpu.memory_space<smem>>
    %411 = vector.broadcast %410 : f32 to vector<16x16xf32>
    %412 = arith.mulf %411, %401 : vector<16x16xf32>
    %413 = arith.addf %379, %412 : vector<16x16xf32>
    %c78 = arith.constant 78 : index
    %414 = memref.load %arg1[%c78] : memref<288xf32, #tpu.memory_space<smem>>
    %415 = vector.broadcast %414 : f32 to vector<16x16xf32>
    %416 = arith.mulf %415, %401 : vector<16x16xf32>
    %417 = arith.addf %383, %416 : vector<16x16xf32>
    %c82 = arith.constant 82 : index
    %418 = memref.load %arg1[%c82] : memref<288xf32, #tpu.memory_space<smem>>
    %419 = vector.broadcast %418 : f32 to vector<16x16xf32>
    %420 = arith.mulf %419, %401 : vector<16x16xf32>
    %421 = arith.addf %387, %420 : vector<16x16xf32>
    %c86 = arith.constant 86 : index
    %422 = memref.load %arg1[%c86] : memref<288xf32, #tpu.memory_space<smem>>
    %423 = vector.broadcast %422 : f32 to vector<16x16xf32>
    %424 = arith.mulf %423, %401 : vector<16x16xf32>
    %425 = arith.addf %391, %424 : vector<16x16xf32>
    %c90 = arith.constant 90 : index
    %426 = memref.load %arg1[%c90] : memref<288xf32, #tpu.memory_space<smem>>
    %427 = vector.broadcast %426 : f32 to vector<16x16xf32>
    %428 = arith.mulf %427, %401 : vector<16x16xf32>
    %429 = arith.addf %395, %428 : vector<16x16xf32>
    %c94 = arith.constant 94 : index
    %430 = memref.load %arg1[%c94] : memref<288xf32, #tpu.memory_space<smem>>
    %431 = vector.broadcast %430 : f32 to vector<16x16xf32>
    %432 = arith.mulf %431, %401 : vector<16x16xf32>
    %433 = arith.addf %399, %432 : vector<16x16xf32>
    %434 = vector.extract_strided_slice %331 {offsets = [3, 0, 0], sizes = [1, 16, 16], strides = [1, 1, 1]} : vector<4x16x16xf32> to vector<1x16x16xf32>
    %435 = vector.shape_cast %434 : vector<1x16x16xf32> to vector<16x16xf32>
    %c67 = arith.constant 67 : index
    %436 = memref.load %arg1[%c67] : memref<288xf32, #tpu.memory_space<smem>>
    %437 = vector.broadcast %436 : f32 to vector<16x16xf32>
    %438 = arith.mulf %437, %435 : vector<16x16xf32>
    %439 = arith.addf %405, %438 : vector<16x16xf32>
    %c71 = arith.constant 71 : index
    %440 = memref.load %arg1[%c71] : memref<288xf32, #tpu.memory_space<smem>>
    %441 = vector.broadcast %440 : f32 to vector<16x16xf32>
    %442 = arith.mulf %441, %435 : vector<16x16xf32>
    %443 = arith.addf %409, %442 : vector<16x16xf32>
    %c75 = arith.constant 75 : index
    %444 = memref.load %arg1[%c75] : memref<288xf32, #tpu.memory_space<smem>>
    %445 = vector.broadcast %444 : f32 to vector<16x16xf32>
    %446 = arith.mulf %445, %435 : vector<16x16xf32>
    %447 = arith.addf %413, %446 : vector<16x16xf32>
    %c79 = arith.constant 79 : index
    %448 = memref.load %arg1[%c79] : memref<288xf32, #tpu.memory_space<smem>>
    %449 = vector.broadcast %448 : f32 to vector<16x16xf32>
    %450 = arith.mulf %449, %435 : vector<16x16xf32>
    %451 = arith.addf %417, %450 : vector<16x16xf32>
    %c83 = arith.constant 83 : index
    %452 = memref.load %arg1[%c83] : memref<288xf32, #tpu.memory_space<smem>>
    %453 = vector.broadcast %452 : f32 to vector<16x16xf32>
    %454 = arith.mulf %453, %435 : vector<16x16xf32>
    %455 = arith.addf %421, %454 : vector<16x16xf32>
    %c87 = arith.constant 87 : index
    %456 = memref.load %arg1[%c87] : memref<288xf32, #tpu.memory_space<smem>>
    %457 = vector.broadcast %456 : f32 to vector<16x16xf32>
    %458 = arith.mulf %457, %435 : vector<16x16xf32>
    %459 = arith.addf %425, %458 : vector<16x16xf32>
    %c91 = arith.constant 91 : index
    %460 = memref.load %arg1[%c91] : memref<288xf32, #tpu.memory_space<smem>>
    %461 = vector.broadcast %460 : f32 to vector<16x16xf32>
    %462 = arith.mulf %461, %435 : vector<16x16xf32>
    %463 = arith.addf %429, %462 : vector<16x16xf32>
    %c95 = arith.constant 95 : index
    %464 = memref.load %arg1[%c95] : memref<288xf32, #tpu.memory_space<smem>>
    %465 = vector.broadcast %464 : f32 to vector<16x16xf32>
    %466 = arith.mulf %465, %435 : vector<16x16xf32>
    %467 = arith.addf %433, %466 : vector<16x16xf32>
    %c0_49 = arith.constant 0 : index
    %c1_50 = arith.constant 1 : index
    %c0_51 = arith.constant 0 : index
    %468 = vector.load %arg6[%c0_49, %c1_50, %c0_51] : memref<4x18x18xf32, #tpu.memory_space<vmem>>, vector<4x16x18xf32>
    %469 = vector.extract_strided_slice %468 {offsets = [0, 0, 0], sizes = [4, 16, 16], strides = [1, 1, 1]} : vector<4x16x18xf32> to vector<4x16x16xf32>
    %470 = vector.extract_strided_slice %469 {offsets = [0, 0, 0], sizes = [1, 16, 16], strides = [1, 1, 1]} : vector<4x16x16xf32> to vector<1x16x16xf32>
    %471 = vector.shape_cast %470 : vector<1x16x16xf32> to vector<16x16xf32>
    %c96 = arith.constant 96 : index
    %472 = memref.load %arg1[%c96] : memref<288xf32, #tpu.memory_space<smem>>
    %473 = vector.broadcast %472 : f32 to vector<16x16xf32>
    %474 = arith.mulf %473, %471 : vector<16x16xf32>
    %475 = arith.addf %439, %474 : vector<16x16xf32>
    %c100 = arith.constant 100 : index
    %476 = memref.load %arg1[%c100] : memref<288xf32, #tpu.memory_space<smem>>
    %477 = vector.broadcast %476 : f32 to vector<16x16xf32>
    %478 = arith.mulf %477, %471 : vector<16x16xf32>
    %479 = arith.addf %443, %478 : vector<16x16xf32>
    %c104 = arith.constant 104 : index
    %480 = memref.load %arg1[%c104] : memref<288xf32, #tpu.memory_space<smem>>
    %481 = vector.broadcast %480 : f32 to vector<16x16xf32>
    %482 = arith.mulf %481, %471 : vector<16x16xf32>
    %483 = arith.addf %447, %482 : vector<16x16xf32>
    %c108 = arith.constant 108 : index
    %484 = memref.load %arg1[%c108] : memref<288xf32, #tpu.memory_space<smem>>
    %485 = vector.broadcast %484 : f32 to vector<16x16xf32>
    %486 = arith.mulf %485, %471 : vector<16x16xf32>
    %487 = arith.addf %451, %486 : vector<16x16xf32>
    %c112 = arith.constant 112 : index
    %488 = memref.load %arg1[%c112] : memref<288xf32, #tpu.memory_space<smem>>
    %489 = vector.broadcast %488 : f32 to vector<16x16xf32>
    %490 = arith.mulf %489, %471 : vector<16x16xf32>
    %491 = arith.addf %455, %490 : vector<16x16xf32>
    %c116 = arith.constant 116 : index
    %492 = memref.load %arg1[%c116] : memref<288xf32, #tpu.memory_space<smem>>
    %493 = vector.broadcast %492 : f32 to vector<16x16xf32>
    %494 = arith.mulf %493, %471 : vector<16x16xf32>
    %495 = arith.addf %459, %494 : vector<16x16xf32>
    %c120 = arith.constant 120 : index
    %496 = memref.load %arg1[%c120] : memref<288xf32, #tpu.memory_space<smem>>
    %497 = vector.broadcast %496 : f32 to vector<16x16xf32>
    %498 = arith.mulf %497, %471 : vector<16x16xf32>
    %499 = arith.addf %463, %498 : vector<16x16xf32>
    %c124 = arith.constant 124 : index
    %500 = memref.load %arg1[%c124] : memref<288xf32, #tpu.memory_space<smem>>
    %501 = vector.broadcast %500 : f32 to vector<16x16xf32>
    %502 = arith.mulf %501, %471 : vector<16x16xf32>
    %503 = arith.addf %467, %502 : vector<16x16xf32>
    %504 = vector.extract_strided_slice %469 {offsets = [1, 0, 0], sizes = [1, 16, 16], strides = [1, 1, 1]} : vector<4x16x16xf32> to vector<1x16x16xf32>
    %505 = vector.shape_cast %504 : vector<1x16x16xf32> to vector<16x16xf32>
    %c97 = arith.constant 97 : index
    %506 = memref.load %arg1[%c97] : memref<288xf32, #tpu.memory_space<smem>>
    %507 = vector.broadcast %506 : f32 to vector<16x16xf32>
    %508 = arith.mulf %507, %505 : vector<16x16xf32>
    %509 = arith.addf %475, %508 : vector<16x16xf32>
    %c101 = arith.constant 101 : index
    %510 = memref.load %arg1[%c101] : memref<288xf32, #tpu.memory_space<smem>>
    %511 = vector.broadcast %510 : f32 to vector<16x16xf32>
    %512 = arith.mulf %511, %505 : vector<16x16xf32>
    %513 = arith.addf %479, %512 : vector<16x16xf32>
    %c105 = arith.constant 105 : index
    %514 = memref.load %arg1[%c105] : memref<288xf32, #tpu.memory_space<smem>>
    %515 = vector.broadcast %514 : f32 to vector<16x16xf32>
    %516 = arith.mulf %515, %505 : vector<16x16xf32>
    %517 = arith.addf %483, %516 : vector<16x16xf32>
    %c109 = arith.constant 109 : index
    %518 = memref.load %arg1[%c109] : memref<288xf32, #tpu.memory_space<smem>>
    %519 = vector.broadcast %518 : f32 to vector<16x16xf32>
    %520 = arith.mulf %519, %505 : vector<16x16xf32>
    %521 = arith.addf %487, %520 : vector<16x16xf32>
    %c113 = arith.constant 113 : index
    %522 = memref.load %arg1[%c113] : memref<288xf32, #tpu.memory_space<smem>>
    %523 = vector.broadcast %522 : f32 to vector<16x16xf32>
    %524 = arith.mulf %523, %505 : vector<16x16xf32>
    %525 = arith.addf %491, %524 : vector<16x16xf32>
    %c117 = arith.constant 117 : index
    %526 = memref.load %arg1[%c117] : memref<288xf32, #tpu.memory_space<smem>>
    %527 = vector.broadcast %526 : f32 to vector<16x16xf32>
    %528 = arith.mulf %527, %505 : vector<16x16xf32>
    %529 = arith.addf %495, %528 : vector<16x16xf32>
    %c121 = arith.constant 121 : index
    %530 = memref.load %arg1[%c121] : memref<288xf32, #tpu.memory_space<smem>>
    %531 = vector.broadcast %530 : f32 to vector<16x16xf32>
    %532 = arith.mulf %531, %505 : vector<16x16xf32>
    %533 = arith.addf %499, %532 : vector<16x16xf32>
    %c125 = arith.constant 125 : index
    %534 = memref.load %arg1[%c125] : memref<288xf32, #tpu.memory_space<smem>>
    %535 = vector.broadcast %534 : f32 to vector<16x16xf32>
    %536 = arith.mulf %535, %505 : vector<16x16xf32>
    %537 = arith.addf %503, %536 : vector<16x16xf32>
    %538 = vector.extract_strided_slice %469 {offsets = [2, 0, 0], sizes = [1, 16, 16], strides = [1, 1, 1]} : vector<4x16x16xf32> to vector<1x16x16xf32>
    %539 = vector.shape_cast %538 : vector<1x16x16xf32> to vector<16x16xf32>
    %c98 = arith.constant 98 : index
    %540 = memref.load %arg1[%c98] : memref<288xf32, #tpu.memory_space<smem>>
    %541 = vector.broadcast %540 : f32 to vector<16x16xf32>
    %542 = arith.mulf %541, %539 : vector<16x16xf32>
    %543 = arith.addf %509, %542 : vector<16x16xf32>
    %c102 = arith.constant 102 : index
    %544 = memref.load %arg1[%c102] : memref<288xf32, #tpu.memory_space<smem>>
    %545 = vector.broadcast %544 : f32 to vector<16x16xf32>
    %546 = arith.mulf %545, %539 : vector<16x16xf32>
    %547 = arith.addf %513, %546 : vector<16x16xf32>
    %c106 = arith.constant 106 : index
    %548 = memref.load %arg1[%c106] : memref<288xf32, #tpu.memory_space<smem>>
    %549 = vector.broadcast %548 : f32 to vector<16x16xf32>
    %550 = arith.mulf %549, %539 : vector<16x16xf32>
    %551 = arith.addf %517, %550 : vector<16x16xf32>
    %c110 = arith.constant 110 : index
    %552 = memref.load %arg1[%c110] : memref<288xf32, #tpu.memory_space<smem>>
    %553 = vector.broadcast %552 : f32 to vector<16x16xf32>
    %554 = arith.mulf %553, %539 : vector<16x16xf32>
    %555 = arith.addf %521, %554 : vector<16x16xf32>
    %c114 = arith.constant 114 : index
    %556 = memref.load %arg1[%c114] : memref<288xf32, #tpu.memory_space<smem>>
    %557 = vector.broadcast %556 : f32 to vector<16x16xf32>
    %558 = arith.mulf %557, %539 : vector<16x16xf32>
    %559 = arith.addf %525, %558 : vector<16x16xf32>
    %c118 = arith.constant 118 : index
    %560 = memref.load %arg1[%c118] : memref<288xf32, #tpu.memory_space<smem>>
    %561 = vector.broadcast %560 : f32 to vector<16x16xf32>
    %562 = arith.mulf %561, %539 : vector<16x16xf32>
    %563 = arith.addf %529, %562 : vector<16x16xf32>
    %c122 = arith.constant 122 : index
    %564 = memref.load %arg1[%c122] : memref<288xf32, #tpu.memory_space<smem>>
    %565 = vector.broadcast %564 : f32 to vector<16x16xf32>
    %566 = arith.mulf %565, %539 : vector<16x16xf32>
    %567 = arith.addf %533, %566 : vector<16x16xf32>
    %c126 = arith.constant 126 : index
    %568 = memref.load %arg1[%c126] : memref<288xf32, #tpu.memory_space<smem>>
    %569 = vector.broadcast %568 : f32 to vector<16x16xf32>
    %570 = arith.mulf %569, %539 : vector<16x16xf32>
    %571 = arith.addf %537, %570 : vector<16x16xf32>
    %572 = vector.extract_strided_slice %469 {offsets = [3, 0, 0], sizes = [1, 16, 16], strides = [1, 1, 1]} : vector<4x16x16xf32> to vector<1x16x16xf32>
    %573 = vector.shape_cast %572 : vector<1x16x16xf32> to vector<16x16xf32>
    %c99 = arith.constant 99 : index
    %574 = memref.load %arg1[%c99] : memref<288xf32, #tpu.memory_space<smem>>
    %575 = vector.broadcast %574 : f32 to vector<16x16xf32>
    %576 = arith.mulf %575, %573 : vector<16x16xf32>
    %577 = arith.addf %543, %576 : vector<16x16xf32>
    %c103 = arith.constant 103 : index
    %578 = memref.load %arg1[%c103] : memref<288xf32, #tpu.memory_space<smem>>
    %579 = vector.broadcast %578 : f32 to vector<16x16xf32>
    %580 = arith.mulf %579, %573 : vector<16x16xf32>
    %581 = arith.addf %547, %580 : vector<16x16xf32>
    %c107 = arith.constant 107 : index
    %582 = memref.load %arg1[%c107] : memref<288xf32, #tpu.memory_space<smem>>
    %583 = vector.broadcast %582 : f32 to vector<16x16xf32>
    %584 = arith.mulf %583, %573 : vector<16x16xf32>
    %585 = arith.addf %551, %584 : vector<16x16xf32>
    %c111 = arith.constant 111 : index
    %586 = memref.load %arg1[%c111] : memref<288xf32, #tpu.memory_space<smem>>
    %587 = vector.broadcast %586 : f32 to vector<16x16xf32>
    %588 = arith.mulf %587, %573 : vector<16x16xf32>
    %589 = arith.addf %555, %588 : vector<16x16xf32>
    %c115 = arith.constant 115 : index
    %590 = memref.load %arg1[%c115] : memref<288xf32, #tpu.memory_space<smem>>
    %591 = vector.broadcast %590 : f32 to vector<16x16xf32>
    %592 = arith.mulf %591, %573 : vector<16x16xf32>
    %593 = arith.addf %559, %592 : vector<16x16xf32>
    %c119 = arith.constant 119 : index
    %594 = memref.load %arg1[%c119] : memref<288xf32, #tpu.memory_space<smem>>
    %595 = vector.broadcast %594 : f32 to vector<16x16xf32>
    %596 = arith.mulf %595, %573 : vector<16x16xf32>
    %597 = arith.addf %563, %596 : vector<16x16xf32>
    %c123 = arith.constant 123 : index
    %598 = memref.load %arg1[%c123] : memref<288xf32, #tpu.memory_space<smem>>
    %599 = vector.broadcast %598 : f32 to vector<16x16xf32>
    %600 = arith.mulf %599, %573 : vector<16x16xf32>
    %601 = arith.addf %567, %600 : vector<16x16xf32>
    %c127 = arith.constant 127 : index
    %602 = memref.load %arg1[%c127] : memref<288xf32, #tpu.memory_space<smem>>
    %603 = vector.broadcast %602 : f32 to vector<16x16xf32>
    %604 = arith.mulf %603, %573 : vector<16x16xf32>
    %605 = arith.addf %571, %604 : vector<16x16xf32>
    %606 = vector.extract_strided_slice %468 {offsets = [0, 0, 1], sizes = [4, 16, 16], strides = [1, 1, 1]} : vector<4x16x18xf32> to vector<4x16x16xf32>
    %607 = vector.extract_strided_slice %606 {offsets = [0, 0, 0], sizes = [1, 16, 16], strides = [1, 1, 1]} : vector<4x16x16xf32> to vector<1x16x16xf32>
    %608 = vector.shape_cast %607 : vector<1x16x16xf32> to vector<16x16xf32>
    %c128 = arith.constant 128 : index
    %609 = memref.load %arg1[%c128] : memref<288xf32, #tpu.memory_space<smem>>
    %610 = vector.broadcast %609 : f32 to vector<16x16xf32>
    %611 = arith.mulf %610, %608 : vector<16x16xf32>
    %612 = arith.addf %577, %611 : vector<16x16xf32>
    %c132 = arith.constant 132 : index
    %613 = memref.load %arg1[%c132] : memref<288xf32, #tpu.memory_space<smem>>
    %614 = vector.broadcast %613 : f32 to vector<16x16xf32>
    %615 = arith.mulf %614, %608 : vector<16x16xf32>
    %616 = arith.addf %581, %615 : vector<16x16xf32>
    %c136 = arith.constant 136 : index
    %617 = memref.load %arg1[%c136] : memref<288xf32, #tpu.memory_space<smem>>
    %618 = vector.broadcast %617 : f32 to vector<16x16xf32>
    %619 = arith.mulf %618, %608 : vector<16x16xf32>
    %620 = arith.addf %585, %619 : vector<16x16xf32>
    %c140 = arith.constant 140 : index
    %621 = memref.load %arg1[%c140] : memref<288xf32, #tpu.memory_space<smem>>
    %622 = vector.broadcast %621 : f32 to vector<16x16xf32>
    %623 = arith.mulf %622, %608 : vector<16x16xf32>
    %624 = arith.addf %589, %623 : vector<16x16xf32>
    %c144 = arith.constant 144 : index
    %625 = memref.load %arg1[%c144] : memref<288xf32, #tpu.memory_space<smem>>
    %626 = vector.broadcast %625 : f32 to vector<16x16xf32>
    %627 = arith.mulf %626, %608 : vector<16x16xf32>
    %628 = arith.addf %593, %627 : vector<16x16xf32>
    %c148 = arith.constant 148 : index
    %629 = memref.load %arg1[%c148] : memref<288xf32, #tpu.memory_space<smem>>
    %630 = vector.broadcast %629 : f32 to vector<16x16xf32>
    %631 = arith.mulf %630, %608 : vector<16x16xf32>
    %632 = arith.addf %597, %631 : vector<16x16xf32>
    %c152 = arith.constant 152 : index
    %633 = memref.load %arg1[%c152] : memref<288xf32, #tpu.memory_space<smem>>
    %634 = vector.broadcast %633 : f32 to vector<16x16xf32>
    %635 = arith.mulf %634, %608 : vector<16x16xf32>
    %636 = arith.addf %601, %635 : vector<16x16xf32>
    %c156 = arith.constant 156 : index
    %637 = memref.load %arg1[%c156] : memref<288xf32, #tpu.memory_space<smem>>
    %638 = vector.broadcast %637 : f32 to vector<16x16xf32>
    %639 = arith.mulf %638, %608 : vector<16x16xf32>
    %640 = arith.addf %605, %639 : vector<16x16xf32>
    %641 = vector.extract_strided_slice %606 {offsets = [1, 0, 0], sizes = [1, 16, 16], strides = [1, 1, 1]} : vector<4x16x16xf32> to vector<1x16x16xf32>
    %642 = vector.shape_cast %641 : vector<1x16x16xf32> to vector<16x16xf32>
    %c129 = arith.constant 129 : index
    %643 = memref.load %arg1[%c129] : memref<288xf32, #tpu.memory_space<smem>>
    %644 = vector.broadcast %643 : f32 to vector<16x16xf32>
    %645 = arith.mulf %644, %642 : vector<16x16xf32>
    %646 = arith.addf %612, %645 : vector<16x16xf32>
    %c133 = arith.constant 133 : index
    %647 = memref.load %arg1[%c133] : memref<288xf32, #tpu.memory_space<smem>>
    %648 = vector.broadcast %647 : f32 to vector<16x16xf32>
    %649 = arith.mulf %648, %642 : vector<16x16xf32>
    %650 = arith.addf %616, %649 : vector<16x16xf32>
    %c137 = arith.constant 137 : index
    %651 = memref.load %arg1[%c137] : memref<288xf32, #tpu.memory_space<smem>>
    %652 = vector.broadcast %651 : f32 to vector<16x16xf32>
    %653 = arith.mulf %652, %642 : vector<16x16xf32>
    %654 = arith.addf %620, %653 : vector<16x16xf32>
    %c141 = arith.constant 141 : index
    %655 = memref.load %arg1[%c141] : memref<288xf32, #tpu.memory_space<smem>>
    %656 = vector.broadcast %655 : f32 to vector<16x16xf32>
    %657 = arith.mulf %656, %642 : vector<16x16xf32>
    %658 = arith.addf %624, %657 : vector<16x16xf32>
    %c145 = arith.constant 145 : index
    %659 = memref.load %arg1[%c145] : memref<288xf32, #tpu.memory_space<smem>>
    %660 = vector.broadcast %659 : f32 to vector<16x16xf32>
    %661 = arith.mulf %660, %642 : vector<16x16xf32>
    %662 = arith.addf %628, %661 : vector<16x16xf32>
    %c149 = arith.constant 149 : index
    %663 = memref.load %arg1[%c149] : memref<288xf32, #tpu.memory_space<smem>>
    %664 = vector.broadcast %663 : f32 to vector<16x16xf32>
    %665 = arith.mulf %664, %642 : vector<16x16xf32>
    %666 = arith.addf %632, %665 : vector<16x16xf32>
    %c153 = arith.constant 153 : index
    %667 = memref.load %arg1[%c153] : memref<288xf32, #tpu.memory_space<smem>>
    %668 = vector.broadcast %667 : f32 to vector<16x16xf32>
    %669 = arith.mulf %668, %642 : vector<16x16xf32>
    %670 = arith.addf %636, %669 : vector<16x16xf32>
    %c157 = arith.constant 157 : index
    %671 = memref.load %arg1[%c157] : memref<288xf32, #tpu.memory_space<smem>>
    %672 = vector.broadcast %671 : f32 to vector<16x16xf32>
    %673 = arith.mulf %672, %642 : vector<16x16xf32>
    %674 = arith.addf %640, %673 : vector<16x16xf32>
    %675 = vector.extract_strided_slice %606 {offsets = [2, 0, 0], sizes = [1, 16, 16], strides = [1, 1, 1]} : vector<4x16x16xf32> to vector<1x16x16xf32>
    %676 = vector.shape_cast %675 : vector<1x16x16xf32> to vector<16x16xf32>
    %c130 = arith.constant 130 : index
    %677 = memref.load %arg1[%c130] : memref<288xf32, #tpu.memory_space<smem>>
    %678 = vector.broadcast %677 : f32 to vector<16x16xf32>
    %679 = arith.mulf %678, %676 : vector<16x16xf32>
    %680 = arith.addf %646, %679 : vector<16x16xf32>
    %c134 = arith.constant 134 : index
    %681 = memref.load %arg1[%c134] : memref<288xf32, #tpu.memory_space<smem>>
    %682 = vector.broadcast %681 : f32 to vector<16x16xf32>
    %683 = arith.mulf %682, %676 : vector<16x16xf32>
    %684 = arith.addf %650, %683 : vector<16x16xf32>
    %c138 = arith.constant 138 : index
    %685 = memref.load %arg1[%c138] : memref<288xf32, #tpu.memory_space<smem>>
    %686 = vector.broadcast %685 : f32 to vector<16x16xf32>
    %687 = arith.mulf %686, %676 : vector<16x16xf32>
    %688 = arith.addf %654, %687 : vector<16x16xf32>
    %c142 = arith.constant 142 : index
    %689 = memref.load %arg1[%c142] : memref<288xf32, #tpu.memory_space<smem>>
    %690 = vector.broadcast %689 : f32 to vector<16x16xf32>
    %691 = arith.mulf %690, %676 : vector<16x16xf32>
    %692 = arith.addf %658, %691 : vector<16x16xf32>
    %c146 = arith.constant 146 : index
    %693 = memref.load %arg1[%c146] : memref<288xf32, #tpu.memory_space<smem>>
    %694 = vector.broadcast %693 : f32 to vector<16x16xf32>
    %695 = arith.mulf %694, %676 : vector<16x16xf32>
    %696 = arith.addf %662, %695 : vector<16x16xf32>
    %c150 = arith.constant 150 : index
    %697 = memref.load %arg1[%c150] : memref<288xf32, #tpu.memory_space<smem>>
    %698 = vector.broadcast %697 : f32 to vector<16x16xf32>
    %699 = arith.mulf %698, %676 : vector<16x16xf32>
    %700 = arith.addf %666, %699 : vector<16x16xf32>
    %c154 = arith.constant 154 : index
    %701 = memref.load %arg1[%c154] : memref<288xf32, #tpu.memory_space<smem>>
    %702 = vector.broadcast %701 : f32 to vector<16x16xf32>
    %703 = arith.mulf %702, %676 : vector<16x16xf32>
    %704 = arith.addf %670, %703 : vector<16x16xf32>
    %c158 = arith.constant 158 : index
    %705 = memref.load %arg1[%c158] : memref<288xf32, #tpu.memory_space<smem>>
    %706 = vector.broadcast %705 : f32 to vector<16x16xf32>
    %707 = arith.mulf %706, %676 : vector<16x16xf32>
    %708 = arith.addf %674, %707 : vector<16x16xf32>
    %709 = vector.extract_strided_slice %606 {offsets = [3, 0, 0], sizes = [1, 16, 16], strides = [1, 1, 1]} : vector<4x16x16xf32> to vector<1x16x16xf32>
    %710 = vector.shape_cast %709 : vector<1x16x16xf32> to vector<16x16xf32>
    %c131 = arith.constant 131 : index
    %711 = memref.load %arg1[%c131] : memref<288xf32, #tpu.memory_space<smem>>
    %712 = vector.broadcast %711 : f32 to vector<16x16xf32>
    %713 = arith.mulf %712, %710 : vector<16x16xf32>
    %714 = arith.addf %680, %713 : vector<16x16xf32>
    %c135 = arith.constant 135 : index
    %715 = memref.load %arg1[%c135] : memref<288xf32, #tpu.memory_space<smem>>
    %716 = vector.broadcast %715 : f32 to vector<16x16xf32>
    %717 = arith.mulf %716, %710 : vector<16x16xf32>
    %718 = arith.addf %684, %717 : vector<16x16xf32>
    %c139 = arith.constant 139 : index
    %719 = memref.load %arg1[%c139] : memref<288xf32, #tpu.memory_space<smem>>
    %720 = vector.broadcast %719 : f32 to vector<16x16xf32>
    %721 = arith.mulf %720, %710 : vector<16x16xf32>
    %722 = arith.addf %688, %721 : vector<16x16xf32>
    %c143 = arith.constant 143 : index
    %723 = memref.load %arg1[%c143] : memref<288xf32, #tpu.memory_space<smem>>
    %724 = vector.broadcast %723 : f32 to vector<16x16xf32>
    %725 = arith.mulf %724, %710 : vector<16x16xf32>
    %726 = arith.addf %692, %725 : vector<16x16xf32>
    %c147 = arith.constant 147 : index
    %727 = memref.load %arg1[%c147] : memref<288xf32, #tpu.memory_space<smem>>
    %728 = vector.broadcast %727 : f32 to vector<16x16xf32>
    %729 = arith.mulf %728, %710 : vector<16x16xf32>
    %730 = arith.addf %696, %729 : vector<16x16xf32>
    %c151 = arith.constant 151 : index
    %731 = memref.load %arg1[%c151] : memref<288xf32, #tpu.memory_space<smem>>
    %732 = vector.broadcast %731 : f32 to vector<16x16xf32>
    %733 = arith.mulf %732, %710 : vector<16x16xf32>
    %734 = arith.addf %700, %733 : vector<16x16xf32>
    %c155 = arith.constant 155 : index
    %735 = memref.load %arg1[%c155] : memref<288xf32, #tpu.memory_space<smem>>
    %736 = vector.broadcast %735 : f32 to vector<16x16xf32>
    %737 = arith.mulf %736, %710 : vector<16x16xf32>
    %738 = arith.addf %704, %737 : vector<16x16xf32>
    %c159 = arith.constant 159 : index
    %739 = memref.load %arg1[%c159] : memref<288xf32, #tpu.memory_space<smem>>
    %740 = vector.broadcast %739 : f32 to vector<16x16xf32>
    %741 = arith.mulf %740, %710 : vector<16x16xf32>
    %742 = arith.addf %708, %741 : vector<16x16xf32>
    %743 = vector.extract_strided_slice %468 {offsets = [0, 0, 2], sizes = [4, 16, 16], strides = [1, 1, 1]} : vector<4x16x18xf32> to vector<4x16x16xf32>
    %744 = vector.extract_strided_slice %743 {offsets = [0, 0, 0], sizes = [1, 16, 16], strides = [1, 1, 1]} : vector<4x16x16xf32> to vector<1x16x16xf32>
    %745 = vector.shape_cast %744 : vector<1x16x16xf32> to vector<16x16xf32>
    %c160 = arith.constant 160 : index
    %746 = memref.load %arg1[%c160] : memref<288xf32, #tpu.memory_space<smem>>
    %747 = vector.broadcast %746 : f32 to vector<16x16xf32>
    %748 = arith.mulf %747, %745 : vector<16x16xf32>
    %749 = arith.addf %714, %748 : vector<16x16xf32>
    %c164 = arith.constant 164 : index
    %750 = memref.load %arg1[%c164] : memref<288xf32, #tpu.memory_space<smem>>
    %751 = vector.broadcast %750 : f32 to vector<16x16xf32>
    %752 = arith.mulf %751, %745 : vector<16x16xf32>
    %753 = arith.addf %718, %752 : vector<16x16xf32>
    %c168 = arith.constant 168 : index
    %754 = memref.load %arg1[%c168] : memref<288xf32, #tpu.memory_space<smem>>
    %755 = vector.broadcast %754 : f32 to vector<16x16xf32>
    %756 = arith.mulf %755, %745 : vector<16x16xf32>
    %757 = arith.addf %722, %756 : vector<16x16xf32>
    %c172 = arith.constant 172 : index
    %758 = memref.load %arg1[%c172] : memref<288xf32, #tpu.memory_space<smem>>
    %759 = vector.broadcast %758 : f32 to vector<16x16xf32>
    %760 = arith.mulf %759, %745 : vector<16x16xf32>
    %761 = arith.addf %726, %760 : vector<16x16xf32>
    %c176 = arith.constant 176 : index
    %762 = memref.load %arg1[%c176] : memref<288xf32, #tpu.memory_space<smem>>
    %763 = vector.broadcast %762 : f32 to vector<16x16xf32>
    %764 = arith.mulf %763, %745 : vector<16x16xf32>
    %765 = arith.addf %730, %764 : vector<16x16xf32>
    %c180 = arith.constant 180 : index
    %766 = memref.load %arg1[%c180] : memref<288xf32, #tpu.memory_space<smem>>
    %767 = vector.broadcast %766 : f32 to vector<16x16xf32>
    %768 = arith.mulf %767, %745 : vector<16x16xf32>
    %769 = arith.addf %734, %768 : vector<16x16xf32>
    %c184 = arith.constant 184 : index
    %770 = memref.load %arg1[%c184] : memref<288xf32, #tpu.memory_space<smem>>
    %771 = vector.broadcast %770 : f32 to vector<16x16xf32>
    %772 = arith.mulf %771, %745 : vector<16x16xf32>
    %773 = arith.addf %738, %772 : vector<16x16xf32>
    %c188 = arith.constant 188 : index
    %774 = memref.load %arg1[%c188] : memref<288xf32, #tpu.memory_space<smem>>
    %775 = vector.broadcast %774 : f32 to vector<16x16xf32>
    %776 = arith.mulf %775, %745 : vector<16x16xf32>
    %777 = arith.addf %742, %776 : vector<16x16xf32>
    %778 = vector.extract_strided_slice %743 {offsets = [1, 0, 0], sizes = [1, 16, 16], strides = [1, 1, 1]} : vector<4x16x16xf32> to vector<1x16x16xf32>
    %779 = vector.shape_cast %778 : vector<1x16x16xf32> to vector<16x16xf32>
    %c161 = arith.constant 161 : index
    %780 = memref.load %arg1[%c161] : memref<288xf32, #tpu.memory_space<smem>>
    %781 = vector.broadcast %780 : f32 to vector<16x16xf32>
    %782 = arith.mulf %781, %779 : vector<16x16xf32>
    %783 = arith.addf %749, %782 : vector<16x16xf32>
    %c165 = arith.constant 165 : index
    %784 = memref.load %arg1[%c165] : memref<288xf32, #tpu.memory_space<smem>>
    %785 = vector.broadcast %784 : f32 to vector<16x16xf32>
    %786 = arith.mulf %785, %779 : vector<16x16xf32>
    %787 = arith.addf %753, %786 : vector<16x16xf32>
    %c169 = arith.constant 169 : index
    %788 = memref.load %arg1[%c169] : memref<288xf32, #tpu.memory_space<smem>>
    %789 = vector.broadcast %788 : f32 to vector<16x16xf32>
    %790 = arith.mulf %789, %779 : vector<16x16xf32>
    %791 = arith.addf %757, %790 : vector<16x16xf32>
    %c173 = arith.constant 173 : index
    %792 = memref.load %arg1[%c173] : memref<288xf32, #tpu.memory_space<smem>>
    %793 = vector.broadcast %792 : f32 to vector<16x16xf32>
    %794 = arith.mulf %793, %779 : vector<16x16xf32>
    %795 = arith.addf %761, %794 : vector<16x16xf32>
    %c177 = arith.constant 177 : index
    %796 = memref.load %arg1[%c177] : memref<288xf32, #tpu.memory_space<smem>>
    %797 = vector.broadcast %796 : f32 to vector<16x16xf32>
    %798 = arith.mulf %797, %779 : vector<16x16xf32>
    %799 = arith.addf %765, %798 : vector<16x16xf32>
    %c181 = arith.constant 181 : index
    %800 = memref.load %arg1[%c181] : memref<288xf32, #tpu.memory_space<smem>>
    %801 = vector.broadcast %800 : f32 to vector<16x16xf32>
    %802 = arith.mulf %801, %779 : vector<16x16xf32>
    %803 = arith.addf %769, %802 : vector<16x16xf32>
    %c185 = arith.constant 185 : index
    %804 = memref.load %arg1[%c185] : memref<288xf32, #tpu.memory_space<smem>>
    %805 = vector.broadcast %804 : f32 to vector<16x16xf32>
    %806 = arith.mulf %805, %779 : vector<16x16xf32>
    %807 = arith.addf %773, %806 : vector<16x16xf32>
    %c189 = arith.constant 189 : index
    %808 = memref.load %arg1[%c189] : memref<288xf32, #tpu.memory_space<smem>>
    %809 = vector.broadcast %808 : f32 to vector<16x16xf32>
    %810 = arith.mulf %809, %779 : vector<16x16xf32>
    %811 = arith.addf %777, %810 : vector<16x16xf32>
    %812 = vector.extract_strided_slice %743 {offsets = [2, 0, 0], sizes = [1, 16, 16], strides = [1, 1, 1]} : vector<4x16x16xf32> to vector<1x16x16xf32>
    %813 = vector.shape_cast %812 : vector<1x16x16xf32> to vector<16x16xf32>
    %c162 = arith.constant 162 : index
    %814 = memref.load %arg1[%c162] : memref<288xf32, #tpu.memory_space<smem>>
    %815 = vector.broadcast %814 : f32 to vector<16x16xf32>
    %816 = arith.mulf %815, %813 : vector<16x16xf32>
    %817 = arith.addf %783, %816 : vector<16x16xf32>
    %c166 = arith.constant 166 : index
    %818 = memref.load %arg1[%c166] : memref<288xf32, #tpu.memory_space<smem>>
    %819 = vector.broadcast %818 : f32 to vector<16x16xf32>
    %820 = arith.mulf %819, %813 : vector<16x16xf32>
    %821 = arith.addf %787, %820 : vector<16x16xf32>
    %c170 = arith.constant 170 : index
    %822 = memref.load %arg1[%c170] : memref<288xf32, #tpu.memory_space<smem>>
    %823 = vector.broadcast %822 : f32 to vector<16x16xf32>
    %824 = arith.mulf %823, %813 : vector<16x16xf32>
    %825 = arith.addf %791, %824 : vector<16x16xf32>
    %c174 = arith.constant 174 : index
    %826 = memref.load %arg1[%c174] : memref<288xf32, #tpu.memory_space<smem>>
    %827 = vector.broadcast %826 : f32 to vector<16x16xf32>
    %828 = arith.mulf %827, %813 : vector<16x16xf32>
    %829 = arith.addf %795, %828 : vector<16x16xf32>
    %c178 = arith.constant 178 : index
    %830 = memref.load %arg1[%c178] : memref<288xf32, #tpu.memory_space<smem>>
    %831 = vector.broadcast %830 : f32 to vector<16x16xf32>
    %832 = arith.mulf %831, %813 : vector<16x16xf32>
    %833 = arith.addf %799, %832 : vector<16x16xf32>
    %c182 = arith.constant 182 : index
    %834 = memref.load %arg1[%c182] : memref<288xf32, #tpu.memory_space<smem>>
    %835 = vector.broadcast %834 : f32 to vector<16x16xf32>
    %836 = arith.mulf %835, %813 : vector<16x16xf32>
    %837 = arith.addf %803, %836 : vector<16x16xf32>
    %c186 = arith.constant 186 : index
    %838 = memref.load %arg1[%c186] : memref<288xf32, #tpu.memory_space<smem>>
    %839 = vector.broadcast %838 : f32 to vector<16x16xf32>
    %840 = arith.mulf %839, %813 : vector<16x16xf32>
    %841 = arith.addf %807, %840 : vector<16x16xf32>
    %c190 = arith.constant 190 : index
    %842 = memref.load %arg1[%c190] : memref<288xf32, #tpu.memory_space<smem>>
    %843 = vector.broadcast %842 : f32 to vector<16x16xf32>
    %844 = arith.mulf %843, %813 : vector<16x16xf32>
    %845 = arith.addf %811, %844 : vector<16x16xf32>
    %846 = vector.extract_strided_slice %743 {offsets = [3, 0, 0], sizes = [1, 16, 16], strides = [1, 1, 1]} : vector<4x16x16xf32> to vector<1x16x16xf32>
    %847 = vector.shape_cast %846 : vector<1x16x16xf32> to vector<16x16xf32>
    %c163 = arith.constant 163 : index
    %848 = memref.load %arg1[%c163] : memref<288xf32, #tpu.memory_space<smem>>
    %849 = vector.broadcast %848 : f32 to vector<16x16xf32>
    %850 = arith.mulf %849, %847 : vector<16x16xf32>
    %851 = arith.addf %817, %850 : vector<16x16xf32>
    %c167 = arith.constant 167 : index
    %852 = memref.load %arg1[%c167] : memref<288xf32, #tpu.memory_space<smem>>
    %853 = vector.broadcast %852 : f32 to vector<16x16xf32>
    %854 = arith.mulf %853, %847 : vector<16x16xf32>
    %855 = arith.addf %821, %854 : vector<16x16xf32>
    %c171 = arith.constant 171 : index
    %856 = memref.load %arg1[%c171] : memref<288xf32, #tpu.memory_space<smem>>
    %857 = vector.broadcast %856 : f32 to vector<16x16xf32>
    %858 = arith.mulf %857, %847 : vector<16x16xf32>
    %859 = arith.addf %825, %858 : vector<16x16xf32>
    %c175 = arith.constant 175 : index
    %860 = memref.load %arg1[%c175] : memref<288xf32, #tpu.memory_space<smem>>
    %861 = vector.broadcast %860 : f32 to vector<16x16xf32>
    %862 = arith.mulf %861, %847 : vector<16x16xf32>
    %863 = arith.addf %829, %862 : vector<16x16xf32>
    %c179 = arith.constant 179 : index
    %864 = memref.load %arg1[%c179] : memref<288xf32, #tpu.memory_space<smem>>
    %865 = vector.broadcast %864 : f32 to vector<16x16xf32>
    %866 = arith.mulf %865, %847 : vector<16x16xf32>
    %867 = arith.addf %833, %866 : vector<16x16xf32>
    %c183 = arith.constant 183 : index
    %868 = memref.load %arg1[%c183] : memref<288xf32, #tpu.memory_space<smem>>
    %869 = vector.broadcast %868 : f32 to vector<16x16xf32>
    %870 = arith.mulf %869, %847 : vector<16x16xf32>
    %871 = arith.addf %837, %870 : vector<16x16xf32>
    %c187 = arith.constant 187 : index
    %872 = memref.load %arg1[%c187] : memref<288xf32, #tpu.memory_space<smem>>
    %873 = vector.broadcast %872 : f32 to vector<16x16xf32>
    %874 = arith.mulf %873, %847 : vector<16x16xf32>
    %875 = arith.addf %841, %874 : vector<16x16xf32>
    %c191 = arith.constant 191 : index
    %876 = memref.load %arg1[%c191] : memref<288xf32, #tpu.memory_space<smem>>
    %877 = vector.broadcast %876 : f32 to vector<16x16xf32>
    %878 = arith.mulf %877, %847 : vector<16x16xf32>
    %879 = arith.addf %845, %878 : vector<16x16xf32>
    %c0_52 = arith.constant 0 : index
    %c2_53 = arith.constant 2 : index
    %c0_54 = arith.constant 0 : index
    %880 = vector.load %arg6[%c0_52, %c2_53, %c0_54] : memref<4x18x18xf32, #tpu.memory_space<vmem>>, vector<4x16x18xf32>
    %881 = vector.extract_strided_slice %880 {offsets = [0, 0, 0], sizes = [4, 16, 16], strides = [1, 1, 1]} : vector<4x16x18xf32> to vector<4x16x16xf32>
    %882 = vector.extract_strided_slice %881 {offsets = [0, 0, 0], sizes = [1, 16, 16], strides = [1, 1, 1]} : vector<4x16x16xf32> to vector<1x16x16xf32>
    %883 = vector.shape_cast %882 : vector<1x16x16xf32> to vector<16x16xf32>
    %c192 = arith.constant 192 : index
    %884 = memref.load %arg1[%c192] : memref<288xf32, #tpu.memory_space<smem>>
    %885 = vector.broadcast %884 : f32 to vector<16x16xf32>
    %886 = arith.mulf %885, %883 : vector<16x16xf32>
    %887 = arith.addf %851, %886 : vector<16x16xf32>
    %c196 = arith.constant 196 : index
    %888 = memref.load %arg1[%c196] : memref<288xf32, #tpu.memory_space<smem>>
    %889 = vector.broadcast %888 : f32 to vector<16x16xf32>
    %890 = arith.mulf %889, %883 : vector<16x16xf32>
    %891 = arith.addf %855, %890 : vector<16x16xf32>
    %c200 = arith.constant 200 : index
    %892 = memref.load %arg1[%c200] : memref<288xf32, #tpu.memory_space<smem>>
    %893 = vector.broadcast %892 : f32 to vector<16x16xf32>
    %894 = arith.mulf %893, %883 : vector<16x16xf32>
    %895 = arith.addf %859, %894 : vector<16x16xf32>
    %c204 = arith.constant 204 : index
    %896 = memref.load %arg1[%c204] : memref<288xf32, #tpu.memory_space<smem>>
    %897 = vector.broadcast %896 : f32 to vector<16x16xf32>
    %898 = arith.mulf %897, %883 : vector<16x16xf32>
    %899 = arith.addf %863, %898 : vector<16x16xf32>
    %c208 = arith.constant 208 : index
    %900 = memref.load %arg1[%c208] : memref<288xf32, #tpu.memory_space<smem>>
    %901 = vector.broadcast %900 : f32 to vector<16x16xf32>
    %902 = arith.mulf %901, %883 : vector<16x16xf32>
    %903 = arith.addf %867, %902 : vector<16x16xf32>
    %c212 = arith.constant 212 : index
    %904 = memref.load %arg1[%c212] : memref<288xf32, #tpu.memory_space<smem>>
    %905 = vector.broadcast %904 : f32 to vector<16x16xf32>
    %906 = arith.mulf %905, %883 : vector<16x16xf32>
    %907 = arith.addf %871, %906 : vector<16x16xf32>
    %c216 = arith.constant 216 : index
    %908 = memref.load %arg1[%c216] : memref<288xf32, #tpu.memory_space<smem>>
    %909 = vector.broadcast %908 : f32 to vector<16x16xf32>
    %910 = arith.mulf %909, %883 : vector<16x16xf32>
    %911 = arith.addf %875, %910 : vector<16x16xf32>
    %c220 = arith.constant 220 : index
    %912 = memref.load %arg1[%c220] : memref<288xf32, #tpu.memory_space<smem>>
    %913 = vector.broadcast %912 : f32 to vector<16x16xf32>
    %914 = arith.mulf %913, %883 : vector<16x16xf32>
    %915 = arith.addf %879, %914 : vector<16x16xf32>
    %916 = vector.extract_strided_slice %881 {offsets = [1, 0, 0], sizes = [1, 16, 16], strides = [1, 1, 1]} : vector<4x16x16xf32> to vector<1x16x16xf32>
    %917 = vector.shape_cast %916 : vector<1x16x16xf32> to vector<16x16xf32>
    %c193 = arith.constant 193 : index
    %918 = memref.load %arg1[%c193] : memref<288xf32, #tpu.memory_space<smem>>
    %919 = vector.broadcast %918 : f32 to vector<16x16xf32>
    %920 = arith.mulf %919, %917 : vector<16x16xf32>
    %921 = arith.addf %887, %920 : vector<16x16xf32>
    %c197 = arith.constant 197 : index
    %922 = memref.load %arg1[%c197] : memref<288xf32, #tpu.memory_space<smem>>
    %923 = vector.broadcast %922 : f32 to vector<16x16xf32>
    %924 = arith.mulf %923, %917 : vector<16x16xf32>
    %925 = arith.addf %891, %924 : vector<16x16xf32>
    %c201 = arith.constant 201 : index
    %926 = memref.load %arg1[%c201] : memref<288xf32, #tpu.memory_space<smem>>
    %927 = vector.broadcast %926 : f32 to vector<16x16xf32>
    %928 = arith.mulf %927, %917 : vector<16x16xf32>
    %929 = arith.addf %895, %928 : vector<16x16xf32>
    %c205 = arith.constant 205 : index
    %930 = memref.load %arg1[%c205] : memref<288xf32, #tpu.memory_space<smem>>
    %931 = vector.broadcast %930 : f32 to vector<16x16xf32>
    %932 = arith.mulf %931, %917 : vector<16x16xf32>
    %933 = arith.addf %899, %932 : vector<16x16xf32>
    %c209 = arith.constant 209 : index
    %934 = memref.load %arg1[%c209] : memref<288xf32, #tpu.memory_space<smem>>
    %935 = vector.broadcast %934 : f32 to vector<16x16xf32>
    %936 = arith.mulf %935, %917 : vector<16x16xf32>
    %937 = arith.addf %903, %936 : vector<16x16xf32>
    %c213 = arith.constant 213 : index
    %938 = memref.load %arg1[%c213] : memref<288xf32, #tpu.memory_space<smem>>
    %939 = vector.broadcast %938 : f32 to vector<16x16xf32>
    %940 = arith.mulf %939, %917 : vector<16x16xf32>
    %941 = arith.addf %907, %940 : vector<16x16xf32>
    %c217 = arith.constant 217 : index
    %942 = memref.load %arg1[%c217] : memref<288xf32, #tpu.memory_space<smem>>
    %943 = vector.broadcast %942 : f32 to vector<16x16xf32>
    %944 = arith.mulf %943, %917 : vector<16x16xf32>
    %945 = arith.addf %911, %944 : vector<16x16xf32>
    %c221 = arith.constant 221 : index
    %946 = memref.load %arg1[%c221] : memref<288xf32, #tpu.memory_space<smem>>
    %947 = vector.broadcast %946 : f32 to vector<16x16xf32>
    %948 = arith.mulf %947, %917 : vector<16x16xf32>
    %949 = arith.addf %915, %948 : vector<16x16xf32>
    %950 = vector.extract_strided_slice %881 {offsets = [2, 0, 0], sizes = [1, 16, 16], strides = [1, 1, 1]} : vector<4x16x16xf32> to vector<1x16x16xf32>
    %951 = vector.shape_cast %950 : vector<1x16x16xf32> to vector<16x16xf32>
    %c194 = arith.constant 194 : index
    %952 = memref.load %arg1[%c194] : memref<288xf32, #tpu.memory_space<smem>>
    %953 = vector.broadcast %952 : f32 to vector<16x16xf32>
    %954 = arith.mulf %953, %951 : vector<16x16xf32>
    %955 = arith.addf %921, %954 : vector<16x16xf32>
    %c198 = arith.constant 198 : index
    %956 = memref.load %arg1[%c198] : memref<288xf32, #tpu.memory_space<smem>>
    %957 = vector.broadcast %956 : f32 to vector<16x16xf32>
    %958 = arith.mulf %957, %951 : vector<16x16xf32>
    %959 = arith.addf %925, %958 : vector<16x16xf32>
    %c202 = arith.constant 202 : index
    %960 = memref.load %arg1[%c202] : memref<288xf32, #tpu.memory_space<smem>>
    %961 = vector.broadcast %960 : f32 to vector<16x16xf32>
    %962 = arith.mulf %961, %951 : vector<16x16xf32>
    %963 = arith.addf %929, %962 : vector<16x16xf32>
    %c206 = arith.constant 206 : index
    %964 = memref.load %arg1[%c206] : memref<288xf32, #tpu.memory_space<smem>>
    %965 = vector.broadcast %964 : f32 to vector<16x16xf32>
    %966 = arith.mulf %965, %951 : vector<16x16xf32>
    %967 = arith.addf %933, %966 : vector<16x16xf32>
    %c210 = arith.constant 210 : index
    %968 = memref.load %arg1[%c210] : memref<288xf32, #tpu.memory_space<smem>>
    %969 = vector.broadcast %968 : f32 to vector<16x16xf32>
    %970 = arith.mulf %969, %951 : vector<16x16xf32>
    %971 = arith.addf %937, %970 : vector<16x16xf32>
    %c214 = arith.constant 214 : index
    %972 = memref.load %arg1[%c214] : memref<288xf32, #tpu.memory_space<smem>>
    %973 = vector.broadcast %972 : f32 to vector<16x16xf32>
    %974 = arith.mulf %973, %951 : vector<16x16xf32>
    %975 = arith.addf %941, %974 : vector<16x16xf32>
    %c218 = arith.constant 218 : index
    %976 = memref.load %arg1[%c218] : memref<288xf32, #tpu.memory_space<smem>>
    %977 = vector.broadcast %976 : f32 to vector<16x16xf32>
    %978 = arith.mulf %977, %951 : vector<16x16xf32>
    %979 = arith.addf %945, %978 : vector<16x16xf32>
    %c222 = arith.constant 222 : index
    %980 = memref.load %arg1[%c222] : memref<288xf32, #tpu.memory_space<smem>>
    %981 = vector.broadcast %980 : f32 to vector<16x16xf32>
    %982 = arith.mulf %981, %951 : vector<16x16xf32>
    %983 = arith.addf %949, %982 : vector<16x16xf32>
    %984 = vector.extract_strided_slice %881 {offsets = [3, 0, 0], sizes = [1, 16, 16], strides = [1, 1, 1]} : vector<4x16x16xf32> to vector<1x16x16xf32>
    %985 = vector.shape_cast %984 : vector<1x16x16xf32> to vector<16x16xf32>
    %c195 = arith.constant 195 : index
    %986 = memref.load %arg1[%c195] : memref<288xf32, #tpu.memory_space<smem>>
    %987 = vector.broadcast %986 : f32 to vector<16x16xf32>
    %988 = arith.mulf %987, %985 : vector<16x16xf32>
    %989 = arith.addf %955, %988 : vector<16x16xf32>
    %c199 = arith.constant 199 : index
    %990 = memref.load %arg1[%c199] : memref<288xf32, #tpu.memory_space<smem>>
    %991 = vector.broadcast %990 : f32 to vector<16x16xf32>
    %992 = arith.mulf %991, %985 : vector<16x16xf32>
    %993 = arith.addf %959, %992 : vector<16x16xf32>
    %c203 = arith.constant 203 : index
    %994 = memref.load %arg1[%c203] : memref<288xf32, #tpu.memory_space<smem>>
    %995 = vector.broadcast %994 : f32 to vector<16x16xf32>
    %996 = arith.mulf %995, %985 : vector<16x16xf32>
    %997 = arith.addf %963, %996 : vector<16x16xf32>
    %c207 = arith.constant 207 : index
    %998 = memref.load %arg1[%c207] : memref<288xf32, #tpu.memory_space<smem>>
    %999 = vector.broadcast %998 : f32 to vector<16x16xf32>
    %1000 = arith.mulf %999, %985 : vector<16x16xf32>
    %1001 = arith.addf %967, %1000 : vector<16x16xf32>
    %c211 = arith.constant 211 : index
    %1002 = memref.load %arg1[%c211] : memref<288xf32, #tpu.memory_space<smem>>
    %1003 = vector.broadcast %1002 : f32 to vector<16x16xf32>
    %1004 = arith.mulf %1003, %985 : vector<16x16xf32>
    %1005 = arith.addf %971, %1004 : vector<16x16xf32>
    %c215 = arith.constant 215 : index
    %1006 = memref.load %arg1[%c215] : memref<288xf32, #tpu.memory_space<smem>>
    %1007 = vector.broadcast %1006 : f32 to vector<16x16xf32>
    %1008 = arith.mulf %1007, %985 : vector<16x16xf32>
    %1009 = arith.addf %975, %1008 : vector<16x16xf32>
    %c219 = arith.constant 219 : index
    %1010 = memref.load %arg1[%c219] : memref<288xf32, #tpu.memory_space<smem>>
    %1011 = vector.broadcast %1010 : f32 to vector<16x16xf32>
    %1012 = arith.mulf %1011, %985 : vector<16x16xf32>
    %1013 = arith.addf %979, %1012 : vector<16x16xf32>
    %c223 = arith.constant 223 : index
    %1014 = memref.load %arg1[%c223] : memref<288xf32, #tpu.memory_space<smem>>
    %1015 = vector.broadcast %1014 : f32 to vector<16x16xf32>
    %1016 = arith.mulf %1015, %985 : vector<16x16xf32>
    %1017 = arith.addf %983, %1016 : vector<16x16xf32>
    %1018 = vector.extract_strided_slice %880 {offsets = [0, 0, 1], sizes = [4, 16, 16], strides = [1, 1, 1]} : vector<4x16x18xf32> to vector<4x16x16xf32>
    %1019 = vector.extract_strided_slice %1018 {offsets = [0, 0, 0], sizes = [1, 16, 16], strides = [1, 1, 1]} : vector<4x16x16xf32> to vector<1x16x16xf32>
    %1020 = vector.shape_cast %1019 : vector<1x16x16xf32> to vector<16x16xf32>
    %c224 = arith.constant 224 : index
    %1021 = memref.load %arg1[%c224] : memref<288xf32, #tpu.memory_space<smem>>
    %1022 = vector.broadcast %1021 : f32 to vector<16x16xf32>
    %1023 = arith.mulf %1022, %1020 : vector<16x16xf32>
    %1024 = arith.addf %989, %1023 : vector<16x16xf32>
    %c228 = arith.constant 228 : index
    %1025 = memref.load %arg1[%c228] : memref<288xf32, #tpu.memory_space<smem>>
    %1026 = vector.broadcast %1025 : f32 to vector<16x16xf32>
    %1027 = arith.mulf %1026, %1020 : vector<16x16xf32>
    %1028 = arith.addf %993, %1027 : vector<16x16xf32>
    %c232 = arith.constant 232 : index
    %1029 = memref.load %arg1[%c232] : memref<288xf32, #tpu.memory_space<smem>>
    %1030 = vector.broadcast %1029 : f32 to vector<16x16xf32>
    %1031 = arith.mulf %1030, %1020 : vector<16x16xf32>
    %1032 = arith.addf %997, %1031 : vector<16x16xf32>
    %c236 = arith.constant 236 : index
    %1033 = memref.load %arg1[%c236] : memref<288xf32, #tpu.memory_space<smem>>
    %1034 = vector.broadcast %1033 : f32 to vector<16x16xf32>
    %1035 = arith.mulf %1034, %1020 : vector<16x16xf32>
    %1036 = arith.addf %1001, %1035 : vector<16x16xf32>
    %c240 = arith.constant 240 : index
    %1037 = memref.load %arg1[%c240] : memref<288xf32, #tpu.memory_space<smem>>
    %1038 = vector.broadcast %1037 : f32 to vector<16x16xf32>
    %1039 = arith.mulf %1038, %1020 : vector<16x16xf32>
    %1040 = arith.addf %1005, %1039 : vector<16x16xf32>
    %c244 = arith.constant 244 : index
    %1041 = memref.load %arg1[%c244] : memref<288xf32, #tpu.memory_space<smem>>
    %1042 = vector.broadcast %1041 : f32 to vector<16x16xf32>
    %1043 = arith.mulf %1042, %1020 : vector<16x16xf32>
    %1044 = arith.addf %1009, %1043 : vector<16x16xf32>
    %c248 = arith.constant 248 : index
    %1045 = memref.load %arg1[%c248] : memref<288xf32, #tpu.memory_space<smem>>
    %1046 = vector.broadcast %1045 : f32 to vector<16x16xf32>
    %1047 = arith.mulf %1046, %1020 : vector<16x16xf32>
    %1048 = arith.addf %1013, %1047 : vector<16x16xf32>
    %c252 = arith.constant 252 : index
    %1049 = memref.load %arg1[%c252] : memref<288xf32, #tpu.memory_space<smem>>
    %1050 = vector.broadcast %1049 : f32 to vector<16x16xf32>
    %1051 = arith.mulf %1050, %1020 : vector<16x16xf32>
    %1052 = arith.addf %1017, %1051 : vector<16x16xf32>
    %1053 = vector.extract_strided_slice %1018 {offsets = [1, 0, 0], sizes = [1, 16, 16], strides = [1, 1, 1]} : vector<4x16x16xf32> to vector<1x16x16xf32>
    %1054 = vector.shape_cast %1053 : vector<1x16x16xf32> to vector<16x16xf32>
    %c225 = arith.constant 225 : index
    %1055 = memref.load %arg1[%c225] : memref<288xf32, #tpu.memory_space<smem>>
    %1056 = vector.broadcast %1055 : f32 to vector<16x16xf32>
    %1057 = arith.mulf %1056, %1054 : vector<16x16xf32>
    %1058 = arith.addf %1024, %1057 : vector<16x16xf32>
    %c229 = arith.constant 229 : index
    %1059 = memref.load %arg1[%c229] : memref<288xf32, #tpu.memory_space<smem>>
    %1060 = vector.broadcast %1059 : f32 to vector<16x16xf32>
    %1061 = arith.mulf %1060, %1054 : vector<16x16xf32>
    %1062 = arith.addf %1028, %1061 : vector<16x16xf32>
    %c233 = arith.constant 233 : index
    %1063 = memref.load %arg1[%c233] : memref<288xf32, #tpu.memory_space<smem>>
    %1064 = vector.broadcast %1063 : f32 to vector<16x16xf32>
    %1065 = arith.mulf %1064, %1054 : vector<16x16xf32>
    %1066 = arith.addf %1032, %1065 : vector<16x16xf32>
    %c237 = arith.constant 237 : index
    %1067 = memref.load %arg1[%c237] : memref<288xf32, #tpu.memory_space<smem>>
    %1068 = vector.broadcast %1067 : f32 to vector<16x16xf32>
    %1069 = arith.mulf %1068, %1054 : vector<16x16xf32>
    %1070 = arith.addf %1036, %1069 : vector<16x16xf32>
    %c241 = arith.constant 241 : index
    %1071 = memref.load %arg1[%c241] : memref<288xf32, #tpu.memory_space<smem>>
    %1072 = vector.broadcast %1071 : f32 to vector<16x16xf32>
    %1073 = arith.mulf %1072, %1054 : vector<16x16xf32>
    %1074 = arith.addf %1040, %1073 : vector<16x16xf32>
    %c245 = arith.constant 245 : index
    %1075 = memref.load %arg1[%c245] : memref<288xf32, #tpu.memory_space<smem>>
    %1076 = vector.broadcast %1075 : f32 to vector<16x16xf32>
    %1077 = arith.mulf %1076, %1054 : vector<16x16xf32>
    %1078 = arith.addf %1044, %1077 : vector<16x16xf32>
    %c249 = arith.constant 249 : index
    %1079 = memref.load %arg1[%c249] : memref<288xf32, #tpu.memory_space<smem>>
    %1080 = vector.broadcast %1079 : f32 to vector<16x16xf32>
    %1081 = arith.mulf %1080, %1054 : vector<16x16xf32>
    %1082 = arith.addf %1048, %1081 : vector<16x16xf32>
    %c253 = arith.constant 253 : index
    %1083 = memref.load %arg1[%c253] : memref<288xf32, #tpu.memory_space<smem>>
    %1084 = vector.broadcast %1083 : f32 to vector<16x16xf32>
    %1085 = arith.mulf %1084, %1054 : vector<16x16xf32>
    %1086 = arith.addf %1052, %1085 : vector<16x16xf32>
    %1087 = vector.extract_strided_slice %1018 {offsets = [2, 0, 0], sizes = [1, 16, 16], strides = [1, 1, 1]} : vector<4x16x16xf32> to vector<1x16x16xf32>
    %1088 = vector.shape_cast %1087 : vector<1x16x16xf32> to vector<16x16xf32>
    %c226 = arith.constant 226 : index
    %1089 = memref.load %arg1[%c226] : memref<288xf32, #tpu.memory_space<smem>>
    %1090 = vector.broadcast %1089 : f32 to vector<16x16xf32>
    %1091 = arith.mulf %1090, %1088 : vector<16x16xf32>
    %1092 = arith.addf %1058, %1091 : vector<16x16xf32>
    %c230 = arith.constant 230 : index
    %1093 = memref.load %arg1[%c230] : memref<288xf32, #tpu.memory_space<smem>>
    %1094 = vector.broadcast %1093 : f32 to vector<16x16xf32>
    %1095 = arith.mulf %1094, %1088 : vector<16x16xf32>
    %1096 = arith.addf %1062, %1095 : vector<16x16xf32>
    %c234 = arith.constant 234 : index
    %1097 = memref.load %arg1[%c234] : memref<288xf32, #tpu.memory_space<smem>>
    %1098 = vector.broadcast %1097 : f32 to vector<16x16xf32>
    %1099 = arith.mulf %1098, %1088 : vector<16x16xf32>
    %1100 = arith.addf %1066, %1099 : vector<16x16xf32>
    %c238 = arith.constant 238 : index
    %1101 = memref.load %arg1[%c238] : memref<288xf32, #tpu.memory_space<smem>>
    %1102 = vector.broadcast %1101 : f32 to vector<16x16xf32>
    %1103 = arith.mulf %1102, %1088 : vector<16x16xf32>
    %1104 = arith.addf %1070, %1103 : vector<16x16xf32>
    %c242 = arith.constant 242 : index
    %1105 = memref.load %arg1[%c242] : memref<288xf32, #tpu.memory_space<smem>>
    %1106 = vector.broadcast %1105 : f32 to vector<16x16xf32>
    %1107 = arith.mulf %1106, %1088 : vector<16x16xf32>
    %1108 = arith.addf %1074, %1107 : vector<16x16xf32>
    %c246 = arith.constant 246 : index
    %1109 = memref.load %arg1[%c246] : memref<288xf32, #tpu.memory_space<smem>>
    %1110 = vector.broadcast %1109 : f32 to vector<16x16xf32>
    %1111 = arith.mulf %1110, %1088 : vector<16x16xf32>
    %1112 = arith.addf %1078, %1111 : vector<16x16xf32>
    %c250 = arith.constant 250 : index
    %1113 = memref.load %arg1[%c250] : memref<288xf32, #tpu.memory_space<smem>>
    %1114 = vector.broadcast %1113 : f32 to vector<16x16xf32>
    %1115 = arith.mulf %1114, %1088 : vector<16x16xf32>
    %1116 = arith.addf %1082, %1115 : vector<16x16xf32>
    %c254 = arith.constant 254 : index
    %1117 = memref.load %arg1[%c254] : memref<288xf32, #tpu.memory_space<smem>>
    %1118 = vector.broadcast %1117 : f32 to vector<16x16xf32>
    %1119 = arith.mulf %1118, %1088 : vector<16x16xf32>
    %1120 = arith.addf %1086, %1119 : vector<16x16xf32>
    %1121 = vector.extract_strided_slice %1018 {offsets = [3, 0, 0], sizes = [1, 16, 16], strides = [1, 1, 1]} : vector<4x16x16xf32> to vector<1x16x16xf32>
    %1122 = vector.shape_cast %1121 : vector<1x16x16xf32> to vector<16x16xf32>
    %c227 = arith.constant 227 : index
    %1123 = memref.load %arg1[%c227] : memref<288xf32, #tpu.memory_space<smem>>
    %1124 = vector.broadcast %1123 : f32 to vector<16x16xf32>
    %1125 = arith.mulf %1124, %1122 : vector<16x16xf32>
    %1126 = arith.addf %1092, %1125 : vector<16x16xf32>
    %c231 = arith.constant 231 : index
    %1127 = memref.load %arg1[%c231] : memref<288xf32, #tpu.memory_space<smem>>
    %1128 = vector.broadcast %1127 : f32 to vector<16x16xf32>
    %1129 = arith.mulf %1128, %1122 : vector<16x16xf32>
    %1130 = arith.addf %1096, %1129 : vector<16x16xf32>
    %c235 = arith.constant 235 : index
    %1131 = memref.load %arg1[%c235] : memref<288xf32, #tpu.memory_space<smem>>
    %1132 = vector.broadcast %1131 : f32 to vector<16x16xf32>
    %1133 = arith.mulf %1132, %1122 : vector<16x16xf32>
    %1134 = arith.addf %1100, %1133 : vector<16x16xf32>
    %c239 = arith.constant 239 : index
    %1135 = memref.load %arg1[%c239] : memref<288xf32, #tpu.memory_space<smem>>
    %1136 = vector.broadcast %1135 : f32 to vector<16x16xf32>
    %1137 = arith.mulf %1136, %1122 : vector<16x16xf32>
    %1138 = arith.addf %1104, %1137 : vector<16x16xf32>
    %c243 = arith.constant 243 : index
    %1139 = memref.load %arg1[%c243] : memref<288xf32, #tpu.memory_space<smem>>
    %1140 = vector.broadcast %1139 : f32 to vector<16x16xf32>
    %1141 = arith.mulf %1140, %1122 : vector<16x16xf32>
    %1142 = arith.addf %1108, %1141 : vector<16x16xf32>
    %c247 = arith.constant 247 : index
    %1143 = memref.load %arg1[%c247] : memref<288xf32, #tpu.memory_space<smem>>
    %1144 = vector.broadcast %1143 : f32 to vector<16x16xf32>
    %1145 = arith.mulf %1144, %1122 : vector<16x16xf32>
    %1146 = arith.addf %1112, %1145 : vector<16x16xf32>
    %c251 = arith.constant 251 : index
    %1147 = memref.load %arg1[%c251] : memref<288xf32, #tpu.memory_space<smem>>
    %1148 = vector.broadcast %1147 : f32 to vector<16x16xf32>
    %1149 = arith.mulf %1148, %1122 : vector<16x16xf32>
    %1150 = arith.addf %1116, %1149 : vector<16x16xf32>
    %c255 = arith.constant 255 : index
    %1151 = memref.load %arg1[%c255] : memref<288xf32, #tpu.memory_space<smem>>
    %1152 = vector.broadcast %1151 : f32 to vector<16x16xf32>
    %1153 = arith.mulf %1152, %1122 : vector<16x16xf32>
    %1154 = arith.addf %1120, %1153 : vector<16x16xf32>
    %1155 = vector.extract_strided_slice %880 {offsets = [0, 0, 2], sizes = [4, 16, 16], strides = [1, 1, 1]} : vector<4x16x18xf32> to vector<4x16x16xf32>
    %1156 = vector.extract_strided_slice %1155 {offsets = [0, 0, 0], sizes = [1, 16, 16], strides = [1, 1, 1]} : vector<4x16x16xf32> to vector<1x16x16xf32>
    %1157 = vector.shape_cast %1156 : vector<1x16x16xf32> to vector<16x16xf32>
    %c256 = arith.constant 256 : index
    %1158 = memref.load %arg1[%c256] : memref<288xf32, #tpu.memory_space<smem>>
    %1159 = vector.broadcast %1158 : f32 to vector<16x16xf32>
    %1160 = arith.mulf %1159, %1157 : vector<16x16xf32>
    %1161 = arith.addf %1126, %1160 : vector<16x16xf32>
    %c260 = arith.constant 260 : index
    %1162 = memref.load %arg1[%c260] : memref<288xf32, #tpu.memory_space<smem>>
    %1163 = vector.broadcast %1162 : f32 to vector<16x16xf32>
    %1164 = arith.mulf %1163, %1157 : vector<16x16xf32>
    %1165 = arith.addf %1130, %1164 : vector<16x16xf32>
    %c264 = arith.constant 264 : index
    %1166 = memref.load %arg1[%c264] : memref<288xf32, #tpu.memory_space<smem>>
    %1167 = vector.broadcast %1166 : f32 to vector<16x16xf32>
    %1168 = arith.mulf %1167, %1157 : vector<16x16xf32>
    %1169 = arith.addf %1134, %1168 : vector<16x16xf32>
    %c268 = arith.constant 268 : index
    %1170 = memref.load %arg1[%c268] : memref<288xf32, #tpu.memory_space<smem>>
    %1171 = vector.broadcast %1170 : f32 to vector<16x16xf32>
    %1172 = arith.mulf %1171, %1157 : vector<16x16xf32>
    %1173 = arith.addf %1138, %1172 : vector<16x16xf32>
    %c272 = arith.constant 272 : index
    %1174 = memref.load %arg1[%c272] : memref<288xf32, #tpu.memory_space<smem>>
    %1175 = vector.broadcast %1174 : f32 to vector<16x16xf32>
    %1176 = arith.mulf %1175, %1157 : vector<16x16xf32>
    %1177 = arith.addf %1142, %1176 : vector<16x16xf32>
    %c276 = arith.constant 276 : index
    %1178 = memref.load %arg1[%c276] : memref<288xf32, #tpu.memory_space<smem>>
    %1179 = vector.broadcast %1178 : f32 to vector<16x16xf32>
    %1180 = arith.mulf %1179, %1157 : vector<16x16xf32>
    %1181 = arith.addf %1146, %1180 : vector<16x16xf32>
    %c280 = arith.constant 280 : index
    %1182 = memref.load %arg1[%c280] : memref<288xf32, #tpu.memory_space<smem>>
    %1183 = vector.broadcast %1182 : f32 to vector<16x16xf32>
    %1184 = arith.mulf %1183, %1157 : vector<16x16xf32>
    %1185 = arith.addf %1150, %1184 : vector<16x16xf32>
    %c284 = arith.constant 284 : index
    %1186 = memref.load %arg1[%c284] : memref<288xf32, #tpu.memory_space<smem>>
    %1187 = vector.broadcast %1186 : f32 to vector<16x16xf32>
    %1188 = arith.mulf %1187, %1157 : vector<16x16xf32>
    %1189 = arith.addf %1154, %1188 : vector<16x16xf32>
    %1190 = vector.extract_strided_slice %1155 {offsets = [1, 0, 0], sizes = [1, 16, 16], strides = [1, 1, 1]} : vector<4x16x16xf32> to vector<1x16x16xf32>
    %1191 = vector.shape_cast %1190 : vector<1x16x16xf32> to vector<16x16xf32>
    %c257 = arith.constant 257 : index
    %1192 = memref.load %arg1[%c257] : memref<288xf32, #tpu.memory_space<smem>>
    %1193 = vector.broadcast %1192 : f32 to vector<16x16xf32>
    %1194 = arith.mulf %1193, %1191 : vector<16x16xf32>
    %1195 = arith.addf %1161, %1194 : vector<16x16xf32>
    %c261 = arith.constant 261 : index
    %1196 = memref.load %arg1[%c261] : memref<288xf32, #tpu.memory_space<smem>>
    %1197 = vector.broadcast %1196 : f32 to vector<16x16xf32>
    %1198 = arith.mulf %1197, %1191 : vector<16x16xf32>
    %1199 = arith.addf %1165, %1198 : vector<16x16xf32>
    %c265 = arith.constant 265 : index
    %1200 = memref.load %arg1[%c265] : memref<288xf32, #tpu.memory_space<smem>>
    %1201 = vector.broadcast %1200 : f32 to vector<16x16xf32>
    %1202 = arith.mulf %1201, %1191 : vector<16x16xf32>
    %1203 = arith.addf %1169, %1202 : vector<16x16xf32>
    %c269 = arith.constant 269 : index
    %1204 = memref.load %arg1[%c269] : memref<288xf32, #tpu.memory_space<smem>>
    %1205 = vector.broadcast %1204 : f32 to vector<16x16xf32>
    %1206 = arith.mulf %1205, %1191 : vector<16x16xf32>
    %1207 = arith.addf %1173, %1206 : vector<16x16xf32>
    %c273 = arith.constant 273 : index
    %1208 = memref.load %arg1[%c273] : memref<288xf32, #tpu.memory_space<smem>>
    %1209 = vector.broadcast %1208 : f32 to vector<16x16xf32>
    %1210 = arith.mulf %1209, %1191 : vector<16x16xf32>
    %1211 = arith.addf %1177, %1210 : vector<16x16xf32>
    %c277 = arith.constant 277 : index
    %1212 = memref.load %arg1[%c277] : memref<288xf32, #tpu.memory_space<smem>>
    %1213 = vector.broadcast %1212 : f32 to vector<16x16xf32>
    %1214 = arith.mulf %1213, %1191 : vector<16x16xf32>
    %1215 = arith.addf %1181, %1214 : vector<16x16xf32>
    %c281 = arith.constant 281 : index
    %1216 = memref.load %arg1[%c281] : memref<288xf32, #tpu.memory_space<smem>>
    %1217 = vector.broadcast %1216 : f32 to vector<16x16xf32>
    %1218 = arith.mulf %1217, %1191 : vector<16x16xf32>
    %1219 = arith.addf %1185, %1218 : vector<16x16xf32>
    %c285 = arith.constant 285 : index
    %1220 = memref.load %arg1[%c285] : memref<288xf32, #tpu.memory_space<smem>>
    %1221 = vector.broadcast %1220 : f32 to vector<16x16xf32>
    %1222 = arith.mulf %1221, %1191 : vector<16x16xf32>
    %1223 = arith.addf %1189, %1222 : vector<16x16xf32>
    %1224 = vector.extract_strided_slice %1155 {offsets = [2, 0, 0], sizes = [1, 16, 16], strides = [1, 1, 1]} : vector<4x16x16xf32> to vector<1x16x16xf32>
    %1225 = vector.shape_cast %1224 : vector<1x16x16xf32> to vector<16x16xf32>
    %c258 = arith.constant 258 : index
    %1226 = memref.load %arg1[%c258] : memref<288xf32, #tpu.memory_space<smem>>
    %1227 = vector.broadcast %1226 : f32 to vector<16x16xf32>
    %1228 = arith.mulf %1227, %1225 : vector<16x16xf32>
    %1229 = arith.addf %1195, %1228 : vector<16x16xf32>
    %c262 = arith.constant 262 : index
    %1230 = memref.load %arg1[%c262] : memref<288xf32, #tpu.memory_space<smem>>
    %1231 = vector.broadcast %1230 : f32 to vector<16x16xf32>
    %1232 = arith.mulf %1231, %1225 : vector<16x16xf32>
    %1233 = arith.addf %1199, %1232 : vector<16x16xf32>
    %c266 = arith.constant 266 : index
    %1234 = memref.load %arg1[%c266] : memref<288xf32, #tpu.memory_space<smem>>
    %1235 = vector.broadcast %1234 : f32 to vector<16x16xf32>
    %1236 = arith.mulf %1235, %1225 : vector<16x16xf32>
    %1237 = arith.addf %1203, %1236 : vector<16x16xf32>
    %c270 = arith.constant 270 : index
    %1238 = memref.load %arg1[%c270] : memref<288xf32, #tpu.memory_space<smem>>
    %1239 = vector.broadcast %1238 : f32 to vector<16x16xf32>
    %1240 = arith.mulf %1239, %1225 : vector<16x16xf32>
    %1241 = arith.addf %1207, %1240 : vector<16x16xf32>
    %c274 = arith.constant 274 : index
    %1242 = memref.load %arg1[%c274] : memref<288xf32, #tpu.memory_space<smem>>
    %1243 = vector.broadcast %1242 : f32 to vector<16x16xf32>
    %1244 = arith.mulf %1243, %1225 : vector<16x16xf32>
    %1245 = arith.addf %1211, %1244 : vector<16x16xf32>
    %c278 = arith.constant 278 : index
    %1246 = memref.load %arg1[%c278] : memref<288xf32, #tpu.memory_space<smem>>
    %1247 = vector.broadcast %1246 : f32 to vector<16x16xf32>
    %1248 = arith.mulf %1247, %1225 : vector<16x16xf32>
    %1249 = arith.addf %1215, %1248 : vector<16x16xf32>
    %c282 = arith.constant 282 : index
    %1250 = memref.load %arg1[%c282] : memref<288xf32, #tpu.memory_space<smem>>
    %1251 = vector.broadcast %1250 : f32 to vector<16x16xf32>
    %1252 = arith.mulf %1251, %1225 : vector<16x16xf32>
    %1253 = arith.addf %1219, %1252 : vector<16x16xf32>
    %c286 = arith.constant 286 : index
    %1254 = memref.load %arg1[%c286] : memref<288xf32, #tpu.memory_space<smem>>
    %1255 = vector.broadcast %1254 : f32 to vector<16x16xf32>
    %1256 = arith.mulf %1255, %1225 : vector<16x16xf32>
    %1257 = arith.addf %1223, %1256 : vector<16x16xf32>
    %1258 = vector.extract_strided_slice %1155 {offsets = [3, 0, 0], sizes = [1, 16, 16], strides = [1, 1, 1]} : vector<4x16x16xf32> to vector<1x16x16xf32>
    %1259 = vector.shape_cast %1258 : vector<1x16x16xf32> to vector<16x16xf32>
    %c259 = arith.constant 259 : index
    %1260 = memref.load %arg1[%c259] : memref<288xf32, #tpu.memory_space<smem>>
    %1261 = vector.broadcast %1260 : f32 to vector<16x16xf32>
    %1262 = arith.mulf %1261, %1259 : vector<16x16xf32>
    %1263 = arith.addf %1229, %1262 : vector<16x16xf32>
    %c263 = arith.constant 263 : index
    %1264 = memref.load %arg1[%c263] : memref<288xf32, #tpu.memory_space<smem>>
    %1265 = vector.broadcast %1264 : f32 to vector<16x16xf32>
    %1266 = arith.mulf %1265, %1259 : vector<16x16xf32>
    %1267 = arith.addf %1233, %1266 : vector<16x16xf32>
    %c267 = arith.constant 267 : index
    %1268 = memref.load %arg1[%c267] : memref<288xf32, #tpu.memory_space<smem>>
    %1269 = vector.broadcast %1268 : f32 to vector<16x16xf32>
    %1270 = arith.mulf %1269, %1259 : vector<16x16xf32>
    %1271 = arith.addf %1237, %1270 : vector<16x16xf32>
    %c271 = arith.constant 271 : index
    %1272 = memref.load %arg1[%c271] : memref<288xf32, #tpu.memory_space<smem>>
    %1273 = vector.broadcast %1272 : f32 to vector<16x16xf32>
    %1274 = arith.mulf %1273, %1259 : vector<16x16xf32>
    %1275 = arith.addf %1241, %1274 : vector<16x16xf32>
    %c275 = arith.constant 275 : index
    %1276 = memref.load %arg1[%c275] : memref<288xf32, #tpu.memory_space<smem>>
    %1277 = vector.broadcast %1276 : f32 to vector<16x16xf32>
    %1278 = arith.mulf %1277, %1259 : vector<16x16xf32>
    %1279 = arith.addf %1245, %1278 : vector<16x16xf32>
    %c279 = arith.constant 279 : index
    %1280 = memref.load %arg1[%c279] : memref<288xf32, #tpu.memory_space<smem>>
    %1281 = vector.broadcast %1280 : f32 to vector<16x16xf32>
    %1282 = arith.mulf %1281, %1259 : vector<16x16xf32>
    %1283 = arith.addf %1249, %1282 : vector<16x16xf32>
    %c283 = arith.constant 283 : index
    %1284 = memref.load %arg1[%c283] : memref<288xf32, #tpu.memory_space<smem>>
    %1285 = vector.broadcast %1284 : f32 to vector<16x16xf32>
    %1286 = arith.mulf %1285, %1259 : vector<16x16xf32>
    %1287 = arith.addf %1253, %1286 : vector<16x16xf32>
    %c287 = arith.constant 287 : index
    %1288 = memref.load %arg1[%c287] : memref<288xf32, #tpu.memory_space<smem>>
    %1289 = vector.broadcast %1288 : f32 to vector<16x16xf32>
    %1290 = arith.mulf %1289, %1259 : vector<16x16xf32>
    %1291 = arith.addf %1257, %1290 : vector<16x16xf32>
    %cst_55 = arith.constant 0.000000e+00 : f32
    %1292 = vector.broadcast %cst_55 : f32 to vector<16x16xf32>
    %1293 = arith.maximumf %1263, %1292 : vector<16x16xf32>
    %cst_56 = arith.constant 0.000000e+00 : f32
    %1294 = vector.broadcast %cst_56 : f32 to vector<16x16xf32>
    %1295 = arith.select %41, %1294, %1293 : vector<16x16xi1>, vector<16x16xf32>
    %c0_57 = arith.constant 0 : index
    %c0_58 = arith.constant 0 : index
    %c0_59 = arith.constant 0 : index
    %c0_60 = arith.constant 0 : index
    %1296 = vector.load %arg4[%c0_57, %c0_58, %c0_59, %c0_60] : memref<2x8x16x16xf32, #tpu.memory_space<vmem>>, vector<1x1x16x16xf32>
    %1297 = vector.shape_cast %1296 : vector<1x1x16x16xf32> to vector<16x16xf32>
    %1298 = vector.shape_cast %1295 : vector<16x16xf32> to vector<1x1x16x16xf32>
    tpu.vector_store %arg4[%c0_57, %c0_58, %c0_59, %c0_60], %1298 {strides = array<i32>} : memref<2x8x16x16xf32, #tpu.memory_space<vmem>>, vector<1x1x16x16xf32>,
    %cst_61 = arith.constant 0.000000e+00 : f32
    %1299 = vector.broadcast %cst_61 : f32 to vector<16x16xf32>
    %1300 = arith.maximumf %1267, %1299 : vector<16x16xf32>
    %cst_62 = arith.constant 0.000000e+00 : f32
    %1301 = vector.broadcast %cst_62 : f32 to vector<16x16xf32>
    %1302 = arith.select %41, %1301, %1300 : vector<16x16xi1>, vector<16x16xf32>
    %c0_63 = arith.constant 0 : index
    %c1_64 = arith.constant 1 : index
    %c0_65 = arith.constant 0 : index
    %c0_66 = arith.constant 0 : index
    %1303 = vector.load %arg4[%c0_63, %c1_64, %c0_65, %c0_66] : memref<2x8x16x16xf32, #tpu.memory_space<vmem>>, vector<1x1x16x16xf32>
    %1304 = vector.shape_cast %1303 : vector<1x1x16x16xf32> to vector<16x16xf32>
    %1305 = vector.shape_cast %1302 : vector<16x16xf32> to vector<1x1x16x16xf32>
    tpu.vector_store %arg4[%c0_63, %c1_64, %c0_65, %c0_66], %1305 {strides = array<i32>} : memref<2x8x16x16xf32, #tpu.memory_space<vmem>>, vector<1x1x16x16xf32>,
    %cst_67 = arith.constant 0.000000e+00 : f32
    %1306 = vector.broadcast %cst_67 : f32 to vector<16x16xf32>
    %1307 = arith.maximumf %1271, %1306 : vector<16x16xf32>
    %cst_68 = arith.constant 0.000000e+00 : f32
    %1308 = vector.broadcast %cst_68 : f32 to vector<16x16xf32>
    %1309 = arith.select %41, %1308, %1307 : vector<16x16xi1>, vector<16x16xf32>
    %c0_69 = arith.constant 0 : index
    %c2_70 = arith.constant 2 : index
    %c0_71 = arith.constant 0 : index
    %c0_72 = arith.constant 0 : index
    %1310 = vector.load %arg4[%c0_69, %c2_70, %c0_71, %c0_72] : memref<2x8x16x16xf32, #tpu.memory_space<vmem>>, vector<1x1x16x16xf32>
    %1311 = vector.shape_cast %1310 : vector<1x1x16x16xf32> to vector<16x16xf32>
    %1312 = vector.shape_cast %1309 : vector<16x16xf32> to vector<1x1x16x16xf32>
    tpu.vector_store %arg4[%c0_69, %c2_70, %c0_71, %c0_72], %1312 {strides = array<i32>} : memref<2x8x16x16xf32, #tpu.memory_space<vmem>>, vector<1x1x16x16xf32>,
    %cst_73 = arith.constant 0.000000e+00 : f32
    %1313 = vector.broadcast %cst_73 : f32 to vector<16x16xf32>
    %1314 = arith.maximumf %1275, %1313 : vector<16x16xf32>
    %cst_74 = arith.constant 0.000000e+00 : f32
    %1315 = vector.broadcast %cst_74 : f32 to vector<16x16xf32>
    %1316 = arith.select %41, %1315, %1314 : vector<16x16xi1>, vector<16x16xf32>
    %c0_75 = arith.constant 0 : index
    %c3_76 = arith.constant 3 : index
    %c0_77 = arith.constant 0 : index
    %c0_78 = arith.constant 0 : index
    %1317 = vector.load %arg4[%c0_75, %c3_76, %c0_77, %c0_78] : memref<2x8x16x16xf32, #tpu.memory_space<vmem>>, vector<1x1x16x16xf32>
    %1318 = vector.shape_cast %1317 : vector<1x1x16x16xf32> to vector<16x16xf32>
    %1319 = vector.shape_cast %1316 : vector<16x16xf32> to vector<1x1x16x16xf32>
    tpu.vector_store %arg4[%c0_75, %c3_76, %c0_77, %c0_78], %1319 {strides = array<i32>} : memref<2x8x16x16xf32, #tpu.memory_space<vmem>>, vector<1x1x16x16xf32>,
    %cst_79 = arith.constant 0.000000e+00 : f32
    %1320 = vector.broadcast %cst_79 : f32 to vector<16x16xf32>
    %1321 = arith.maximumf %1279, %1320 : vector<16x16xf32>
    %cst_80 = arith.constant 0.000000e+00 : f32
    %1322 = vector.broadcast %cst_80 : f32 to vector<16x16xf32>
    %1323 = arith.select %41, %1322, %1321 : vector<16x16xi1>, vector<16x16xf32>
    %c0_81 = arith.constant 0 : index
    %c4_82 = arith.constant 4 : index
    %c0_83 = arith.constant 0 : index
    %c0_84 = arith.constant 0 : index
    %1324 = vector.load %arg4[%c0_81, %c4_82, %c0_83, %c0_84] : memref<2x8x16x16xf32, #tpu.memory_space<vmem>>, vector<1x1x16x16xf32>
    %1325 = vector.shape_cast %1324 : vector<1x1x16x16xf32> to vector<16x16xf32>
    %1326 = vector.shape_cast %1323 : vector<16x16xf32> to vector<1x1x16x16xf32>
    tpu.vector_store %arg4[%c0_81, %c4_82, %c0_83, %c0_84], %1326 {strides = array<i32>} : memref<2x8x16x16xf32, #tpu.memory_space<vmem>>, vector<1x1x16x16xf32>,
    %cst_85 = arith.constant 0.000000e+00 : f32
    %1327 = vector.broadcast %cst_85 : f32 to vector<16x16xf32>
    %1328 = arith.maximumf %1283, %1327 : vector<16x16xf32>
    %cst_86 = arith.constant 0.000000e+00 : f32
    %1329 = vector.broadcast %cst_86 : f32 to vector<16x16xf32>
    %1330 = arith.select %41, %1329, %1328 : vector<16x16xi1>, vector<16x16xf32>
    %c0_87 = arith.constant 0 : index
    %c5_88 = arith.constant 5 : index
    %c0_89 = arith.constant 0 : index
    %c0_90 = arith.constant 0 : index
    %1331 = vector.load %arg4[%c0_87, %c5_88, %c0_89, %c0_90] : memref<2x8x16x16xf32, #tpu.memory_space<vmem>>, vector<1x1x16x16xf32>
    %1332 = vector.shape_cast %1331 : vector<1x1x16x16xf32> to vector<16x16xf32>
    %1333 = vector.shape_cast %1330 : vector<16x16xf32> to vector<1x1x16x16xf32>
    tpu.vector_store %arg4[%c0_87, %c5_88, %c0_89, %c0_90], %1333 {strides = array<i32>} : memref<2x8x16x16xf32, #tpu.memory_space<vmem>>, vector<1x1x16x16xf32>,
    %cst_91 = arith.constant 0.000000e+00 : f32
    %1334 = vector.broadcast %cst_91 : f32 to vector<16x16xf32>
    %1335 = arith.maximumf %1287, %1334 : vector<16x16xf32>
    %cst_92 = arith.constant 0.000000e+00 : f32
    %1336 = vector.broadcast %cst_92 : f32 to vector<16x16xf32>
    %1337 = arith.select %41, %1336, %1335 : vector<16x16xi1>, vector<16x16xf32>
    %c0_93 = arith.constant 0 : index
    %c6_94 = arith.constant 6 : index
    %c0_95 = arith.constant 0 : index
    %c0_96 = arith.constant 0 : index
    %1338 = vector.load %arg4[%c0_93, %c6_94, %c0_95, %c0_96] : memref<2x8x16x16xf32, #tpu.memory_space<vmem>>, vector<1x1x16x16xf32>
    %1339 = vector.shape_cast %1338 : vector<1x1x16x16xf32> to vector<16x16xf32>
    %1340 = vector.shape_cast %1337 : vector<16x16xf32> to vector<1x1x16x16xf32>
    tpu.vector_store %arg4[%c0_93, %c6_94, %c0_95, %c0_96], %1340 {strides = array<i32>} : memref<2x8x16x16xf32, #tpu.memory_space<vmem>>, vector<1x1x16x16xf32>,
    %cst_97 = arith.constant 0.000000e+00 : f32
    %1341 = vector.broadcast %cst_97 : f32 to vector<16x16xf32>
    %1342 = arith.maximumf %1291, %1341 : vector<16x16xf32>
    %cst_98 = arith.constant 0.000000e+00 : f32
    %1343 = vector.broadcast %cst_98 : f32 to vector<16x16xf32>
    %1344 = arith.select %41, %1343, %1342 : vector<16x16xi1>, vector<16x16xf32>
    %c0_99 = arith.constant 0 : index
    %c7_100 = arith.constant 7 : index
    %c0_101 = arith.constant 0 : index
    %c0_102 = arith.constant 0 : index
    %1345 = vector.load %arg4[%c0_99, %c7_100, %c0_101, %c0_102] : memref<2x8x16x16xf32, #tpu.memory_space<vmem>>, vector<1x1x16x16xf32>
    %1346 = vector.shape_cast %1345 : vector<1x1x16x16xf32> to vector<16x16xf32>
    %1347 = vector.shape_cast %1344 : vector<16x16xf32> to vector<1x1x16x16xf32>
    tpu.vector_store %arg4[%c0_99, %c7_100, %c0_101, %c0_102], %1347 {strides = array<i32>} : memref<2x8x16x16xf32, #tpu.memory_space<vmem>>, vector<1x1x16x16xf32>,
    %c1_103 = arith.constant 1 : index
    %c0_104 = arith.constant 0 : index
    %c0_105 = arith.constant 0 : index
    %c0_106 = arith.constant 0 : index
    %1348 = vector.load %arg3[%c1_103, %c0_104, %c0_105, %c0_106] : memref<2x1x16x16xf32, #tpu.memory_space<vmem>>, vector<1x1x16x16xf32>
    %1349 = vector.shape_cast %1348 : vector<1x1x16x16xf32> to vector<16x16xf32>
    %c1_107 = arith.constant 1 : index
    %c0_108 = arith.constant 0 : index
    %c0_109 = arith.constant 0 : index
    %c0_110 = arith.constant 0 : index
    %1350 = vector.load %arg2[%c1_107, %c0_108, %c0_109, %c0_110] : memref<2x4x16x16xf32, #tpu.memory_space<vmem>>, vector<1x4x16x16xf32>
    %1351 = vector.shape_cast %1350 : vector<1x4x16x16xf32> to vector<4x16x16xf32>
    %1352 = vector.shape_cast %1349 : vector<16x16xf32> to vector<1x16x16xf32>
    %1353 = vector.broadcast %1352 : vector<1x16x16xf32> to vector<4x16x16xf32>
    %1354 = arith.mulf %1351, %1353 : vector<4x16x16xf32>
    %c0_111 = arith.constant 0 : index
    %c1_112 = arith.constant 1 : index
    %c1_113 = arith.constant 1 : index
    %1355 = vector.load %arg6[%c0_111, %c1_112, %c1_113] : memref<4x18x18xf32, #tpu.memory_space<vmem>>, vector<4x16x16xf32>
    tpu.vector_store %arg6[%c0_111, %c1_112, %c1_113], %1354 {strides = array<i32>} : memref<4x18x18xf32, #tpu.memory_space<vmem>>, vector<4x16x16xf32>,
    %c0_114 = arith.constant 0 : index
    %c1_115 = arith.constant 1 : index
    %c1_116 = arith.constant 1 : index
    %1356 = vector.load %arg7[%c0_114, %c1_115, %c1_116] : memref<1x18x18xf32, #tpu.memory_space<vmem>>, vector<1x16x16xf32>
    %1357 = vector.shape_cast %1356 : vector<1x16x16xf32> to vector<16x16xf32>
    %1358 = vector.shape_cast %1349 : vector<16x16xf32> to vector<1x16x16xf32>
    tpu.vector_store %arg7[%c0_114, %c1_115, %c1_116], %1358 {strides = array<i32>} : memref<1x18x18xf32, #tpu.memory_space<vmem>>, vector<1x16x16xf32>,
    %cst_117 = arith.constant 0.000000e+00 : f32
    %1359 = vector.broadcast %cst_117 : f32 to vector<16x16xf32>
    %c0_118 = arith.constant 0 : index
    %c0_119 = arith.constant 0 : index
    %c0_120 = arith.constant 0 : index
    %1360 = vector.load %arg7[%c0_118, %c0_119, %c0_120] : memref<1x18x18xf32, #tpu.memory_space<vmem>>, vector<1x16x18xf32>
    %1361 = vector.shape_cast %1360 : vector<1x16x18xf32> to vector<16x18xf32>
    %1362 = vector.extract_strided_slice %1361 {offsets = [0, 0], sizes = [16, 16], strides = [1, 1]} : vector<16x18xf32> to vector<16x16xf32>
    %1363 = arith.addf %1359, %1362 : vector<16x16xf32>
    %1364 = vector.extract_strided_slice %1361 {offsets = [0, 1], sizes = [16, 16], strides = [1, 1]} : vector<16x18xf32> to vector<16x16xf32>
    %1365 = arith.addf %1363, %1364 : vector<16x16xf32>
    %1366 = vector.extract_strided_slice %1361 {offsets = [0, 2], sizes = [16, 16], strides = [1, 1]} : vector<16x18xf32> to vector<16x16xf32>
    %1367 = arith.addf %1365, %1366 : vector<16x16xf32>
    %c0_121 = arith.constant 0 : index
    %c1_122 = arith.constant 1 : index
    %c0_123 = arith.constant 0 : index
    %1368 = vector.load %arg7[%c0_121, %c1_122, %c0_123] : memref<1x18x18xf32, #tpu.memory_space<vmem>>, vector<1x16x18xf32>
    %1369 = vector.shape_cast %1368 : vector<1x16x18xf32> to vector<16x18xf32>
    %1370 = vector.extract_strided_slice %1369 {offsets = [0, 0], sizes = [16, 16], strides = [1, 1]} : vector<16x18xf32> to vector<16x16xf32>
    %1371 = arith.addf %1367, %1370 : vector<16x16xf32>
    %1372 = vector.extract_strided_slice %1369 {offsets = [0, 1], sizes = [16, 16], strides = [1, 1]} : vector<16x18xf32> to vector<16x16xf32>
    %1373 = arith.addf %1371, %1372 : vector<16x16xf32>
    %1374 = vector.extract_strided_slice %1369 {offsets = [0, 2], sizes = [16, 16], strides = [1, 1]} : vector<16x18xf32> to vector<16x16xf32>
    %1375 = arith.addf %1373, %1374 : vector<16x16xf32>
    %c0_124 = arith.constant 0 : index
    %c2_125 = arith.constant 2 : index
    %c0_126 = arith.constant 0 : index
    %1376 = vector.load %arg7[%c0_124, %c2_125, %c0_126] : memref<1x18x18xf32, #tpu.memory_space<vmem>>, vector<1x16x18xf32>
    %1377 = vector.shape_cast %1376 : vector<1x16x18xf32> to vector<16x18xf32>
    %1378 = vector.extract_strided_slice %1377 {offsets = [0, 0], sizes = [16, 16], strides = [1, 1]} : vector<16x18xf32> to vector<16x16xf32>
    %1379 = arith.addf %1375, %1378 : vector<16x16xf32>
    %1380 = vector.extract_strided_slice %1377 {offsets = [0, 1], sizes = [16, 16], strides = [1, 1]} : vector<16x18xf32> to vector<16x16xf32>
    %1381 = arith.addf %1379, %1380 : vector<16x16xf32>
    %1382 = vector.extract_strided_slice %1377 {offsets = [0, 2], sizes = [16, 16], strides = [1, 1]} : vector<16x18xf32> to vector<16x16xf32>
    %1383 = arith.addf %1381, %1382 : vector<16x16xf32>
    %cst_127 = arith.constant 0.000000e+00 : f32
    %1384 = vector.broadcast %cst_127 : f32 to vector<16x16xf32>
    %1385 = arith.cmpf oeq, %1383, %1384 : vector<16x16xf32>
    %cst_128 = arith.constant 0.000000e+00 : f32
    %cst_129 = arith.constant 1.000000e+00 : f32
    %1386 = vector.broadcast %cst_128 : f32 to vector<16x16xf32>
    %1387 = vector.broadcast %cst_129 : f32 to vector<16x16xf32>
    %1388 = arith.select %1385, %1386, %1387 : vector<16x16xi1>, vector<16x16xf32>
    %c1_130 = arith.constant 1 : index
    %c0_131 = arith.constant 0 : index
    %c0_132 = arith.constant 0 : index
    %c0_133 = arith.constant 0 : index
    %1389 = vector.load %arg5[%c1_130, %c0_131, %c0_132, %c0_133] : memref<2x1x16x16xf32, #tpu.memory_space<vmem>>, vector<1x1x16x16xf32>
    %1390 = vector.shape_cast %1389 : vector<1x1x16x16xf32> to vector<16x16xf32>
    %1391 = vector.shape_cast %1388 : vector<16x16xf32> to vector<1x1x16x16xf32>
    tpu.vector_store %arg5[%c1_130, %c0_131, %c0_132, %c0_133], %1391 {strides = array<i32>} : memref<2x1x16x16xf32, #tpu.memory_space<vmem>>, vector<1x1x16x16xf32>,
    %cst_134 = arith.constant 0.000000e+00 : f32
    %1392 = vector.broadcast %cst_134 : f32 to vector<16x16xf32>
    %cst_135 = arith.constant 0.000000e+00 : f32
    %1393 = vector.broadcast %cst_135 : f32 to vector<16x16xf32>
    %cst_136 = arith.constant 0.000000e+00 : f32
    %1394 = vector.broadcast %cst_136 : f32 to vector<16x16xf32>
    %cst_137 = arith.constant 0.000000e+00 : f32
    %1395 = vector.broadcast %cst_137 : f32 to vector<16x16xf32>
    %cst_138 = arith.constant 0.000000e+00 : f32
    %1396 = vector.broadcast %cst_138 : f32 to vector<16x16xf32>
    %cst_139 = arith.constant 0.000000e+00 : f32
    %1397 = vector.broadcast %cst_139 : f32 to vector<16x16xf32>
    %cst_140 = arith.constant 0.000000e+00 : f32
    %1398 = vector.broadcast %cst_140 : f32 to vector<16x16xf32>
    %cst_141 = arith.constant 0.000000e+00 : f32
    %1399 = vector.broadcast %cst_141 : f32 to vector<16x16xf32>
    %c0_142 = arith.constant 0 : index
    %c0_143 = arith.constant 0 : index
    %c0_144 = arith.constant 0 : index
    %1400 = vector.load %arg6[%c0_142, %c0_143, %c0_144] : memref<4x18x18xf32, #tpu.memory_space<vmem>>, vector<4x16x18xf32>
    %1401 = vector.extract_strided_slice %1400 {offsets = [0, 0, 0], sizes = [4, 16, 16], strides = [1, 1, 1]} : vector<4x16x18xf32> to vector<4x16x16xf32>
    %1402 = vector.extract_strided_slice %1401 {offsets = [0, 0, 0], sizes = [1, 16, 16], strides = [1, 1, 1]} : vector<4x16x16xf32> to vector<1x16x16xf32>
    %1403 = vector.shape_cast %1402 : vector<1x16x16xf32> to vector<16x16xf32>
    %c0_145 = arith.constant 0 : index
    %1404 = memref.load %arg1[%c0_145] : memref<288xf32, #tpu.memory_space<smem>>
    %1405 = vector.broadcast %1404 : f32 to vector<16x16xf32>
    %1406 = arith.mulf %1405, %1403 : vector<16x16xf32>
    %1407 = arith.addf %1392, %1406 : vector<16x16xf32>
    %c4_146 = arith.constant 4 : index
    %1408 = memref.load %arg1[%c4_146] : memref<288xf32, #tpu.memory_space<smem>>
    %1409 = vector.broadcast %1408 : f32 to vector<16x16xf32>
    %1410 = arith.mulf %1409, %1403 : vector<16x16xf32>
    %1411 = arith.addf %1393, %1410 : vector<16x16xf32>
    %c8_147 = arith.constant 8 : index
    %1412 = memref.load %arg1[%c8_147] : memref<288xf32, #tpu.memory_space<smem>>
    %1413 = vector.broadcast %1412 : f32 to vector<16x16xf32>
    %1414 = arith.mulf %1413, %1403 : vector<16x16xf32>
    %1415 = arith.addf %1394, %1414 : vector<16x16xf32>
    %c12_148 = arith.constant 12 : index
    %1416 = memref.load %arg1[%c12_148] : memref<288xf32, #tpu.memory_space<smem>>
    %1417 = vector.broadcast %1416 : f32 to vector<16x16xf32>
    %1418 = arith.mulf %1417, %1403 : vector<16x16xf32>
    %1419 = arith.addf %1395, %1418 : vector<16x16xf32>
    %c16_149 = arith.constant 16 : index
    %1420 = memref.load %arg1[%c16_149] : memref<288xf32, #tpu.memory_space<smem>>
    %1421 = vector.broadcast %1420 : f32 to vector<16x16xf32>
    %1422 = arith.mulf %1421, %1403 : vector<16x16xf32>
    %1423 = arith.addf %1396, %1422 : vector<16x16xf32>
    %c20_150 = arith.constant 20 : index
    %1424 = memref.load %arg1[%c20_150] : memref<288xf32, #tpu.memory_space<smem>>
    %1425 = vector.broadcast %1424 : f32 to vector<16x16xf32>
    %1426 = arith.mulf %1425, %1403 : vector<16x16xf32>
    %1427 = arith.addf %1397, %1426 : vector<16x16xf32>
    %c24_151 = arith.constant 24 : index
    %1428 = memref.load %arg1[%c24_151] : memref<288xf32, #tpu.memory_space<smem>>
    %1429 = vector.broadcast %1428 : f32 to vector<16x16xf32>
    %1430 = arith.mulf %1429, %1403 : vector<16x16xf32>
    %1431 = arith.addf %1398, %1430 : vector<16x16xf32>
    %c28_152 = arith.constant 28 : index
    %1432 = memref.load %arg1[%c28_152] : memref<288xf32, #tpu.memory_space<smem>>
    %1433 = vector.broadcast %1432 : f32 to vector<16x16xf32>
    %1434 = arith.mulf %1433, %1403 : vector<16x16xf32>
    %1435 = arith.addf %1399, %1434 : vector<16x16xf32>
    %1436 = vector.extract_strided_slice %1401 {offsets = [1, 0, 0], sizes = [1, 16, 16], strides = [1, 1, 1]} : vector<4x16x16xf32> to vector<1x16x16xf32>
    %1437 = vector.shape_cast %1436 : vector<1x16x16xf32> to vector<16x16xf32>
    %c1_153 = arith.constant 1 : index
    %1438 = memref.load %arg1[%c1_153] : memref<288xf32, #tpu.memory_space<smem>>
    %1439 = vector.broadcast %1438 : f32 to vector<16x16xf32>
    %1440 = arith.mulf %1439, %1437 : vector<16x16xf32>
    %1441 = arith.addf %1407, %1440 : vector<16x16xf32>
    %c5_154 = arith.constant 5 : index
    %1442 = memref.load %arg1[%c5_154] : memref<288xf32, #tpu.memory_space<smem>>
    %1443 = vector.broadcast %1442 : f32 to vector<16x16xf32>
    %1444 = arith.mulf %1443, %1437 : vector<16x16xf32>
    %1445 = arith.addf %1411, %1444 : vector<16x16xf32>
    %c9_155 = arith.constant 9 : index
    %1446 = memref.load %arg1[%c9_155] : memref<288xf32, #tpu.memory_space<smem>>
    %1447 = vector.broadcast %1446 : f32 to vector<16x16xf32>
    %1448 = arith.mulf %1447, %1437 : vector<16x16xf32>
    %1449 = arith.addf %1415, %1448 : vector<16x16xf32>
    %c13_156 = arith.constant 13 : index
    %1450 = memref.load %arg1[%c13_156] : memref<288xf32, #tpu.memory_space<smem>>
    %1451 = vector.broadcast %1450 : f32 to vector<16x16xf32>
    %1452 = arith.mulf %1451, %1437 : vector<16x16xf32>
    %1453 = arith.addf %1419, %1452 : vector<16x16xf32>
    %c17_157 = arith.constant 17 : index
    %1454 = memref.load %arg1[%c17_157] : memref<288xf32, #tpu.memory_space<smem>>
    %1455 = vector.broadcast %1454 : f32 to vector<16x16xf32>
    %1456 = arith.mulf %1455, %1437 : vector<16x16xf32>
    %1457 = arith.addf %1423, %1456 : vector<16x16xf32>
    %c21_158 = arith.constant 21 : index
    %1458 = memref.load %arg1[%c21_158] : memref<288xf32, #tpu.memory_space<smem>>
    %1459 = vector.broadcast %1458 : f32 to vector<16x16xf32>
    %1460 = arith.mulf %1459, %1437 : vector<16x16xf32>
    %1461 = arith.addf %1427, %1460 : vector<16x16xf32>
    %c25_159 = arith.constant 25 : index
    %1462 = memref.load %arg1[%c25_159] : memref<288xf32, #tpu.memory_space<smem>>
    %1463 = vector.broadcast %1462 : f32 to vector<16x16xf32>
    %1464 = arith.mulf %1463, %1437 : vector<16x16xf32>
    %1465 = arith.addf %1431, %1464 : vector<16x16xf32>
    %c29_160 = arith.constant 29 : index
    %1466 = memref.load %arg1[%c29_160] : memref<288xf32, #tpu.memory_space<smem>>
    %1467 = vector.broadcast %1466 : f32 to vector<16x16xf32>
    %1468 = arith.mulf %1467, %1437 : vector<16x16xf32>
    %1469 = arith.addf %1435, %1468 : vector<16x16xf32>
    %1470 = vector.extract_strided_slice %1401 {offsets = [2, 0, 0], sizes = [1, 16, 16], strides = [1, 1, 1]} : vector<4x16x16xf32> to vector<1x16x16xf32>
    %1471 = vector.shape_cast %1470 : vector<1x16x16xf32> to vector<16x16xf32>
    %c2_161 = arith.constant 2 : index
    %1472 = memref.load %arg1[%c2_161] : memref<288xf32, #tpu.memory_space<smem>>
    %1473 = vector.broadcast %1472 : f32 to vector<16x16xf32>
    %1474 = arith.mulf %1473, %1471 : vector<16x16xf32>
    %1475 = arith.addf %1441, %1474 : vector<16x16xf32>
    %c6_162 = arith.constant 6 : index
    %1476 = memref.load %arg1[%c6_162] : memref<288xf32, #tpu.memory_space<smem>>
    %1477 = vector.broadcast %1476 : f32 to vector<16x16xf32>
    %1478 = arith.mulf %1477, %1471 : vector<16x16xf32>
    %1479 = arith.addf %1445, %1478 : vector<16x16xf32>
    %c10_163 = arith.constant 10 : index
    %1480 = memref.load %arg1[%c10_163] : memref<288xf32, #tpu.memory_space<smem>>
    %1481 = vector.broadcast %1480 : f32 to vector<16x16xf32>
    %1482 = arith.mulf %1481, %1471 : vector<16x16xf32>
    %1483 = arith.addf %1449, %1482 : vector<16x16xf32>
    %c14_164 = arith.constant 14 : index
    %1484 = memref.load %arg1[%c14_164] : memref<288xf32, #tpu.memory_space<smem>>
    %1485 = vector.broadcast %1484 : f32 to vector<16x16xf32>
    %1486 = arith.mulf %1485, %1471 : vector<16x16xf32>
    %1487 = arith.addf %1453, %1486 : vector<16x16xf32>
    %c18_165 = arith.constant 18 : index
    %1488 = memref.load %arg1[%c18_165] : memref<288xf32, #tpu.memory_space<smem>>
    %1489 = vector.broadcast %1488 : f32 to vector<16x16xf32>
    %1490 = arith.mulf %1489, %1471 : vector<16x16xf32>
    %1491 = arith.addf %1457, %1490 : vector<16x16xf32>
    %c22_166 = arith.constant 22 : index
    %1492 = memref.load %arg1[%c22_166] : memref<288xf32, #tpu.memory_space<smem>>
    %1493 = vector.broadcast %1492 : f32 to vector<16x16xf32>
    %1494 = arith.mulf %1493, %1471 : vector<16x16xf32>
    %1495 = arith.addf %1461, %1494 : vector<16x16xf32>
    %c26_167 = arith.constant 26 : index
    %1496 = memref.load %arg1[%c26_167] : memref<288xf32, #tpu.memory_space<smem>>
    %1497 = vector.broadcast %1496 : f32 to vector<16x16xf32>
    %1498 = arith.mulf %1497, %1471 : vector<16x16xf32>
    %1499 = arith.addf %1465, %1498 : vector<16x16xf32>
    %c30_168 = arith.constant 30 : index
    %1500 = memref.load %arg1[%c30_168] : memref<288xf32, #tpu.memory_space<smem>>
    %1501 = vector.broadcast %1500 : f32 to vector<16x16xf32>
    %1502 = arith.mulf %1501, %1471 : vector<16x16xf32>
    %1503 = arith.addf %1469, %1502 : vector<16x16xf32>
    %1504 = vector.extract_strided_slice %1401 {offsets = [3, 0, 0], sizes = [1, 16, 16], strides = [1, 1, 1]} : vector<4x16x16xf32> to vector<1x16x16xf32>
    %1505 = vector.shape_cast %1504 : vector<1x16x16xf32> to vector<16x16xf32>
    %c3_169 = arith.constant 3 : index
    %1506 = memref.load %arg1[%c3_169] : memref<288xf32, #tpu.memory_space<smem>>
    %1507 = vector.broadcast %1506 : f32 to vector<16x16xf32>
    %1508 = arith.mulf %1507, %1505 : vector<16x16xf32>
    %1509 = arith.addf %1475, %1508 : vector<16x16xf32>
    %c7_170 = arith.constant 7 : index
    %1510 = memref.load %arg1[%c7_170] : memref<288xf32, #tpu.memory_space<smem>>
    %1511 = vector.broadcast %1510 : f32 to vector<16x16xf32>
    %1512 = arith.mulf %1511, %1505 : vector<16x16xf32>
    %1513 = arith.addf %1479, %1512 : vector<16x16xf32>
    %c11_171 = arith.constant 11 : index
    %1514 = memref.load %arg1[%c11_171] : memref<288xf32, #tpu.memory_space<smem>>
    %1515 = vector.broadcast %1514 : f32 to vector<16x16xf32>
    %1516 = arith.mulf %1515, %1505 : vector<16x16xf32>
    %1517 = arith.addf %1483, %1516 : vector<16x16xf32>
    %c15_172 = arith.constant 15 : index
    %1518 = memref.load %arg1[%c15_172] : memref<288xf32, #tpu.memory_space<smem>>
    %1519 = vector.broadcast %1518 : f32 to vector<16x16xf32>
    %1520 = arith.mulf %1519, %1505 : vector<16x16xf32>
    %1521 = arith.addf %1487, %1520 : vector<16x16xf32>
    %c19_173 = arith.constant 19 : index
    %1522 = memref.load %arg1[%c19_173] : memref<288xf32, #tpu.memory_space<smem>>
    %1523 = vector.broadcast %1522 : f32 to vector<16x16xf32>
    %1524 = arith.mulf %1523, %1505 : vector<16x16xf32>
    %1525 = arith.addf %1491, %1524 : vector<16x16xf32>
    %c23_174 = arith.constant 23 : index
    %1526 = memref.load %arg1[%c23_174] : memref<288xf32, #tpu.memory_space<smem>>
    %1527 = vector.broadcast %1526 : f32 to vector<16x16xf32>
    %1528 = arith.mulf %1527, %1505 : vector<16x16xf32>
    %1529 = arith.addf %1495, %1528 : vector<16x16xf32>
    %c27_175 = arith.constant 27 : index
    %1530 = memref.load %arg1[%c27_175] : memref<288xf32, #tpu.memory_space<smem>>
    %1531 = vector.broadcast %1530 : f32 to vector<16x16xf32>
    %1532 = arith.mulf %1531, %1505 : vector<16x16xf32>
    %1533 = arith.addf %1499, %1532 : vector<16x16xf32>
    %c31_176 = arith.constant 31 : index
    %1534 = memref.load %arg1[%c31_176] : memref<288xf32, #tpu.memory_space<smem>>
    %1535 = vector.broadcast %1534 : f32 to vector<16x16xf32>
    %1536 = arith.mulf %1535, %1505 : vector<16x16xf32>
    %1537 = arith.addf %1503, %1536 : vector<16x16xf32>
    %1538 = vector.extract_strided_slice %1400 {offsets = [0, 0, 1], sizes = [4, 16, 16], strides = [1, 1, 1]} : vector<4x16x18xf32> to vector<4x16x16xf32>
    %1539 = vector.extract_strided_slice %1538 {offsets = [0, 0, 0], sizes = [1, 16, 16], strides = [1, 1, 1]} : vector<4x16x16xf32> to vector<1x16x16xf32>
    %1540 = vector.shape_cast %1539 : vector<1x16x16xf32> to vector<16x16xf32>
    %c32_177 = arith.constant 32 : index
    %1541 = memref.load %arg1[%c32_177] : memref<288xf32, #tpu.memory_space<smem>>
    %1542 = vector.broadcast %1541 : f32 to vector<16x16xf32>
    %1543 = arith.mulf %1542, %1540 : vector<16x16xf32>
    %1544 = arith.addf %1509, %1543 : vector<16x16xf32>
    %c36_178 = arith.constant 36 : index
    %1545 = memref.load %arg1[%c36_178] : memref<288xf32, #tpu.memory_space<smem>>
    %1546 = vector.broadcast %1545 : f32 to vector<16x16xf32>
    %1547 = arith.mulf %1546, %1540 : vector<16x16xf32>
    %1548 = arith.addf %1513, %1547 : vector<16x16xf32>
    %c40_179 = arith.constant 40 : index
    %1549 = memref.load %arg1[%c40_179] : memref<288xf32, #tpu.memory_space<smem>>
    %1550 = vector.broadcast %1549 : f32 to vector<16x16xf32>
    %1551 = arith.mulf %1550, %1540 : vector<16x16xf32>
    %1552 = arith.addf %1517, %1551 : vector<16x16xf32>
    %c44_180 = arith.constant 44 : index
    %1553 = memref.load %arg1[%c44_180] : memref<288xf32, #tpu.memory_space<smem>>
    %1554 = vector.broadcast %1553 : f32 to vector<16x16xf32>
    %1555 = arith.mulf %1554, %1540 : vector<16x16xf32>
    %1556 = arith.addf %1521, %1555 : vector<16x16xf32>
    %c48_181 = arith.constant 48 : index
    %1557 = memref.load %arg1[%c48_181] : memref<288xf32, #tpu.memory_space<smem>>
    %1558 = vector.broadcast %1557 : f32 to vector<16x16xf32>
    %1559 = arith.mulf %1558, %1540 : vector<16x16xf32>
    %1560 = arith.addf %1525, %1559 : vector<16x16xf32>
    %c52_182 = arith.constant 52 : index
    %1561 = memref.load %arg1[%c52_182] : memref<288xf32, #tpu.memory_space<smem>>
    %1562 = vector.broadcast %1561 : f32 to vector<16x16xf32>
    %1563 = arith.mulf %1562, %1540 : vector<16x16xf32>
    %1564 = arith.addf %1529, %1563 : vector<16x16xf32>
    %c56_183 = arith.constant 56 : index
    %1565 = memref.load %arg1[%c56_183] : memref<288xf32, #tpu.memory_space<smem>>
    %1566 = vector.broadcast %1565 : f32 to vector<16x16xf32>
    %1567 = arith.mulf %1566, %1540 : vector<16x16xf32>
    %1568 = arith.addf %1533, %1567 : vector<16x16xf32>
    %c60_184 = arith.constant 60 : index
    %1569 = memref.load %arg1[%c60_184] : memref<288xf32, #tpu.memory_space<smem>>
    %1570 = vector.broadcast %1569 : f32 to vector<16x16xf32>
    %1571 = arith.mulf %1570, %1540 : vector<16x16xf32>
    %1572 = arith.addf %1537, %1571 : vector<16x16xf32>
    %1573 = vector.extract_strided_slice %1538 {offsets = [1, 0, 0], sizes = [1, 16, 16], strides = [1, 1, 1]} : vector<4x16x16xf32> to vector<1x16x16xf32>
    %1574 = vector.shape_cast %1573 : vector<1x16x16xf32> to vector<16x16xf32>
    %c33_185 = arith.constant 33 : index
    %1575 = memref.load %arg1[%c33_185] : memref<288xf32, #tpu.memory_space<smem>>
    %1576 = vector.broadcast %1575 : f32 to vector<16x16xf32>
    %1577 = arith.mulf %1576, %1574 : vector<16x16xf32>
    %1578 = arith.addf %1544, %1577 : vector<16x16xf32>
    %c37_186 = arith.constant 37 : index
    %1579 = memref.load %arg1[%c37_186] : memref<288xf32, #tpu.memory_space<smem>>
    %1580 = vector.broadcast %1579 : f32 to vector<16x16xf32>
    %1581 = arith.mulf %1580, %1574 : vector<16x16xf32>
    %1582 = arith.addf %1548, %1581 : vector<16x16xf32>
    %c41_187 = arith.constant 41 : index
    %1583 = memref.load %arg1[%c41_187] : memref<288xf32, #tpu.memory_space<smem>>
    %1584 = vector.broadcast %1583 : f32 to vector<16x16xf32>
    %1585 = arith.mulf %1584, %1574 : vector<16x16xf32>
    %1586 = arith.addf %1552, %1585 : vector<16x16xf32>
    %c45_188 = arith.constant 45 : index
    %1587 = memref.load %arg1[%c45_188] : memref<288xf32, #tpu.memory_space<smem>>
    %1588 = vector.broadcast %1587 : f32 to vector<16x16xf32>
    %1589 = arith.mulf %1588, %1574 : vector<16x16xf32>
    %1590 = arith.addf %1556, %1589 : vector<16x16xf32>
    %c49_189 = arith.constant 49 : index
    %1591 = memref.load %arg1[%c49_189] : memref<288xf32, #tpu.memory_space<smem>>
    %1592 = vector.broadcast %1591 : f32 to vector<16x16xf32>
    %1593 = arith.mulf %1592, %1574 : vector<16x16xf32>
    %1594 = arith.addf %1560, %1593 : vector<16x16xf32>
    %c53_190 = arith.constant 53 : index
    %1595 = memref.load %arg1[%c53_190] : memref<288xf32, #tpu.memory_space<smem>>
    %1596 = vector.broadcast %1595 : f32 to vector<16x16xf32>
    %1597 = arith.mulf %1596, %1574 : vector<16x16xf32>
    %1598 = arith.addf %1564, %1597 : vector<16x16xf32>
    %c57_191 = arith.constant 57 : index
    %1599 = memref.load %arg1[%c57_191] : memref<288xf32, #tpu.memory_space<smem>>
    %1600 = vector.broadcast %1599 : f32 to vector<16x16xf32>
    %1601 = arith.mulf %1600, %1574 : vector<16x16xf32>
    %1602 = arith.addf %1568, %1601 : vector<16x16xf32>
    %c61_192 = arith.constant 61 : index
    %1603 = memref.load %arg1[%c61_192] : memref<288xf32, #tpu.memory_space<smem>>
    %1604 = vector.broadcast %1603 : f32 to vector<16x16xf32>
    %1605 = arith.mulf %1604, %1574 : vector<16x16xf32>
    %1606 = arith.addf %1572, %1605 : vector<16x16xf32>
    %1607 = vector.extract_strided_slice %1538 {offsets = [2, 0, 0], sizes = [1, 16, 16], strides = [1, 1, 1]} : vector<4x16x16xf32> to vector<1x16x16xf32>
    %1608 = vector.shape_cast %1607 : vector<1x16x16xf32> to vector<16x16xf32>
    %c34_193 = arith.constant 34 : index
    %1609 = memref.load %arg1[%c34_193] : memref<288xf32, #tpu.memory_space<smem>>
    %1610 = vector.broadcast %1609 : f32 to vector<16x16xf32>
    %1611 = arith.mulf %1610, %1608 : vector<16x16xf32>
    %1612 = arith.addf %1578, %1611 : vector<16x16xf32>
    %c38_194 = arith.constant 38 : index
    %1613 = memref.load %arg1[%c38_194] : memref<288xf32, #tpu.memory_space<smem>>
    %1614 = vector.broadcast %1613 : f32 to vector<16x16xf32>
    %1615 = arith.mulf %1614, %1608 : vector<16x16xf32>
    %1616 = arith.addf %1582, %1615 : vector<16x16xf32>
    %c42_195 = arith.constant 42 : index
    %1617 = memref.load %arg1[%c42_195] : memref<288xf32, #tpu.memory_space<smem>>
    %1618 = vector.broadcast %1617 : f32 to vector<16x16xf32>
    %1619 = arith.mulf %1618, %1608 : vector<16x16xf32>
    %1620 = arith.addf %1586, %1619 : vector<16x16xf32>
    %c46_196 = arith.constant 46 : index
    %1621 = memref.load %arg1[%c46_196] : memref<288xf32, #tpu.memory_space<smem>>
    %1622 = vector.broadcast %1621 : f32 to vector<16x16xf32>
    %1623 = arith.mulf %1622, %1608 : vector<16x16xf32>
    %1624 = arith.addf %1590, %1623 : vector<16x16xf32>
    %c50_197 = arith.constant 50 : index
    %1625 = memref.load %arg1[%c50_197] : memref<288xf32, #tpu.memory_space<smem>>
    %1626 = vector.broadcast %1625 : f32 to vector<16x16xf32>
    %1627 = arith.mulf %1626, %1608 : vector<16x16xf32>
    %1628 = arith.addf %1594, %1627 : vector<16x16xf32>
    %c54_198 = arith.constant 54 : index
    %1629 = memref.load %arg1[%c54_198] : memref<288xf32, #tpu.memory_space<smem>>
    %1630 = vector.broadcast %1629 : f32 to vector<16x16xf32>
    %1631 = arith.mulf %1630, %1608 : vector<16x16xf32>
    %1632 = arith.addf %1598, %1631 : vector<16x16xf32>
    %c58_199 = arith.constant 58 : index
    %1633 = memref.load %arg1[%c58_199] : memref<288xf32, #tpu.memory_space<smem>>
    %1634 = vector.broadcast %1633 : f32 to vector<16x16xf32>
    %1635 = arith.mulf %1634, %1608 : vector<16x16xf32>
    %1636 = arith.addf %1602, %1635 : vector<16x16xf32>
    %c62_200 = arith.constant 62 : index
    %1637 = memref.load %arg1[%c62_200] : memref<288xf32, #tpu.memory_space<smem>>
    %1638 = vector.broadcast %1637 : f32 to vector<16x16xf32>
    %1639 = arith.mulf %1638, %1608 : vector<16x16xf32>
    %1640 = arith.addf %1606, %1639 : vector<16x16xf32>
    %1641 = vector.extract_strided_slice %1538 {offsets = [3, 0, 0], sizes = [1, 16, 16], strides = [1, 1, 1]} : vector<4x16x16xf32> to vector<1x16x16xf32>
    %1642 = vector.shape_cast %1641 : vector<1x16x16xf32> to vector<16x16xf32>
    %c35_201 = arith.constant 35 : index
    %1643 = memref.load %arg1[%c35_201] : memref<288xf32, #tpu.memory_space<smem>>
    %1644 = vector.broadcast %1643 : f32 to vector<16x16xf32>
    %1645 = arith.mulf %1644, %1642 : vector<16x16xf32>
    %1646 = arith.addf %1612, %1645 : vector<16x16xf32>
    %c39_202 = arith.constant 39 : index
    %1647 = memref.load %arg1[%c39_202] : memref<288xf32, #tpu.memory_space<smem>>
    %1648 = vector.broadcast %1647 : f32 to vector<16x16xf32>
    %1649 = arith.mulf %1648, %1642 : vector<16x16xf32>
    %1650 = arith.addf %1616, %1649 : vector<16x16xf32>
    %c43_203 = arith.constant 43 : index
    %1651 = memref.load %arg1[%c43_203] : memref<288xf32, #tpu.memory_space<smem>>
    %1652 = vector.broadcast %1651 : f32 to vector<16x16xf32>
    %1653 = arith.mulf %1652, %1642 : vector<16x16xf32>
    %1654 = arith.addf %1620, %1653 : vector<16x16xf32>
    %c47_204 = arith.constant 47 : index
    %1655 = memref.load %arg1[%c47_204] : memref<288xf32, #tpu.memory_space<smem>>
    %1656 = vector.broadcast %1655 : f32 to vector<16x16xf32>
    %1657 = arith.mulf %1656, %1642 : vector<16x16xf32>
    %1658 = arith.addf %1624, %1657 : vector<16x16xf32>
    %c51_205 = arith.constant 51 : index
    %1659 = memref.load %arg1[%c51_205] : memref<288xf32, #tpu.memory_space<smem>>
    %1660 = vector.broadcast %1659 : f32 to vector<16x16xf32>
    %1661 = arith.mulf %1660, %1642 : vector<16x16xf32>
    %1662 = arith.addf %1628, %1661 : vector<16x16xf32>
    %c55_206 = arith.constant 55 : index
    %1663 = memref.load %arg1[%c55_206] : memref<288xf32, #tpu.memory_space<smem>>
    %1664 = vector.broadcast %1663 : f32 to vector<16x16xf32>
    %1665 = arith.mulf %1664, %1642 : vector<16x16xf32>
    %1666 = arith.addf %1632, %1665 : vector<16x16xf32>
    %c59_207 = arith.constant 59 : index
    %1667 = memref.load %arg1[%c59_207] : memref<288xf32, #tpu.memory_space<smem>>
    %1668 = vector.broadcast %1667 : f32 to vector<16x16xf32>
    %1669 = arith.mulf %1668, %1642 : vector<16x16xf32>
    %1670 = arith.addf %1636, %1669 : vector<16x16xf32>
    %c63_208 = arith.constant 63 : index
    %1671 = memref.load %arg1[%c63_208] : memref<288xf32, #tpu.memory_space<smem>>
    %1672 = vector.broadcast %1671 : f32 to vector<16x16xf32>
    %1673 = arith.mulf %1672, %1642 : vector<16x16xf32>
    %1674 = arith.addf %1640, %1673 : vector<16x16xf32>
    %1675 = vector.extract_strided_slice %1400 {offsets = [0, 0, 2], sizes = [4, 16, 16], strides = [1, 1, 1]} : vector<4x16x18xf32> to vector<4x16x16xf32>
    %1676 = vector.extract_strided_slice %1675 {offsets = [0, 0, 0], sizes = [1, 16, 16], strides = [1, 1, 1]} : vector<4x16x16xf32> to vector<1x16x16xf32>
    %1677 = vector.shape_cast %1676 : vector<1x16x16xf32> to vector<16x16xf32>
    %c64_209 = arith.constant 64 : index
    %1678 = memref.load %arg1[%c64_209] : memref<288xf32, #tpu.memory_space<smem>>
    %1679 = vector.broadcast %1678 : f32 to vector<16x16xf32>
    %1680 = arith.mulf %1679, %1677 : vector<16x16xf32>
    %1681 = arith.addf %1646, %1680 : vector<16x16xf32>
    %c68_210 = arith.constant 68 : index
    %1682 = memref.load %arg1[%c68_210] : memref<288xf32, #tpu.memory_space<smem>>
    %1683 = vector.broadcast %1682 : f32 to vector<16x16xf32>
    %1684 = arith.mulf %1683, %1677 : vector<16x16xf32>
    %1685 = arith.addf %1650, %1684 : vector<16x16xf32>
    %c72_211 = arith.constant 72 : index
    %1686 = memref.load %arg1[%c72_211] : memref<288xf32, #tpu.memory_space<smem>>
    %1687 = vector.broadcast %1686 : f32 to vector<16x16xf32>
    %1688 = arith.mulf %1687, %1677 : vector<16x16xf32>
    %1689 = arith.addf %1654, %1688 : vector<16x16xf32>
    %c76_212 = arith.constant 76 : index
    %1690 = memref.load %arg1[%c76_212] : memref<288xf32, #tpu.memory_space<smem>>
    %1691 = vector.broadcast %1690 : f32 to vector<16x16xf32>
    %1692 = arith.mulf %1691, %1677 : vector<16x16xf32>
    %1693 = arith.addf %1658, %1692 : vector<16x16xf32>
    %c80_213 = arith.constant 80 : index
    %1694 = memref.load %arg1[%c80_213] : memref<288xf32, #tpu.memory_space<smem>>
    %1695 = vector.broadcast %1694 : f32 to vector<16x16xf32>
    %1696 = arith.mulf %1695, %1677 : vector<16x16xf32>
    %1697 = arith.addf %1662, %1696 : vector<16x16xf32>
    %c84_214 = arith.constant 84 : index
    %1698 = memref.load %arg1[%c84_214] : memref<288xf32, #tpu.memory_space<smem>>
    %1699 = vector.broadcast %1698 : f32 to vector<16x16xf32>
    %1700 = arith.mulf %1699, %1677 : vector<16x16xf32>
    %1701 = arith.addf %1666, %1700 : vector<16x16xf32>
    %c88_215 = arith.constant 88 : index
    %1702 = memref.load %arg1[%c88_215] : memref<288xf32, #tpu.memory_space<smem>>
    %1703 = vector.broadcast %1702 : f32 to vector<16x16xf32>
    %1704 = arith.mulf %1703, %1677 : vector<16x16xf32>
    %1705 = arith.addf %1670, %1704 : vector<16x16xf32>
    %c92_216 = arith.constant 92 : index
    %1706 = memref.load %arg1[%c92_216] : memref<288xf32, #tpu.memory_space<smem>>
    %1707 = vector.broadcast %1706 : f32 to vector<16x16xf32>
    %1708 = arith.mulf %1707, %1677 : vector<16x16xf32>
    %1709 = arith.addf %1674, %1708 : vector<16x16xf32>
    %1710 = vector.extract_strided_slice %1675 {offsets = [1, 0, 0], sizes = [1, 16, 16], strides = [1, 1, 1]} : vector<4x16x16xf32> to vector<1x16x16xf32>
    %1711 = vector.shape_cast %1710 : vector<1x16x16xf32> to vector<16x16xf32>
    %c65_217 = arith.constant 65 : index
    %1712 = memref.load %arg1[%c65_217] : memref<288xf32, #tpu.memory_space<smem>>
    %1713 = vector.broadcast %1712 : f32 to vector<16x16xf32>
    %1714 = arith.mulf %1713, %1711 : vector<16x16xf32>
    %1715 = arith.addf %1681, %1714 : vector<16x16xf32>
    %c69_218 = arith.constant 69 : index
    %1716 = memref.load %arg1[%c69_218] : memref<288xf32, #tpu.memory_space<smem>>
    %1717 = vector.broadcast %1716 : f32 to vector<16x16xf32>
    %1718 = arith.mulf %1717, %1711 : vector<16x16xf32>
    %1719 = arith.addf %1685, %1718 : vector<16x16xf32>
    %c73_219 = arith.constant 73 : index
    %1720 = memref.load %arg1[%c73_219] : memref<288xf32, #tpu.memory_space<smem>>
    %1721 = vector.broadcast %1720 : f32 to vector<16x16xf32>
    %1722 = arith.mulf %1721, %1711 : vector<16x16xf32>
    %1723 = arith.addf %1689, %1722 : vector<16x16xf32>
    %c77_220 = arith.constant 77 : index
    %1724 = memref.load %arg1[%c77_220] : memref<288xf32, #tpu.memory_space<smem>>
    %1725 = vector.broadcast %1724 : f32 to vector<16x16xf32>
    %1726 = arith.mulf %1725, %1711 : vector<16x16xf32>
    %1727 = arith.addf %1693, %1726 : vector<16x16xf32>
    %c81_221 = arith.constant 81 : index
    %1728 = memref.load %arg1[%c81_221] : memref<288xf32, #tpu.memory_space<smem>>
    %1729 = vector.broadcast %1728 : f32 to vector<16x16xf32>
    %1730 = arith.mulf %1729, %1711 : vector<16x16xf32>
    %1731 = arith.addf %1697, %1730 : vector<16x16xf32>
    %c85_222 = arith.constant 85 : index
    %1732 = memref.load %arg1[%c85_222] : memref<288xf32, #tpu.memory_space<smem>>
    %1733 = vector.broadcast %1732 : f32 to vector<16x16xf32>
    %1734 = arith.mulf %1733, %1711 : vector<16x16xf32>
    %1735 = arith.addf %1701, %1734 : vector<16x16xf32>
    %c89_223 = arith.constant 89 : index
    %1736 = memref.load %arg1[%c89_223] : memref<288xf32, #tpu.memory_space<smem>>
    %1737 = vector.broadcast %1736 : f32 to vector<16x16xf32>
    %1738 = arith.mulf %1737, %1711 : vector<16x16xf32>
    %1739 = arith.addf %1705, %1738 : vector<16x16xf32>
    %c93_224 = arith.constant 93 : index
    %1740 = memref.load %arg1[%c93_224] : memref<288xf32, #tpu.memory_space<smem>>
    %1741 = vector.broadcast %1740 : f32 to vector<16x16xf32>
    %1742 = arith.mulf %1741, %1711 : vector<16x16xf32>
    %1743 = arith.addf %1709, %1742 : vector<16x16xf32>
    %1744 = vector.extract_strided_slice %1675 {offsets = [2, 0, 0], sizes = [1, 16, 16], strides = [1, 1, 1]} : vector<4x16x16xf32> to vector<1x16x16xf32>
    %1745 = vector.shape_cast %1744 : vector<1x16x16xf32> to vector<16x16xf32>
    %c66_225 = arith.constant 66 : index
    %1746 = memref.load %arg1[%c66_225] : memref<288xf32, #tpu.memory_space<smem>>
    %1747 = vector.broadcast %1746 : f32 to vector<16x16xf32>
    %1748 = arith.mulf %1747, %1745 : vector<16x16xf32>
    %1749 = arith.addf %1715, %1748 : vector<16x16xf32>
    %c70_226 = arith.constant 70 : index
    %1750 = memref.load %arg1[%c70_226] : memref<288xf32, #tpu.memory_space<smem>>
    %1751 = vector.broadcast %1750 : f32 to vector<16x16xf32>
    %1752 = arith.mulf %1751, %1745 : vector<16x16xf32>
    %1753 = arith.addf %1719, %1752 : vector<16x16xf32>
    %c74_227 = arith.constant 74 : index
    %1754 = memref.load %arg1[%c74_227] : memref<288xf32, #tpu.memory_space<smem>>
    %1755 = vector.broadcast %1754 : f32 to vector<16x16xf32>
    %1756 = arith.mulf %1755, %1745 : vector<16x16xf32>
    %1757 = arith.addf %1723, %1756 : vector<16x16xf32>
    %c78_228 = arith.constant 78 : index
    %1758 = memref.load %arg1[%c78_228] : memref<288xf32, #tpu.memory_space<smem>>
    %1759 = vector.broadcast %1758 : f32 to vector<16x16xf32>
    %1760 = arith.mulf %1759, %1745 : vector<16x16xf32>
    %1761 = arith.addf %1727, %1760 : vector<16x16xf32>
    %c82_229 = arith.constant 82 : index
    %1762 = memref.load %arg1[%c82_229] : memref<288xf32, #tpu.memory_space<smem>>
    %1763 = vector.broadcast %1762 : f32 to vector<16x16xf32>
    %1764 = arith.mulf %1763, %1745 : vector<16x16xf32>
    %1765 = arith.addf %1731, %1764 : vector<16x16xf32>
    %c86_230 = arith.constant 86 : index
    %1766 = memref.load %arg1[%c86_230] : memref<288xf32, #tpu.memory_space<smem>>
    %1767 = vector.broadcast %1766 : f32 to vector<16x16xf32>
    %1768 = arith.mulf %1767, %1745 : vector<16x16xf32>
    %1769 = arith.addf %1735, %1768 : vector<16x16xf32>
    %c90_231 = arith.constant 90 : index
    %1770 = memref.load %arg1[%c90_231] : memref<288xf32, #tpu.memory_space<smem>>
    %1771 = vector.broadcast %1770 : f32 to vector<16x16xf32>
    %1772 = arith.mulf %1771, %1745 : vector<16x16xf32>
    %1773 = arith.addf %1739, %1772 : vector<16x16xf32>
    %c94_232 = arith.constant 94 : index
    %1774 = memref.load %arg1[%c94_232] : memref<288xf32, #tpu.memory_space<smem>>
    %1775 = vector.broadcast %1774 : f32 to vector<16x16xf32>
    %1776 = arith.mulf %1775, %1745 : vector<16x16xf32>
    %1777 = arith.addf %1743, %1776 : vector<16x16xf32>
    %1778 = vector.extract_strided_slice %1675 {offsets = [3, 0, 0], sizes = [1, 16, 16], strides = [1, 1, 1]} : vector<4x16x16xf32> to vector<1x16x16xf32>
    %1779 = vector.shape_cast %1778 : vector<1x16x16xf32> to vector<16x16xf32>
    %c67_233 = arith.constant 67 : index
    %1780 = memref.load %arg1[%c67_233] : memref<288xf32, #tpu.memory_space<smem>>
    %1781 = vector.broadcast %1780 : f32 to vector<16x16xf32>
    %1782 = arith.mulf %1781, %1779 : vector<16x16xf32>
    %1783 = arith.addf %1749, %1782 : vector<16x16xf32>
    %c71_234 = arith.constant 71 : index
    %1784 = memref.load %arg1[%c71_234] : memref<288xf32, #tpu.memory_space<smem>>
    %1785 = vector.broadcast %1784 : f32 to vector<16x16xf32>
    %1786 = arith.mulf %1785, %1779 : vector<16x16xf32>
    %1787 = arith.addf %1753, %1786 : vector<16x16xf32>
    %c75_235 = arith.constant 75 : index
    %1788 = memref.load %arg1[%c75_235] : memref<288xf32, #tpu.memory_space<smem>>
    %1789 = vector.broadcast %1788 : f32 to vector<16x16xf32>
    %1790 = arith.mulf %1789, %1779 : vector<16x16xf32>
    %1791 = arith.addf %1757, %1790 : vector<16x16xf32>
    %c79_236 = arith.constant 79 : index
    %1792 = memref.load %arg1[%c79_236] : memref<288xf32, #tpu.memory_space<smem>>
    %1793 = vector.broadcast %1792 : f32 to vector<16x16xf32>
    %1794 = arith.mulf %1793, %1779 : vector<16x16xf32>
    %1795 = arith.addf %1761, %1794 : vector<16x16xf32>
    %c83_237 = arith.constant 83 : index
    %1796 = memref.load %arg1[%c83_237] : memref<288xf32, #tpu.memory_space<smem>>
    %1797 = vector.broadcast %1796 : f32 to vector<16x16xf32>
    %1798 = arith.mulf %1797, %1779 : vector<16x16xf32>
    %1799 = arith.addf %1765, %1798 : vector<16x16xf32>
    %c87_238 = arith.constant 87 : index
    %1800 = memref.load %arg1[%c87_238] : memref<288xf32, #tpu.memory_space<smem>>
    %1801 = vector.broadcast %1800 : f32 to vector<16x16xf32>
    %1802 = arith.mulf %1801, %1779 : vector<16x16xf32>
    %1803 = arith.addf %1769, %1802 : vector<16x16xf32>
    %c91_239 = arith.constant 91 : index
    %1804 = memref.load %arg1[%c91_239] : memref<288xf32, #tpu.memory_space<smem>>
    %1805 = vector.broadcast %1804 : f32 to vector<16x16xf32>
    %1806 = arith.mulf %1805, %1779 : vector<16x16xf32>
    %1807 = arith.addf %1773, %1806 : vector<16x16xf32>
    %c95_240 = arith.constant 95 : index
    %1808 = memref.load %arg1[%c95_240] : memref<288xf32, #tpu.memory_space<smem>>
    %1809 = vector.broadcast %1808 : f32 to vector<16x16xf32>
    %1810 = arith.mulf %1809, %1779 : vector<16x16xf32>
    %1811 = arith.addf %1777, %1810 : vector<16x16xf32>
    %c0_241 = arith.constant 0 : index
    %c1_242 = arith.constant 1 : index
    %c0_243 = arith.constant 0 : index
    %1812 = vector.load %arg6[%c0_241, %c1_242, %c0_243] : memref<4x18x18xf32, #tpu.memory_space<vmem>>, vector<4x16x18xf32>
    %1813 = vector.extract_strided_slice %1812 {offsets = [0, 0, 0], sizes = [4, 16, 16], strides = [1, 1, 1]} : vector<4x16x18xf32> to vector<4x16x16xf32>
    %1814 = vector.extract_strided_slice %1813 {offsets = [0, 0, 0], sizes = [1, 16, 16], strides = [1, 1, 1]} : vector<4x16x16xf32> to vector<1x16x16xf32>
    %1815 = vector.shape_cast %1814 : vector<1x16x16xf32> to vector<16x16xf32>
    %c96_244 = arith.constant 96 : index
    %1816 = memref.load %arg1[%c96_244] : memref<288xf32, #tpu.memory_space<smem>>
    %1817 = vector.broadcast %1816 : f32 to vector<16x16xf32>
    %1818 = arith.mulf %1817, %1815 : vector<16x16xf32>
    %1819 = arith.addf %1783, %1818 : vector<16x16xf32>
    %c100_245 = arith.constant 100 : index
    %1820 = memref.load %arg1[%c100_245] : memref<288xf32, #tpu.memory_space<smem>>
    %1821 = vector.broadcast %1820 : f32 to vector<16x16xf32>
    %1822 = arith.mulf %1821, %1815 : vector<16x16xf32>
    %1823 = arith.addf %1787, %1822 : vector<16x16xf32>
    %c104_246 = arith.constant 104 : index
    %1824 = memref.load %arg1[%c104_246] : memref<288xf32, #tpu.memory_space<smem>>
    %1825 = vector.broadcast %1824 : f32 to vector<16x16xf32>
    %1826 = arith.mulf %1825, %1815 : vector<16x16xf32>
    %1827 = arith.addf %1791, %1826 : vector<16x16xf32>
    %c108_247 = arith.constant 108 : index
    %1828 = memref.load %arg1[%c108_247] : memref<288xf32, #tpu.memory_space<smem>>
    %1829 = vector.broadcast %1828 : f32 to vector<16x16xf32>
    %1830 = arith.mulf %1829, %1815 : vector<16x16xf32>
    %1831 = arith.addf %1795, %1830 : vector<16x16xf32>
    %c112_248 = arith.constant 112 : index
    %1832 = memref.load %arg1[%c112_248] : memref<288xf32, #tpu.memory_space<smem>>
    %1833 = vector.broadcast %1832 : f32 to vector<16x16xf32>
    %1834 = arith.mulf %1833, %1815 : vector<16x16xf32>
    %1835 = arith.addf %1799, %1834 : vector<16x16xf32>
    %c116_249 = arith.constant 116 : index
    %1836 = memref.load %arg1[%c116_249] : memref<288xf32, #tpu.memory_space<smem>>
    %1837 = vector.broadcast %1836 : f32 to vector<16x16xf32>
    %1838 = arith.mulf %1837, %1815 : vector<16x16xf32>
    %1839 = arith.addf %1803, %1838 : vector<16x16xf32>
    %c120_250 = arith.constant 120 : index
    %1840 = memref.load %arg1[%c120_250] : memref<288xf32, #tpu.memory_space<smem>>
    %1841 = vector.broadcast %1840 : f32 to vector<16x16xf32>
    %1842 = arith.mulf %1841, %1815 : vector<16x16xf32>
    %1843 = arith.addf %1807, %1842 : vector<16x16xf32>
    %c124_251 = arith.constant 124 : index
    %1844 = memref.load %arg1[%c124_251] : memref<288xf32, #tpu.memory_space<smem>>
    %1845 = vector.broadcast %1844 : f32 to vector<16x16xf32>
    %1846 = arith.mulf %1845, %1815 : vector<16x16xf32>
    %1847 = arith.addf %1811, %1846 : vector<16x16xf32>
    %1848 = vector.extract_strided_slice %1813 {offsets = [1, 0, 0], sizes = [1, 16, 16], strides = [1, 1, 1]} : vector<4x16x16xf32> to vector<1x16x16xf32>
    %1849 = vector.shape_cast %1848 : vector<1x16x16xf32> to vector<16x16xf32>
    %c97_252 = arith.constant 97 : index
    %1850 = memref.load %arg1[%c97_252] : memref<288xf32, #tpu.memory_space<smem>>
    %1851 = vector.broadcast %1850 : f32 to vector<16x16xf32>
    %1852 = arith.mulf %1851, %1849 : vector<16x16xf32>
    %1853 = arith.addf %1819, %1852 : vector<16x16xf32>
    %c101_253 = arith.constant 101 : index
    %1854 = memref.load %arg1[%c101_253] : memref<288xf32, #tpu.memory_space<smem>>
    %1855 = vector.broadcast %1854 : f32 to vector<16x16xf32>
    %1856 = arith.mulf %1855, %1849 : vector<16x16xf32>
    %1857 = arith.addf %1823, %1856 : vector<16x16xf32>
    %c105_254 = arith.constant 105 : index
    %1858 = memref.load %arg1[%c105_254] : memref<288xf32, #tpu.memory_space<smem>>
    %1859 = vector.broadcast %1858 : f32 to vector<16x16xf32>
    %1860 = arith.mulf %1859, %1849 : vector<16x16xf32>
    %1861 = arith.addf %1827, %1860 : vector<16x16xf32>
    %c109_255 = arith.constant 109 : index
    %1862 = memref.load %arg1[%c109_255] : memref<288xf32, #tpu.memory_space<smem>>
    %1863 = vector.broadcast %1862 : f32 to vector<16x16xf32>
    %1864 = arith.mulf %1863, %1849 : vector<16x16xf32>
    %1865 = arith.addf %1831, %1864 : vector<16x16xf32>
    %c113_256 = arith.constant 113 : index
    %1866 = memref.load %arg1[%c113_256] : memref<288xf32, #tpu.memory_space<smem>>
    %1867 = vector.broadcast %1866 : f32 to vector<16x16xf32>
    %1868 = arith.mulf %1867, %1849 : vector<16x16xf32>
    %1869 = arith.addf %1835, %1868 : vector<16x16xf32>
    %c117_257 = arith.constant 117 : index
    %1870 = memref.load %arg1[%c117_257] : memref<288xf32, #tpu.memory_space<smem>>
    %1871 = vector.broadcast %1870 : f32 to vector<16x16xf32>
    %1872 = arith.mulf %1871, %1849 : vector<16x16xf32>
    %1873 = arith.addf %1839, %1872 : vector<16x16xf32>
    %c121_258 = arith.constant 121 : index
    %1874 = memref.load %arg1[%c121_258] : memref<288xf32, #tpu.memory_space<smem>>
    %1875 = vector.broadcast %1874 : f32 to vector<16x16xf32>
    %1876 = arith.mulf %1875, %1849 : vector<16x16xf32>
    %1877 = arith.addf %1843, %1876 : vector<16x16xf32>
    %c125_259 = arith.constant 125 : index
    %1878 = memref.load %arg1[%c125_259] : memref<288xf32, #tpu.memory_space<smem>>
    %1879 = vector.broadcast %1878 : f32 to vector<16x16xf32>
    %1880 = arith.mulf %1879, %1849 : vector<16x16xf32>
    %1881 = arith.addf %1847, %1880 : vector<16x16xf32>
    %1882 = vector.extract_strided_slice %1813 {offsets = [2, 0, 0], sizes = [1, 16, 16], strides = [1, 1, 1]} : vector<4x16x16xf32> to vector<1x16x16xf32>
    %1883 = vector.shape_cast %1882 : vector<1x16x16xf32> to vector<16x16xf32>
    %c98_260 = arith.constant 98 : index
    %1884 = memref.load %arg1[%c98_260] : memref<288xf32, #tpu.memory_space<smem>>
    %1885 = vector.broadcast %1884 : f32 to vector<16x16xf32>
    %1886 = arith.mulf %1885, %1883 : vector<16x16xf32>
    %1887 = arith.addf %1853, %1886 : vector<16x16xf32>
    %c102_261 = arith.constant 102 : index
    %1888 = memref.load %arg1[%c102_261] : memref<288xf32, #tpu.memory_space<smem>>
    %1889 = vector.broadcast %1888 : f32 to vector<16x16xf32>
    %1890 = arith.mulf %1889, %1883 : vector<16x16xf32>
    %1891 = arith.addf %1857, %1890 : vector<16x16xf32>
    %c106_262 = arith.constant 106 : index
    %1892 = memref.load %arg1[%c106_262] : memref<288xf32, #tpu.memory_space<smem>>
    %1893 = vector.broadcast %1892 : f32 to vector<16x16xf32>
    %1894 = arith.mulf %1893, %1883 : vector<16x16xf32>
    %1895 = arith.addf %1861, %1894 : vector<16x16xf32>
    %c110_263 = arith.constant 110 : index
    %1896 = memref.load %arg1[%c110_263] : memref<288xf32, #tpu.memory_space<smem>>
    %1897 = vector.broadcast %1896 : f32 to vector<16x16xf32>
    %1898 = arith.mulf %1897, %1883 : vector<16x16xf32>
    %1899 = arith.addf %1865, %1898 : vector<16x16xf32>
    %c114_264 = arith.constant 114 : index
    %1900 = memref.load %arg1[%c114_264] : memref<288xf32, #tpu.memory_space<smem>>
    %1901 = vector.broadcast %1900 : f32 to vector<16x16xf32>
    %1902 = arith.mulf %1901, %1883 : vector<16x16xf32>
    %1903 = arith.addf %1869, %1902 : vector<16x16xf32>
    %c118_265 = arith.constant 118 : index
    %1904 = memref.load %arg1[%c118_265] : memref<288xf32, #tpu.memory_space<smem>>
    %1905 = vector.broadcast %1904 : f32 to vector<16x16xf32>
    %1906 = arith.mulf %1905, %1883 : vector<16x16xf32>
    %1907 = arith.addf %1873, %1906 : vector<16x16xf32>
    %c122_266 = arith.constant 122 : index
    %1908 = memref.load %arg1[%c122_266] : memref<288xf32, #tpu.memory_space<smem>>
    %1909 = vector.broadcast %1908 : f32 to vector<16x16xf32>
    %1910 = arith.mulf %1909, %1883 : vector<16x16xf32>
    %1911 = arith.addf %1877, %1910 : vector<16x16xf32>
    %c126_267 = arith.constant 126 : index
    %1912 = memref.load %arg1[%c126_267] : memref<288xf32, #tpu.memory_space<smem>>
    %1913 = vector.broadcast %1912 : f32 to vector<16x16xf32>
    %1914 = arith.mulf %1913, %1883 : vector<16x16xf32>
    %1915 = arith.addf %1881, %1914 : vector<16x16xf32>
    %1916 = vector.extract_strided_slice %1813 {offsets = [3, 0, 0], sizes = [1, 16, 16], strides = [1, 1, 1]} : vector<4x16x16xf32> to vector<1x16x16xf32>
    %1917 = vector.shape_cast %1916 : vector<1x16x16xf32> to vector<16x16xf32>
    %c99_268 = arith.constant 99 : index
    %1918 = memref.load %arg1[%c99_268] : memref<288xf32, #tpu.memory_space<smem>>
    %1919 = vector.broadcast %1918 : f32 to vector<16x16xf32>
    %1920 = arith.mulf %1919, %1917 : vector<16x16xf32>
    %1921 = arith.addf %1887, %1920 : vector<16x16xf32>
    %c103_269 = arith.constant 103 : index
    %1922 = memref.load %arg1[%c103_269] : memref<288xf32, #tpu.memory_space<smem>>
    %1923 = vector.broadcast %1922 : f32 to vector<16x16xf32>
    %1924 = arith.mulf %1923, %1917 : vector<16x16xf32>
    %1925 = arith.addf %1891, %1924 : vector<16x16xf32>
    %c107_270 = arith.constant 107 : index
    %1926 = memref.load %arg1[%c107_270] : memref<288xf32, #tpu.memory_space<smem>>
    %1927 = vector.broadcast %1926 : f32 to vector<16x16xf32>
    %1928 = arith.mulf %1927, %1917 : vector<16x16xf32>
    %1929 = arith.addf %1895, %1928 : vector<16x16xf32>
    %c111_271 = arith.constant 111 : index
    %1930 = memref.load %arg1[%c111_271] : memref<288xf32, #tpu.memory_space<smem>>
    %1931 = vector.broadcast %1930 : f32 to vector<16x16xf32>
    %1932 = arith.mulf %1931, %1917 : vector<16x16xf32>
    %1933 = arith.addf %1899, %1932 : vector<16x16xf32>
    %c115_272 = arith.constant 115 : index
    %1934 = memref.load %arg1[%c115_272] : memref<288xf32, #tpu.memory_space<smem>>
    %1935 = vector.broadcast %1934 : f32 to vector<16x16xf32>
    %1936 = arith.mulf %1935, %1917 : vector<16x16xf32>
    %1937 = arith.addf %1903, %1936 : vector<16x16xf32>
    %c119_273 = arith.constant 119 : index
    %1938 = memref.load %arg1[%c119_273] : memref<288xf32, #tpu.memory_space<smem>>
    %1939 = vector.broadcast %1938 : f32 to vector<16x16xf32>
    %1940 = arith.mulf %1939, %1917 : vector<16x16xf32>
    %1941 = arith.addf %1907, %1940 : vector<16x16xf32>
    %c123_274 = arith.constant 123 : index
    %1942 = memref.load %arg1[%c123_274] : memref<288xf32, #tpu.memory_space<smem>>
    %1943 = vector.broadcast %1942 : f32 to vector<16x16xf32>
    %1944 = arith.mulf %1943, %1917 : vector<16x16xf32>
    %1945 = arith.addf %1911, %1944 : vector<16x16xf32>
    %c127_275 = arith.constant 127 : index
    %1946 = memref.load %arg1[%c127_275] : memref<288xf32, #tpu.memory_space<smem>>
    %1947 = vector.broadcast %1946 : f32 to vector<16x16xf32>
    %1948 = arith.mulf %1947, %1917 : vector<16x16xf32>
    %1949 = arith.addf %1915, %1948 : vector<16x16xf32>
    %1950 = vector.extract_strided_slice %1812 {offsets = [0, 0, 1], sizes = [4, 16, 16], strides = [1, 1, 1]} : vector<4x16x18xf32> to vector<4x16x16xf32>
    %1951 = vector.extract_strided_slice %1950 {offsets = [0, 0, 0], sizes = [1, 16, 16], strides = [1, 1, 1]} : vector<4x16x16xf32> to vector<1x16x16xf32>
    %1952 = vector.shape_cast %1951 : vector<1x16x16xf32> to vector<16x16xf32>
    %c128_276 = arith.constant 128 : index
    %1953 = memref.load %arg1[%c128_276] : memref<288xf32, #tpu.memory_space<smem>>
    %1954 = vector.broadcast %1953 : f32 to vector<16x16xf32>
    %1955 = arith.mulf %1954, %1952 : vector<16x16xf32>
    %1956 = arith.addf %1921, %1955 : vector<16x16xf32>
    %c132_277 = arith.constant 132 : index
    %1957 = memref.load %arg1[%c132_277] : memref<288xf32, #tpu.memory_space<smem>>
    %1958 = vector.broadcast %1957 : f32 to vector<16x16xf32>
    %1959 = arith.mulf %1958, %1952 : vector<16x16xf32>
    %1960 = arith.addf %1925, %1959 : vector<16x16xf32>
    %c136_278 = arith.constant 136 : index
    %1961 = memref.load %arg1[%c136_278] : memref<288xf32, #tpu.memory_space<smem>>
    %1962 = vector.broadcast %1961 : f32 to vector<16x16xf32>
    %1963 = arith.mulf %1962, %1952 : vector<16x16xf32>
    %1964 = arith.addf %1929, %1963 : vector<16x16xf32>
    %c140_279 = arith.constant 140 : index
    %1965 = memref.load %arg1[%c140_279] : memref<288xf32, #tpu.memory_space<smem>>
    %1966 = vector.broadcast %1965 : f32 to vector<16x16xf32>
    %1967 = arith.mulf %1966, %1952 : vector<16x16xf32>
    %1968 = arith.addf %1933, %1967 : vector<16x16xf32>
    %c144_280 = arith.constant 144 : index
    %1969 = memref.load %arg1[%c144_280] : memref<288xf32, #tpu.memory_space<smem>>
    %1970 = vector.broadcast %1969 : f32 to vector<16x16xf32>
    %1971 = arith.mulf %1970, %1952 : vector<16x16xf32>
    %1972 = arith.addf %1937, %1971 : vector<16x16xf32>
    %c148_281 = arith.constant 148 : index
    %1973 = memref.load %arg1[%c148_281] : memref<288xf32, #tpu.memory_space<smem>>
    %1974 = vector.broadcast %1973 : f32 to vector<16x16xf32>
    %1975 = arith.mulf %1974, %1952 : vector<16x16xf32>
    %1976 = arith.addf %1941, %1975 : vector<16x16xf32>
    %c152_282 = arith.constant 152 : index
    %1977 = memref.load %arg1[%c152_282] : memref<288xf32, #tpu.memory_space<smem>>
    %1978 = vector.broadcast %1977 : f32 to vector<16x16xf32>
    %1979 = arith.mulf %1978, %1952 : vector<16x16xf32>
    %1980 = arith.addf %1945, %1979 : vector<16x16xf32>
    %c156_283 = arith.constant 156 : index
    %1981 = memref.load %arg1[%c156_283] : memref<288xf32, #tpu.memory_space<smem>>
    %1982 = vector.broadcast %1981 : f32 to vector<16x16xf32>
    %1983 = arith.mulf %1982, %1952 : vector<16x16xf32>
    %1984 = arith.addf %1949, %1983 : vector<16x16xf32>
    %1985 = vector.extract_strided_slice %1950 {offsets = [1, 0, 0], sizes = [1, 16, 16], strides = [1, 1, 1]} : vector<4x16x16xf32> to vector<1x16x16xf32>
    %1986 = vector.shape_cast %1985 : vector<1x16x16xf32> to vector<16x16xf32>
    %c129_284 = arith.constant 129 : index
    %1987 = memref.load %arg1[%c129_284] : memref<288xf32, #tpu.memory_space<smem>>
    %1988 = vector.broadcast %1987 : f32 to vector<16x16xf32>
    %1989 = arith.mulf %1988, %1986 : vector<16x16xf32>
    %1990 = arith.addf %1956, %1989 : vector<16x16xf32>
    %c133_285 = arith.constant 133 : index
    %1991 = memref.load %arg1[%c133_285] : memref<288xf32, #tpu.memory_space<smem>>
    %1992 = vector.broadcast %1991 : f32 to vector<16x16xf32>
    %1993 = arith.mulf %1992, %1986 : vector<16x16xf32>
    %1994 = arith.addf %1960, %1993 : vector<16x16xf32>
    %c137_286 = arith.constant 137 : index
    %1995 = memref.load %arg1[%c137_286] : memref<288xf32, #tpu.memory_space<smem>>
    %1996 = vector.broadcast %1995 : f32 to vector<16x16xf32>
    %1997 = arith.mulf %1996, %1986 : vector<16x16xf32>
    %1998 = arith.addf %1964, %1997 : vector<16x16xf32>
    %c141_287 = arith.constant 141 : index
    %1999 = memref.load %arg1[%c141_287] : memref<288xf32, #tpu.memory_space<smem>>
    %2000 = vector.broadcast %1999 : f32 to vector<16x16xf32>
    %2001 = arith.mulf %2000, %1986 : vector<16x16xf32>
    %2002 = arith.addf %1968, %2001 : vector<16x16xf32>
    %c145_288 = arith.constant 145 : index
    %2003 = memref.load %arg1[%c145_288] : memref<288xf32, #tpu.memory_space<smem>>
    %2004 = vector.broadcast %2003 : f32 to vector<16x16xf32>
    %2005 = arith.mulf %2004, %1986 : vector<16x16xf32>
    %2006 = arith.addf %1972, %2005 : vector<16x16xf32>
    %c149_289 = arith.constant 149 : index
    %2007 = memref.load %arg1[%c149_289] : memref<288xf32, #tpu.memory_space<smem>>
    %2008 = vector.broadcast %2007 : f32 to vector<16x16xf32>
    %2009 = arith.mulf %2008, %1986 : vector<16x16xf32>
    %2010 = arith.addf %1976, %2009 : vector<16x16xf32>
    %c153_290 = arith.constant 153 : index
    %2011 = memref.load %arg1[%c153_290] : memref<288xf32, #tpu.memory_space<smem>>
    %2012 = vector.broadcast %2011 : f32 to vector<16x16xf32>
    %2013 = arith.mulf %2012, %1986 : vector<16x16xf32>
    %2014 = arith.addf %1980, %2013 : vector<16x16xf32>
    %c157_291 = arith.constant 157 : index
    %2015 = memref.load %arg1[%c157_291] : memref<288xf32, #tpu.memory_space<smem>>
    %2016 = vector.broadcast %2015 : f32 to vector<16x16xf32>
    %2017 = arith.mulf %2016, %1986 : vector<16x16xf32>
    %2018 = arith.addf %1984, %2017 : vector<16x16xf32>
    %2019 = vector.extract_strided_slice %1950 {offsets = [2, 0, 0], sizes = [1, 16, 16], strides = [1, 1, 1]} : vector<4x16x16xf32> to vector<1x16x16xf32>
    %2020 = vector.shape_cast %2019 : vector<1x16x16xf32> to vector<16x16xf32>
    %c130_292 = arith.constant 130 : index
    %2021 = memref.load %arg1[%c130_292] : memref<288xf32, #tpu.memory_space<smem>>
    %2022 = vector.broadcast %2021 : f32 to vector<16x16xf32>
    %2023 = arith.mulf %2022, %2020 : vector<16x16xf32>
    %2024 = arith.addf %1990, %2023 : vector<16x16xf32>
    %c134_293 = arith.constant 134 : index
    %2025 = memref.load %arg1[%c134_293] : memref<288xf32, #tpu.memory_space<smem>>
    %2026 = vector.broadcast %2025 : f32 to vector<16x16xf32>
    %2027 = arith.mulf %2026, %2020 : vector<16x16xf32>
    %2028 = arith.addf %1994, %2027 : vector<16x16xf32>
    %c138_294 = arith.constant 138 : index
    %2029 = memref.load %arg1[%c138_294] : memref<288xf32, #tpu.memory_space<smem>>
    %2030 = vector.broadcast %2029 : f32 to vector<16x16xf32>
    %2031 = arith.mulf %2030, %2020 : vector<16x16xf32>
    %2032 = arith.addf %1998, %2031 : vector<16x16xf32>
    %c142_295 = arith.constant 142 : index
    %2033 = memref.load %arg1[%c142_295] : memref<288xf32, #tpu.memory_space<smem>>
    %2034 = vector.broadcast %2033 : f32 to vector<16x16xf32>
    %2035 = arith.mulf %2034, %2020 : vector<16x16xf32>
    %2036 = arith.addf %2002, %2035 : vector<16x16xf32>
    %c146_296 = arith.constant 146 : index
    %2037 = memref.load %arg1[%c146_296] : memref<288xf32, #tpu.memory_space<smem>>
    %2038 = vector.broadcast %2037 : f32 to vector<16x16xf32>
    %2039 = arith.mulf %2038, %2020 : vector<16x16xf32>
    %2040 = arith.addf %2006, %2039 : vector<16x16xf32>
    %c150_297 = arith.constant 150 : index
    %2041 = memref.load %arg1[%c150_297] : memref<288xf32, #tpu.memory_space<smem>>
    %2042 = vector.broadcast %2041 : f32 to vector<16x16xf32>
    %2043 = arith.mulf %2042, %2020 : vector<16x16xf32>
    %2044 = arith.addf %2010, %2043 : vector<16x16xf32>
    %c154_298 = arith.constant 154 : index
    %2045 = memref.load %arg1[%c154_298] : memref<288xf32, #tpu.memory_space<smem>>
    %2046 = vector.broadcast %2045 : f32 to vector<16x16xf32>
    %2047 = arith.mulf %2046, %2020 : vector<16x16xf32>
    %2048 = arith.addf %2014, %2047 : vector<16x16xf32>
    %c158_299 = arith.constant 158 : index
    %2049 = memref.load %arg1[%c158_299] : memref<288xf32, #tpu.memory_space<smem>>
    %2050 = vector.broadcast %2049 : f32 to vector<16x16xf32>
    %2051 = arith.mulf %2050, %2020 : vector<16x16xf32>
    %2052 = arith.addf %2018, %2051 : vector<16x16xf32>
    %2053 = vector.extract_strided_slice %1950 {offsets = [3, 0, 0], sizes = [1, 16, 16], strides = [1, 1, 1]} : vector<4x16x16xf32> to vector<1x16x16xf32>
    %2054 = vector.shape_cast %2053 : vector<1x16x16xf32> to vector<16x16xf32>
    %c131_300 = arith.constant 131 : index
    %2055 = memref.load %arg1[%c131_300] : memref<288xf32, #tpu.memory_space<smem>>
    %2056 = vector.broadcast %2055 : f32 to vector<16x16xf32>
    %2057 = arith.mulf %2056, %2054 : vector<16x16xf32>
    %2058 = arith.addf %2024, %2057 : vector<16x16xf32>
    %c135_301 = arith.constant 135 : index
    %2059 = memref.load %arg1[%c135_301] : memref<288xf32, #tpu.memory_space<smem>>
    %2060 = vector.broadcast %2059 : f32 to vector<16x16xf32>
    %2061 = arith.mulf %2060, %2054 : vector<16x16xf32>
    %2062 = arith.addf %2028, %2061 : vector<16x16xf32>
    %c139_302 = arith.constant 139 : index
    %2063 = memref.load %arg1[%c139_302] : memref<288xf32, #tpu.memory_space<smem>>
    %2064 = vector.broadcast %2063 : f32 to vector<16x16xf32>
    %2065 = arith.mulf %2064, %2054 : vector<16x16xf32>
    %2066 = arith.addf %2032, %2065 : vector<16x16xf32>
    %c143_303 = arith.constant 143 : index
    %2067 = memref.load %arg1[%c143_303] : memref<288xf32, #tpu.memory_space<smem>>
    %2068 = vector.broadcast %2067 : f32 to vector<16x16xf32>
    %2069 = arith.mulf %2068, %2054 : vector<16x16xf32>
    %2070 = arith.addf %2036, %2069 : vector<16x16xf32>
    %c147_304 = arith.constant 147 : index
    %2071 = memref.load %arg1[%c147_304] : memref<288xf32, #tpu.memory_space<smem>>
    %2072 = vector.broadcast %2071 : f32 to vector<16x16xf32>
    %2073 = arith.mulf %2072, %2054 : vector<16x16xf32>
    %2074 = arith.addf %2040, %2073 : vector<16x16xf32>
    %c151_305 = arith.constant 151 : index
    %2075 = memref.load %arg1[%c151_305] : memref<288xf32, #tpu.memory_space<smem>>
    %2076 = vector.broadcast %2075 : f32 to vector<16x16xf32>
    %2077 = arith.mulf %2076, %2054 : vector<16x16xf32>
    %2078 = arith.addf %2044, %2077 : vector<16x16xf32>
    %c155_306 = arith.constant 155 : index
    %2079 = memref.load %arg1[%c155_306] : memref<288xf32, #tpu.memory_space<smem>>
    %2080 = vector.broadcast %2079 : f32 to vector<16x16xf32>
    %2081 = arith.mulf %2080, %2054 : vector<16x16xf32>
    %2082 = arith.addf %2048, %2081 : vector<16x16xf32>
    %c159_307 = arith.constant 159 : index
    %2083 = memref.load %arg1[%c159_307] : memref<288xf32, #tpu.memory_space<smem>>
    %2084 = vector.broadcast %2083 : f32 to vector<16x16xf32>
    %2085 = arith.mulf %2084, %2054 : vector<16x16xf32>
    %2086 = arith.addf %2052, %2085 : vector<16x16xf32>
    %2087 = vector.extract_strided_slice %1812 {offsets = [0, 0, 2], sizes = [4, 16, 16], strides = [1, 1, 1]} : vector<4x16x18xf32> to vector<4x16x16xf32>
    %2088 = vector.extract_strided_slice %2087 {offsets = [0, 0, 0], sizes = [1, 16, 16], strides = [1, 1, 1]} : vector<4x16x16xf32> to vector<1x16x16xf32>
    %2089 = vector.shape_cast %2088 : vector<1x16x16xf32> to vector<16x16xf32>
    %c160_308 = arith.constant 160 : index
    %2090 = memref.load %arg1[%c160_308] : memref<288xf32, #tpu.memory_space<smem>>
    %2091 = vector.broadcast %2090 : f32 to vector<16x16xf32>
    %2092 = arith.mulf %2091, %2089 : vector<16x16xf32>
    %2093 = arith.addf %2058, %2092 : vector<16x16xf32>
    %c164_309 = arith.constant 164 : index
    %2094 = memref.load %arg1[%c164_309] : memref<288xf32, #tpu.memory_space<smem>>
    %2095 = vector.broadcast %2094 : f32 to vector<16x16xf32>
    %2096 = arith.mulf %2095, %2089 : vector<16x16xf32>
    %2097 = arith.addf %2062, %2096 : vector<16x16xf32>
    %c168_310 = arith.constant 168 : index
    %2098 = memref.load %arg1[%c168_310] : memref<288xf32, #tpu.memory_space<smem>>
    %2099 = vector.broadcast %2098 : f32 to vector<16x16xf32>
    %2100 = arith.mulf %2099, %2089 : vector<16x16xf32>
    %2101 = arith.addf %2066, %2100 : vector<16x16xf32>
    %c172_311 = arith.constant 172 : index
    %2102 = memref.load %arg1[%c172_311] : memref<288xf32, #tpu.memory_space<smem>>
    %2103 = vector.broadcast %2102 : f32 to vector<16x16xf32>
    %2104 = arith.mulf %2103, %2089 : vector<16x16xf32>
    %2105 = arith.addf %2070, %2104 : vector<16x16xf32>
    %c176_312 = arith.constant 176 : index
    %2106 = memref.load %arg1[%c176_312] : memref<288xf32, #tpu.memory_space<smem>>
    %2107 = vector.broadcast %2106 : f32 to vector<16x16xf32>
    %2108 = arith.mulf %2107, %2089 : vector<16x16xf32>
    %2109 = arith.addf %2074, %2108 : vector<16x16xf32>
    %c180_313 = arith.constant 180 : index
    %2110 = memref.load %arg1[%c180_313] : memref<288xf32, #tpu.memory_space<smem>>
    %2111 = vector.broadcast %2110 : f32 to vector<16x16xf32>
    %2112 = arith.mulf %2111, %2089 : vector<16x16xf32>
    %2113 = arith.addf %2078, %2112 : vector<16x16xf32>
    %c184_314 = arith.constant 184 : index
    %2114 = memref.load %arg1[%c184_314] : memref<288xf32, #tpu.memory_space<smem>>
    %2115 = vector.broadcast %2114 : f32 to vector<16x16xf32>
    %2116 = arith.mulf %2115, %2089 : vector<16x16xf32>
    %2117 = arith.addf %2082, %2116 : vector<16x16xf32>
    %c188_315 = arith.constant 188 : index
    %2118 = memref.load %arg1[%c188_315] : memref<288xf32, #tpu.memory_space<smem>>
    %2119 = vector.broadcast %2118 : f32 to vector<16x16xf32>
    %2120 = arith.mulf %2119, %2089 : vector<16x16xf32>
    %2121 = arith.addf %2086, %2120 : vector<16x16xf32>
    %2122 = vector.extract_strided_slice %2087 {offsets = [1, 0, 0], sizes = [1, 16, 16], strides = [1, 1, 1]} : vector<4x16x16xf32> to vector<1x16x16xf32>
    %2123 = vector.shape_cast %2122 : vector<1x16x16xf32> to vector<16x16xf32>
    %c161_316 = arith.constant 161 : index
    %2124 = memref.load %arg1[%c161_316] : memref<288xf32, #tpu.memory_space<smem>>
    %2125 = vector.broadcast %2124 : f32 to vector<16x16xf32>
    %2126 = arith.mulf %2125, %2123 : vector<16x16xf32>
    %2127 = arith.addf %2093, %2126 : vector<16x16xf32>
    %c165_317 = arith.constant 165 : index
    %2128 = memref.load %arg1[%c165_317] : memref<288xf32, #tpu.memory_space<smem>>
    %2129 = vector.broadcast %2128 : f32 to vector<16x16xf32>
    %2130 = arith.mulf %2129, %2123 : vector<16x16xf32>
    %2131 = arith.addf %2097, %2130 : vector<16x16xf32>
    %c169_318 = arith.constant 169 : index
    %2132 = memref.load %arg1[%c169_318] : memref<288xf32, #tpu.memory_space<smem>>
    %2133 = vector.broadcast %2132 : f32 to vector<16x16xf32>
    %2134 = arith.mulf %2133, %2123 : vector<16x16xf32>
    %2135 = arith.addf %2101, %2134 : vector<16x16xf32>
    %c173_319 = arith.constant 173 : index
    %2136 = memref.load %arg1[%c173_319] : memref<288xf32, #tpu.memory_space<smem>>
    %2137 = vector.broadcast %2136 : f32 to vector<16x16xf32>
    %2138 = arith.mulf %2137, %2123 : vector<16x16xf32>
    %2139 = arith.addf %2105, %2138 : vector<16x16xf32>
    %c177_320 = arith.constant 177 : index
    %2140 = memref.load %arg1[%c177_320] : memref<288xf32, #tpu.memory_space<smem>>
    %2141 = vector.broadcast %2140 : f32 to vector<16x16xf32>
    %2142 = arith.mulf %2141, %2123 : vector<16x16xf32>
    %2143 = arith.addf %2109, %2142 : vector<16x16xf32>
    %c181_321 = arith.constant 181 : index
    %2144 = memref.load %arg1[%c181_321] : memref<288xf32, #tpu.memory_space<smem>>
    %2145 = vector.broadcast %2144 : f32 to vector<16x16xf32>
    %2146 = arith.mulf %2145, %2123 : vector<16x16xf32>
    %2147 = arith.addf %2113, %2146 : vector<16x16xf32>
    %c185_322 = arith.constant 185 : index
    %2148 = memref.load %arg1[%c185_322] : memref<288xf32, #tpu.memory_space<smem>>
    %2149 = vector.broadcast %2148 : f32 to vector<16x16xf32>
    %2150 = arith.mulf %2149, %2123 : vector<16x16xf32>
    %2151 = arith.addf %2117, %2150 : vector<16x16xf32>
    %c189_323 = arith.constant 189 : index
    %2152 = memref.load %arg1[%c189_323] : memref<288xf32, #tpu.memory_space<smem>>
    %2153 = vector.broadcast %2152 : f32 to vector<16x16xf32>
    %2154 = arith.mulf %2153, %2123 : vector<16x16xf32>
    %2155 = arith.addf %2121, %2154 : vector<16x16xf32>
    %2156 = vector.extract_strided_slice %2087 {offsets = [2, 0, 0], sizes = [1, 16, 16], strides = [1, 1, 1]} : vector<4x16x16xf32> to vector<1x16x16xf32>
    %2157 = vector.shape_cast %2156 : vector<1x16x16xf32> to vector<16x16xf32>
    %c162_324 = arith.constant 162 : index
    %2158 = memref.load %arg1[%c162_324] : memref<288xf32, #tpu.memory_space<smem>>
    %2159 = vector.broadcast %2158 : f32 to vector<16x16xf32>
    %2160 = arith.mulf %2159, %2157 : vector<16x16xf32>
    %2161 = arith.addf %2127, %2160 : vector<16x16xf32>
    %c166_325 = arith.constant 166 : index
    %2162 = memref.load %arg1[%c166_325] : memref<288xf32, #tpu.memory_space<smem>>
    %2163 = vector.broadcast %2162 : f32 to vector<16x16xf32>
    %2164 = arith.mulf %2163, %2157 : vector<16x16xf32>
    %2165 = arith.addf %2131, %2164 : vector<16x16xf32>
    %c170_326 = arith.constant 170 : index
    %2166 = memref.load %arg1[%c170_326] : memref<288xf32, #tpu.memory_space<smem>>
    %2167 = vector.broadcast %2166 : f32 to vector<16x16xf32>
    %2168 = arith.mulf %2167, %2157 : vector<16x16xf32>
    %2169 = arith.addf %2135, %2168 : vector<16x16xf32>
    %c174_327 = arith.constant 174 : index
    %2170 = memref.load %arg1[%c174_327] : memref<288xf32, #tpu.memory_space<smem>>
    %2171 = vector.broadcast %2170 : f32 to vector<16x16xf32>
    %2172 = arith.mulf %2171, %2157 : vector<16x16xf32>
    %2173 = arith.addf %2139, %2172 : vector<16x16xf32>
    %c178_328 = arith.constant 178 : index
    %2174 = memref.load %arg1[%c178_328] : memref<288xf32, #tpu.memory_space<smem>>
    %2175 = vector.broadcast %2174 : f32 to vector<16x16xf32>
    %2176 = arith.mulf %2175, %2157 : vector<16x16xf32>
    %2177 = arith.addf %2143, %2176 : vector<16x16xf32>
    %c182_329 = arith.constant 182 : index
    %2178 = memref.load %arg1[%c182_329] : memref<288xf32, #tpu.memory_space<smem>>
    %2179 = vector.broadcast %2178 : f32 to vector<16x16xf32>
    %2180 = arith.mulf %2179, %2157 : vector<16x16xf32>
    %2181 = arith.addf %2147, %2180 : vector<16x16xf32>
    %c186_330 = arith.constant 186 : index
    %2182 = memref.load %arg1[%c186_330] : memref<288xf32, #tpu.memory_space<smem>>
    %2183 = vector.broadcast %2182 : f32 to vector<16x16xf32>
    %2184 = arith.mulf %2183, %2157 : vector<16x16xf32>
    %2185 = arith.addf %2151, %2184 : vector<16x16xf32>
    %c190_331 = arith.constant 190 : index
    %2186 = memref.load %arg1[%c190_331] : memref<288xf32, #tpu.memory_space<smem>>
    %2187 = vector.broadcast %2186 : f32 to vector<16x16xf32>
    %2188 = arith.mulf %2187, %2157 : vector<16x16xf32>
    %2189 = arith.addf %2155, %2188 : vector<16x16xf32>
    %2190 = vector.extract_strided_slice %2087 {offsets = [3, 0, 0], sizes = [1, 16, 16], strides = [1, 1, 1]} : vector<4x16x16xf32> to vector<1x16x16xf32>
    %2191 = vector.shape_cast %2190 : vector<1x16x16xf32> to vector<16x16xf32>
    %c163_332 = arith.constant 163 : index
    %2192 = memref.load %arg1[%c163_332] : memref<288xf32, #tpu.memory_space<smem>>
    %2193 = vector.broadcast %2192 : f32 to vector<16x16xf32>
    %2194 = arith.mulf %2193, %2191 : vector<16x16xf32>
    %2195 = arith.addf %2161, %2194 : vector<16x16xf32>
    %c167_333 = arith.constant 167 : index
    %2196 = memref.load %arg1[%c167_333] : memref<288xf32, #tpu.memory_space<smem>>
    %2197 = vector.broadcast %2196 : f32 to vector<16x16xf32>
    %2198 = arith.mulf %2197, %2191 : vector<16x16xf32>
    %2199 = arith.addf %2165, %2198 : vector<16x16xf32>
    %c171_334 = arith.constant 171 : index
    %2200 = memref.load %arg1[%c171_334] : memref<288xf32, #tpu.memory_space<smem>>
    %2201 = vector.broadcast %2200 : f32 to vector<16x16xf32>
    %2202 = arith.mulf %2201, %2191 : vector<16x16xf32>
    %2203 = arith.addf %2169, %2202 : vector<16x16xf32>
    %c175_335 = arith.constant 175 : index
    %2204 = memref.load %arg1[%c175_335] : memref<288xf32, #tpu.memory_space<smem>>
    %2205 = vector.broadcast %2204 : f32 to vector<16x16xf32>
    %2206 = arith.mulf %2205, %2191 : vector<16x16xf32>
    %2207 = arith.addf %2173, %2206 : vector<16x16xf32>
    %c179_336 = arith.constant 179 : index
    %2208 = memref.load %arg1[%c179_336] : memref<288xf32, #tpu.memory_space<smem>>
    %2209 = vector.broadcast %2208 : f32 to vector<16x16xf32>
    %2210 = arith.mulf %2209, %2191 : vector<16x16xf32>
    %2211 = arith.addf %2177, %2210 : vector<16x16xf32>
    %c183_337 = arith.constant 183 : index
    %2212 = memref.load %arg1[%c183_337] : memref<288xf32, #tpu.memory_space<smem>>
    %2213 = vector.broadcast %2212 : f32 to vector<16x16xf32>
    %2214 = arith.mulf %2213, %2191 : vector<16x16xf32>
    %2215 = arith.addf %2181, %2214 : vector<16x16xf32>
    %c187_338 = arith.constant 187 : index
    %2216 = memref.load %arg1[%c187_338] : memref<288xf32, #tpu.memory_space<smem>>
    %2217 = vector.broadcast %2216 : f32 to vector<16x16xf32>
    %2218 = arith.mulf %2217, %2191 : vector<16x16xf32>
    %2219 = arith.addf %2185, %2218 : vector<16x16xf32>
    %c191_339 = arith.constant 191 : index
    %2220 = memref.load %arg1[%c191_339] : memref<288xf32, #tpu.memory_space<smem>>
    %2221 = vector.broadcast %2220 : f32 to vector<16x16xf32>
    %2222 = arith.mulf %2221, %2191 : vector<16x16xf32>
    %2223 = arith.addf %2189, %2222 : vector<16x16xf32>
    %c0_340 = arith.constant 0 : index
    %c2_341 = arith.constant 2 : index
    %c0_342 = arith.constant 0 : index
    %2224 = vector.load %arg6[%c0_340, %c2_341, %c0_342] : memref<4x18x18xf32, #tpu.memory_space<vmem>>, vector<4x16x18xf32>
    %2225 = vector.extract_strided_slice %2224 {offsets = [0, 0, 0], sizes = [4, 16, 16], strides = [1, 1, 1]} : vector<4x16x18xf32> to vector<4x16x16xf32>
    %2226 = vector.extract_strided_slice %2225 {offsets = [0, 0, 0], sizes = [1, 16, 16], strides = [1, 1, 1]} : vector<4x16x16xf32> to vector<1x16x16xf32>
    %2227 = vector.shape_cast %2226 : vector<1x16x16xf32> to vector<16x16xf32>
    %c192_343 = arith.constant 192 : index
    %2228 = memref.load %arg1[%c192_343] : memref<288xf32, #tpu.memory_space<smem>>
    %2229 = vector.broadcast %2228 : f32 to vector<16x16xf32>
    %2230 = arith.mulf %2229, %2227 : vector<16x16xf32>
    %2231 = arith.addf %2195, %2230 : vector<16x16xf32>
    %c196_344 = arith.constant 196 : index
    %2232 = memref.load %arg1[%c196_344] : memref<288xf32, #tpu.memory_space<smem>>
    %2233 = vector.broadcast %2232 : f32 to vector<16x16xf32>
    %2234 = arith.mulf %2233, %2227 : vector<16x16xf32>
    %2235 = arith.addf %2199, %2234 : vector<16x16xf32>
    %c200_345 = arith.constant 200 : index
    %2236 = memref.load %arg1[%c200_345] : memref<288xf32, #tpu.memory_space<smem>>
    %2237 = vector.broadcast %2236 : f32 to vector<16x16xf32>
    %2238 = arith.mulf %2237, %2227 : vector<16x16xf32>
    %2239 = arith.addf %2203, %2238 : vector<16x16xf32>
    %c204_346 = arith.constant 204 : index
    %2240 = memref.load %arg1[%c204_346] : memref<288xf32, #tpu.memory_space<smem>>
    %2241 = vector.broadcast %2240 : f32 to vector<16x16xf32>
    %2242 = arith.mulf %2241, %2227 : vector<16x16xf32>
    %2243 = arith.addf %2207, %2242 : vector<16x16xf32>
    %c208_347 = arith.constant 208 : index
    %2244 = memref.load %arg1[%c208_347] : memref<288xf32, #tpu.memory_space<smem>>
    %2245 = vector.broadcast %2244 : f32 to vector<16x16xf32>
    %2246 = arith.mulf %2245, %2227 : vector<16x16xf32>
    %2247 = arith.addf %2211, %2246 : vector<16x16xf32>
    %c212_348 = arith.constant 212 : index
    %2248 = memref.load %arg1[%c212_348] : memref<288xf32, #tpu.memory_space<smem>>
    %2249 = vector.broadcast %2248 : f32 to vector<16x16xf32>
    %2250 = arith.mulf %2249, %2227 : vector<16x16xf32>
    %2251 = arith.addf %2215, %2250 : vector<16x16xf32>
    %c216_349 = arith.constant 216 : index
    %2252 = memref.load %arg1[%c216_349] : memref<288xf32, #tpu.memory_space<smem>>
    %2253 = vector.broadcast %2252 : f32 to vector<16x16xf32>
    %2254 = arith.mulf %2253, %2227 : vector<16x16xf32>
    %2255 = arith.addf %2219, %2254 : vector<16x16xf32>
    %c220_350 = arith.constant 220 : index
    %2256 = memref.load %arg1[%c220_350] : memref<288xf32, #tpu.memory_space<smem>>
    %2257 = vector.broadcast %2256 : f32 to vector<16x16xf32>
    %2258 = arith.mulf %2257, %2227 : vector<16x16xf32>
    %2259 = arith.addf %2223, %2258 : vector<16x16xf32>
    %2260 = vector.extract_strided_slice %2225 {offsets = [1, 0, 0], sizes = [1, 16, 16], strides = [1, 1, 1]} : vector<4x16x16xf32> to vector<1x16x16xf32>
    %2261 = vector.shape_cast %2260 : vector<1x16x16xf32> to vector<16x16xf32>
    %c193_351 = arith.constant 193 : index
    %2262 = memref.load %arg1[%c193_351] : memref<288xf32, #tpu.memory_space<smem>>
    %2263 = vector.broadcast %2262 : f32 to vector<16x16xf32>
    %2264 = arith.mulf %2263, %2261 : vector<16x16xf32>
    %2265 = arith.addf %2231, %2264 : vector<16x16xf32>
    %c197_352 = arith.constant 197 : index
    %2266 = memref.load %arg1[%c197_352] : memref<288xf32, #tpu.memory_space<smem>>
    %2267 = vector.broadcast %2266 : f32 to vector<16x16xf32>
    %2268 = arith.mulf %2267, %2261 : vector<16x16xf32>
    %2269 = arith.addf %2235, %2268 : vector<16x16xf32>
    %c201_353 = arith.constant 201 : index
    %2270 = memref.load %arg1[%c201_353] : memref<288xf32, #tpu.memory_space<smem>>
    %2271 = vector.broadcast %2270 : f32 to vector<16x16xf32>
    %2272 = arith.mulf %2271, %2261 : vector<16x16xf32>
    %2273 = arith.addf %2239, %2272 : vector<16x16xf32>
    %c205_354 = arith.constant 205 : index
    %2274 = memref.load %arg1[%c205_354] : memref<288xf32, #tpu.memory_space<smem>>
    %2275 = vector.broadcast %2274 : f32 to vector<16x16xf32>
    %2276 = arith.mulf %2275, %2261 : vector<16x16xf32>
    %2277 = arith.addf %2243, %2276 : vector<16x16xf32>
    %c209_355 = arith.constant 209 : index
    %2278 = memref.load %arg1[%c209_355] : memref<288xf32, #tpu.memory_space<smem>>
    %2279 = vector.broadcast %2278 : f32 to vector<16x16xf32>
    %2280 = arith.mulf %2279, %2261 : vector<16x16xf32>
    %2281 = arith.addf %2247, %2280 : vector<16x16xf32>
    %c213_356 = arith.constant 213 : index
    %2282 = memref.load %arg1[%c213_356] : memref<288xf32, #tpu.memory_space<smem>>
    %2283 = vector.broadcast %2282 : f32 to vector<16x16xf32>
    %2284 = arith.mulf %2283, %2261 : vector<16x16xf32>
    %2285 = arith.addf %2251, %2284 : vector<16x16xf32>
    %c217_357 = arith.constant 217 : index
    %2286 = memref.load %arg1[%c217_357] : memref<288xf32, #tpu.memory_space<smem>>
    %2287 = vector.broadcast %2286 : f32 to vector<16x16xf32>
    %2288 = arith.mulf %2287, %2261 : vector<16x16xf32>
    %2289 = arith.addf %2255, %2288 : vector<16x16xf32>
    %c221_358 = arith.constant 221 : index
    %2290 = memref.load %arg1[%c221_358] : memref<288xf32, #tpu.memory_space<smem>>
    %2291 = vector.broadcast %2290 : f32 to vector<16x16xf32>
    %2292 = arith.mulf %2291, %2261 : vector<16x16xf32>
    %2293 = arith.addf %2259, %2292 : vector<16x16xf32>
    %2294 = vector.extract_strided_slice %2225 {offsets = [2, 0, 0], sizes = [1, 16, 16], strides = [1, 1, 1]} : vector<4x16x16xf32> to vector<1x16x16xf32>
    %2295 = vector.shape_cast %2294 : vector<1x16x16xf32> to vector<16x16xf32>
    %c194_359 = arith.constant 194 : index
    %2296 = memref.load %arg1[%c194_359] : memref<288xf32, #tpu.memory_space<smem>>
    %2297 = vector.broadcast %2296 : f32 to vector<16x16xf32>
    %2298 = arith.mulf %2297, %2295 : vector<16x16xf32>
    %2299 = arith.addf %2265, %2298 : vector<16x16xf32>
    %c198_360 = arith.constant 198 : index
    %2300 = memref.load %arg1[%c198_360] : memref<288xf32, #tpu.memory_space<smem>>
    %2301 = vector.broadcast %2300 : f32 to vector<16x16xf32>
    %2302 = arith.mulf %2301, %2295 : vector<16x16xf32>
    %2303 = arith.addf %2269, %2302 : vector<16x16xf32>
    %c202_361 = arith.constant 202 : index
    %2304 = memref.load %arg1[%c202_361] : memref<288xf32, #tpu.memory_space<smem>>
    %2305 = vector.broadcast %2304 : f32 to vector<16x16xf32>
    %2306 = arith.mulf %2305, %2295 : vector<16x16xf32>
    %2307 = arith.addf %2273, %2306 : vector<16x16xf32>
    %c206_362 = arith.constant 206 : index
    %2308 = memref.load %arg1[%c206_362] : memref<288xf32, #tpu.memory_space<smem>>
    %2309 = vector.broadcast %2308 : f32 to vector<16x16xf32>
    %2310 = arith.mulf %2309, %2295 : vector<16x16xf32>
    %2311 = arith.addf %2277, %2310 : vector<16x16xf32>
    %c210_363 = arith.constant 210 : index
    %2312 = memref.load %arg1[%c210_363] : memref<288xf32, #tpu.memory_space<smem>>
    %2313 = vector.broadcast %2312 : f32 to vector<16x16xf32>
    %2314 = arith.mulf %2313, %2295 : vector<16x16xf32>
    %2315 = arith.addf %2281, %2314 : vector<16x16xf32>
    %c214_364 = arith.constant 214 : index
    %2316 = memref.load %arg1[%c214_364] : memref<288xf32, #tpu.memory_space<smem>>
    %2317 = vector.broadcast %2316 : f32 to vector<16x16xf32>
    %2318 = arith.mulf %2317, %2295 : vector<16x16xf32>
    %2319 = arith.addf %2285, %2318 : vector<16x16xf32>
    %c218_365 = arith.constant 218 : index
    %2320 = memref.load %arg1[%c218_365] : memref<288xf32, #tpu.memory_space<smem>>
    %2321 = vector.broadcast %2320 : f32 to vector<16x16xf32>
    %2322 = arith.mulf %2321, %2295 : vector<16x16xf32>
    %2323 = arith.addf %2289, %2322 : vector<16x16xf32>
    %c222_366 = arith.constant 222 : index
    %2324 = memref.load %arg1[%c222_366] : memref<288xf32, #tpu.memory_space<smem>>
    %2325 = vector.broadcast %2324 : f32 to vector<16x16xf32>
    %2326 = arith.mulf %2325, %2295 : vector<16x16xf32>
    %2327 = arith.addf %2293, %2326 : vector<16x16xf32>
    %2328 = vector.extract_strided_slice %2225 {offsets = [3, 0, 0], sizes = [1, 16, 16], strides = [1, 1, 1]} : vector<4x16x16xf32> to vector<1x16x16xf32>
    %2329 = vector.shape_cast %2328 : vector<1x16x16xf32> to vector<16x16xf32>
    %c195_367 = arith.constant 195 : index
    %2330 = memref.load %arg1[%c195_367] : memref<288xf32, #tpu.memory_space<smem>>
    %2331 = vector.broadcast %2330 : f32 to vector<16x16xf32>
    %2332 = arith.mulf %2331, %2329 : vector<16x16xf32>
    %2333 = arith.addf %2299, %2332 : vector<16x16xf32>
    %c199_368 = arith.constant 199 : index
    %2334 = memref.load %arg1[%c199_368] : memref<288xf32, #tpu.memory_space<smem>>
    %2335 = vector.broadcast %2334 : f32 to vector<16x16xf32>
    %2336 = arith.mulf %2335, %2329 : vector<16x16xf32>
    %2337 = arith.addf %2303, %2336 : vector<16x16xf32>
    %c203_369 = arith.constant 203 : index
    %2338 = memref.load %arg1[%c203_369] : memref<288xf32, #tpu.memory_space<smem>>
    %2339 = vector.broadcast %2338 : f32 to vector<16x16xf32>
    %2340 = arith.mulf %2339, %2329 : vector<16x16xf32>
    %2341 = arith.addf %2307, %2340 : vector<16x16xf32>
    %c207_370 = arith.constant 207 : index
    %2342 = memref.load %arg1[%c207_370] : memref<288xf32, #tpu.memory_space<smem>>
    %2343 = vector.broadcast %2342 : f32 to vector<16x16xf32>
    %2344 = arith.mulf %2343, %2329 : vector<16x16xf32>
    %2345 = arith.addf %2311, %2344 : vector<16x16xf32>
    %c211_371 = arith.constant 211 : index
    %2346 = memref.load %arg1[%c211_371] : memref<288xf32, #tpu.memory_space<smem>>
    %2347 = vector.broadcast %2346 : f32 to vector<16x16xf32>
    %2348 = arith.mulf %2347, %2329 : vector<16x16xf32>
    %2349 = arith.addf %2315, %2348 : vector<16x16xf32>
    %c215_372 = arith.constant 215 : index
    %2350 = memref.load %arg1[%c215_372] : memref<288xf32, #tpu.memory_space<smem>>
    %2351 = vector.broadcast %2350 : f32 to vector<16x16xf32>
    %2352 = arith.mulf %2351, %2329 : vector<16x16xf32>
    %2353 = arith.addf %2319, %2352 : vector<16x16xf32>
    %c219_373 = arith.constant 219 : index
    %2354 = memref.load %arg1[%c219_373] : memref<288xf32, #tpu.memory_space<smem>>
    %2355 = vector.broadcast %2354 : f32 to vector<16x16xf32>
    %2356 = arith.mulf %2355, %2329 : vector<16x16xf32>
    %2357 = arith.addf %2323, %2356 : vector<16x16xf32>
    %c223_374 = arith.constant 223 : index
    %2358 = memref.load %arg1[%c223_374] : memref<288xf32, #tpu.memory_space<smem>>
    %2359 = vector.broadcast %2358 : f32 to vector<16x16xf32>
    %2360 = arith.mulf %2359, %2329 : vector<16x16xf32>
    %2361 = arith.addf %2327, %2360 : vector<16x16xf32>
    %2362 = vector.extract_strided_slice %2224 {offsets = [0, 0, 1], sizes = [4, 16, 16], strides = [1, 1, 1]} : vector<4x16x18xf32> to vector<4x16x16xf32>
    %2363 = vector.extract_strided_slice %2362 {offsets = [0, 0, 0], sizes = [1, 16, 16], strides = [1, 1, 1]} : vector<4x16x16xf32> to vector<1x16x16xf32>
    %2364 = vector.shape_cast %2363 : vector<1x16x16xf32> to vector<16x16xf32>
    %c224_375 = arith.constant 224 : index
    %2365 = memref.load %arg1[%c224_375] : memref<288xf32, #tpu.memory_space<smem>>
    %2366 = vector.broadcast %2365 : f32 to vector<16x16xf32>
    %2367 = arith.mulf %2366, %2364 : vector<16x16xf32>
    %2368 = arith.addf %2333, %2367 : vector<16x16xf32>
    %c228_376 = arith.constant 228 : index
    %2369 = memref.load %arg1[%c228_376] : memref<288xf32, #tpu.memory_space<smem>>
    %2370 = vector.broadcast %2369 : f32 to vector<16x16xf32>
    %2371 = arith.mulf %2370, %2364 : vector<16x16xf32>
    %2372 = arith.addf %2337, %2371 : vector<16x16xf32>
    %c232_377 = arith.constant 232 : index
    %2373 = memref.load %arg1[%c232_377] : memref<288xf32, #tpu.memory_space<smem>>
    %2374 = vector.broadcast %2373 : f32 to vector<16x16xf32>
    %2375 = arith.mulf %2374, %2364 : vector<16x16xf32>
    %2376 = arith.addf %2341, %2375 : vector<16x16xf32>
    %c236_378 = arith.constant 236 : index
    %2377 = memref.load %arg1[%c236_378] : memref<288xf32, #tpu.memory_space<smem>>
    %2378 = vector.broadcast %2377 : f32 to vector<16x16xf32>
    %2379 = arith.mulf %2378, %2364 : vector<16x16xf32>
    %2380 = arith.addf %2345, %2379 : vector<16x16xf32>
    %c240_379 = arith.constant 240 : index
    %2381 = memref.load %arg1[%c240_379] : memref<288xf32, #tpu.memory_space<smem>>
    %2382 = vector.broadcast %2381 : f32 to vector<16x16xf32>
    %2383 = arith.mulf %2382, %2364 : vector<16x16xf32>
    %2384 = arith.addf %2349, %2383 : vector<16x16xf32>
    %c244_380 = arith.constant 244 : index
    %2385 = memref.load %arg1[%c244_380] : memref<288xf32, #tpu.memory_space<smem>>
    %2386 = vector.broadcast %2385 : f32 to vector<16x16xf32>
    %2387 = arith.mulf %2386, %2364 : vector<16x16xf32>
    %2388 = arith.addf %2353, %2387 : vector<16x16xf32>
    %c248_381 = arith.constant 248 : index
    %2389 = memref.load %arg1[%c248_381] : memref<288xf32, #tpu.memory_space<smem>>
    %2390 = vector.broadcast %2389 : f32 to vector<16x16xf32>
    %2391 = arith.mulf %2390, %2364 : vector<16x16xf32>
    %2392 = arith.addf %2357, %2391 : vector<16x16xf32>
    %c252_382 = arith.constant 252 : index
    %2393 = memref.load %arg1[%c252_382] : memref<288xf32, #tpu.memory_space<smem>>
    %2394 = vector.broadcast %2393 : f32 to vector<16x16xf32>
    %2395 = arith.mulf %2394, %2364 : vector<16x16xf32>
    %2396 = arith.addf %2361, %2395 : vector<16x16xf32>
    %2397 = vector.extract_strided_slice %2362 {offsets = [1, 0, 0], sizes = [1, 16, 16], strides = [1, 1, 1]} : vector<4x16x16xf32> to vector<1x16x16xf32>
    %2398 = vector.shape_cast %2397 : vector<1x16x16xf32> to vector<16x16xf32>
    %c225_383 = arith.constant 225 : index
    %2399 = memref.load %arg1[%c225_383] : memref<288xf32, #tpu.memory_space<smem>>
    %2400 = vector.broadcast %2399 : f32 to vector<16x16xf32>
    %2401 = arith.mulf %2400, %2398 : vector<16x16xf32>
    %2402 = arith.addf %2368, %2401 : vector<16x16xf32>
    %c229_384 = arith.constant 229 : index
    %2403 = memref.load %arg1[%c229_384] : memref<288xf32, #tpu.memory_space<smem>>
    %2404 = vector.broadcast %2403 : f32 to vector<16x16xf32>
    %2405 = arith.mulf %2404, %2398 : vector<16x16xf32>
    %2406 = arith.addf %2372, %2405 : vector<16x16xf32>
    %c233_385 = arith.constant 233 : index
    %2407 = memref.load %arg1[%c233_385] : memref<288xf32, #tpu.memory_space<smem>>
    %2408 = vector.broadcast %2407 : f32 to vector<16x16xf32>
    %2409 = arith.mulf %2408, %2398 : vector<16x16xf32>
    %2410 = arith.addf %2376, %2409 : vector<16x16xf32>
    %c237_386 = arith.constant 237 : index
    %2411 = memref.load %arg1[%c237_386] : memref<288xf32, #tpu.memory_space<smem>>
    %2412 = vector.broadcast %2411 : f32 to vector<16x16xf32>
    %2413 = arith.mulf %2412, %2398 : vector<16x16xf32>
    %2414 = arith.addf %2380, %2413 : vector<16x16xf32>
    %c241_387 = arith.constant 241 : index
    %2415 = memref.load %arg1[%c241_387] : memref<288xf32, #tpu.memory_space<smem>>
    %2416 = vector.broadcast %2415 : f32 to vector<16x16xf32>
    %2417 = arith.mulf %2416, %2398 : vector<16x16xf32>
    %2418 = arith.addf %2384, %2417 : vector<16x16xf32>
    %c245_388 = arith.constant 245 : index
    %2419 = memref.load %arg1[%c245_388] : memref<288xf32, #tpu.memory_space<smem>>
    %2420 = vector.broadcast %2419 : f32 to vector<16x16xf32>
    %2421 = arith.mulf %2420, %2398 : vector<16x16xf32>
    %2422 = arith.addf %2388, %2421 : vector<16x16xf32>
    %c249_389 = arith.constant 249 : index
    %2423 = memref.load %arg1[%c249_389] : memref<288xf32, #tpu.memory_space<smem>>
    %2424 = vector.broadcast %2423 : f32 to vector<16x16xf32>
    %2425 = arith.mulf %2424, %2398 : vector<16x16xf32>
    %2426 = arith.addf %2392, %2425 : vector<16x16xf32>
    %c253_390 = arith.constant 253 : index
    %2427 = memref.load %arg1[%c253_390] : memref<288xf32, #tpu.memory_space<smem>>
    %2428 = vector.broadcast %2427 : f32 to vector<16x16xf32>
    %2429 = arith.mulf %2428, %2398 : vector<16x16xf32>
    %2430 = arith.addf %2396, %2429 : vector<16x16xf32>
    %2431 = vector.extract_strided_slice %2362 {offsets = [2, 0, 0], sizes = [1, 16, 16], strides = [1, 1, 1]} : vector<4x16x16xf32> to vector<1x16x16xf32>
    %2432 = vector.shape_cast %2431 : vector<1x16x16xf32> to vector<16x16xf32>
    %c226_391 = arith.constant 226 : index
    %2433 = memref.load %arg1[%c226_391] : memref<288xf32, #tpu.memory_space<smem>>
    %2434 = vector.broadcast %2433 : f32 to vector<16x16xf32>
    %2435 = arith.mulf %2434, %2432 : vector<16x16xf32>
    %2436 = arith.addf %2402, %2435 : vector<16x16xf32>
    %c230_392 = arith.constant 230 : index
    %2437 = memref.load %arg1[%c230_392] : memref<288xf32, #tpu.memory_space<smem>>
    %2438 = vector.broadcast %2437 : f32 to vector<16x16xf32>
    %2439 = arith.mulf %2438, %2432 : vector<16x16xf32>
    %2440 = arith.addf %2406, %2439 : vector<16x16xf32>
    %c234_393 = arith.constant 234 : index
    %2441 = memref.load %arg1[%c234_393] : memref<288xf32, #tpu.memory_space<smem>>
    %2442 = vector.broadcast %2441 : f32 to vector<16x16xf32>
    %2443 = arith.mulf %2442, %2432 : vector<16x16xf32>
    %2444 = arith.addf %2410, %2443 : vector<16x16xf32>
    %c238_394 = arith.constant 238 : index
    %2445 = memref.load %arg1[%c238_394] : memref<288xf32, #tpu.memory_space<smem>>
    %2446 = vector.broadcast %2445 : f32 to vector<16x16xf32>
    %2447 = arith.mulf %2446, %2432 : vector<16x16xf32>
    %2448 = arith.addf %2414, %2447 : vector<16x16xf32>
    %c242_395 = arith.constant 242 : index
    %2449 = memref.load %arg1[%c242_395] : memref<288xf32, #tpu.memory_space<smem>>
    %2450 = vector.broadcast %2449 : f32 to vector<16x16xf32>
    %2451 = arith.mulf %2450, %2432 : vector<16x16xf32>
    %2452 = arith.addf %2418, %2451 : vector<16x16xf32>
    %c246_396 = arith.constant 246 : index
    %2453 = memref.load %arg1[%c246_396] : memref<288xf32, #tpu.memory_space<smem>>
    %2454 = vector.broadcast %2453 : f32 to vector<16x16xf32>
    %2455 = arith.mulf %2454, %2432 : vector<16x16xf32>
    %2456 = arith.addf %2422, %2455 : vector<16x16xf32>
    %c250_397 = arith.constant 250 : index
    %2457 = memref.load %arg1[%c250_397] : memref<288xf32, #tpu.memory_space<smem>>
    %2458 = vector.broadcast %2457 : f32 to vector<16x16xf32>
    %2459 = arith.mulf %2458, %2432 : vector<16x16xf32>
    %2460 = arith.addf %2426, %2459 : vector<16x16xf32>
    %c254_398 = arith.constant 254 : index
    %2461 = memref.load %arg1[%c254_398] : memref<288xf32, #tpu.memory_space<smem>>
    %2462 = vector.broadcast %2461 : f32 to vector<16x16xf32>
    %2463 = arith.mulf %2462, %2432 : vector<16x16xf32>
    %2464 = arith.addf %2430, %2463 : vector<16x16xf32>
    %2465 = vector.extract_strided_slice %2362 {offsets = [3, 0, 0], sizes = [1, 16, 16], strides = [1, 1, 1]} : vector<4x16x16xf32> to vector<1x16x16xf32>
    %2466 = vector.shape_cast %2465 : vector<1x16x16xf32> to vector<16x16xf32>
    %c227_399 = arith.constant 227 : index
    %2467 = memref.load %arg1[%c227_399] : memref<288xf32, #tpu.memory_space<smem>>
    %2468 = vector.broadcast %2467 : f32 to vector<16x16xf32>
    %2469 = arith.mulf %2468, %2466 : vector<16x16xf32>
    %2470 = arith.addf %2436, %2469 : vector<16x16xf32>
    %c231_400 = arith.constant 231 : index
    %2471 = memref.load %arg1[%c231_400] : memref<288xf32, #tpu.memory_space<smem>>
    %2472 = vector.broadcast %2471 : f32 to vector<16x16xf32>
    %2473 = arith.mulf %2472, %2466 : vector<16x16xf32>
    %2474 = arith.addf %2440, %2473 : vector<16x16xf32>
    %c235_401 = arith.constant 235 : index
    %2475 = memref.load %arg1[%c235_401] : memref<288xf32, #tpu.memory_space<smem>>
    %2476 = vector.broadcast %2475 : f32 to vector<16x16xf32>
    %2477 = arith.mulf %2476, %2466 : vector<16x16xf32>
    %2478 = arith.addf %2444, %2477 : vector<16x16xf32>
    %c239_402 = arith.constant 239 : index
    %2479 = memref.load %arg1[%c239_402] : memref<288xf32, #tpu.memory_space<smem>>
    %2480 = vector.broadcast %2479 : f32 to vector<16x16xf32>
    %2481 = arith.mulf %2480, %2466 : vector<16x16xf32>
    %2482 = arith.addf %2448, %2481 : vector<16x16xf32>
    %c243_403 = arith.constant 243 : index
    %2483 = memref.load %arg1[%c243_403] : memref<288xf32, #tpu.memory_space<smem>>
    %2484 = vector.broadcast %2483 : f32 to vector<16x16xf32>
    %2485 = arith.mulf %2484, %2466 : vector<16x16xf32>
    %2486 = arith.addf %2452, %2485 : vector<16x16xf32>
    %c247_404 = arith.constant 247 : index
    %2487 = memref.load %arg1[%c247_404] : memref<288xf32, #tpu.memory_space<smem>>
    %2488 = vector.broadcast %2487 : f32 to vector<16x16xf32>
    %2489 = arith.mulf %2488, %2466 : vector<16x16xf32>
    %2490 = arith.addf %2456, %2489 : vector<16x16xf32>
    %c251_405 = arith.constant 251 : index
    %2491 = memref.load %arg1[%c251_405] : memref<288xf32, #tpu.memory_space<smem>>
    %2492 = vector.broadcast %2491 : f32 to vector<16x16xf32>
    %2493 = arith.mulf %2492, %2466 : vector<16x16xf32>
    %2494 = arith.addf %2460, %2493 : vector<16x16xf32>
    %c255_406 = arith.constant 255 : index
    %2495 = memref.load %arg1[%c255_406] : memref<288xf32, #tpu.memory_space<smem>>
    %2496 = vector.broadcast %2495 : f32 to vector<16x16xf32>
    %2497 = arith.mulf %2496, %2466 : vector<16x16xf32>
    %2498 = arith.addf %2464, %2497 : vector<16x16xf32>
    %2499 = vector.extract_strided_slice %2224 {offsets = [0, 0, 2], sizes = [4, 16, 16], strides = [1, 1, 1]} : vector<4x16x18xf32> to vector<4x16x16xf32>
    %2500 = vector.extract_strided_slice %2499 {offsets = [0, 0, 0], sizes = [1, 16, 16], strides = [1, 1, 1]} : vector<4x16x16xf32> to vector<1x16x16xf32>
    %2501 = vector.shape_cast %2500 : vector<1x16x16xf32> to vector<16x16xf32>
    %c256_407 = arith.constant 256 : index
    %2502 = memref.load %arg1[%c256_407] : memref<288xf32, #tpu.memory_space<smem>>
    %2503 = vector.broadcast %2502 : f32 to vector<16x16xf32>
    %2504 = arith.mulf %2503, %2501 : vector<16x16xf32>
    %2505 = arith.addf %2470, %2504 : vector<16x16xf32>
    %c260_408 = arith.constant 260 : index
    %2506 = memref.load %arg1[%c260_408] : memref<288xf32, #tpu.memory_space<smem>>
    %2507 = vector.broadcast %2506 : f32 to vector<16x16xf32>
    %2508 = arith.mulf %2507, %2501 : vector<16x16xf32>
    %2509 = arith.addf %2474, %2508 : vector<16x16xf32>
    %c264_409 = arith.constant 264 : index
    %2510 = memref.load %arg1[%c264_409] : memref<288xf32, #tpu.memory_space<smem>>
    %2511 = vector.broadcast %2510 : f32 to vector<16x16xf32>
    %2512 = arith.mulf %2511, %2501 : vector<16x16xf32>
    %2513 = arith.addf %2478, %2512 : vector<16x16xf32>
    %c268_410 = arith.constant 268 : index
    %2514 = memref.load %arg1[%c268_410] : memref<288xf32, #tpu.memory_space<smem>>
    %2515 = vector.broadcast %2514 : f32 to vector<16x16xf32>
    %2516 = arith.mulf %2515, %2501 : vector<16x16xf32>
    %2517 = arith.addf %2482, %2516 : vector<16x16xf32>
    %c272_411 = arith.constant 272 : index
    %2518 = memref.load %arg1[%c272_411] : memref<288xf32, #tpu.memory_space<smem>>
    %2519 = vector.broadcast %2518 : f32 to vector<16x16xf32>
    %2520 = arith.mulf %2519, %2501 : vector<16x16xf32>
    %2521 = arith.addf %2486, %2520 : vector<16x16xf32>
    %c276_412 = arith.constant 276 : index
    %2522 = memref.load %arg1[%c276_412] : memref<288xf32, #tpu.memory_space<smem>>
    %2523 = vector.broadcast %2522 : f32 to vector<16x16xf32>
    %2524 = arith.mulf %2523, %2501 : vector<16x16xf32>
    %2525 = arith.addf %2490, %2524 : vector<16x16xf32>
    %c280_413 = arith.constant 280 : index
    %2526 = memref.load %arg1[%c280_413] : memref<288xf32, #tpu.memory_space<smem>>
    %2527 = vector.broadcast %2526 : f32 to vector<16x16xf32>
    %2528 = arith.mulf %2527, %2501 : vector<16x16xf32>
    %2529 = arith.addf %2494, %2528 : vector<16x16xf32>
    %c284_414 = arith.constant 284 : index
    %2530 = memref.load %arg1[%c284_414] : memref<288xf32, #tpu.memory_space<smem>>
    %2531 = vector.broadcast %2530 : f32 to vector<16x16xf32>
    %2532 = arith.mulf %2531, %2501 : vector<16x16xf32>
    %2533 = arith.addf %2498, %2532 : vector<16x16xf32>
    %2534 = vector.extract_strided_slice %2499 {offsets = [1, 0, 0], sizes = [1, 16, 16], strides = [1, 1, 1]} : vector<4x16x16xf32> to vector<1x16x16xf32>
    %2535 = vector.shape_cast %2534 : vector<1x16x16xf32> to vector<16x16xf32>
    %c257_415 = arith.constant 257 : index
    %2536 = memref.load %arg1[%c257_415] : memref<288xf32, #tpu.memory_space<smem>>
    %2537 = vector.broadcast %2536 : f32 to vector<16x16xf32>
    %2538 = arith.mulf %2537, %2535 : vector<16x16xf32>
    %2539 = arith.addf %2505, %2538 : vector<16x16xf32>
    %c261_416 = arith.constant 261 : index
    %2540 = memref.load %arg1[%c261_416] : memref<288xf32, #tpu.memory_space<smem>>
    %2541 = vector.broadcast %2540 : f32 to vector<16x16xf32>
    %2542 = arith.mulf %2541, %2535 : vector<16x16xf32>
    %2543 = arith.addf %2509, %2542 : vector<16x16xf32>
    %c265_417 = arith.constant 265 : index
    %2544 = memref.load %arg1[%c265_417] : memref<288xf32, #tpu.memory_space<smem>>
    %2545 = vector.broadcast %2544 : f32 to vector<16x16xf32>
    %2546 = arith.mulf %2545, %2535 : vector<16x16xf32>
    %2547 = arith.addf %2513, %2546 : vector<16x16xf32>
    %c269_418 = arith.constant 269 : index
    %2548 = memref.load %arg1[%c269_418] : memref<288xf32, #tpu.memory_space<smem>>
    %2549 = vector.broadcast %2548 : f32 to vector<16x16xf32>
    %2550 = arith.mulf %2549, %2535 : vector<16x16xf32>
    %2551 = arith.addf %2517, %2550 : vector<16x16xf32>
    %c273_419 = arith.constant 273 : index
    %2552 = memref.load %arg1[%c273_419] : memref<288xf32, #tpu.memory_space<smem>>
    %2553 = vector.broadcast %2552 : f32 to vector<16x16xf32>
    %2554 = arith.mulf %2553, %2535 : vector<16x16xf32>
    %2555 = arith.addf %2521, %2554 : vector<16x16xf32>
    %c277_420 = arith.constant 277 : index
    %2556 = memref.load %arg1[%c277_420] : memref<288xf32, #tpu.memory_space<smem>>
    %2557 = vector.broadcast %2556 : f32 to vector<16x16xf32>
    %2558 = arith.mulf %2557, %2535 : vector<16x16xf32>
    %2559 = arith.addf %2525, %2558 : vector<16x16xf32>
    %c281_421 = arith.constant 281 : index
    %2560 = memref.load %arg1[%c281_421] : memref<288xf32, #tpu.memory_space<smem>>
    %2561 = vector.broadcast %2560 : f32 to vector<16x16xf32>
    %2562 = arith.mulf %2561, %2535 : vector<16x16xf32>
    %2563 = arith.addf %2529, %2562 : vector<16x16xf32>
    %c285_422 = arith.constant 285 : index
    %2564 = memref.load %arg1[%c285_422] : memref<288xf32, #tpu.memory_space<smem>>
    %2565 = vector.broadcast %2564 : f32 to vector<16x16xf32>
    %2566 = arith.mulf %2565, %2535 : vector<16x16xf32>
    %2567 = arith.addf %2533, %2566 : vector<16x16xf32>
    %2568 = vector.extract_strided_slice %2499 {offsets = [2, 0, 0], sizes = [1, 16, 16], strides = [1, 1, 1]} : vector<4x16x16xf32> to vector<1x16x16xf32>
    %2569 = vector.shape_cast %2568 : vector<1x16x16xf32> to vector<16x16xf32>
    %c258_423 = arith.constant 258 : index
    %2570 = memref.load %arg1[%c258_423] : memref<288xf32, #tpu.memory_space<smem>>
    %2571 = vector.broadcast %2570 : f32 to vector<16x16xf32>
    %2572 = arith.mulf %2571, %2569 : vector<16x16xf32>
    %2573 = arith.addf %2539, %2572 : vector<16x16xf32>
    %c262_424 = arith.constant 262 : index
    %2574 = memref.load %arg1[%c262_424] : memref<288xf32, #tpu.memory_space<smem>>
    %2575 = vector.broadcast %2574 : f32 to vector<16x16xf32>
    %2576 = arith.mulf %2575, %2569 : vector<16x16xf32>
    %2577 = arith.addf %2543, %2576 : vector<16x16xf32>
    %c266_425 = arith.constant 266 : index
    %2578 = memref.load %arg1[%c266_425] : memref<288xf32, #tpu.memory_space<smem>>
    %2579 = vector.broadcast %2578 : f32 to vector<16x16xf32>
    %2580 = arith.mulf %2579, %2569 : vector<16x16xf32>
    %2581 = arith.addf %2547, %2580 : vector<16x16xf32>
    %c270_426 = arith.constant 270 : index
    %2582 = memref.load %arg1[%c270_426] : memref<288xf32, #tpu.memory_space<smem>>
    %2583 = vector.broadcast %2582 : f32 to vector<16x16xf32>
    %2584 = arith.mulf %2583, %2569 : vector<16x16xf32>
    %2585 = arith.addf %2551, %2584 : vector<16x16xf32>
    %c274_427 = arith.constant 274 : index
    %2586 = memref.load %arg1[%c274_427] : memref<288xf32, #tpu.memory_space<smem>>
    %2587 = vector.broadcast %2586 : f32 to vector<16x16xf32>
    %2588 = arith.mulf %2587, %2569 : vector<16x16xf32>
    %2589 = arith.addf %2555, %2588 : vector<16x16xf32>
    %c278_428 = arith.constant 278 : index
    %2590 = memref.load %arg1[%c278_428] : memref<288xf32, #tpu.memory_space<smem>>
    %2591 = vector.broadcast %2590 : f32 to vector<16x16xf32>
    %2592 = arith.mulf %2591, %2569 : vector<16x16xf32>
    %2593 = arith.addf %2559, %2592 : vector<16x16xf32>
    %c282_429 = arith.constant 282 : index
    %2594 = memref.load %arg1[%c282_429] : memref<288xf32, #tpu.memory_space<smem>>
    %2595 = vector.broadcast %2594 : f32 to vector<16x16xf32>
    %2596 = arith.mulf %2595, %2569 : vector<16x16xf32>
    %2597 = arith.addf %2563, %2596 : vector<16x16xf32>
    %c286_430 = arith.constant 286 : index
    %2598 = memref.load %arg1[%c286_430] : memref<288xf32, #tpu.memory_space<smem>>
    %2599 = vector.broadcast %2598 : f32 to vector<16x16xf32>
    %2600 = arith.mulf %2599, %2569 : vector<16x16xf32>
    %2601 = arith.addf %2567, %2600 : vector<16x16xf32>
    %2602 = vector.extract_strided_slice %2499 {offsets = [3, 0, 0], sizes = [1, 16, 16], strides = [1, 1, 1]} : vector<4x16x16xf32> to vector<1x16x16xf32>
    %2603 = vector.shape_cast %2602 : vector<1x16x16xf32> to vector<16x16xf32>
    %c259_431 = arith.constant 259 : index
    %2604 = memref.load %arg1[%c259_431] : memref<288xf32, #tpu.memory_space<smem>>
    %2605 = vector.broadcast %2604 : f32 to vector<16x16xf32>
    %2606 = arith.mulf %2605, %2603 : vector<16x16xf32>
    %2607 = arith.addf %2573, %2606 : vector<16x16xf32>
    %c263_432 = arith.constant 263 : index
    %2608 = memref.load %arg1[%c263_432] : memref<288xf32, #tpu.memory_space<smem>>
    %2609 = vector.broadcast %2608 : f32 to vector<16x16xf32>
    %2610 = arith.mulf %2609, %2603 : vector<16x16xf32>
    %2611 = arith.addf %2577, %2610 : vector<16x16xf32>
    %c267_433 = arith.constant 267 : index
    %2612 = memref.load %arg1[%c267_433] : memref<288xf32, #tpu.memory_space<smem>>
    %2613 = vector.broadcast %2612 : f32 to vector<16x16xf32>
    %2614 = arith.mulf %2613, %2603 : vector<16x16xf32>
    %2615 = arith.addf %2581, %2614 : vector<16x16xf32>
    %c271_434 = arith.constant 271 : index
    %2616 = memref.load %arg1[%c271_434] : memref<288xf32, #tpu.memory_space<smem>>
    %2617 = vector.broadcast %2616 : f32 to vector<16x16xf32>
    %2618 = arith.mulf %2617, %2603 : vector<16x16xf32>
    %2619 = arith.addf %2585, %2618 : vector<16x16xf32>
    %c275_435 = arith.constant 275 : index
    %2620 = memref.load %arg1[%c275_435] : memref<288xf32, #tpu.memory_space<smem>>
    %2621 = vector.broadcast %2620 : f32 to vector<16x16xf32>
    %2622 = arith.mulf %2621, %2603 : vector<16x16xf32>
    %2623 = arith.addf %2589, %2622 : vector<16x16xf32>
    %c279_436 = arith.constant 279 : index
    %2624 = memref.load %arg1[%c279_436] : memref<288xf32, #tpu.memory_space<smem>>
    %2625 = vector.broadcast %2624 : f32 to vector<16x16xf32>
    %2626 = arith.mulf %2625, %2603 : vector<16x16xf32>
    %2627 = arith.addf %2593, %2626 : vector<16x16xf32>
    %c283_437 = arith.constant 283 : index
    %2628 = memref.load %arg1[%c283_437] : memref<288xf32, #tpu.memory_space<smem>>
    %2629 = vector.broadcast %2628 : f32 to vector<16x16xf32>
    %2630 = arith.mulf %2629, %2603 : vector<16x16xf32>
    %2631 = arith.addf %2597, %2630 : vector<16x16xf32>
    %c287_438 = arith.constant 287 : index
    %2632 = memref.load %arg1[%c287_438] : memref<288xf32, #tpu.memory_space<smem>>
    %2633 = vector.broadcast %2632 : f32 to vector<16x16xf32>
    %2634 = arith.mulf %2633, %2603 : vector<16x16xf32>
    %2635 = arith.addf %2601, %2634 : vector<16x16xf32>
    %cst_439 = arith.constant 0.000000e+00 : f32
    %2636 = vector.broadcast %cst_439 : f32 to vector<16x16xf32>
    %2637 = arith.maximumf %2607, %2636 : vector<16x16xf32>
    %cst_440 = arith.constant 0.000000e+00 : f32
    %2638 = vector.broadcast %cst_440 : f32 to vector<16x16xf32>
    %2639 = arith.select %1385, %2638, %2637 : vector<16x16xi1>, vector<16x16xf32>
    %c1_441 = arith.constant 1 : index
    %c0_442 = arith.constant 0 : index
    %c0_443 = arith.constant 0 : index
    %c0_444 = arith.constant 0 : index
    %2640 = vector.load %arg4[%c1_441, %c0_442, %c0_443, %c0_444] : memref<2x8x16x16xf32, #tpu.memory_space<vmem>>, vector<1x1x16x16xf32>
    %2641 = vector.shape_cast %2640 : vector<1x1x16x16xf32> to vector<16x16xf32>
    %2642 = vector.shape_cast %2639 : vector<16x16xf32> to vector<1x1x16x16xf32>
    tpu.vector_store %arg4[%c1_441, %c0_442, %c0_443, %c0_444], %2642 {strides = array<i32>} : memref<2x8x16x16xf32, #tpu.memory_space<vmem>>, vector<1x1x16x16xf32>,
    %cst_445 = arith.constant 0.000000e+00 : f32
    %2643 = vector.broadcast %cst_445 : f32 to vector<16x16xf32>
    %2644 = arith.maximumf %2611, %2643 : vector<16x16xf32>
    %cst_446 = arith.constant 0.000000e+00 : f32
    %2645 = vector.broadcast %cst_446 : f32 to vector<16x16xf32>
    %2646 = arith.select %1385, %2645, %2644 : vector<16x16xi1>, vector<16x16xf32>
    %c1_447 = arith.constant 1 : index
    %c1_448 = arith.constant 1 : index
    %c0_449 = arith.constant 0 : index
    %c0_450 = arith.constant 0 : index
    %2647 = vector.load %arg4[%c1_447, %c1_448, %c0_449, %c0_450] : memref<2x8x16x16xf32, #tpu.memory_space<vmem>>, vector<1x1x16x16xf32>
    %2648 = vector.shape_cast %2647 : vector<1x1x16x16xf32> to vector<16x16xf32>
    %2649 = vector.shape_cast %2646 : vector<16x16xf32> to vector<1x1x16x16xf32>
    tpu.vector_store %arg4[%c1_447, %c1_448, %c0_449, %c0_450], %2649 {strides = array<i32>} : memref<2x8x16x16xf32, #tpu.memory_space<vmem>>, vector<1x1x16x16xf32>,
    %cst_451 = arith.constant 0.000000e+00 : f32
    %2650 = vector.broadcast %cst_451 : f32 to vector<16x16xf32>
    %2651 = arith.maximumf %2615, %2650 : vector<16x16xf32>
    %cst_452 = arith.constant 0.000000e+00 : f32
    %2652 = vector.broadcast %cst_452 : f32 to vector<16x16xf32>
    %2653 = arith.select %1385, %2652, %2651 : vector<16x16xi1>, vector<16x16xf32>
    %c1_453 = arith.constant 1 : index
    %c2_454 = arith.constant 2 : index
    %c0_455 = arith.constant 0 : index
    %c0_456 = arith.constant 0 : index
    %2654 = vector.load %arg4[%c1_453, %c2_454, %c0_455, %c0_456] : memref<2x8x16x16xf32, #tpu.memory_space<vmem>>, vector<1x1x16x16xf32>
    %2655 = vector.shape_cast %2654 : vector<1x1x16x16xf32> to vector<16x16xf32>
    %2656 = vector.shape_cast %2653 : vector<16x16xf32> to vector<1x1x16x16xf32>
    tpu.vector_store %arg4[%c1_453, %c2_454, %c0_455, %c0_456], %2656 {strides = array<i32>} : memref<2x8x16x16xf32, #tpu.memory_space<vmem>>, vector<1x1x16x16xf32>,
    %cst_457 = arith.constant 0.000000e+00 : f32
    %2657 = vector.broadcast %cst_457 : f32 to vector<16x16xf32>
    %2658 = arith.maximumf %2619, %2657 : vector<16x16xf32>
    %cst_458 = arith.constant 0.000000e+00 : f32
    %2659 = vector.broadcast %cst_458 : f32 to vector<16x16xf32>
    %2660 = arith.select %1385, %2659, %2658 : vector<16x16xi1>, vector<16x16xf32>
    %c1_459 = arith.constant 1 : index
    %c3_460 = arith.constant 3 : index
    %c0_461 = arith.constant 0 : index
    %c0_462 = arith.constant 0 : index
    %2661 = vector.load %arg4[%c1_459, %c3_460, %c0_461, %c0_462] : memref<2x8x16x16xf32, #tpu.memory_space<vmem>>, vector<1x1x16x16xf32>
    %2662 = vector.shape_cast %2661 : vector<1x1x16x16xf32> to vector<16x16xf32>
    %2663 = vector.shape_cast %2660 : vector<16x16xf32> to vector<1x1x16x16xf32>
    tpu.vector_store %arg4[%c1_459, %c3_460, %c0_461, %c0_462], %2663 {strides = array<i32>} : memref<2x8x16x16xf32, #tpu.memory_space<vmem>>, vector<1x1x16x16xf32>,
    %cst_463 = arith.constant 0.000000e+00 : f32
    %2664 = vector.broadcast %cst_463 : f32 to vector<16x16xf32>
    %2665 = arith.maximumf %2623, %2664 : vector<16x16xf32>
    %cst_464 = arith.constant 0.000000e+00 : f32
    %2666 = vector.broadcast %cst_464 : f32 to vector<16x16xf32>
    %2667 = arith.select %1385, %2666, %2665 : vector<16x16xi1>, vector<16x16xf32>
    %c1_465 = arith.constant 1 : index
    %c4_466 = arith.constant 4 : index
    %c0_467 = arith.constant 0 : index
    %c0_468 = arith.constant 0 : index
    %2668 = vector.load %arg4[%c1_465, %c4_466, %c0_467, %c0_468] : memref<2x8x16x16xf32, #tpu.memory_space<vmem>>, vector<1x1x16x16xf32>
    %2669 = vector.shape_cast %2668 : vector<1x1x16x16xf32> to vector<16x16xf32>
    %2670 = vector.shape_cast %2667 : vector<16x16xf32> to vector<1x1x16x16xf32>
    tpu.vector_store %arg4[%c1_465, %c4_466, %c0_467, %c0_468], %2670 {strides = array<i32>} : memref<2x8x16x16xf32, #tpu.memory_space<vmem>>, vector<1x1x16x16xf32>,
    %cst_469 = arith.constant 0.000000e+00 : f32
    %2671 = vector.broadcast %cst_469 : f32 to vector<16x16xf32>
    %2672 = arith.maximumf %2627, %2671 : vector<16x16xf32>
    %cst_470 = arith.constant 0.000000e+00 : f32
    %2673 = vector.broadcast %cst_470 : f32 to vector<16x16xf32>
    %2674 = arith.select %1385, %2673, %2672 : vector<16x16xi1>, vector<16x16xf32>
    %c1_471 = arith.constant 1 : index
    %c5_472 = arith.constant 5 : index
    %c0_473 = arith.constant 0 : index
    %c0_474 = arith.constant 0 : index
    %2675 = vector.load %arg4[%c1_471, %c5_472, %c0_473, %c0_474] : memref<2x8x16x16xf32, #tpu.memory_space<vmem>>, vector<1x1x16x16xf32>
    %2676 = vector.shape_cast %2675 : vector<1x1x16x16xf32> to vector<16x16xf32>
    %2677 = vector.shape_cast %2674 : vector<16x16xf32> to vector<1x1x16x16xf32>
    tpu.vector_store %arg4[%c1_471, %c5_472, %c0_473, %c0_474], %2677 {strides = array<i32>} : memref<2x8x16x16xf32, #tpu.memory_space<vmem>>, vector<1x1x16x16xf32>,
    %cst_475 = arith.constant 0.000000e+00 : f32
    %2678 = vector.broadcast %cst_475 : f32 to vector<16x16xf32>
    %2679 = arith.maximumf %2631, %2678 : vector<16x16xf32>
    %cst_476 = arith.constant 0.000000e+00 : f32
    %2680 = vector.broadcast %cst_476 : f32 to vector<16x16xf32>
    %2681 = arith.select %1385, %2680, %2679 : vector<16x16xi1>, vector<16x16xf32>
    %c1_477 = arith.constant 1 : index
    %c6_478 = arith.constant 6 : index
    %c0_479 = arith.constant 0 : index
    %c0_480 = arith.constant 0 : index
    %2682 = vector.load %arg4[%c1_477, %c6_478, %c0_479, %c0_480] : memref<2x8x16x16xf32, #tpu.memory_space<vmem>>, vector<1x1x16x16xf32>
    %2683 = vector.shape_cast %2682 : vector<1x1x16x16xf32> to vector<16x16xf32>
    %2684 = vector.shape_cast %2681 : vector<16x16xf32> to vector<1x1x16x16xf32>
    tpu.vector_store %arg4[%c1_477, %c6_478, %c0_479, %c0_480], %2684 {strides = array<i32>} : memref<2x8x16x16xf32, #tpu.memory_space<vmem>>, vector<1x1x16x16xf32>,
    %cst_481 = arith.constant 0.000000e+00 : f32
    %2685 = vector.broadcast %cst_481 : f32 to vector<16x16xf32>
    %2686 = arith.maximumf %2635, %2685 : vector<16x16xf32>
    %cst_482 = arith.constant 0.000000e+00 : f32
    %2687 = vector.broadcast %cst_482 : f32 to vector<16x16xf32>
    %2688 = arith.select %1385, %2687, %2686 : vector<16x16xi1>, vector<16x16xf32>
    %c1_483 = arith.constant 1 : index
    %c7_484 = arith.constant 7 : index
    %c0_485 = arith.constant 0 : index
    %c0_486 = arith.constant 0 : index
    %2689 = vector.load %arg4[%c1_483, %c7_484, %c0_485, %c0_486] : memref<2x8x16x16xf32, #tpu.memory_space<vmem>>, vector<1x1x16x16xf32>
    %2690 = vector.shape_cast %2689 : vector<1x1x16x16xf32> to vector<16x16xf32>
    %2691 = vector.shape_cast %2688 : vector<16x16xf32> to vector<1x1x16x16xf32>
    tpu.vector_store %arg4[%c1_483, %c7_484, %c0_485, %c0_486], %2691 {strides = array<i32>} : memref<2x8x16x16xf32, #tpu.memory_space<vmem>>, vector<1x1x16x16xf32>,
    return
  }
  func.func @transform_0(%arg0: i32) -> i32 {
    %c0_i32 = arith.constant 0 : i32
    %c0_i32_0 = arith.constant 0 : i32
    return %c0_i32 : i32
  }
  func.func @transform_1(%arg0: i32) -> (i32, i32, i32, i32) {
    %c0_i32 = arith.constant 0 : i32
    %c0_i32_0 = arith.constant 0 : i32
    %c0_i32_1 = arith.constant 0 : i32
    %c0_i32_2 = arith.constant 0 : i32
    return %arg0, %c0_i32, %c0_i32_0, %c0_i32_1 : i32, i32, i32, i32
  }
  func.func @transform_2(%arg0: i32) -> (i32, i32, i32, i32) {
    %c0_i32 = arith.constant 0 : i32
    %c0_i32_0 = arith.constant 0 : i32
    %c0_i32_1 = arith.constant 0 : i32
    %c0_i32_2 = arith.constant 0 : i32
    return %arg0, %c0_i32, %c0_i32_0, %c0_i32_1 : i32, i32, i32, i32
  }
  func.func @transform_3(%arg0: i32) -> (i32, i32, i32, i32) {
    %c0_i32 = arith.constant 0 : i32
    %c0_i32_0 = arith.constant 0 : i32
    %c0_i32_1 = arith.constant 0 : i32
    %c0_i32_2 = arith.constant 0 : i32
    return %arg0, %c0_i32, %c0_i32_0, %c0_i32_1 : i32, i32, i32, i32
  }
  func.func @transform_4(%arg0: i32) -> (i32, i32, i32, i32) {
    %c0_i32 = arith.constant 0 : i32
    %c0_i32_0 = arith.constant 0 : i32
    %c0_i32_1 = arith.constant 0 : i32
    %c0_i32_2 = arith.constant 0 : i32
    return %arg0, %c0_i32, %c0_i32_0, %c0_i32_1 : i32, i32, i32, i32
  }
}

</mosaic_0001>

<llo_original>
// kernel: tpu_custom_call.1
$region0: #{tpu_custom_call.1}
  #allocation0 [shape = 'u32[]', space=smem, size = 0x4, offset = 0x4, fixed_abs, tag = 'smem constant byte address 0x4 - core index']
  #allocation1 [shape = 'u32[144,128]{1,0:T(1,128)}', space=vmem, size = 0x12000, scoped, tag = 'internal scratch']
  #allocation2 [shape = 'f32[4,18,18]{2,1,0:T(8,128)}', space=vmem, size = 0xc000, scoped, tag = 'scratch operand']
  #allocation3 [shape = 'f32[1,18,18]{2,1,0:T(8,128)}', space=vmem, size = 0x3000, scoped, tag = 'scratch operand']
  %s0 = inlined_call_operand.hbm [shape: f32[288], index: 0, kind: input, shape index: {}]
  %s1 = inlined_call_operand.hbm [shape: f32[2,4,16,16], index: 1, kind: input, shape index: {}]
  %s2 = inlined_call_operand.hbm [shape: f32[2,1,16,16], index: 2, kind: input, shape index: {}]
  %s3 = inlined_call_operand.hbm [shape: f32[2,8,16,16], index: 3, kind: output, shape index: {0}]
  %s4 = inlined_call_operand.hbm [shape: f32[2,1,16,16], index: 4, kind: output, shape index: {1}]
  %5 = xla_tuple %s3, %s4
  %s6 = sld [smem:[#allocation0]]
  $region42: #{tpu_custom_call.1} parent=0
    _
  %s8 = ssub.s32 1, %s6
  %s9 = scalar_select 0, %s8, %s6
  $region1: #{tpu_custom_call.1} parent=0
    #allocation4 [shape = 'u8[1536]{0}', space=smem, size = 0x600, scoped, tag = 'input window, operand 0, single buffered']
    #allocation5 [shape = 's32[1]{0}', space=sflag, size = 0x4, scoped, tag = 'scoped memory for tpu_custom_call.1']
    #allocation6 [shape = 's32[1]{0}', space=sflag, size = 0x4, scoped, tag = 'scoped memory for tpu_custom_call.1']
    #allocation7 [shape = 's32[1]{0}', space=sflag, size = 0x4, scoped, tag = 'scoped memory for tpu_custom_call.1']
    #allocation8 [shape = 'u8[65536]{0}', space=vmem, size = 0x10000, scoped, tag = 'input window, operand 1, single buffered']
    #allocation9 [shape = 'u8[16384]{0}', space=vmem, size = 0x4000, scoped, tag = 'input window, operand 2, single buffered']
    #allocation10 [shape = 's32[1]{0}', space=sflag, size = 0x4, scoped, tag = 'scoped memory for tpu_custom_call.1']
    #allocation11 [shape = 'u8[131072]{0}', space=vmem, size = 0x20000, scoped, tag = 'output window, operand 0, single buffered']
    #allocation12 [shape = 'u8[16384]{0}', space=vmem, size = 0x4000, scoped, tag = 'output window, operand 1, single buffered']
    #allocation13 [shape = 's32[1]{0}', space=sflag, size = 0x4, scoped, tag = 'scoped memory for tpu_custom_call.1']
    %10 = vsyncpa [#allocation7], 0
    %11 = vsyncpa [#allocation5], 0
    %12 = vsyncpa [#allocation10], 0
    %13 = vsyncpa [#allocation6], 0
    %14 = vsyncpa [#allocation13], 0
    // Predicated region
    $region2: #{tpu_custom_call.1} parent=1 // pred_check
      _
    $region3: #{tpu_custom_call.1} parent=1 // pred_check_branch
      %16 = sbr.rel (0) target = $region5
    $region4: #{tpu_custom_call.1} parent=1 // pred_region
      %s18 = ssub.s32 48, 48
      %19 = vsyncadd [#allocation7], %s18
      %22 = dma.hbm_to_smem %s0, 48, [#allocation4], [#allocation7]
    $region5: #{tpu_custom_call.1} parent=1 // pred_fallthru
      _
    // Predicated region
    $region6: #{tpu_custom_call.1} parent=1 // pred_check
      _
    $region7: #{tpu_custom_call.1} parent=1 // pred_check_branch
      %24 = sbr.rel (0) target = $region9
    $region8: #{tpu_custom_call.1} parent=1 // pred_region
      %s26 = ssub.s32 2048, 2048
      %27 = vsyncadd [#allocation5], %s26
      %s28 = sshll.u32 [#allocation8], 4
      %s29 = int_to_ptr.vmem [resolvable:$true] %s28
      %34 = dma.hbm_to_vmem [thread:$0]  %s1, 2048, %s29, [#allocation5], 128, 128, 8
    $region9: #{tpu_custom_call.1} parent=1 // pred_fallthru
      _
    // Predicated region
    $region10: #{tpu_custom_call.1} parent=1 // pred_check
      _
    $region11: #{tpu_custom_call.1} parent=1 // pred_check_branch
      %36 = sbr.rel (0) target = $region13
    $region12: #{tpu_custom_call.1} parent=1 // pred_region
      %s38 = ssub.s32 512, 512
      %39 = vsyncadd [#allocation10], %s38
      %s40 = sshll.u32 [#allocation9], 4
      %s41 = int_to_ptr.vmem [resolvable:$true] %s40
      %46 = dma.hbm_to_vmem [thread:$0]  %s2, 512, %s41, [#allocation10], 128, 128, 8
    $region13: #{tpu_custom_call.1} parent=1 // pred_fallthru
      _
    // Predicated region
    $region14: #{tpu_custom_call.1} parent=1 // pred_check
      _
    $region15: #{tpu_custom_call.1} parent=1 // pred_check_branch
      %48 = sbr.rel (0) target = $region17
    $region16: #{tpu_custom_call.1} parent=1 // pred_region
      %49 = dma.done [#allocation7], 48
    $region17: #{tpu_custom_call.1} parent=1 // pred_fallthru
      _
    // Predicated region
    $region18: #{tpu_custom_call.1} parent=1 // pred_check
      _
    $region19: #{tpu_custom_call.1} parent=1 // pred_check_branch
      %51 = sbr.rel (0) target = $region21
    $region20: #{tpu_custom_call.1} parent=1 // pred_region
      %52 = dma.done [#allocation5], 2048
    $region21: #{tpu_custom_call.1} parent=1 // pred_fallthru
      _
    // Predicated region
    $region22: #{tpu_custom_call.1} parent=1 // pred_check
      _
    $region23: #{tpu_custom_call.1} parent=1 // pred_check_branch
      %54 = sbr.rel (0) target = $region25
    $region24: #{tpu_custom_call.1} parent=1 // pred_region
      %55 = dma.done [#allocation10], 512
    $region25: #{tpu_custom_call.1} parent=1 // pred_fallthru
      _
    %56 = sfence
    %vm57 = vcmask 146432
    %58 = vst.msk [vmem:[#allocation2] sm:$0xff] %vm57, 0.0
    %59 = vst.msk [vmem:[#allocation2 + $0x8] sm:$0xff] %vm57, 0.0
    %vm60 = vcmask 140288
    %61 = vst.msk [vmem:[#allocation2 + $0x10] sm:$0x3] %vm60, 0.0
    %62 = vst.msk [vmem:[#allocation2 + $0x18] sm:$0xff] %vm57, 0.0
    %63 = vst.msk [vmem:[#allocation2 + $0x20] sm:$0xff] %vm57, 0.0
    %64 = vst.msk [vmem:[#allocation2 + $0x28] sm:$0x3] %vm60, 0.0
    %65 = vst.msk [vmem:[#allocation2 + $0x30] sm:$0xff] %vm57, 0.0
    %66 = vst.msk [vmem:[#allocation2 + $0x38] sm:$0xff] %vm57, 0.0
    %67 = vst.msk [vmem:[#allocation2 + $0x40] sm:$0x3] %vm60, 0.0
    %68 = vst.msk [vmem:[#allocation2 + $0x48] sm:$0xff] %vm57, 0.0
    %69 = vst.msk [vmem:[#allocation2 + $0x50] sm:$0xff] %vm57, 0.0
    %70 = vst.msk [vmem:[#allocation2 + $0x58] sm:$0x3] %vm60, 0.0
    %71 = vst.msk [vmem:[#allocation3] sm:$0xff] %vm57, 0.0
    %72 = vst.msk [vmem:[#allocation3 + $0x8] sm:$0xff] %vm57, 0.0
    %73 = vst.msk [vmem:[#allocation3 + $0x10] sm:$0x3] %vm60, 0.0
    %v74 = vld [vmem:[#allocation9] sm:$0xff]
    %v75 = vld [vmem:[#allocation9 + $0x8] sm:$0xff]
    %v76 = vld [vmem:[#allocation8] sm:$0xff]
    %v77 = vld [vmem:[#allocation8 + $0x8] sm:$0xff]
    %v78 = vld [vmem:[#allocation8 + $0x10] sm:$0xff]
    %v79 = vld [vmem:[#allocation8 + $0x18] sm:$0xff]
    %v80 = vld [vmem:[#allocation8 + $0x20] sm:$0xff]
    %v81 = vld [vmem:[#allocation8 + $0x28] sm:$0xff]
    %v82 = vld [vmem:[#allocation8 + $0x30] sm:$0xff]
    %v83 = vld [vmem:[#allocation8 + $0x38] sm:$0xff]
    %v84 = vmul.f32 %v76, %v74
    %v85 = vmul.f32 %v77, %v75
    %v86 = vmul.f32 %v78, %v74
    %v87 = vmul.f32 %v79, %v75
    %v88 = vmul.f32 %v80, %v74
    %v89 = vmul.f32 %v81, %v75
    %v90 = vmul.f32 %v82, %v74
    %v91 = vmul.f32 %v83, %v75
    %100 = vrot.lane.b32.xlu0 %v84, 1
    %v101 = vpop.permute.xlu0 %100
    %102 = vrot.lane.b32.xlu0 %v85, 1
    %v103 = vpop.permute.xlu0 %102
    %104 = vrot.lane.b32.xlu0 %v86, 1
    %v105 = vpop.permute.xlu0 %104
    %106 = vrot.lane.b32.xlu0 %v87, 1
    %v107 = vpop.permute.xlu0 %106
    %108 = vrot.lane.b32.xlu0 %v88, 1
    %v109 = vpop.permute.xlu0 %108
    %110 = vrot.lane.b32.xlu0 %v89, 1
    %v111 = vpop.permute.xlu0 %110
    %112 = vrot.lane.b32.xlu0 %v90, 1
    %v113 = vpop.permute.xlu0 %112
    %114 = vrot.lane.b32.xlu0 %v91, 1
    %v115 = vpop.permute.xlu0 %114
    %vm124 = vcmask 138248
    %125 = vst.msk [vmem:[#allocation2 + $0x1] sm:$0xff] %vm124, %v101
    %126 = vst.msk [vmem:[#allocation2 + $0x9] sm:$0xff] %vm124, %v103
    %127 = vst.msk [vmem:[#allocation2 + $0x19] sm:$0xff] %vm124, %v105
    %128 = vst.msk [vmem:[#allocation2 + $0x21] sm:$0xff] %vm124, %v107
    %129 = vst.msk [vmem:[#allocation2 + $0x31] sm:$0xff] %vm124, %v109
    %130 = vst.msk [vmem:[#allocation2 + $0x39] sm:$0xff] %vm124, %v111
    %131 = vst.msk [vmem:[#allocation2 + $0x49] sm:$0xff] %vm124, %v113
    %132 = vst.msk [vmem:[#allocation2 + $0x51] sm:$0xff] %vm124, %v115
    %135 = vrot.lane.b32.xlu0 %v74, 1
    %v136 = vpop.permute.xlu0 %135
    %137 = vrot.lane.b32.xlu0 %v75, 1
    %v138 = vpop.permute.xlu0 %137
    %141 = vst.msk [vmem:[#allocation3 + $0x1] sm:$0xff] %vm124, %v136
    %142 = vst.msk [vmem:[#allocation3 + $0x9] sm:$0xff] %vm124, %v138
    %v143 = vld [vmem:[#allocation3] sm:$0xff]
    %v144 = vld [vmem:[#allocation3 + $0x8] sm:$0xff]
    %v145 = vadd.f32 %v143, 0.0
    %v146 = vadd.f32 %v144, 0.0
    %149 = vrot.lane.b32.xlu0 %v143, 127
    %v150 = vpop.permute.xlu0 %149
    %151 = vrot.lane.b32.xlu0 %v144, 127
    %v152 = vpop.permute.xlu0 %151
    %v155 = vadd.f32 %v145, %v150
    %v156 = vadd.f32 %v146, %v152
    %157 = vrot.lane.b32.xlu0 %v143, 126
    %v158 = vpop.permute.xlu0 %157
    %159 = vrot.lane.b32.xlu0 %v144, 126
    %v160 = vpop.permute.xlu0 %159
    %v163 = vadd.f32 %v155, %v158
    %v164 = vadd.f32 %v156, %v160
    %v165 = vld [vmem:[#allocation3 + $0x1] sm:$0xff]
    %v166 = vld [vmem:[#allocation3 + $0x9] sm:$0xff]
    %v167 = vadd.f32 %v163, %v165
    %v168 = vadd.f32 %v164, %v166
    %171 = vrot.lane.b32.xlu0 %v165, 127
    %v172 = vpop.permute.xlu0 %171
    %173 = vrot.lane.b32.xlu0 %v166, 127
    %v174 = vpop.permute.xlu0 %173
    %v177 = vadd.f32 %v167, %v172
    %v178 = vadd.f32 %v168, %v174
    %179 = vrot.lane.b32.xlu0 %v165, 126
    %v180 = vpop.permute.xlu0 %179
    %181 = vrot.lane.b32.xlu0 %v166, 126
    %v182 = vpop.permute.xlu0 %181
    %v185 = vadd.f32 %v177, %v180
    %v186 = vadd.f32 %v178, %v182
    %v187 = vld [vmem:[#allocation3 + $0x2] sm:$0xff]
    %v188 = vld [vmem:[#allocation3 + $0xa] sm:$0xff]
    %v189 = vadd.f32 %v185, %v187
    %v190 = vadd.f32 %v186, %v188
    %193 = vrot.lane.b32.xlu0 %v187, 127
    %v194 = vpop.permute.xlu0 %193
    %195 = vrot.lane.b32.xlu0 %v188, 127
    %v196 = vpop.permute.xlu0 %195
    %v199 = vadd.f32 %v189, %v194
    %v200 = vadd.f32 %v190, %v196
    %201 = vrot.lane.b32.xlu0 %v187, 126
    %v202 = vpop.permute.xlu0 %201
    %203 = vrot.lane.b32.xlu0 %v188, 126
    %v204 = vpop.permute.xlu0 %203
    %v207 = vadd.f32 %v199, %v202
    %v208 = vadd.f32 %v200, %v204
    %vm209 = vcmp.eq.f32.partialorder %v207, 0.0
    %vm210 = vcmp.eq.f32.partialorder %v208, 0.0
    %v211 = vsel %vm209, 0.0, 1.0
    %v212 = vsel %vm210, 0.0, 1.0
    %vm213 = vcmask 130048
    %214 = vst.msk [vmem:[#allocation12] sm:$0xff] %vm213, %v211
    %215 = vst.msk [vmem:[#allocation12 + $0x8] sm:$0xff] %vm213, %v212
    %v216 = vld [vmem:[#allocation2] sm:$0xff]
    %v217 = vld [vmem:[#allocation2 + $0x8] sm:$0xff]
    %v218 = vld [vmem:[#allocation2 + $0x18] sm:$0xff]
    %v219 = vld [vmem:[#allocation2 + $0x20] sm:$0xff]
    %v220 = vld [vmem:[#allocation2 + $0x30] sm:$0xff]
    %v221 = vld [vmem:[#allocation2 + $0x38] sm:$0xff]
    %v222 = vld [vmem:[#allocation2 + $0x48] sm:$0xff]
    %v223 = vld [vmem:[#allocation2 + $0x50] sm:$0xff]
    %s224 = sld [smem:[#allocation4]]
    %v225 = vstv %s224
    %v226 = vmul.f32 %v225, %v216
    %v227 = vmul.f32 %v225, %v217
    %v228 = vadd.f32 %v226, 0.0
    %v229 = vadd.f32 %v227, 0.0
    %s230 = sld [smem:[#allocation4 + $0x4]]
    %v231 = vstv %s230
    %v232 = vmul.f32 %v231, %v216
    %v233 = vmul.f32 %v231, %v217
    %v234 = vadd.f32 %v232, 0.0
    %v235 = vadd.f32 %v233, 0.0
    %s236 = sld [smem:[#allocation4 + $0x8]]
    %v237 = vstv %s236
    %v238 = vmul.f32 %v237, %v216
    %v239 = vmul.f32 %v237, %v217
    %v240 = vadd.f32 %v238, 0.0
    %v241 = vadd.f32 %v239, 0.0
    %s242 = sld [smem:[#allocation4 + $0xc]]
    %v243 = vstv %s242
    %v244 = vmul.f32 %v243, %v216
    %v245 = vmul.f32 %v243, %v217
    %v246 = vadd.f32 %v244, 0.0
    %v247 = vadd.f32 %v245, 0.0
    %s248 = sld [smem:[#allocation4 + $0x10]]
    %v249 = vstv %s248
    %v250 = vmul.f32 %v249, %v216
    %v251 = vmul.f32 %v249, %v217
    %v252 = vadd.f32 %v250, 0.0
    %v253 = vadd.f32 %v251, 0.0
    %s254 = sld [smem:[#allocation4 + $0x14]]
    %v255 = vstv %s254
    %v256 = vmul.f32 %v255, %v216
    %v257 = vmul.f32 %v255, %v217
    %v258 = vadd.f32 %v256, 0.0
    %v259 = vadd.f32 %v257, 0.0
    %s260 = sld [smem:[#allocation4 + $0x18]]
    %v261 = vstv %s260
    %v262 = vmul.f32 %v261, %v216
    %v263 = vmul.f32 %v261, %v217
    %v264 = vadd.f32 %v262, 0.0
    %v265 = vadd.f32 %v263, 0.0
    %s266 = sld [smem:[#allocation4 + $0x1c]]
    %v267 = vstv %s266
    %v268 = vmul.f32 %v267, %v216
    %v269 = vmul.f32 %v267, %v217
    %v270 = vadd.f32 %v268, 0.0
    %v271 = vadd.f32 %v269, 0.0
    %s272 = sld [smem:[#allocation4 + $0x1]]
    %v273 = vstv %s272
    %v274 = vmul.f32 %v273, %v218
    %v275 = vmul.f32 %v273, %v219
    %v276 = vadd.f32 %v228, %v274
    %v277 = vadd.f32 %v229, %v275
    %s278 = sld [smem:[#allocation4 + $0x5]]
    %v279 = vstv %s278
    %v280 = vmul.f32 %v279, %v218
    %v281 = vmul.f32 %v279, %v219
    %v282 = vadd.f32 %v234, %v280
    %v283 = vadd.f32 %v235, %v281
    %s284 = sld [smem:[#allocation4 + $0x9]]
    %v285 = vstv %s284
    %v286 = vmul.f32 %v285, %v218
    %v287 = vmul.f32 %v285, %v219
    %v288 = vadd.f32 %v240, %v286
    %v289 = vadd.f32 %v241, %v287
    %s290 = sld [smem:[#allocation4 + $0xd]]
    %v291 = vstv %s290
    %v292 = vmul.f32 %v291, %v218
    %v293 = vmul.f32 %v291, %v219
    %v294 = vadd.f32 %v246, %v292
    %v295 = vadd.f32 %v247, %v293
    %s296 = sld [smem:[#allocation4 + $0x11]]
    %v297 = vstv %s296
    %v298 = vmul.f32 %v297, %v218
    %v299 = vmul.f32 %v297, %v219
    %v300 = vadd.f32 %v252, %v298
    %v301 = vadd.f32 %v253, %v299
    %s302 = sld [smem:[#allocation4 + $0x15]]
    %v303 = vstv %s302
    %v304 = vmul.f32 %v303, %v218
    %v305 = vmul.f32 %v303, %v219
    %v306 = vadd.f32 %v258, %v304
    %v307 = vadd.f32 %v259, %v305
    %s308 = sld [smem:[#allocation4 + $0x19]]
    %v309 = vstv %s308
    %v310 = vmul.f32 %v309, %v218
    %v311 = vmul.f32 %v309, %v219
    %v312 = vadd.f32 %v264, %v310
    %v313 = vadd.f32 %v265, %v311
    %s314 = sld [smem:[#allocation4 + $0x1d]]
    %v315 = vstv %s314
    %v316 = vmul.f32 %v315, %v218
    %v317 = vmul.f32 %v315, %v219
    %v318 = vadd.f32 %v270, %v316
    %v319 = vadd.f32 %v271, %v317
    %s320 = sld [smem:[#allocation4 + $0x2]]
    %v321 = vstv %s320
    %v322 = vmul.f32 %v321, %v220
    %v323 = vmul.f32 %v321, %v221
    %v324 = vadd.f32 %v276, %v322
    %v325 = vadd.f32 %v277, %v323
    %s326 = sld [smem:[#allocation4 + $0x6]]
    %v327 = vstv %s326
    %v328 = vmul.f32 %v327, %v220
    %v329 = vmul.f32 %v327, %v221
    %v330 = vadd.f32 %v282, %v328
    %v331 = vadd.f32 %v283, %v329
    %s332 = sld [smem:[#allocation4 + $0xa]]
    %v333 = vstv %s332
    %v334 = vmul.f32 %v333, %v220
    %v335 = vmul.f32 %v333, %v221
    %v336 = vadd.f32 %v288, %v334
    %v337 = vadd.f32 %v289, %v335
    %s338 = sld [smem:[#allocation4 + $0xe]]
    %v339 = vstv %s338
    %v340 = vmul.f32 %v339, %v220
    %v341 = vmul.f32 %v339, %v221
    %v342 = vadd.f32 %v294, %v340
    %v343 = vadd.f32 %v295, %v341
    %s344 = sld [smem:[#allocation4 + $0x12]]
    %v345 = vstv %s344
    %v346 = vmul.f32 %v345, %v220
    %v347 = vmul.f32 %v345, %v221
    %v348 = vadd.f32 %v300, %v346
    %v349 = vadd.f32 %v301, %v347
    %s350 = sld [smem:[#allocation4 + $0x16]]
    %v351 = vstv %s350
    %v352 = vmul.f32 %v351, %v220
    %v353 = vmul.f32 %v351, %v221
    %v354 = vadd.f32 %v306, %v352
    %v355 = vadd.f32 %v307, %v353
    %s356 = sld [smem:[#allocation4 + $0x1a]]
    %v357 = vstv %s356
    %v358 = vmul.f32 %v357, %v220
    %v359 = vmul.f32 %v357, %v221
    %v360 = vadd.f32 %v312, %v358
    %v361 = vadd.f32 %v313, %v359
    %s362 = sld [smem:[#allocation4 + $0x1e]]
    %v363 = vstv %s362
    %v364 = vmul.f32 %v363, %v220
    %v365 = vmul.f32 %v363, %v221
    %v366 = vadd.f32 %v318, %v364
    %v367 = vadd.f32 %v319, %v365
    %s368 = sld [smem:[#allocation4 + $0x3]]
    %v369 = vstv %s368
    %v370 = vmul.f32 %v369, %v222
    %v371 = vmul.f32 %v369, %v223
    %v372 = vadd.f32 %v324, %v370
    %v373 = vadd.f32 %v325, %v371
    %s374 = sld [smem:[#allocation4 + $0x7]]
    %v375 = vstv %s374
    %v376 = vmul.f32 %v375, %v222
    %v377 = vmul.f32 %v375, %v223
    %v378 = vadd.f32 %v330, %v376
    %v379 = vadd.f32 %v331, %v377
    %s380 = sld [smem:[#allocation4 + $0xb]]
    %v381 = vstv %s380
    %v382 = vmul.f32 %v381, %v222
    %v383 = vmul.f32 %v381, %v223
    %v384 = vadd.f32 %v336, %v382
    %v385 = vadd.f32 %v337, %v383
    %s386 = sld [smem:[#allocation4 + $0xf]]
    %v387 = vstv %s386
    %v388 = vmul.f32 %v387, %v222
    %v389 = vmul.f32 %v387, %v223
    %v390 = vadd.f32 %v342, %v388
    %v391 = vadd.f32 %v343, %v389
    %s392 = sld [smem:[#allocation4 + $0x13]]
    %v393 = vstv %s392
    %v394 = vmul.f32 %v393, %v222
    %v395 = vmul.f32 %v393, %v223
    %v396 = vadd.f32 %v348, %v394
    %v397 = vadd.f32 %v349, %v395
    %s398 = sld [smem:[#allocation4 + $0x17]]
    %v399 = vstv %s398
    %v400 = vmul.f32 %v399, %v222
    %v401 = vmul.f32 %v399, %v223
    %v402 = vadd.f32 %v354, %v400
    %v403 = vadd.f32 %v355, %v401
    %s404 = sld [smem:[#allocation4 + $0x1b]]
    %v405 = vstv %s404
    %v406 = vmul.f32 %v405, %v222
    %v407 = vmul.f32 %v405, %v223
    %v408 = vadd.f32 %v360, %v406
    %v409 = vadd.f32 %v361, %v407
    %s410 = sld [smem:[#allocation4 + $0x1f]]
    %v411 = vstv %s410
    %v412 = vmul.f32 %v411, %v222
    %v413 = vmul.f32 %v411, %v223
    %v414 = vadd.f32 %v366, %v412
    %v415 = vadd.f32 %v367, %v413
    %s416 = sld [smem:[#allocation4 + $0x20]]
    %v417 = vstv %s416
    %v418 = vmul.f32 %v417, %v216
    %v419 = vmul.f32 %v417, %v217
    %422 = vrot.lane.b32.xlu0 %v418, 127
    %v423 = vpop.permute.xlu0 %422
    %424 = vrot.lane.b32.xlu0 %v419, 127
    %v425 = vpop.permute.xlu0 %424
    %v428 = vadd.f32 %v372, %v423
    %v429 = vadd.f32 %v373, %v425
    %s430 = sld [smem:[#allocation4 + $0x24]]
    %v431 = vstv %s430
    %v432 = vmul.f32 %v431, %v216
    %v433 = vmul.f32 %v431, %v217
    %436 = vrot.lane.b32.xlu0 %v432, 127
    %v437 = vpop.permute.xlu0 %436
    %438 = vrot.lane.b32.xlu0 %v433, 127
    %v439 = vpop.permute.xlu0 %438
    %v442 = vadd.f32 %v378, %v437
    %v443 = vadd.f32 %v379, %v439
    %s444 = sld [smem:[#allocation4 + $0x28]]
    %v445 = vstv %s444
    %v446 = vmul.f32 %v445, %v216
    %v447 = vmul.f32 %v445, %v217
    %450 = vrot.lane.b32.xlu0 %v446, 127
    %v451 = vpop.permute.xlu0 %450
    %452 = vrot.lane.b32.xlu0 %v447, 127
    %v453 = vpop.permute.xlu0 %452
    %v456 = vadd.f32 %v384, %v451
    %v457 = vadd.f32 %v385, %v453
    %s458 = sld [smem:[#allocation4 + $0x2c]]
    %v459 = vstv %s458
    %v460 = vmul.f32 %v459, %v216
    %v461 = vmul.f32 %v459, %v217
    %464 = vrot.lane.b32.xlu0 %v460, 127
    %v465 = vpop.permute.xlu0 %464
    %466 = vrot.lane.b32.xlu0 %v461, 127
    %v467 = vpop.permute.xlu0 %466
    %v470 = vadd.f32 %v390, %v465
    %v471 = vadd.f32 %v391, %v467
    %s472 = sld [smem:[#allocation4 + $0x30]]
    %v473 = vstv %s472
    %v474 = vmul.f32 %v473, %v216
    %v475 = vmul.f32 %v473, %v217
    %478 = vrot.lane.b32.xlu0 %v474, 127
    %v479 = vpop.permute.xlu0 %478
    %480 = vrot.lane.b32.xlu0 %v475, 127
    %v481 = vpop.permute.xlu0 %480
    %v484 = vadd.f32 %v396, %v479
    %v485 = vadd.f32 %v397, %v481
    %s486 = sld [smem:[#allocation4 + $0x34]]
    %v487 = vstv %s486
    %v488 = vmul.f32 %v487, %v216
    %v489 = vmul.f32 %v487, %v217
    %492 = vrot.lane.b32.xlu0 %v488, 127
    %v493 = vpop.permute.xlu0 %492
    %494 = vrot.lane.b32.xlu0 %v489, 127
    %v495 = vpop.permute.xlu0 %494
    %v498 = vadd.f32 %v402, %v493
    %v499 = vadd.f32 %v403, %v495
    %s500 = sld [smem:[#allocation4 + $0x38]]
    %v501 = vstv %s500
    %v502 = vmul.f32 %v501, %v216
    %v503 = vmul.f32 %v501, %v217
    %506 = vrot.lane.b32.xlu0 %v502, 127
    %v507 = vpop.permute.xlu0 %506
    %508 = vrot.lane.b32.xlu0 %v503, 127
    %v509 = vpop.permute.xlu0 %508
    %v512 = vadd.f32 %v408, %v507
    %v513 = vadd.f32 %v409, %v509
    %s514 = sld [smem:[#allocation4 + $0x3c]]
    %v515 = vstv %s514
    %v516 = vmul.f32 %v515, %v216
    %v517 = vmul.f32 %v515, %v217
    %520 = vrot.lane.b32.xlu0 %v516, 127
    %v521 = vpop.permute.xlu0 %520
    %522 = vrot.lane.b32.xlu0 %v517, 127
    %v523 = vpop.permute.xlu0 %522
    %v526 = vadd.f32 %v414, %v521
    %v527 = vadd.f32 %v415, %v523
    %s528 = sld [smem:[#allocation4 + $0x21]]
    %v529 = vstv %s528
    %v530 = vmul.f32 %v529, %v218
    %v531 = vmul.f32 %v529, %v219
    %534 = vrot.lane.b32.xlu0 %v530, 127
    %v535 = vpop.permute.xlu0 %534
    %536 = vrot.lane.b32.xlu0 %v531, 127
    %v537 = vpop.permute.xlu0 %536
    %v540 = vadd.f32 %v428, %v535
    %v541 = vadd.f32 %v429, %v537
    %s542 = sld [smem:[#allocation4 + $0x25]]
    %v543 = vstv %s542
    %v544 = vmul.f32 %v543, %v218
    %v545 = vmul.f32 %v543, %v219
    %548 = vrot.lane.b32.xlu0 %v544, 127
    %v549 = vpop.permute.xlu0 %548
    %550 = vrot.lane.b32.xlu0 %v545, 127
    %v551 = vpop.permute.xlu0 %550
    %v554 = vadd.f32 %v442, %v549
    %v555 = vadd.f32 %v443, %v551
    %s556 = sld [smem:[#allocation4 + $0x29]]
    %v557 = vstv %s556
    %v558 = vmul.f32 %v557, %v218
    %v559 = vmul.f32 %v557, %v219
    %562 = vrot.lane.b32.xlu0 %v558, 127
    %v563 = vpop.permute.xlu0 %562
    %564 = vrot.lane.b32.xlu0 %v559, 127
    %v565 = vpop.permute.xlu0 %564
    %v568 = vadd.f32 %v456, %v563
    %v569 = vadd.f32 %v457, %v565
    %s570 = sld [smem:[#allocation4 + $0x2d]]
    %v571 = vstv %s570
    %v572 = vmul.f32 %v571, %v218
    %v573 = vmul.f32 %v571, %v219
    %576 = vrot.lane.b32.xlu0 %v572, 127
    %v577 = vpop.permute.xlu0 %576
    %578 = vrot.lane.b32.xlu0 %v573, 127
    %v579 = vpop.permute.xlu0 %578
    %v582 = vadd.f32 %v470, %v577
    %v583 = vadd.f32 %v471, %v579
    %s584 = sld [smem:[#allocation4 + $0x31]]
    %v585 = vstv %s584
    %v586 = vmul.f32 %v585, %v218
    %v587 = vmul.f32 %v585, %v219
    %590 = vrot.lane.b32.xlu0 %v586, 127
    %v591 = vpop.permute.xlu0 %590
    %592 = vrot.lane.b32.xlu0 %v587, 127
    %v593 = vpop.permute.xlu0 %592
    %v596 = vadd.f32 %v484, %v591
    %v597 = vadd.f32 %v485, %v593
    %s598 = sld [smem:[#allocation4 + $0x35]]
    %v599 = vstv %s598
    %v600 = vmul.f32 %v599, %v218
    %v601 = vmul.f32 %v599, %v219
    %604 = vrot.lane.b32.xlu0 %v600, 127
    %v605 = vpop.permute.xlu0 %604
    %606 = vrot.lane.b32.xlu0 %v601, 127
    %v607 = vpop.permute.xlu0 %606
    %v610 = vadd.f32 %v498, %v605
    %v611 = vadd.f32 %v499, %v607
    %s612 = sld [smem:[#allocation4 + $0x39]]
    %v613 = vstv %s612
    %v614 = vmul.f32 %v613, %v218
    %v615 = vmul.f32 %v613, %v219
    %618 = vrot.lane.b32.xlu0 %v614, 127
    %v619 = vpop.permute.xlu0 %618
    %620 = vrot.lane.b32.xlu0 %v615, 127
    %v621 = vpop.permute.xlu0 %620
    %v624 = vadd.f32 %v512, %v619
    %v625 = vadd.f32 %v513, %v621
    %s626 = sld [smem:[#allocation4 + $0x3d]]
    %v627 = vstv %s626
    %v628 = vmul.f32 %v627, %v218
    %v629 = vmul.f32 %v627, %v219
    %632 = vrot.lane.b32.xlu0 %v628, 127
    %v633 = vpop.permute.xlu0 %632
    %634 = vrot.lane.b32.xlu0 %v629, 127
    %v635 = vpop.permute.xlu0 %634
    %v638 = vadd.f32 %v526, %v633
    %v639 = vadd.f32 %v527, %v635
    %s640 = sld [smem:[#allocation4 + $0x22]]
    %v641 = vstv %s640
    %v642 = vmul.f32 %v641, %v220
    %v643 = vmul.f32 %v641, %v221
    %646 = vrot.lane.b32.xlu0 %v642, 127
    %v647 = vpop.permute.xlu0 %646
    %648 = vrot.lane.b32.xlu0 %v643, 127
    %v649 = vpop.permute.xlu0 %648
    %v652 = vadd.f32 %v540, %v647
    %v653 = vadd.f32 %v541, %v649
    %s654 = sld [smem:[#allocation4 + $0x26]]
    %v655 = vstv %s654
    %v656 = vmul.f32 %v655, %v220
    %v657 = vmul.f32 %v655, %v221
    %660 = vrot.lane.b32.xlu0 %v656, 127
    %v661 = vpop.permute.xlu0 %660
    %662 = vrot.lane.b32.xlu0 %v657, 127
    %v663 = vpop.permute.xlu0 %662
    %v666 = vadd.f32 %v554, %v661
    %v667 = vadd.f32 %v555, %v663
    %s668 = sld [smem:[#allocation4 + $0x2a]]
    %v669 = vstv %s668
    %v670 = vmul.f32 %v669, %v220
    %v671 = vmul.f32 %v669, %v221
    %674 = vrot.lane.b32.xlu0 %v670, 127
    %v675 = vpop.permute.xlu0 %674
    %676 = vrot.lane.b32.xlu0 %v671, 127
    %v677 = vpop.permute.xlu0 %676
    %v680 = vadd.f32 %v568, %v675
    %v681 = vadd.f32 %v569, %v677
    %s682 = sld [smem:[#allocation4 + $0x2e]]
    %v683 = vstv %s682
    %v684 = vmul.f32 %v683, %v220
    %v685 = vmul.f32 %v683, %v221
    %688 = vrot.lane.b32.xlu0 %v684, 127
    %v689 = vpop.permute.xlu0 %688
    %690 = vrot.lane.b32.xlu0 %v685, 127
    %v691 = vpop.permute.xlu0 %690
    %v694 = vadd.f32 %v582, %v689
    %v695 = vadd.f32 %v583, %v691
    %s696 = sld [smem:[#allocation4 + $0x32]]
    %v697 = vstv %s696
    %v698 = vmul.f32 %v697, %v220
    %v699 = vmul.f32 %v697, %v221
    %702 = vrot.lane.b32.xlu0 %v698, 127
    %v703 = vpop.permute.xlu0 %702
    %704 = vrot.lane.b32.xlu0 %v699, 127
    %v705 = vpop.permute.xlu0 %704
    %v708 = vadd.f32 %v596, %v703
    %v709 = vadd.f32 %v597, %v705
    %s710 = sld [smem:[#allocation4 + $0x36]]
    %v711 = vstv %s710
    %v712 = vmul.f32 %v711, %v220
    %v713 = vmul.f32 %v711, %v221
    %716 = vrot.lane.b32.xlu0 %v712, 127
    %v717 = vpop.permute.xlu0 %716
    %718 = vrot.lane.b32.xlu0 %v713, 127
    %v719 = vpop.permute.xlu0 %718
    %v722 = vadd.f32 %v610, %v717
    %v723 = vadd.f32 %v611, %v719
    %s724 = sld [smem:[#allocation4 + $0x3a]]
    %v725 = vstv %s724
    %v726 = vmul.f32 %v725, %v220
    %v727 = vmul.f32 %v725, %v221
    %730 = vrot.lane.b32.xlu0 %v726, 127
    %v731 = vpop.permute.xlu0 %730
    %732 = vrot.lane.b32.xlu0 %v727, 127
    %v733 = vpop.permute.xlu0 %732
    %v736 = vadd.f32 %v624, %v731
    %v737 = vadd.f32 %v625, %v733
    %s738 = sld [smem:[#allocation4 + $0x3e]]
    %v739 = vstv %s738
    %v740 = vmul.f32 %v739, %v220
    %v741 = vmul.f32 %v739, %v221
    %744 = vrot.lane.b32.xlu0 %v740, 127
    %v745 = vpop.permute.xlu0 %744
    %746 = vrot.lane.b32.xlu0 %v741, 127
    %v747 = vpop.permute.xlu0 %746
    %v750 = vadd.f32 %v638, %v745
    %v751 = vadd.f32 %v639, %v747
    %s752 = sld [smem:[#allocation4 + $0x23]]
    %v753 = vstv %s752
    %v754 = vmul.f32 %v753, %v222
    %v755 = vmul.f32 %v753, %v223
    %758 = vrot.lane.b32.xlu0 %v754, 127
    %v759 = vpop.permute.xlu0 %758
    %760 = vrot.lane.b32.xlu0 %v755, 127
    %v761 = vpop.permute.xlu0 %760
    %v764 = vadd.f32 %v652, %v759
    %v765 = vadd.f32 %v653, %v761
    %s766 = sld [smem:[#allocation4 + $0x27]]
    %v767 = vstv %s766
    %v768 = vmul.f32 %v767, %v222
    %v769 = vmul.f32 %v767, %v223
    %772 = vrot.lane.b32.xlu0 %v768, 127
    %v773 = vpop.permute.xlu0 %772
    %774 = vrot.lane.b32.xlu0 %v769, 127
    %v775 = vpop.permute.xlu0 %774
    %v778 = vadd.f32 %v666, %v773
    %v779 = vadd.f32 %v667, %v775
    %s780 = sld [smem:[#allocation4 + $0x2b]]
    %v781 = vstv %s780
    %v782 = vmul.f32 %v781, %v222
    %v783 = vmul.f32 %v781, %v223
    %786 = vrot.lane.b32.xlu0 %v782, 127
    %v787 = vpop.permute.xlu0 %786
    %788 = vrot.lane.b32.xlu0 %v783, 127
    %v789 = vpop.permute.xlu0 %788
    %v792 = vadd.f32 %v680, %v787
    %v793 = vadd.f32 %v681, %v789
    %s794 = sld [smem:[#allocation4 + $0x2f]]
    %v795 = vstv %s794
    %v796 = vmul.f32 %v795, %v222
    %v797 = vmul.f32 %v795, %v223
    %800 = vrot.lane.b32.xlu0 %v796, 127
    %v801 = vpop.permute.xlu0 %800
    %802 = vrot.lane.b32.xlu0 %v797, 127
    %v803 = vpop.permute.xlu0 %802
    %v806 = vadd.f32 %v694, %v801
    %v807 = vadd.f32 %v695, %v803
    %s808 = sld [smem:[#allocation4 + $0x33]]
    %v809 = vstv %s808
    %v810 = vmul.f32 %v809, %v222
    %v811 = vmul.f32 %v809, %v223
    %814 = vrot.lane.b32.xlu0 %v810, 127
    %v815 = vpop.permute.xlu0 %814
    %816 = vrot.lane.b32.xlu0 %v811, 127
    %v817 = vpop.permute.xlu0 %816
    %v820 = vadd.f32 %v708, %v815
    %v821 = vadd.f32 %v709, %v817
    %s822 = sld [smem:[#allocation4 + $0x37]]
    %v823 = vstv %s822
    %v824 = vmul.f32 %v823, %v222
    %v825 = vmul.f32 %v823, %v223
    %828 = vrot.lane.b32.xlu0 %v824, 127
    %v829 = vpop.permute.xlu0 %828
    %830 = vrot.lane.b32.xlu0 %v825, 127
    %v831 = vpop.permute.xlu0 %830
    %v834 = vadd.f32 %v722, %v829
    %v835 = vadd.f32 %v723, %v831
    %s836 = sld [smem:[#allocation4 + $0x3b]]
    %v837 = vstv %s836
    %v838 = vmul.f32 %v837, %v222
    %v839 = vmul.f32 %v837, %v223
    %842 = vrot.lane.b32.xlu0 %v838, 127
    %v843 = vpop.permute.xlu0 %842
    %844 = vrot.lane.b32.xlu0 %v839, 127
    %v845 = vpop.permute.xlu0 %844
    %v848 = vadd.f32 %v736, %v843
    %v849 = vadd.f32 %v737, %v845
    %s850 = sld [smem:[#allocation4 + $0x3f]]
    %v851 = vstv %s850
    %v852 = vmul.f32 %v851, %v222
    %v853 = vmul.f32 %v851, %v223
    %856 = vrot.lane.b32.xlu0 %v852, 127
    %v857 = vpop.permute.xlu0 %856
    %858 = vrot.lane.b32.xlu0 %v853, 127
    %v859 = vpop.permute.xlu0 %858
    %v862 = vadd.f32 %v750, %v857
    %v863 = vadd.f32 %v751, %v859
    %s864 = sld [smem:[#allocation4 + $0x40]]
    %v865 = vstv %s864
    %v866 = vmul.f32 %v865, %v216
    %v867 = vmul.f32 %v865, %v217
    %870 = vrot.lane.b32.xlu0 %v866, 126
    %v871 = vpop.permute.xlu0 %870
    %872 = vrot.lane.b32.xlu0 %v867, 126
    %v873 = vpop.permute.xlu0 %872
    %v876 = vadd.f32 %v764, %v871
    %v877 = vadd.f32 %v765, %v873
    %s878 = sld [smem:[#allocation4 + $0x44]]
    %v879 = vstv %s878
    %v880 = vmul.f32 %v879, %v216
    %v881 = vmul.f32 %v879, %v217
    %884 = vrot.lane.b32.xlu0 %v880, 126
    %v885 = vpop.permute.xlu0 %884
    %886 = vrot.lane.b32.xlu0 %v881, 126
    %v887 = vpop.permute.xlu0 %886
    %v890 = vadd.f32 %v778, %v885
    %v891 = vadd.f32 %v779, %v887
    %s892 = sld [smem:[#allocation4 + $0x48]]
    %v893 = vstv %s892
    %v894 = vmul.f32 %v893, %v216
    %v895 = vmul.f32 %v893, %v217
    %898 = vrot.lane.b32.xlu0 %v894, 126
    %v899 = vpop.permute.xlu0 %898
    %900 = vrot.lane.b32.xlu0 %v895, 126
    %v901 = vpop.permute.xlu0 %900
    %v904 = vadd.f32 %v792, %v899
    %v905 = vadd.f32 %v793, %v901
    %s906 = sld [smem:[#allocation4 + $0x4c]]
    %v907 = vstv %s906
    %v908 = vmul.f32 %v907, %v216
    %v909 = vmul.f32 %v907, %v217
    %912 = vrot.lane.b32.xlu0 %v908, 126
    %v913 = vpop.permute.xlu0 %912
    %914 = vrot.lane.b32.xlu0 %v909, 126
    %v915 = vpop.permute.xlu0 %914
    %v918 = vadd.f32 %v806, %v913
    %v919 = vadd.f32 %v807, %v915
    %s920 = sld [smem:[#allocation4 + $0x50]]
    %v921 = vstv %s920
    %v922 = vmul.f32 %v921, %v216
    %v923 = vmul.f32 %v921, %v217
    %926 = vrot.lane.b32.xlu0 %v922, 126
    %v927 = vpop.permute.xlu0 %926
    %928 = vrot.lane.b32.xlu0 %v923, 126
    %v929 = vpop.permute.xlu0 %928
    %v932 = vadd.f32 %v820, %v927
    %v933 = vadd.f32 %v821, %v929
    %s934 = sld [smem:[#allocation4 + $0x54]]
    %v935 = vstv %s934
    %v936 = vmul.f32 %v935, %v216
    %v937 = vmul.f32 %v935, %v217
    %940 = vrot.lane.b32.xlu0 %v936, 126
    %v941 = vpop.permute.xlu0 %940
    %942 = vrot.lane.b32.xlu0 %v937, 126
    %v943 = vpop.permute.xlu0 %942
    %v946 = vadd.f32 %v834, %v941
    %v947 = vadd.f32 %v835, %v943
    %s948 = sld [smem:[#allocation4 + $0x58]]
    %v949 = vstv %s948
    %v950 = vmul.f32 %v949, %v216
    %v951 = vmul.f32 %v949, %v217
    %954 = vrot.lane.b32.xlu0 %v950, 126
    %v955 = vpop.permute.xlu0 %954
    %956 = vrot.lane.b32.xlu0 %v951, 126
    %v957 = vpop.permute.xlu0 %956
    %v960 = vadd.f32 %v848, %v955
    %v961 = vadd.f32 %v849, %v957
    %s962 = sld [smem:[#allocation4 + $0x5c]]
    %v963 = vstv %s962
    %v964 = vmul.f32 %v963, %v216
    %v965 = vmul.f32 %v963, %v217
    %968 = vrot.lane.b32.xlu0 %v964, 126
    %v969 = vpop.permute.xlu0 %968
    %970 = vrot.lane.b32.xlu0 %v965, 126
    %v971 = vpop.permute.xlu0 %970
    %v974 = vadd.f32 %v862, %v969
    %v975 = vadd.f32 %v863, %v971
    %s976 = sld [smem:[#allocation4 + $0x41]]
    %v977 = vstv %s976
    %v978 = vmul.f32 %v977, %v218
    %v979 = vmul.f32 %v977, %v219
    %982 = vrot.lane.b32.xlu0 %v978, 126
    %v983 = vpop.permute.xlu0 %982
    %984 = vrot.lane.b32.xlu0 %v979, 126
    %v985 = vpop.permute.xlu0 %984
    %v988 = vadd.f32 %v876, %v983
    %v989 = vadd.f32 %v877, %v985
    %s990 = sld [smem:[#allocation4 + $0x45]]
    %v991 = vstv %s990
    %v992 = vmul.f32 %v991, %v218
    %v993 = vmul.f32 %v991, %v219
    %996 = vrot.lane.b32.xlu0 %v992, 126
    %v997 = vpop.permute.xlu0 %996
    %998 = vrot.lane.b32.xlu0 %v993, 126
    %v999 = vpop.permute.xlu0 %998
    %v1002 = vadd.f32 %v890, %v997
    %v1003 = vadd.f32 %v891, %v999
    %s1004 = sld [smem:[#allocation4 + $0x49]]
    %v1005 = vstv %s1004
    %v1006 = vmul.f32 %v1005, %v218
    %v1007 = vmul.f32 %v1005, %v219
    %1010 = vrot.lane.b32.xlu0 %v1006, 126
    %v1011 = vpop.permute.xlu0 %1010
    %1012 = vrot.lane.b32.xlu0 %v1007, 126
    %v1013 = vpop.permute.xlu0 %1012
    %v1016 = vadd.f32 %v904, %v1011
    %v1017 = vadd.f32 %v905, %v1013
    %s1018 = sld [smem:[#allocation4 + $0x4d]]
    %v1019 = vstv %s1018
    %v1020 = vmul.f32 %v1019, %v218
    %v1021 = vmul.f32 %v1019, %v219
    %1024 = vrot.lane.b32.xlu0 %v1020, 126
    %v1025 = vpop.permute.xlu0 %1024
    %1026 = vrot.lane.b32.xlu0 %v1021, 126
    %v1027 = vpop.permute.xlu0 %1026
    %v1030 = vadd.f32 %v918, %v1025
    %v1031 = vadd.f32 %v919, %v1027
    %s1032 = sld [smem:[#allocation4 + $0x51]]
    %v1033 = vstv %s1032
    %v1034 = vmul.f32 %v1033, %v218
    %v1035 = vmul.f32 %v1033, %v219
    %1038 = vrot.lane.b32.xlu0 %v1034, 126
    %v1039 = vpop.permute.xlu0 %1038
    %1040 = vrot.lane.b32.xlu0 %v1035, 126
    %v1041 = vpop.permute.xlu0 %1040
    %v1044 = vadd.f32 %v932, %v1039
    %v1045 = vadd.f32 %v933, %v1041
    %s1046 = sld [smem:[#allocation4 + $0x55]]
    %v1047 = vstv %s1046
    %v1048 = vmul.f32 %v1047, %v218
    %v1049 = vmul.f32 %v1047, %v219
    %1052 = vrot.lane.b32.xlu0 %v1048, 126
    %v1053 = vpop.permute.xlu0 %1052
    %1054 = vrot.lane.b32.xlu0 %v1049, 126
    %v1055 = vpop.permute.xlu0 %1054
    %v1058 = vadd.f32 %v946, %v1053
    %v1059 = vadd.f32 %v947, %v1055
    %s1060 = sld [smem:[#allocation4 + $0x59]]
    %v1061 = vstv %s1060
    %v1062 = vmul.f32 %v1061, %v218
    %v1063 = vmul.f32 %v1061, %v219
    %1066 = vrot.lane.b32.xlu0 %v1062, 126
    %v1067 = vpop.permute.xlu0 %1066
    %1068 = vrot.lane.b32.xlu0 %v1063, 126
    %v1069 = vpop.permute.xlu0 %1068
    %v1072 = vadd.f32 %v960, %v1067
    %v1073 = vadd.f32 %v961, %v1069
    %s1074 = sld [smem:[#allocation4 + $0x5d]]
    %v1075 = vstv %s1074
    %v1076 = vmul.f32 %v1075, %v218
    %v1077 = vmul.f32 %v1075, %v219
    %1080 = vrot.lane.b32.xlu0 %v1076, 126
    %v1081 = vpop.permute.xlu0 %1080
    %1082 = vrot.lane.b32.xlu0 %v1077, 126
    %v1083 = vpop.permute.xlu0 %1082
    %v1086 = vadd.f32 %v974, %v1081
    %v1087 = vadd.f32 %v975, %v1083
    %s1088 = sld [smem:[#allocation4 + $0x42]]
    %v1089 = vstv %s1088
    %v1090 = vmul.f32 %v1089, %v220
    %v1091 = vmul.f32 %v1089, %v221
    %1094 = vrot.lane.b32.xlu0 %v1090, 126
    %v1095 = vpop.permute.xlu0 %1094
    %1096 = vrot.lane.b32.xlu0 %v1091, 126
    %v1097 = vpop.permute.xlu0 %1096
    %v1100 = vadd.f32 %v988, %v1095
    %v1101 = vadd.f32 %v989, %v1097
    %s1102 = sld [smem:[#allocation4 + $0x46]]
    %v1103 = vstv %s1102
    %v1104 = vmul.f32 %v1103, %v220
    %v1105 = vmul.f32 %v1103, %v221
    %1108 = vrot.lane.b32.xlu0 %v1104, 126
    %v1109 = vpop.permute.xlu0 %1108
    %1110 = vrot.lane.b32.xlu0 %v1105, 126
    %v1111 = vpop.permute.xlu0 %1110
    %v1114 = vadd.f32 %v1002, %v1109
    %v1115 = vadd.f32 %v1003, %v1111
    %s1116 = sld [smem:[#allocation4 + $0x4a]]
    %v1117 = vstv %s1116
    %v1118 = vmul.f32 %v1117, %v220
    %v1119 = vmul.f32 %v1117, %v221
    %1122 = vrot.lane.b32.xlu0 %v1118, 126
    %v1123 = vpop.permute.xlu0 %1122
    %1124 = vrot.lane.b32.xlu0 %v1119, 126
    %v1125 = vpop.permute.xlu0 %1124
    %v1128 = vadd.f32 %v1016, %v1123
    %v1129 = vadd.f32 %v1017, %v1125
    %s1130 = sld [smem:[#allocation4 + $0x4e]]
    %v1131 = vstv %s1130
    %v1132 = vmul.f32 %v1131, %v220
    %v1133 = vmul.f32 %v1131, %v221
    %1136 = vrot.lane.b32.xlu0 %v1132, 126
    %v1137 = vpop.permute.xlu0 %1136
    %1138 = vrot.lane.b32.xlu0 %v1133, 126
    %v1139 = vpop.permute.xlu0 %1138
    %v1142 = vadd.f32 %v1030, %v1137
    %v1143 = vadd.f32 %v1031, %v1139
    %s1144 = sld [smem:[#allocation4 + $0x52]]
    %v1145 = vstv %s1144
    %v1146 = vmul.f32 %v1145, %v220
    %v1147 = vmul.f32 %v1145, %v221
    %1150 = vrot.lane.b32.xlu0 %v1146, 126
    %v1151 = vpop.permute.xlu0 %1150
    %1152 = vrot.lane.b32.xlu0 %v1147, 126
    %v1153 = vpop.permute.xlu0 %1152
    %v1156 = vadd.f32 %v1044, %v1151
    %v1157 = vadd.f32 %v1045, %v1153
    %s1158 = sld [smem:[#allocation4 + $0x56]]
    %v1159 = vstv %s1158
    %v1160 = vmul.f32 %v1159, %v220
    %v1161 = vmul.f32 %v1159, %v221
    %1164 = vrot.lane.b32.xlu0 %v1160, 126
    %v1165 = vpop.permute.xlu0 %1164
    %1166 = vrot.lane.b32.xlu0 %v1161, 126
    %v1167 = vpop.permute.xlu0 %1166
    %v1170 = vadd.f32 %v1058, %v1165
    %v1171 = vadd.f32 %v1059, %v1167
    %s1172 = sld [smem:[#allocation4 + $0x5a]]
    %v1173 = vstv %s1172
    %v1174 = vmul.f32 %v1173, %v220
    %v1175 = vmul.f32 %v1173, %v221
    %1178 = vrot.lane.b32.xlu0 %v1174, 126
    %v1179 = vpop.permute.xlu0 %1178
    %1180 = vrot.lane.b32.xlu0 %v1175, 126
    %v1181 = vpop.permute.xlu0 %1180
    %v1184 = vadd.f32 %v1072, %v1179
    %v1185 = vadd.f32 %v1073, %v1181
    %s1186 = sld [smem:[#allocation4 + $0x5e]]
    %v1187 = vstv %s1186
    %v1188 = vmul.f32 %v1187, %v220
    %v1189 = vmul.f32 %v1187, %v221
    %1192 = vrot.lane.b32.xlu0 %v1188, 126
    %v1193 = vpop.permute.xlu0 %1192
    %1194 = vrot.lane.b32.xlu0 %v1189, 126
    %v1195 = vpop.permute.xlu0 %1194
    %v1198 = vadd.f32 %v1086, %v1193
    %v1199 = vadd.f32 %v1087, %v1195
    %s1200 = sld [smem:[#allocation4 + $0x43]]
    %v1201 = vstv %s1200
    %v1202 = vmul.f32 %v1201, %v222
    %v1203 = vmul.f32 %v1201, %v223
    %1206 = vrot.lane.b32.xlu0 %v1202, 126
    %v1207 = vpop.permute.xlu0 %1206
    %1208 = vrot.lane.b32.xlu0 %v1203, 126
    %v1209 = vpop.permute.xlu0 %1208
    %v1212 = vadd.f32 %v1100, %v1207
    %v1213 = vadd.f32 %v1101, %v1209
    %s1214 = sld [smem:[#allocation4 + $0x47]]
    %v1215 = vstv %s1214
    %v1216 = vmul.f32 %v1215, %v222
    %v1217 = vmul.f32 %v1215, %v223
    %1220 = vrot.lane.b32.xlu0 %v1216, 126
    %v1221 = vpop.permute.xlu0 %1220
    %1222 = vrot.lane.b32.xlu0 %v1217, 126
    %v1223 = vpop.permute.xlu0 %1222
    %v1226 = vadd.f32 %v1114, %v1221
    %v1227 = vadd.f32 %v1115, %v1223
    %s1228 = sld [smem:[#allocation4 + $0x4b]]
    %v1229 = vstv %s1228
    %v1230 = vmul.f32 %v1229, %v222
    %v1231 = vmul.f32 %v1229, %v223
    %1234 = vrot.lane.b32.xlu0 %v1230, 126
    %v1235 = vpop.permute.xlu0 %1234
    %1236 = vrot.lane.b32.xlu0 %v1231, 126
    %v1237 = vpop.permute.xlu0 %1236
    %v1240 = vadd.f32 %v1128, %v1235
    %v1241 = vadd.f32 %v1129, %v1237
    %s1242 = sld [smem:[#allocation4 + $0x4f]]
    %v1243 = vstv %s1242
    %v1244 = vmul.f32 %v1243, %v222
    %v1245 = vmul.f32 %v1243, %v223
    %1248 = vrot.lane.b32.xlu0 %v1244, 126
    %v1249 = vpop.permute.xlu0 %1248
    %1250 = vrot.lane.b32.xlu0 %v1245, 126
    %v1251 = vpop.permute.xlu0 %1250
    %v1254 = vadd.f32 %v1142, %v1249
    %v1255 = vadd.f32 %v1143, %v1251
    %s1256 = sld [smem:[#allocation4 + $0x53]]
    %v1257 = vstv %s1256
    %v1258 = vmul.f32 %v1257, %v222
    %v1259 = vmul.f32 %v1257, %v223
    %1262 = vrot.lane.b32.xlu0 %v1258, 126
    %v1263 = vpop.permute.xlu0 %1262
    %1264 = vrot.lane.b32.xlu0 %v1259, 126
    %v1265 = vpop.permute.xlu0 %1264
    %v1268 = vadd.f32 %v1156, %v1263
    %v1269 = vadd.f32 %v1157, %v1265
    %s1270 = sld [smem:[#allocation4 + $0x57]]
    %v1271 = vstv %s1270
    %v1272 = vmul.f32 %v1271, %v222
    %v1273 = vmul.f32 %v1271, %v223
    %1276 = vrot.lane.b32.xlu0 %v1272, 126
    %v1277 = vpop.permute.xlu0 %1276
    %1278 = vrot.lane.b32.xlu0 %v1273, 126
    %v1279 = vpop.permute.xlu0 %1278
    %v1282 = vadd.f32 %v1170, %v1277
    %v1283 = vadd.f32 %v1171, %v1279
    %s1284 = sld [smem:[#allocation4 + $0x5b]]
    %v1285 = vstv %s1284
    %v1286 = vmul.f32 %v1285, %v222
    %v1287 = vmul.f32 %v1285, %v223
    %1290 = vrot.lane.b32.xlu0 %v1286, 126
    %v1291 = vpop.permute.xlu0 %1290
    %1292 = vrot.lane.b32.xlu0 %v1287, 126
    %v1293 = vpop.permute.xlu0 %1292
    %v1296 = vadd.f32 %v1184, %v1291
    %v1297 = vadd.f32 %v1185, %v1293
    %s1298 = sld [smem:[#allocation4 + $0x5f]]
    %v1299 = vstv %s1298
    %v1300 = vmul.f32 %v1299, %v222
    %v1301 = vmul.f32 %v1299, %v223
    %1304 = vrot.lane.b32.xlu0 %v1300, 126
    %v1305 = vpop.permute.xlu0 %1304
    %1306 = vrot.lane.b32.xlu0 %v1301, 126
    %v1307 = vpop.permute.xlu0 %1306
    %v1310 = vadd.f32 %v1198, %v1305
    %v1311 = vadd.f32 %v1199, %v1307
    %v1312 = vld [vmem:[#allocation2 + $0x1] sm:$0xff]
    %v1313 = vld [vmem:[#allocation2 + $0x9] sm:$0xff]
    %v1314 = vld [vmem:[#allocation2 + $0x19] sm:$0xff]
    %v1315 = vld [vmem:[#allocation2 + $0x21] sm:$0xff]
    %v1316 = vld [vmem:[#allocation2 + $0x31] sm:$0xff]
    %v1317 = vld [vmem:[#allocation2 + $0x39] sm:$0xff]
    %v1318 = vld [vmem:[#allocation2 + $0x49] sm:$0xff]
    %v1319 = vld [vmem:[#allocation2 + $0x51] sm:$0xff]
    %s1320 = sld [smem:[#allocation4 + $0x60]]
    %v1321 = vstv %s1320
    %v1322 = vmul.f32 %v1321, %v1312
    %v1323 = vmul.f32 %v1321, %v1313
    %v1324 = vadd.f32 %v1212, %v1322
    %v1325 = vadd.f32 %v1213, %v1323
    %s1326 = sld [smem:[#allocation4 + $0x64]]
    %v1327 = vstv %s1326
    %v1328 = vmul.f32 %v1327, %v1312
    %v1329 = vmul.f32 %v1327, %v1313
    %v1330 = vadd.f32 %v1226, %v1328
    %v1331 = vadd.f32 %v1227, %v1329
    %s1332 = sld [smem:[#allocation4 + $0x68]]
    %v1333 = vstv %s1332
    %v1334 = vmul.f32 %v1333, %v1312
    %v1335 = vmul.f32 %v1333, %v1313
    %v1336 = vadd.f32 %v1240, %v1334
    %v1337 = vadd.f32 %v1241, %v1335
    %s1338 = sld [smem:[#allocation4 + $0x6c]]
    %v1339 = vstv %s1338
    %v1340 = vmul.f32 %v1339, %v1312
    %v1341 = vmul.f32 %v1339, %v1313
    %v1342 = vadd.f32 %v1254, %v1340
    %v1343 = vadd.f32 %v1255, %v1341
    %s1344 = sld [smem:[#allocation4 + $0x70]]
    %v1345 = vstv %s1344
    %v1346 = vmul.f32 %v1345, %v1312
    %v1347 = vmul.f32 %v1345, %v1313
    %v1348 = vadd.f32 %v1268, %v1346
    %v1349 = vadd.f32 %v1269, %v1347
    %s1350 = sld [smem:[#allocation4 + $0x74]]
    %v1351 = vstv %s1350
    %v1352 = vmul.f32 %v1351, %v1312
    %v1353 = vmul.f32 %v1351, %v1313
    %v1354 = vadd.f32 %v1282, %v1352
    %v1355 = vadd.f32 %v1283, %v1353
    %s1356 = sld [smem:[#allocation4 + $0x78]]
    %v1357 = vstv %s1356
    %v1358 = vmul.f32 %v1357, %v1312
    %v1359 = vmul.f32 %v1357, %v1313
    %v1360 = vadd.f32 %v1296, %v1358
    %v1361 = vadd.f32 %v1297, %v1359
    %s1362 = sld [smem:[#allocation4 + $0x7c]]
    %v1363 = vstv %s1362
    %v1364 = vmul.f32 %v1363, %v1312
    %v1365 = vmul.f32 %v1363, %v1313
    %v1366 = vadd.f32 %v1310, %v1364
    %v1367 = vadd.f32 %v1311, %v1365
    %s1368 = sld [smem:[#allocation4 + $0x61]]
    %v1369 = vstv %s1368
    %v1370 = vmul.f32 %v1369, %v1314
    %v1371 = vmul.f32 %v1369, %v1315
    %v1372 = vadd.f32 %v1324, %v1370
    %v1373 = vadd.f32 %v1325, %v1371
    %s1374 = sld [smem:[#allocation4 + $0x65]]
    %v1375 = vstv %s1374
    %v1376 = vmul.f32 %v1375, %v1314
    %v1377 = vmul.f32 %v1375, %v1315
    %v1378 = vadd.f32 %v1330, %v1376
    %v1379 = vadd.f32 %v1331, %v1377
    %s1380 = sld [smem:[#allocation4 + $0x69]]
    %v1381 = vstv %s1380
    %v1382 = vmul.f32 %v1381, %v1314
    %v1383 = vmul.f32 %v1381, %v1315
    %v1384 = vadd.f32 %v1336, %v1382
    %v1385 = vadd.f32 %v1337, %v1383
    %s1386 = sld [smem:[#allocation4 + $0x6d]]
    %v1387 = vstv %s1386
    %v1388 = vmul.f32 %v1387, %v1314
    %v1389 = vmul.f32 %v1387, %v1315
    %v1390 = vadd.f32 %v1342, %v1388
    %v1391 = vadd.f32 %v1343, %v1389
    %s1392 = sld [smem:[#allocation4 + $0x71]]
    %v1393 = vstv %s1392
    %v1394 = vmul.f32 %v1393, %v1314
    %v1395 = vmul.f32 %v1393, %v1315
    %v1396 = vadd.f32 %v1348, %v1394
    %v1397 = vadd.f32 %v1349, %v1395
    %s1398 = sld [smem:[#allocation4 + $0x75]]
    %v1399 = vstv %s1398
    %v1400 = vmul.f32 %v1399, %v1314
    %v1401 = vmul.f32 %v1399, %v1315
    %v1402 = vadd.f32 %v1354, %v1400
    %v1403 = vadd.f32 %v1355, %v1401
    %s1404 = sld [smem:[#allocation4 + $0x79]]
    %v1405 = vstv %s1404
    %v1406 = vmul.f32 %v1405, %v1314
    %v1407 = vmul.f32 %v1405, %v1315
    %v1408 = vadd.f32 %v1360, %v1406
    %v1409 = vadd.f32 %v1361, %v1407
    %s1410 = sld [smem:[#allocation4 + $0x7d]]
    %v1411 = vstv %s1410
    %v1412 = vmul.f32 %v1411, %v1314
    %v1413 = vmul.f32 %v1411, %v1315
    %v1414 = vadd.f32 %v1366, %v1412
    %v1415 = vadd.f32 %v1367, %v1413
    %s1416 = sld [smem:[#allocation4 + $0x62]]
    %v1417 = vstv %s1416
    %v1418 = vmul.f32 %v1417, %v1316
    %v1419 = vmul.f32 %v1417, %v1317
    %v1420 = vadd.f32 %v1372, %v1418
    %v1421 = vadd.f32 %v1373, %v1419
    %s1422 = sld [smem:[#allocation4 + $0x66]]
    %v1423 = vstv %s1422
    %v1424 = vmul.f32 %v1423, %v1316
    %v1425 = vmul.f32 %v1423, %v1317
    %v1426 = vadd.f32 %v1378, %v1424
    %v1427 = vadd.f32 %v1379, %v1425
    %s1428 = sld [smem:[#allocation4 + $0x6a]]
    %v1429 = vstv %s1428
    %v1430 = vmul.f32 %v1429, %v1316
    %v1431 = vmul.f32 %v1429, %v1317
    %v1432 = vadd.f32 %v1384, %v1430
    %v1433 = vadd.f32 %v1385, %v1431
    %s1434 = sld [smem:[#allocation4 + $0x6e]]
    %v1435 = vstv %s1434
    %v1436 = vmul.f32 %v1435, %v1316
    %v1437 = vmul.f32 %v1435, %v1317
    %v1438 = vadd.f32 %v1390, %v1436
    %v1439 = vadd.f32 %v1391, %v1437
    %s1440 = sld [smem:[#allocation4 + $0x72]]
    %v1441 = vstv %s1440
    %v1442 = vmul.f32 %v1441, %v1316
    %v1443 = vmul.f32 %v1441, %v1317
    %v1444 = vadd.f32 %v1396, %v1442
    %v1445 = vadd.f32 %v1397, %v1443
    %s1446 = sld [smem:[#allocation4 + $0x76]]
    %v1447 = vstv %s1446
    %v1448 = vmul.f32 %v1447, %v1316
    %v1449 = vmul.f32 %v1447, %v1317
    %v1450 = vadd.f32 %v1402, %v1448
    %v1451 = vadd.f32 %v1403, %v1449
    %s1452 = sld [smem:[#allocation4 + $0x7a]]
    %v1453 = vstv %s1452
    %v1454 = vmul.f32 %v1453, %v1316
    %v1455 = vmul.f32 %v1453, %v1317
    %v1456 = vadd.f32 %v1408, %v1454
    %v1457 = vadd.f32 %v1409, %v1455
    %s1458 = sld [smem:[#allocation4 + $0x7e]]
    %v1459 = vstv %s1458
    %v1460 = vmul.f32 %v1459, %v1316
    %v1461 = vmul.f32 %v1459, %v1317
    %v1462 = vadd.f32 %v1414, %v1460
    %v1463 = vadd.f32 %v1415, %v1461
    %s1464 = sld [smem:[#allocation4 + $0x63]]
    %v1465 = vstv %s1464
    %v1466 = vmul.f32 %v1465, %v1318
    %v1467 = vmul.f32 %v1465, %v1319
    %v1468 = vadd.f32 %v1420, %v1466
    %v1469 = vadd.f32 %v1421, %v1467
    %s1470 = sld [smem:[#allocation4 + $0x67]]
    %v1471 = vstv %s1470
    %v1472 = vmul.f32 %v1471, %v1318
    %v1473 = vmul.f32 %v1471, %v1319
    %v1474 = vadd.f32 %v1426, %v1472
    %v1475 = vadd.f32 %v1427, %v1473
    %s1476 = sld [smem:[#allocation4 + $0x6b]]
    %v1477 = vstv %s1476
    %v1478 = vmul.f32 %v1477, %v1318
    %v1479 = vmul.f32 %v1477, %v1319
    %v1480 = vadd.f32 %v1432, %v1478
    %v1481 = vadd.f32 %v1433, %v1479
    %s1482 = sld [smem:[#allocation4 + $0x6f]]
    %v1483 = vstv %s1482
    %v1484 = vmul.f32 %v1483, %v1318
    %v1485 = vmul.f32 %v1483, %v1319
    %v1486 = vadd.f32 %v1438, %v1484
    %v1487 = vadd.f32 %v1439, %v1485
    %s1488 = sld [smem:[#allocation4 + $0x73]]
    %v1489 = vstv %s1488
    %v1490 = vmul.f32 %v1489, %v1318
    %v1491 = vmul.f32 %v1489, %v1319
    %v1492 = vadd.f32 %v1444, %v1490
    %v1493 = vadd.f32 %v1445, %v1491
    %s1494 = sld [smem:[#allocation4 + $0x77]]
    %v1495 = vstv %s1494
    %v1496 = vmul.f32 %v1495, %v1318
    %v1497 = vmul.f32 %v1495, %v1319
    %v1498 = vadd.f32 %v1450, %v1496
    %v1499 = vadd.f32 %v1451, %v1497
    %s1500 = sld [smem:[#allocation4 + $0x7b]]
    %v1501 = vstv %s1500
    %v1502 = vmul.f32 %v1501, %v1318
    %v1503 = vmul.f32 %v1501, %v1319
    %v1504 = vadd.f32 %v1456, %v1502
    %v1505 = vadd.f32 %v1457, %v1503
    %s1506 = sld [smem:[#allocation4 + $0x7f]]
    %v1507 = vstv %s1506
    %v1508 = vmul.f32 %v1507, %v1318
    %v1509 = vmul.f32 %v1507, %v1319
    %v1510 = vadd.f32 %v1462, %v1508
    %v1511 = vadd.f32 %v1463, %v1509
    %s1512 = sld [smem:[#allocation4 + $0x80]]
    %v1513 = vstv %s1512
    %v1514 = vmul.f32 %v1513, %v1312
    %v1515 = vmul.f32 %v1513, %v1313
    %1518 = vrot.lane.b32.xlu0 %v1514, 127
    %v1519 = vpop.permute.xlu0 %1518
    %1520 = vrot.lane.b32.xlu0 %v1515, 127
    %v1521 = vpop.permute.xlu0 %1520
    %v1524 = vadd.f32 %v1468, %v1519
    %v1525 = vadd.f32 %v1469, %v1521
    %s1526 = sld [smem:[#allocation4 + $0x84]]
    %v1527 = vstv %s1526
    %v1528 = vmul.f32 %v1527, %v1312
    %v1529 = vmul.f32 %v1527, %v1313
    %1532 = vrot.lane.b32.xlu0 %v1528, 127
    %v1533 = vpop.permute.xlu0 %1532
    %1534 = vrot.lane.b32.xlu0 %v1529, 127
    %v1535 = vpop.permute.xlu0 %1534
    %v1538 = vadd.f32 %v1474, %v1533
    %v1539 = vadd.f32 %v1475, %v1535
    %s1540 = sld [smem:[#allocation4 + $0x88]]
    %v1541 = vstv %s1540
    %v1542 = vmul.f32 %v1541, %v1312
    %v1543 = vmul.f32 %v1541, %v1313
    %1546 = vrot.lane.b32.xlu0 %v1542, 127
    %v1547 = vpop.permute.xlu0 %1546
    %1548 = vrot.lane.b32.xlu0 %v1543, 127
    %v1549 = vpop.permute.xlu0 %1548
    %v1552 = vadd.f32 %v1480, %v1547
    %v1553 = vadd.f32 %v1481, %v1549
    %s1554 = sld [smem:[#allocation4 + $0x8c]]
    %v1555 = vstv %s1554
    %v1556 = vmul.f32 %v1555, %v1312
    %v1557 = vmul.f32 %v1555, %v1313
    %1560 = vrot.lane.b32.xlu0 %v1556, 127
    %v1561 = vpop.permute.xlu0 %1560
    %1562 = vrot.lane.b32.xlu0 %v1557, 127
    %v1563 = vpop.permute.xlu0 %1562
    %v1566 = vadd.f32 %v1486, %v1561
    %v1567 = vadd.f32 %v1487, %v1563
    %s1568 = sld [smem:[#allocation4 + $0x90]]
    %v1569 = vstv %s1568
    %v1570 = vmul.f32 %v1569, %v1312
    %v1571 = vmul.f32 %v1569, %v1313
    %1574 = vrot.lane.b32.xlu0 %v1570, 127
    %v1575 = vpop.permute.xlu0 %1574
    %1576 = vrot.lane.b32.xlu0 %v1571, 127
    %v1577 = vpop.permute.xlu0 %1576
    %v1580 = vadd.f32 %v1492, %v1575
    %v1581 = vadd.f32 %v1493, %v1577
    %s1582 = sld [smem:[#allocation4 + $0x94]]
    %v1583 = vstv %s1582
    %v1584 = vmul.f32 %v1583, %v1312
    %v1585 = vmul.f32 %v1583, %v1313
    %1588 = vrot.lane.b32.xlu0 %v1584, 127
    %v1589 = vpop.permute.xlu0 %1588
    %1590 = vrot.lane.b32.xlu0 %v1585, 127
    %v1591 = vpop.permute.xlu0 %1590
    %v1594 = vadd.f32 %v1498, %v1589
    %v1595 = vadd.f32 %v1499, %v1591
    %s1596 = sld [smem:[#allocation4 + $0x98]]
    %v1597 = vstv %s1596
    %v1598 = vmul.f32 %v1597, %v1312
    %v1599 = vmul.f32 %v1597, %v1313
    %1602 = vrot.lane.b32.xlu0 %v1598, 127
    %v1603 = vpop.permute.xlu0 %1602
    %1604 = vrot.lane.b32.xlu0 %v1599, 127
    %v1605 = vpop.permute.xlu0 %1604
    %v1608 = vadd.f32 %v1504, %v1603
    %v1609 = vadd.f32 %v1505, %v1605
    %s1610 = sld [smem:[#allocation4 + $0x9c]]
    %v1611 = vstv %s1610
    %v1612 = vmul.f32 %v1611, %v1312
    %v1613 = vmul.f32 %v1611, %v1313
    %1616 = vrot.lane.b32.xlu0 %v1612, 127
    %v1617 = vpop.permute.xlu0 %1616
    %1618 = vrot.lane.b32.xlu0 %v1613, 127
    %v1619 = vpop.permute.xlu0 %1618
    %v1622 = vadd.f32 %v1510, %v1617
    %v1623 = vadd.f32 %v1511, %v1619
    %s1624 = sld [smem:[#allocation4 + $0x81]]
    %v1625 = vstv %s1624
    %v1626 = vmul.f32 %v1625, %v1314
    %v1627 = vmul.f32 %v1625, %v1315
    %1630 = vrot.lane.b32.xlu0 %v1626, 127
    %v1631 = vpop.permute.xlu0 %1630
    %1632 = vrot.lane.b32.xlu0 %v1627, 127
    %v1633 = vpop.permute.xlu0 %1632
    %v1636 = vadd.f32 %v1524, %v1631
    %v1637 = vadd.f32 %v1525, %v1633
    %s1638 = sld [smem:[#allocation4 + $0x85]]
    %v1639 = vstv %s1638
    %v1640 = vmul.f32 %v1639, %v1314
    %v1641 = vmul.f32 %v1639, %v1315
    %1644 = vrot.lane.b32.xlu0 %v1640, 127
    %v1645 = vpop.permute.xlu0 %1644
    %1646 = vrot.lane.b32.xlu0 %v1641, 127
    %v1647 = vpop.permute.xlu0 %1646
    %v1650 = vadd.f32 %v1538, %v1645
    %v1651 = vadd.f32 %v1539, %v1647
    %s1652 = sld [smem:[#allocation4 + $0x89]]
    %v1653 = vstv %s1652
    %v1654 = vmul.f32 %v1653, %v1314
    %v1655 = vmul.f32 %v1653, %v1315
    %1658 = vrot.lane.b32.xlu0 %v1654, 127
    %v1659 = vpop.permute.xlu0 %1658
    %1660 = vrot.lane.b32.xlu0 %v1655, 127
    %v1661 = vpop.permute.xlu0 %1660
    %v1664 = vadd.f32 %v1552, %v1659
    %v1665 = vadd.f32 %v1553, %v1661
    %s1666 = sld [smem:[#allocation4 + $0x8d]]
    %v1667 = vstv %s1666
    %v1668 = vmul.f32 %v1667, %v1314
    %v1669 = vmul.f32 %v1667, %v1315
    %1672 = vrot.lane.b32.xlu0 %v1668, 127
    %v1673 = vpop.permute.xlu0 %1672
    %1674 = vrot.lane.b32.xlu0 %v1669, 127
    %v1675 = vpop.permute.xlu0 %1674
    %v1678 = vadd.f32 %v1566, %v1673
    %v1679 = vadd.f32 %v1567, %v1675
    %s1680 = sld [smem:[#allocation4 + $0x91]]
    %v1681 = vstv %s1680
    %v1682 = vmul.f32 %v1681, %v1314
    %v1683 = vmul.f32 %v1681, %v1315
    %1686 = vrot.lane.b32.xlu0 %v1682, 127
    %v1687 = vpop.permute.xlu0 %1686
    %1688 = vrot.lane.b32.xlu0 %v1683, 127
    %v1689 = vpop.permute.xlu0 %1688
    %v1692 = vadd.f32 %v1580, %v1687
    %v1693 = vadd.f32 %v1581, %v1689
    %s1694 = sld [smem:[#allocation4 + $0x95]]
    %v1695 = vstv %s1694
    %v1696 = vmul.f32 %v1695, %v1314
    %v1697 = vmul.f32 %v1695, %v1315
    %1700 = vrot.lane.b32.xlu0 %v1696, 127
    %v1701 = vpop.permute.xlu0 %1700
    %1702 = vrot.lane.b32.xlu0 %v1697, 127
    %v1703 = vpop.permute.xlu0 %1702
    %v1706 = vadd.f32 %v1594, %v1701
    %v1707 = vadd.f32 %v1595, %v1703
    %s1708 = sld [smem:[#allocation4 + $0x99]]
    %v1709 = vstv %s1708
    %v1710 = vmul.f32 %v1709, %v1314
    %v1711 = vmul.f32 %v1709, %v1315
    %1714 = vrot.lane.b32.xlu0 %v1710, 127
    %v1715 = vpop.permute.xlu0 %1714
    %1716 = vrot.lane.b32.xlu0 %v1711, 127
    %v1717 = vpop.permute.xlu0 %1716
    %v1720 = vadd.f32 %v1608, %v1715
    %v1721 = vadd.f32 %v1609, %v1717
    %s1722 = sld [smem:[#allocation4 + $0x9d]]
    %v1723 = vstv %s1722
    %v1724 = vmul.f32 %v1723, %v1314
    %v1725 = vmul.f32 %v1723, %v1315
    %1728 = vrot.lane.b32.xlu0 %v1724, 127
    %v1729 = vpop.permute.xlu0 %1728
    %1730 = vrot.lane.b32.xlu0 %v1725, 127
    %v1731 = vpop.permute.xlu0 %1730
    %v1734 = vadd.f32 %v1622, %v1729
    %v1735 = vadd.f32 %v1623, %v1731
    %s1736 = sld [smem:[#allocation4 + $0x82]]
    %v1737 = vstv %s1736
    %v1738 = vmul.f32 %v1737, %v1316
    %v1739 = vmul.f32 %v1737, %v1317
    %1742 = vrot.lane.b32.xlu0 %v1738, 127
    %v1743 = vpop.permute.xlu0 %1742
    %1744 = vrot.lane.b32.xlu0 %v1739, 127
    %v1745 = vpop.permute.xlu0 %1744
    %v1748 = vadd.f32 %v1636, %v1743
    %v1749 = vadd.f32 %v1637, %v1745
    %s1750 = sld [smem:[#allocation4 + $0x86]]
    %v1751 = vstv %s1750
    %v1752 = vmul.f32 %v1751, %v1316
    %v1753 = vmul.f32 %v1751, %v1317
    %1756 = vrot.lane.b32.xlu0 %v1752, 127
    %v1757 = vpop.permute.xlu0 %1756
    %1758 = vrot.lane.b32.xlu0 %v1753, 127
    %v1759 = vpop.permute.xlu0 %1758
    %v1762 = vadd.f32 %v1650, %v1757
    %v1763 = vadd.f32 %v1651, %v1759
    %s1764 = sld [smem:[#allocation4 + $0x8a]]
    %v1765 = vstv %s1764
    %v1766 = vmul.f32 %v1765, %v1316
    %v1767 = vmul.f32 %v1765, %v1317
    %1770 = vrot.lane.b32.xlu0 %v1766, 127
    %v1771 = vpop.permute.xlu0 %1770
    %1772 = vrot.lane.b32.xlu0 %v1767, 127
    %v1773 = vpop.permute.xlu0 %1772
    %v1776 = vadd.f32 %v1664, %v1771
    %v1777 = vadd.f32 %v1665, %v1773
    %s1778 = sld [smem:[#allocation4 + $0x8e]]
    %v1779 = vstv %s1778
    %v1780 = vmul.f32 %v1779, %v1316
    %v1781 = vmul.f32 %v1779, %v1317
    %1784 = vrot.lane.b32.xlu0 %v1780, 127
    %v1785 = vpop.permute.xlu0 %1784
    %1786 = vrot.lane.b32.xlu0 %v1781, 127
    %v1787 = vpop.permute.xlu0 %1786
    %v1790 = vadd.f32 %v1678, %v1785
    %v1791 = vadd.f32 %v1679, %v1787
    %s1792 = sld [smem:[#allocation4 + $0x92]]
    %v1793 = vstv %s1792
    %v1794 = vmul.f32 %v1793, %v1316
    %v1795 = vmul.f32 %v1793, %v1317
    %1798 = vrot.lane.b32.xlu0 %v1794, 127
    %v1799 = vpop.permute.xlu0 %1798
    %1800 = vrot.lane.b32.xlu0 %v1795, 127
    %v1801 = vpop.permute.xlu0 %1800
    %v1804 = vadd.f32 %v1692, %v1799
    %v1805 = vadd.f32 %v1693, %v1801
    %s1806 = sld [smem:[#allocation4 + $0x96]]
    %v1807 = vstv %s1806
    %v1808 = vmul.f32 %v1807, %v1316
    %v1809 = vmul.f32 %v1807, %v1317
    %1812 = vrot.lane.b32.xlu0 %v1808, 127
    %v1813 = vpop.permute.xlu0 %1812
    %1814 = vrot.lane.b32.xlu0 %v1809, 127
    %v1815 = vpop.permute.xlu0 %1814
    %v1818 = vadd.f32 %v1706, %v1813
    %v1819 = vadd.f32 %v1707, %v1815
    %s1820 = sld [smem:[#allocation4 + $0x9a]]
    %v1821 = vstv %s1820
    %v1822 = vmul.f32 %v1821, %v1316
    %v1823 = vmul.f32 %v1821, %v1317
    %1826 = vrot.lane.b32.xlu0 %v1822, 127
    %v1827 = vpop.permute.xlu0 %1826
    %1828 = vrot.lane.b32.xlu0 %v1823, 127
    %v1829 = vpop.permute.xlu0 %1828
    %v1832 = vadd.f32 %v1720, %v1827
    %v1833 = vadd.f32 %v1721, %v1829
    %s1834 = sld [smem:[#allocation4 + $0x9e]]
    %v1835 = vstv %s1834
    %v1836 = vmul.f32 %v1835, %v1316
    %v1837 = vmul.f32 %v1835, %v1317
    %1840 = vrot.lane.b32.xlu0 %v1836, 127
    %v1841 = vpop.permute.xlu0 %1840
    %1842 = vrot.lane.b32.xlu0 %v1837, 127
    %v1843 = vpop.permute.xlu0 %1842
    %v1846 = vadd.f32 %v1734, %v1841
    %v1847 = vadd.f32 %v1735, %v1843
    %s1848 = sld [smem:[#allocation4 + $0x83]]
    %v1849 = vstv %s1848
    %v1850 = vmul.f32 %v1849, %v1318
    %v1851 = vmul.f32 %v1849, %v1319
    %1854 = vrot.lane.b32.xlu0 %v1850, 127
    %v1855 = vpop.permute.xlu0 %1854
    %1856 = vrot.lane.b32.xlu0 %v1851, 127
    %v1857 = vpop.permute.xlu0 %1856
    %v1860 = vadd.f32 %v1748, %v1855
    %v1861 = vadd.f32 %v1749, %v1857
    %s1862 = sld [smem:[#allocation4 + $0x87]]
    %v1863 = vstv %s1862
    %v1864 = vmul.f32 %v1863, %v1318
    %v1865 = vmul.f32 %v1863, %v1319
    %1868 = vrot.lane.b32.xlu0 %v1864, 127
    %v1869 = vpop.permute.xlu0 %1868
    %1870 = vrot.lane.b32.xlu0 %v1865, 127
    %v1871 = vpop.permute.xlu0 %1870
    %v1874 = vadd.f32 %v1762, %v1869
    %v1875 = vadd.f32 %v1763, %v1871
    %s1876 = sld [smem:[#allocation4 + $0x8b]]
    %v1877 = vstv %s1876
    %v1878 = vmul.f32 %v1877, %v1318
    %v1879 = vmul.f32 %v1877, %v1319
    %1882 = vrot.lane.b32.xlu0 %v1878, 127
    %v1883 = vpop.permute.xlu0 %1882
    %1884 = vrot.lane.b32.xlu0 %v1879, 127
    %v1885 = vpop.permute.xlu0 %1884
    %v1888 = vadd.f32 %v1776, %v1883
    %v1889 = vadd.f32 %v1777, %v1885
    %s1890 = sld [smem:[#allocation4 + $0x8f]]
    %v1891 = vstv %s1890
    %v1892 = vmul.f32 %v1891, %v1318
    %v1893 = vmul.f32 %v1891, %v1319
    %1896 = vrot.lane.b32.xlu0 %v1892, 127
    %v1897 = vpop.permute.xlu0 %1896
    %1898 = vrot.lane.b32.xlu0 %v1893, 127
    %v1899 = vpop.permute.xlu0 %1898
    %v1902 = vadd.f32 %v1790, %v1897
    %v1903 = vadd.f32 %v1791, %v1899
    %s1904 = sld [smem:[#allocation4 + $0x93]]
    %v1905 = vstv %s1904
    %v1906 = vmul.f32 %v1905, %v1318
    %v1907 = vmul.f32 %v1905, %v1319
    %1910 = vrot.lane.b32.xlu0 %v1906, 127
    %v1911 = vpop.permute.xlu0 %1910
    %1912 = vrot.lane.b32.xlu0 %v1907, 127
    %v1913 = vpop.permute.xlu0 %1912
    %v1916 = vadd.f32 %v1804, %v1911
    %v1917 = vadd.f32 %v1805, %v1913
    %s1918 = sld [smem:[#allocation4 + $0x97]]
    %v1919 = vstv %s1918
    %v1920 = vmul.f32 %v1919, %v1318
    %v1921 = vmul.f32 %v1919, %v1319
    %1924 = vrot.lane.b32.xlu0 %v1920, 127
    %v1925 = vpop.permute.xlu0 %1924
    %1926 = vrot.lane.b32.xlu0 %v1921, 127
    %v1927 = vpop.permute.xlu0 %1926
    %v1930 = vadd.f32 %v1818, %v1925
    %v1931 = vadd.f32 %v1819, %v1927
    %s1932 = sld [smem:[#allocation4 + $0x9b]]
    %v1933 = vstv %s1932
    %v1934 = vmul.f32 %v1933, %v1318
    %v1935 = vmul.f32 %v1933, %v1319
    %1938 = vrot.lane.b32.xlu0 %v1934, 127
    %v1939 = vpop.permute.xlu0 %1938
    %1940 = vrot.lane.b32.xlu0 %v1935, 127
    %v1941 = vpop.permute.xlu0 %1940
    %v1944 = vadd.f32 %v1832, %v1939
    %v1945 = vadd.f32 %v1833, %v1941
    %s1946 = sld [smem:[#allocation4 + $0x9f]]
    %v1947 = vstv %s1946
    %v1948 = vmul.f32 %v1947, %v1318
    %v1949 = vmul.f32 %v1947, %v1319
    %1952 = vrot.lane.b32.xlu0 %v1948, 127
    %v1953 = vpop.permute.xlu0 %1952
    %1954 = vrot.lane.b32.xlu0 %v1949, 127
    %v1955 = vpop.permute.xlu0 %1954
    %v1958 = vadd.f32 %v1846, %v1953
    %v1959 = vadd.f32 %v1847, %v1955
    %s1960 = sld [smem:[#allocation4 + $0xa0]]
    %v1961 = vstv %s1960
    %v1962 = vmul.f32 %v1961, %v1312
    %v1963 = vmul.f32 %v1961, %v1313
    %1966 = vrot.lane.b32.xlu0 %v1962, 126
    %v1967 = vpop.permute.xlu0 %1966
    %1968 = vrot.lane.b32.xlu0 %v1963, 126
    %v1969 = vpop.permute.xlu0 %1968
    %v1972 = vadd.f32 %v1860, %v1967
    %v1973 = vadd.f32 %v1861, %v1969
    %s1974 = sld [smem:[#allocation4 + $0xa4]]
    %v1975 = vstv %s1974
    %v1976 = vmul.f32 %v1975, %v1312
    %v1977 = vmul.f32 %v1975, %v1313
    %1980 = vrot.lane.b32.xlu0 %v1976, 126
    %v1981 = vpop.permute.xlu0 %1980
    %1982 = vrot.lane.b32.xlu0 %v1977, 126
    %v1983 = vpop.permute.xlu0 %1982
    %v1986 = vadd.f32 %v1874, %v1981
    %v1987 = vadd.f32 %v1875, %v1983
    %s1988 = sld [smem:[#allocation4 + $0xa8]]
    %v1989 = vstv %s1988
    %v1990 = vmul.f32 %v1989, %v1312
    %v1991 = vmul.f32 %v1989, %v1313
    %1994 = vrot.lane.b32.xlu0 %v1990, 126
    %v1995 = vpop.permute.xlu0 %1994
    %1996 = vrot.lane.b32.xlu0 %v1991, 126
    %v1997 = vpop.permute.xlu0 %1996
    %v2000 = vadd.f32 %v1888, %v1995
    %v2001 = vadd.f32 %v1889, %v1997
    %s2002 = sld [smem:[#allocation4 + $0xac]]
    %v2003 = vstv %s2002
    %v2004 = vmul.f32 %v2003, %v1312
    %v2005 = vmul.f32 %v2003, %v1313
    %2008 = vrot.lane.b32.xlu0 %v2004, 126
    %v2009 = vpop.permute.xlu0 %2008
    %2010 = vrot.lane.b32.xlu0 %v2005, 126
    %v2011 = vpop.permute.xlu0 %2010
    %v2014 = vadd.f32 %v1902, %v2009
    %v2015 = vadd.f32 %v1903, %v2011
    %s2016 = sld [smem:[#allocation4 + $0xb0]]
    %v2017 = vstv %s2016
    %v2018 = vmul.f32 %v2017, %v1312
    %v2019 = vmul.f32 %v2017, %v1313
    %2022 = vrot.lane.b32.xlu0 %v2018, 126
    %v2023 = vpop.permute.xlu0 %2022
    %2024 = vrot.lane.b32.xlu0 %v2019, 126
    %v2025 = vpop.permute.xlu0 %2024
    %v2028 = vadd.f32 %v1916, %v2023
    %v2029 = vadd.f32 %v1917, %v2025
    %s2030 = sld [smem:[#allocation4 + $0xb4]]
    %v2031 = vstv %s2030
    %v2032 = vmul.f32 %v2031, %v1312
    %v2033 = vmul.f32 %v2031, %v1313
    %2036 = vrot.lane.b32.xlu0 %v2032, 126
    %v2037 = vpop.permute.xlu0 %2036
    %2038 = vrot.lane.b32.xlu0 %v2033, 126
    %v2039 = vpop.permute.xlu0 %2038
    %v2042 = vadd.f32 %v1930, %v2037
    %v2043 = vadd.f32 %v1931, %v2039
    %s2044 = sld [smem:[#allocation4 + $0xb8]]
    %v2045 = vstv %s2044
    %v2046 = vmul.f32 %v2045, %v1312
    %v2047 = vmul.f32 %v2045, %v1313
    %2050 = vrot.lane.b32.xlu0 %v2046, 126
    %v2051 = vpop.permute.xlu0 %2050
    %2052 = vrot.lane.b32.xlu0 %v2047, 126
    %v2053 = vpop.permute.xlu0 %2052
    %v2056 = vadd.f32 %v1944, %v2051
    %v2057 = vadd.f32 %v1945, %v2053
    %s2058 = sld [smem:[#allocation4 + $0xbc]]
    %v2059 = vstv %s2058
    %v2060 = vmul.f32 %v2059, %v1312
    %v2061 = vmul.f32 %v2059, %v1313
    %2064 = vrot.lane.b32.xlu0 %v2060, 126
    %v2065 = vpop.permute.xlu0 %2064
    %2066 = vrot.lane.b32.xlu0 %v2061, 126
    %v2067 = vpop.permute.xlu0 %2066
    %v2070 = vadd.f32 %v1958, %v2065
    %v2071 = vadd.f32 %v1959, %v2067
    %s2072 = sld [smem:[#allocation4 + $0xa1]]
    %v2073 = vstv %s2072
    %v2074 = vmul.f32 %v2073, %v1314
    %v2075 = vmul.f32 %v2073, %v1315
    %2078 = vrot.lane.b32.xlu0 %v2074, 126
    %v2079 = vpop.permute.xlu0 %2078
    %2080 = vrot.lane.b32.xlu0 %v2075, 126
    %v2081 = vpop.permute.xlu0 %2080
    %v2084 = vadd.f32 %v1972, %v2079
    %v2085 = vadd.f32 %v1973, %v2081
    %s2086 = sld [smem:[#allocation4 + $0xa5]]
    %v2087 = vstv %s2086
    %v2088 = vmul.f32 %v2087, %v1314
    %v2089 = vmul.f32 %v2087, %v1315
    %2092 = vrot.lane.b32.xlu0 %v2088, 126
    %v2093 = vpop.permute.xlu0 %2092
    %2094 = vrot.lane.b32.xlu0 %v2089, 126
    %v2095 = vpop.permute.xlu0 %2094
    %v2098 = vadd.f32 %v1986, %v2093
    %v2099 = vadd.f32 %v1987, %v2095
    %s2100 = sld [smem:[#allocation4 + $0xa9]]
    %v2101 = vstv %s2100
    %v2102 = vmul.f32 %v2101, %v1314
    %v2103 = vmul.f32 %v2101, %v1315
    %2106 = vrot.lane.b32.xlu0 %v2102, 126
    %v2107 = vpop.permute.xlu0 %2106
    %2108 = vrot.lane.b32.xlu0 %v2103, 126
    %v2109 = vpop.permute.xlu0 %2108
    %v2112 = vadd.f32 %v2000, %v2107
    %v2113 = vadd.f32 %v2001, %v2109
    %s2114 = sld [smem:[#allocation4 + $0xad]]
    %v2115 = vstv %s2114
    %v2116 = vmul.f32 %v2115, %v1314
    %v2117 = vmul.f32 %v2115, %v1315
    %2120 = vrot.lane.b32.xlu0 %v2116, 126
    %v2121 = vpop.permute.xlu0 %2120
    %2122 = vrot.lane.b32.xlu0 %v2117, 126
    %v2123 = vpop.permute.xlu0 %2122
    %v2126 = vadd.f32 %v2014, %v2121
    %v2127 = vadd.f32 %v2015, %v2123
    %s2128 = sld [smem:[#allocation4 + $0xb1]]
    %v2129 = vstv %s2128
    %v2130 = vmul.f32 %v2129, %v1314
    %v2131 = vmul.f32 %v2129, %v1315
    %2134 = vrot.lane.b32.xlu0 %v2130, 126
    %v2135 = vpop.permute.xlu0 %2134
    %2136 = vrot.lane.b32.xlu0 %v2131, 126
    %v2137 = vpop.permute.xlu0 %2136
    %v2140 = vadd.f32 %v2028, %v2135
    %v2141 = vadd.f32 %v2029, %v2137
    %s2142 = sld [smem:[#allocation4 + $0xb5]]
    %v2143 = vstv %s2142
    %v2144 = vmul.f32 %v2143, %v1314
    %v2145 = vmul.f32 %v2143, %v1315
    %2148 = vrot.lane.b32.xlu0 %v2144, 126
    %v2149 = vpop.permute.xlu0 %2148
    %2150 = vrot.lane.b32.xlu0 %v2145, 126
    %v2151 = vpop.permute.xlu0 %2150
    %v2154 = vadd.f32 %v2042, %v2149
    %v2155 = vadd.f32 %v2043, %v2151
    %s2156 = sld [smem:[#allocation4 + $0xb9]]
    %v2157 = vstv %s2156
    %v2158 = vmul.f32 %v2157, %v1314
    %v2159 = vmul.f32 %v2157, %v1315
    %2162 = vrot.lane.b32.xlu0 %v2158, 126
    %v2163 = vpop.permute.xlu0 %2162
    %2164 = vrot.lane.b32.xlu0 %v2159, 126
    %v2165 = vpop.permute.xlu0 %2164
    %v2168 = vadd.f32 %v2056, %v2163
    %v2169 = vadd.f32 %v2057, %v2165
    %s2170 = sld [smem:[#allocation4 + $0xbd]]
    %v2171 = vstv %s2170
    %v2172 = vmul.f32 %v2171, %v1314
    %v2173 = vmul.f32 %v2171, %v1315
    %2176 = vrot.lane.b32.xlu0 %v2172, 126
    %v2177 = vpop.permute.xlu0 %2176
    %2178 = vrot.lane.b32.xlu0 %v2173, 126
    %v2179 = vpop.permute.xlu0 %2178
    %v2182 = vadd.f32 %v2070, %v2177
    %v2183 = vadd.f32 %v2071, %v2179
    %s2184 = sld [smem:[#allocation4 + $0xa2]]
    %v2185 = vstv %s2184
    %v2186 = vmul.f32 %v2185, %v1316
    %v2187 = vmul.f32 %v2185, %v1317
    %2190 = vrot.lane.b32.xlu0 %v2186, 126
    %v2191 = vpop.permute.xlu0 %2190
    %2192 = vrot.lane.b32.xlu0 %v2187, 126
    %v2193 = vpop.permute.xlu0 %2192
    %v2196 = vadd.f32 %v2084, %v2191
    %v2197 = vadd.f32 %v2085, %v2193
    %s2198 = sld [smem:[#allocation4 + $0xa6]]
    %v2199 = vstv %s2198
    %v2200 = vmul.f32 %v2199, %v1316
    %v2201 = vmul.f32 %v2199, %v1317
    %2204 = vrot.lane.b32.xlu0 %v2200, 126
    %v2205 = vpop.permute.xlu0 %2204
    %2206 = vrot.lane.b32.xlu0 %v2201, 126
    %v2207 = vpop.permute.xlu0 %2206
    %v2210 = vadd.f32 %v2098, %v2205
    %v2211 = vadd.f32 %v2099, %v2207
    %s2212 = sld [smem:[#allocation4 + $0xaa]]
    %v2213 = vstv %s2212
    %v2214 = vmul.f32 %v2213, %v1316
    %v2215 = vmul.f32 %v2213, %v1317
    %2218 = vrot.lane.b32.xlu0 %v2214, 126
    %v2219 = vpop.permute.xlu0 %2218
    %2220 = vrot.lane.b32.xlu0 %v2215, 126
    %v2221 = vpop.permute.xlu0 %2220
    %v2224 = vadd.f32 %v2112, %v2219
    %v2225 = vadd.f32 %v2113, %v2221
    %s2226 = sld [smem:[#allocation4 + $0xae]]
    %v2227 = vstv %s2226
    %v2228 = vmul.f32 %v2227, %v1316
    %v2229 = vmul.f32 %v2227, %v1317
    %2232 = vrot.lane.b32.xlu0 %v2228, 126
    %v2233 = vpop.permute.xlu0 %2232
    %2234 = vrot.lane.b32.xlu0 %v2229, 126
    %v2235 = vpop.permute.xlu0 %2234
    %v2238 = vadd.f32 %v2126, %v2233
    %v2239 = vadd.f32 %v2127, %v2235
    %s2240 = sld [smem:[#allocation4 + $0xb2]]
    %v2241 = vstv %s2240
    %v2242 = vmul.f32 %v2241, %v1316
    %v2243 = vmul.f32 %v2241, %v1317
    %2246 = vrot.lane.b32.xlu0 %v2242, 126
    %v2247 = vpop.permute.xlu0 %2246
    %2248 = vrot.lane.b32.xlu0 %v2243, 126
    %v2249 = vpop.permute.xlu0 %2248
    %v2252 = vadd.f32 %v2140, %v2247
    %v2253 = vadd.f32 %v2141, %v2249
    %s2254 = sld [smem:[#allocation4 + $0xb6]]
    %v2255 = vstv %s2254
    %v2256 = vmul.f32 %v2255, %v1316
    %v2257 = vmul.f32 %v2255, %v1317
    %2260 = vrot.lane.b32.xlu0 %v2256, 126
    %v2261 = vpop.permute.xlu0 %2260
    %2262 = vrot.lane.b32.xlu0 %v2257, 126
    %v2263 = vpop.permute.xlu0 %2262
    %v2266 = vadd.f32 %v2154, %v2261
    %v2267 = vadd.f32 %v2155, %v2263
    %s2268 = sld [smem:[#allocation4 + $0xba]]
    %v2269 = vstv %s2268
    %v2270 = vmul.f32 %v2269, %v1316
    %v2271 = vmul.f32 %v2269, %v1317
    %2274 = vrot.lane.b32.xlu0 %v2270, 126
    %v2275 = vpop.permute.xlu0 %2274
    %2276 = vrot.lane.b32.xlu0 %v2271, 126
    %v2277 = vpop.permute.xlu0 %2276
    %v2280 = vadd.f32 %v2168, %v2275
    %v2281 = vadd.f32 %v2169, %v2277
    %s2282 = sld [smem:[#allocation4 + $0xbe]]
    %v2283 = vstv %s2282
    %v2284 = vmul.f32 %v2283, %v1316
    %v2285 = vmul.f32 %v2283, %v1317
    %2288 = vrot.lane.b32.xlu0 %v2284, 126
    %v2289 = vpop.permute.xlu0 %2288
    %2290 = vrot.lane.b32.xlu0 %v2285, 126
    %v2291 = vpop.permute.xlu0 %2290
    %v2294 = vadd.f32 %v2182, %v2289
    %v2295 = vadd.f32 %v2183, %v2291
    %s2296 = sld [smem:[#allocation4 + $0xa3]]
    %v2297 = vstv %s2296
    %v2298 = vmul.f32 %v2297, %v1318
    %v2299 = vmul.f32 %v2297, %v1319
    %2302 = vrot.lane.b32.xlu0 %v2298, 126
    %v2303 = vpop.permute.xlu0 %2302
    %2304 = vrot.lane.b32.xlu0 %v2299, 126
    %v2305 = vpop.permute.xlu0 %2304
    %v2308 = vadd.f32 %v2196, %v2303
    %v2309 = vadd.f32 %v2197, %v2305
    %s2310 = sld [smem:[#allocation4 + $0xa7]]
    %v2311 = vstv %s2310
    %v2312 = vmul.f32 %v2311, %v1318
    %v2313 = vmul.f32 %v2311, %v1319
    %2316 = vrot.lane.b32.xlu0 %v2312, 126
    %v2317 = vpop.permute.xlu0 %2316
    %2318 = vrot.lane.b32.xlu0 %v2313, 126
    %v2319 = vpop.permute.xlu0 %2318
    %v2322 = vadd.f32 %v2210, %v2317
    %v2323 = vadd.f32 %v2211, %v2319
    %s2324 = sld [smem:[#allocation4 + $0xab]]
    %v2325 = vstv %s2324
    %v2326 = vmul.f32 %v2325, %v1318
    %v2327 = vmul.f32 %v2325, %v1319
    %2330 = vrot.lane.b32.xlu0 %v2326, 126
    %v2331 = vpop.permute.xlu0 %2330
    %2332 = vrot.lane.b32.xlu0 %v2327, 126
    %v2333 = vpop.permute.xlu0 %2332
    %v2336 = vadd.f32 %v2224, %v2331
    %v2337 = vadd.f32 %v2225, %v2333
    %s2338 = sld [smem:[#allocation4 + $0xaf]]
    %v2339 = vstv %s2338
    %v2340 = vmul.f32 %v2339, %v1318
    %v2341 = vmul.f32 %v2339, %v1319
    %2344 = vrot.lane.b32.xlu0 %v2340, 126
    %v2345 = vpop.permute.xlu0 %2344
    %2346 = vrot.lane.b32.xlu0 %v2341, 126
    %v2347 = vpop.permute.xlu0 %2346
    %v2350 = vadd.f32 %v2238, %v2345
    %v2351 = vadd.f32 %v2239, %v2347
    %s2352 = sld [smem:[#allocation4 + $0xb3]]
    %v2353 = vstv %s2352
    %v2354 = vmul.f32 %v2353, %v1318
    %v2355 = vmul.f32 %v2353, %v1319
    %2358 = vrot.lane.b32.xlu0 %v2354, 126
    %v2359 = vpop.permute.xlu0 %2358
    %2360 = vrot.lane.b32.xlu0 %v2355, 126
    %v2361 = vpop.permute.xlu0 %2360
    %v2364 = vadd.f32 %v2252, %v2359
    %v2365 = vadd.f32 %v2253, %v2361
    %s2366 = sld [smem:[#allocation4 + $0xb7]]
    %v2367 = vstv %s2366
    %v2368 = vmul.f32 %v2367, %v1318
    %v2369 = vmul.f32 %v2367, %v1319
    %2372 = vrot.lane.b32.xlu0 %v2368, 126
    %v2373 = vpop.permute.xlu0 %2372
    %2374 = vrot.lane.b32.xlu0 %v2369, 126
    %v2375 = vpop.permute.xlu0 %2374
    %v2378 = vadd.f32 %v2266, %v2373
    %v2379 = vadd.f32 %v2267, %v2375
    %s2380 = sld [smem:[#allocation4 + $0xbb]]
    %v2381 = vstv %s2380
    %v2382 = vmul.f32 %v2381, %v1318
    %v2383 = vmul.f32 %v2381, %v1319
    %2386 = vrot.lane.b32.xlu0 %v2382, 126
    %v2387 = vpop.permute.xlu0 %2386
    %2388 = vrot.lane.b32.xlu0 %v2383, 126
    %v2389 = vpop.permute.xlu0 %2388
    %v2392 = vadd.f32 %v2280, %v2387
    %v2393 = vadd.f32 %v2281, %v2389
    %s2394 = sld [smem:[#allocation4 + $0xbf]]
    %v2395 = vstv %s2394
    %v2396 = vmul.f32 %v2395, %v1318
    %v2397 = vmul.f32 %v2395, %v1319
    %2400 = vrot.lane.b32.xlu0 %v2396, 126
    %v2401 = vpop.permute.xlu0 %2400
    %2402 = vrot.lane.b32.xlu0 %v2397, 126
    %v2403 = vpop.permute.xlu0 %2402
    %v2406 = vadd.f32 %v2294, %v2401
    %v2407 = vadd.f32 %v2295, %v2403
    %v2408 = vld [vmem:[#allocation2 + $0x2] sm:$0xff]
    %v2409 = vld [vmem:[#allocation2 + $0xa] sm:$0xff]
    %v2410 = vld [vmem:[#allocation2 + $0x1a] sm:$0xff]
    %v2411 = vld [vmem:[#allocation2 + $0x22] sm:$0xff]
    %v2412 = vld [vmem:[#allocation2 + $0x32] sm:$0xff]
    %v2413 = vld [vmem:[#allocation2 + $0x3a] sm:$0xff]
    %v2414 = vld [vmem:[#allocation2 + $0x4a] sm:$0xff]
    %v2415 = vld [vmem:[#allocation2 + $0x52] sm:$0xff]
    %s2416 = sld [smem:[#allocation4 + $0xc0]]
    %v2417 = vstv %s2416
    %v2418 = vmul.f32 %v2417, %v2408
    %v2419 = vmul.f32 %v2417, %v2409
    %v2420 = vadd.f32 %v2308, %v2418
    %v2421 = vadd.f32 %v2309, %v2419
    %s2422 = sld [smem:[#allocation4 + $0xc4]]
    %v2423 = vstv %s2422
    %v2424 = vmul.f32 %v2423, %v2408
    %v2425 = vmul.f32 %v2423, %v2409
    %v2426 = vadd.f32 %v2322, %v2424
    %v2427 = vadd.f32 %v2323, %v2425
    %s2428 = sld [smem:[#allocation4 + $0xc8]]
    %v2429 = vstv %s2428
    %v2430 = vmul.f32 %v2429, %v2408
    %v2431 = vmul.f32 %v2429, %v2409
    %v2432 = vadd.f32 %v2336, %v2430
    %v2433 = vadd.f32 %v2337, %v2431
    %s2434 = sld [smem:[#allocation4 + $0xcc]]
    %v2435 = vstv %s2434
    %v2436 = vmul.f32 %v2435, %v2408
    %v2437 = vmul.f32 %v2435, %v2409
    %v2438 = vadd.f32 %v2350, %v2436
    %v2439 = vadd.f32 %v2351, %v2437
    %s2440 = sld [smem:[#allocation4 + $0xd0]]
    %v2441 = vstv %s2440
    %v2442 = vmul.f32 %v2441, %v2408
    %v2443 = vmul.f32 %v2441, %v2409
    %v2444 = vadd.f32 %v2364, %v2442
    %v2445 = vadd.f32 %v2365, %v2443
    %s2446 = sld [smem:[#allocation4 + $0xd4]]
    %v2447 = vstv %s2446
    %v2448 = vmul.f32 %v2447, %v2408
    %v2449 = vmul.f32 %v2447, %v2409
    %v2450 = vadd.f32 %v2378, %v2448
    %v2451 = vadd.f32 %v2379, %v2449
    %s2452 = sld [smem:[#allocation4 + $0xd8]]
    %v2453 = vstv %s2452
    %v2454 = vmul.f32 %v2453, %v2408
    %v2455 = vmul.f32 %v2453, %v2409
    %v2456 = vadd.f32 %v2392, %v2454
    %v2457 = vadd.f32 %v2393, %v2455
    %s2458 = sld [smem:[#allocation4 + $0xdc]]
    %v2459 = vstv %s2458
    %v2460 = vmul.f32 %v2459, %v2408
    %v2461 = vmul.f32 %v2459, %v2409
    %v2462 = vadd.f32 %v2406, %v2460
    %v2463 = vadd.f32 %v2407, %v2461
    %s2464 = sld [smem:[#allocation4 + $0xc1]]
    %v2465 = vstv %s2464
    %v2466 = vmul.f32 %v2465, %v2410
    %v2467 = vmul.f32 %v2465, %v2411
    %v2468 = vadd.f32 %v2420, %v2466
    %v2469 = vadd.f32 %v2421, %v2467
    %s2470 = sld [smem:[#allocation4 + $0xc5]]
    %v2471 = vstv %s2470
    %v2472 = vmul.f32 %v2471, %v2410
    %v2473 = vmul.f32 %v2471, %v2411
    %v2474 = vadd.f32 %v2426, %v2472
    %v2475 = vadd.f32 %v2427, %v2473
    %s2476 = sld [smem:[#allocation4 + $0xc9]]
    %v2477 = vstv %s2476
    %v2478 = vmul.f32 %v2477, %v2410
    %v2479 = vmul.f32 %v2477, %v2411
    %v2480 = vadd.f32 %v2432, %v2478
    %v2481 = vadd.f32 %v2433, %v2479
    %s2482 = sld [smem:[#allocation4 + $0xcd]]
    %v2483 = vstv %s2482
    %v2484 = vmul.f32 %v2483, %v2410
    %v2485 = vmul.f32 %v2483, %v2411
    %v2486 = vadd.f32 %v2438, %v2484
    %v2487 = vadd.f32 %v2439, %v2485
    %s2488 = sld [smem:[#allocation4 + $0xd1]]
    %v2489 = vstv %s2488
    %v2490 = vmul.f32 %v2489, %v2410
    %v2491 = vmul.f32 %v2489, %v2411
    %v2492 = vadd.f32 %v2444, %v2490
    %v2493 = vadd.f32 %v2445, %v2491
    %s2494 = sld [smem:[#allocation4 + $0xd5]]
    %v2495 = vstv %s2494
    %v2496 = vmul.f32 %v2495, %v2410
    %v2497 = vmul.f32 %v2495, %v2411
    %v2498 = vadd.f32 %v2450, %v2496
    %v2499 = vadd.f32 %v2451, %v2497
    %s2500 = sld [smem:[#allocation4 + $0xd9]]
    %v2501 = vstv %s2500
    %v2502 = vmul.f32 %v2501, %v2410
    %v2503 = vmul.f32 %v2501, %v2411
    %v2504 = vadd.f32 %v2456, %v2502
    %v2505 = vadd.f32 %v2457, %v2503
    %s2506 = sld [smem:[#allocation4 + $0xdd]]
    %v2507 = vstv %s2506
    %v2508 = vmul.f32 %v2507, %v2410
    %v2509 = vmul.f32 %v2507, %v2411
    %v2510 = vadd.f32 %v2462, %v2508
    %v2511 = vadd.f32 %v2463, %v2509
    %s2512 = sld [smem:[#allocation4 + $0xc2]]
    %v2513 = vstv %s2512
    %v2514 = vmul.f32 %v2513, %v2412
    %v2515 = vmul.f32 %v2513, %v2413
    %v2516 = vadd.f32 %v2468, %v2514
    %v2517 = vadd.f32 %v2469, %v2515
    %s2518 = sld [smem:[#allocation4 + $0xc6]]
    %v2519 = vstv %s2518
    %v2520 = vmul.f32 %v2519, %v2412
    %v2521 = vmul.f32 %v2519, %v2413
    %v2522 = vadd.f32 %v2474, %v2520
    %v2523 = vadd.f32 %v2475, %v2521
    %s2524 = sld [smem:[#allocation4 + $0xca]]
    %v2525 = vstv %s2524
    %v2526 = vmul.f32 %v2525, %v2412
    %v2527 = vmul.f32 %v2525, %v2413
    %v2528 = vadd.f32 %v2480, %v2526
    %v2529 = vadd.f32 %v2481, %v2527
    %s2530 = sld [smem:[#allocation4 + $0xce]]
    %v2531 = vstv %s2530
    %v2532 = vmul.f32 %v2531, %v2412
    %v2533 = vmul.f32 %v2531, %v2413
    %v2534 = vadd.f32 %v2486, %v2532
    %v2535 = vadd.f32 %v2487, %v2533
    %s2536 = sld [smem:[#allocation4 + $0xd2]]
    %v2537 = vstv %s2536
    %v2538 = vmul.f32 %v2537, %v2412
    %v2539 = vmul.f32 %v2537, %v2413
    %v2540 = vadd.f32 %v2492, %v2538
    %v2541 = vadd.f32 %v2493, %v2539
    %s2542 = sld [smem:[#allocation4 + $0xd6]]
    %v2543 = vstv %s2542
    %v2544 = vmul.f32 %v2543, %v2412
    %v2545 = vmul.f32 %v2543, %v2413
    %v2546 = vadd.f32 %v2498, %v2544
    %v2547 = vadd.f32 %v2499, %v2545
    %s2548 = sld [smem:[#allocation4 + $0xda]]
    %v2549 = vstv %s2548
    %v2550 = vmul.f32 %v2549, %v2412
    %v2551 = vmul.f32 %v2549, %v2413
    %v2552 = vadd.f32 %v2504, %v2550
    %v2553 = vadd.f32 %v2505, %v2551
    %s2554 = sld [smem:[#allocation4 + $0xde]]
    %v2555 = vstv %s2554
    %v2556 = vmul.f32 %v2555, %v2412
    %v2557 = vmul.f32 %v2555, %v2413
    %v2558 = vadd.f32 %v2510, %v2556
    %v2559 = vadd.f32 %v2511, %v2557
    %s2560 = sld [smem:[#allocation4 + $0xc3]]
    %v2561 = vstv %s2560
    %v2562 = vmul.f32 %v2561, %v2414
    %v2563 = vmul.f32 %v2561, %v2415
    %v2564 = vadd.f32 %v2516, %v2562
    %v2565 = vadd.f32 %v2517, %v2563
    %s2566 = sld [smem:[#allocation4 + $0xc7]]
    %v2567 = vstv %s2566
    %v2568 = vmul.f32 %v2567, %v2414
    %v2569 = vmul.f32 %v2567, %v2415
    %v2570 = vadd.f32 %v2522, %v2568
    %v2571 = vadd.f32 %v2523, %v2569
    %s2572 = sld [smem:[#allocation4 + $0xcb]]
    %v2573 = vstv %s2572
    %v2574 = vmul.f32 %v2573, %v2414
    %v2575 = vmul.f32 %v2573, %v2415
    %v2576 = vadd.f32 %v2528, %v2574
    %v2577 = vadd.f32 %v2529, %v2575
    %s2578 = sld [smem:[#allocation4 + $0xcf]]
    %v2579 = vstv %s2578
    %v2580 = vmul.f32 %v2579, %v2414
    %v2581 = vmul.f32 %v2579, %v2415
    %v2582 = vadd.f32 %v2534, %v2580
    %v2583 = vadd.f32 %v2535, %v2581
    %s2584 = sld [smem:[#allocation4 + $0xd3]]
    %v2585 = vstv %s2584
    %v2586 = vmul.f32 %v2585, %v2414
    %v2587 = vmul.f32 %v2585, %v2415
    %v2588 = vadd.f32 %v2540, %v2586
    %v2589 = vadd.f32 %v2541, %v2587
    %s2590 = sld [smem:[#allocation4 + $0xd7]]
    %v2591 = vstv %s2590
    %v2592 = vmul.f32 %v2591, %v2414
    %v2593 = vmul.f32 %v2591, %v2415
    %v2594 = vadd.f32 %v2546, %v2592
    %v2595 = vadd.f32 %v2547, %v2593
    %s2596 = sld [smem:[#allocation4 + $0xdb]]
    %v2597 = vstv %s2596
    %v2598 = vmul.f32 %v2597, %v2414
    %v2599 = vmul.f32 %v2597, %v2415
    %v2600 = vadd.f32 %v2552, %v2598
    %v2601 = vadd.f32 %v2553, %v2599
    %s2602 = sld [smem:[#allocation4 + $0xdf]]
    %v2603 = vstv %s2602
    %v2604 = vmul.f32 %v2603, %v2414
    %v2605 = vmul.f32 %v2603, %v2415
    %v2606 = vadd.f32 %v2558, %v2604
    %v2607 = vadd.f32 %v2559, %v2605
    %s2608 = sld [smem:[#allocation4 + $0xe0]]
    %v2609 = vstv %s2608
    %v2610 = vmul.f32 %v2609, %v2408
    %v2611 = vmul.f32 %v2609, %v2409
    %2614 = vrot.lane.b32.xlu0 %v2610, 127
    %v2615 = vpop.permute.xlu0 %2614
    %2616 = vrot.lane.b32.xlu0 %v2611, 127
    %v2617 = vpop.permute.xlu0 %2616
    %v2620 = vadd.f32 %v2564, %v2615
    %v2621 = vadd.f32 %v2565, %v2617
    %s2622 = sld [smem:[#allocation4 + $0xe4]]
    %v2623 = vstv %s2622
    %v2624 = vmul.f32 %v2623, %v2408
    %v2625 = vmul.f32 %v2623, %v2409
    %2628 = vrot.lane.b32.xlu0 %v2624, 127
    %v2629 = vpop.permute.xlu0 %2628
    %2630 = vrot.lane.b32.xlu0 %v2625, 127
    %v2631 = vpop.permute.xlu0 %2630
    %v2634 = vadd.f32 %v2570, %v2629
    %v2635 = vadd.f32 %v2571, %v2631
    %s2636 = sld [smem:[#allocation4 + $0xe8]]
    %v2637 = vstv %s2636
    %v2638 = vmul.f32 %v2637, %v2408
    %v2639 = vmul.f32 %v2637, %v2409
    %2642 = vrot.lane.b32.xlu0 %v2638, 127
    %v2643 = vpop.permute.xlu0 %2642
    %2644 = vrot.lane.b32.xlu0 %v2639, 127
    %v2645 = vpop.permute.xlu0 %2644
    %v2648 = vadd.f32 %v2576, %v2643
    %v2649 = vadd.f32 %v2577, %v2645
    %s2650 = sld [smem:[#allocation4 + $0xec]]
    %v2651 = vstv %s2650
    %v2652 = vmul.f32 %v2651, %v2408
    %v2653 = vmul.f32 %v2651, %v2409
    %2656 = vrot.lane.b32.xlu0 %v2652, 127
    %v2657 = vpop.permute.xlu0 %2656
    %2658 = vrot.lane.b32.xlu0 %v2653, 127
    %v2659 = vpop.permute.xlu0 %2658
    %v2662 = vadd.f32 %v2582, %v2657
    %v2663 = vadd.f32 %v2583, %v2659
    %s2664 = sld [smem:[#allocation4 + $0xf0]]
    %v2665 = vstv %s2664
    %v2666 = vmul.f32 %v2665, %v2408
    %v2667 = vmul.f32 %v2665, %v2409
    %2670 = vrot.lane.b32.xlu0 %v2666, 127
    %v2671 = vpop.permute.xlu0 %2670
    %2672 = vrot.lane.b32.xlu0 %v2667, 127
    %v2673 = vpop.permute.xlu0 %2672
    %v2676 = vadd.f32 %v2588, %v2671
    %v2677 = vadd.f32 %v2589, %v2673
    %s2678 = sld [smem:[#allocation4 + $0xf4]]
    %v2679 = vstv %s2678
    %v2680 = vmul.f32 %v2679, %v2408
    %v2681 = vmul.f32 %v2679, %v2409
    %2684 = vrot.lane.b32.xlu0 %v2680, 127
    %v2685 = vpop.permute.xlu0 %2684
    %2686 = vrot.lane.b32.xlu0 %v2681, 127
    %v2687 = vpop.permute.xlu0 %2686
    %v2690 = vadd.f32 %v2594, %v2685
    %v2691 = vadd.f32 %v2595, %v2687
    %s2692 = sld [smem:[#allocation4 + $0xf8]]
    %v2693 = vstv %s2692
    %v2694 = vmul.f32 %v2693, %v2408
    %v2695 = vmul.f32 %v2693, %v2409
    %2698 = vrot.lane.b32.xlu0 %v2694, 127
    %v2699 = vpop.permute.xlu0 %2698
    %2700 = vrot.lane.b32.xlu0 %v2695, 127
    %v2701 = vpop.permute.xlu0 %2700
    %v2704 = vadd.f32 %v2600, %v2699
    %v2705 = vadd.f32 %v2601, %v2701
    %s2706 = sld [smem:[#allocation4 + $0xfc]]
    %v2707 = vstv %s2706
    %v2708 = vmul.f32 %v2707, %v2408
    %v2709 = vmul.f32 %v2707, %v2409
    %2712 = vrot.lane.b32.xlu0 %v2708, 127
    %v2713 = vpop.permute.xlu0 %2712
    %2714 = vrot.lane.b32.xlu0 %v2709, 127
    %v2715 = vpop.permute.xlu0 %2714
    %v2718 = vadd.f32 %v2606, %v2713
    %v2719 = vadd.f32 %v2607, %v2715
    %s2720 = sld [smem:[#allocation4 + $0xe1]]
    %v2721 = vstv %s2720
    %v2722 = vmul.f32 %v2721, %v2410
    %v2723 = vmul.f32 %v2721, %v2411
    %2726 = vrot.lane.b32.xlu0 %v2722, 127
    %v2727 = vpop.permute.xlu0 %2726
    %2728 = vrot.lane.b32.xlu0 %v2723, 127
    %v2729 = vpop.permute.xlu0 %2728
    %v2732 = vadd.f32 %v2620, %v2727
    %v2733 = vadd.f32 %v2621, %v2729
    %s2734 = sld [smem:[#allocation4 + $0xe5]]
    %v2735 = vstv %s2734
    %v2736 = vmul.f32 %v2735, %v2410
    %v2737 = vmul.f32 %v2735, %v2411
    %2740 = vrot.lane.b32.xlu0 %v2736, 127
    %v2741 = vpop.permute.xlu0 %2740
    %2742 = vrot.lane.b32.xlu0 %v2737, 127
    %v2743 = vpop.permute.xlu0 %2742
    %v2746 = vadd.f32 %v2634, %v2741
    %v2747 = vadd.f32 %v2635, %v2743
    %s2748 = sld [smem:[#allocation4 + $0xe9]]
    %v2749 = vstv %s2748
    %v2750 = vmul.f32 %v2749, %v2410
    %v2751 = vmul.f32 %v2749, %v2411
    %2754 = vrot.lane.b32.xlu0 %v2750, 127
    %v2755 = vpop.permute.xlu0 %2754
    %2756 = vrot.lane.b32.xlu0 %v2751, 127
    %v2757 = vpop.permute.xlu0 %2756
    %v2760 = vadd.f32 %v2648, %v2755
    %v2761 = vadd.f32 %v2649, %v2757
    %s2762 = sld [smem:[#allocation4 + $0xed]]
    %v2763 = vstv %s2762
    %v2764 = vmul.f32 %v2763, %v2410
    %v2765 = vmul.f32 %v2763, %v2411
    %2768 = vrot.lane.b32.xlu0 %v2764, 127
    %v2769 = vpop.permute.xlu0 %2768
    %2770 = vrot.lane.b32.xlu0 %v2765, 127
    %v2771 = vpop.permute.xlu0 %2770
    %v2774 = vadd.f32 %v2662, %v2769
    %v2775 = vadd.f32 %v2663, %v2771
    %s2776 = sld [smem:[#allocation4 + $0xf1]]
    %v2777 = vstv %s2776
    %v2778 = vmul.f32 %v2777, %v2410
    %v2779 = vmul.f32 %v2777, %v2411
    %2782 = vrot.lane.b32.xlu0 %v2778, 127
    %v2783 = vpop.permute.xlu0 %2782
    %2784 = vrot.lane.b32.xlu0 %v2779, 127
    %v2785 = vpop.permute.xlu0 %2784
    %v2788 = vadd.f32 %v2676, %v2783
    %v2789 = vadd.f32 %v2677, %v2785
    %s2790 = sld [smem:[#allocation4 + $0xf5]]
    %v2791 = vstv %s2790
    %v2792 = vmul.f32 %v2791, %v2410
    %v2793 = vmul.f32 %v2791, %v2411
    %2796 = vrot.lane.b32.xlu0 %v2792, 127
    %v2797 = vpop.permute.xlu0 %2796
    %2798 = vrot.lane.b32.xlu0 %v2793, 127
    %v2799 = vpop.permute.xlu0 %2798
    %v2802 = vadd.f32 %v2690, %v2797
    %v2803 = vadd.f32 %v2691, %v2799
    %s2804 = sld [smem:[#allocation4 + $0xf9]]
    %v2805 = vstv %s2804
    %v2806 = vmul.f32 %v2805, %v2410
    %v2807 = vmul.f32 %v2805, %v2411
    %2810 = vrot.lane.b32.xlu0 %v2806, 127
    %v2811 = vpop.permute.xlu0 %2810
    %2812 = vrot.lane.b32.xlu0 %v2807, 127
    %v2813 = vpop.permute.xlu0 %2812
    %v2816 = vadd.f32 %v2704, %v2811
    %v2817 = vadd.f32 %v2705, %v2813
    %s2818 = sld [smem:[#allocation4 + $0xfd]]
    %v2819 = vstv %s2818
    %v2820 = vmul.f32 %v2819, %v2410
    %v2821 = vmul.f32 %v2819, %v2411
    %2824 = vrot.lane.b32.xlu0 %v2820, 127
    %v2825 = vpop.permute.xlu0 %2824
    %2826 = vrot.lane.b32.xlu0 %v2821, 127
    %v2827 = vpop.permute.xlu0 %2826
    %v2830 = vadd.f32 %v2718, %v2825
    %v2831 = vadd.f32 %v2719, %v2827
    %s2832 = sld [smem:[#allocation4 + $0xe2]]
    %v2833 = vstv %s2832
    %v2834 = vmul.f32 %v2833, %v2412
    %v2835 = vmul.f32 %v2833, %v2413
    %2838 = vrot.lane.b32.xlu0 %v2834, 127
    %v2839 = vpop.permute.xlu0 %2838
    %2840 = vrot.lane.b32.xlu0 %v2835, 127
    %v2841 = vpop.permute.xlu0 %2840
    %v2844 = vadd.f32 %v2732, %v2839
    %v2845 = vadd.f32 %v2733, %v2841
    %s2846 = sld [smem:[#allocation4 + $0xe6]]
    %v2847 = vstv %s2846
    %v2848 = vmul.f32 %v2847, %v2412
    %v2849 = vmul.f32 %v2847, %v2413
    %2852 = vrot.lane.b32.xlu0 %v2848, 127
    %v2853 = vpop.permute.xlu0 %2852
    %2854 = vrot.lane.b32.xlu0 %v2849, 127
    %v2855 = vpop.permute.xlu0 %2854
    %v2858 = vadd.f32 %v2746, %v2853
    %v2859 = vadd.f32 %v2747, %v2855
    %s2860 = sld [smem:[#allocation4 + $0xea]]
    %v2861 = vstv %s2860
    %v2862 = vmul.f32 %v2861, %v2412
    %v2863 = vmul.f32 %v2861, %v2413
    %2866 = vrot.lane.b32.xlu0 %v2862, 127
    %v2867 = vpop.permute.xlu0 %2866
    %2868 = vrot.lane.b32.xlu0 %v2863, 127
    %v2869 = vpop.permute.xlu0 %2868
    %v2872 = vadd.f32 %v2760, %v2867
    %v2873 = vadd.f32 %v2761, %v2869
    %s2874 = sld [smem:[#allocation4 + $0xee]]
    %v2875 = vstv %s2874
    %v2876 = vmul.f32 %v2875, %v2412
    %v2877 = vmul.f32 %v2875, %v2413
    %2880 = vrot.lane.b32.xlu0 %v2876, 127
    %v2881 = vpop.permute.xlu0 %2880
    %2882 = vrot.lane.b32.xlu0 %v2877, 127
    %v2883 = vpop.permute.xlu0 %2882
    %v2886 = vadd.f32 %v2774, %v2881
    %v2887 = vadd.f32 %v2775, %v2883
    %s2888 = sld [smem:[#allocation4 + $0xf2]]
    %v2889 = vstv %s2888
    %v2890 = vmul.f32 %v2889, %v2412
    %v2891 = vmul.f32 %v2889, %v2413
    %2894 = vrot.lane.b32.xlu0 %v2890, 127
    %v2895 = vpop.permute.xlu0 %2894
    %2896 = vrot.lane.b32.xlu0 %v2891, 127
    %v2897 = vpop.permute.xlu0 %2896
    %v2900 = vadd.f32 %v2788, %v2895
    %v2901 = vadd.f32 %v2789, %v2897
    %s2902 = sld [smem:[#allocation4 + $0xf6]]
    %v2903 = vstv %s2902
    %v2904 = vmul.f32 %v2903, %v2412
    %v2905 = vmul.f32 %v2903, %v2413
    %2908 = vrot.lane.b32.xlu0 %v2904, 127
    %v2909 = vpop.permute.xlu0 %2908
    %2910 = vrot.lane.b32.xlu0 %v2905, 127
    %v2911 = vpop.permute.xlu0 %2910
    %v2914 = vadd.f32 %v2802, %v2909
    %v2915 = vadd.f32 %v2803, %v2911
    %s2916 = sld [smem:[#allocation4 + $0xfa]]
    %v2917 = vstv %s2916
    %v2918 = vmul.f32 %v2917, %v2412
    %v2919 = vmul.f32 %v2917, %v2413
    %2922 = vrot.lane.b32.xlu0 %v2918, 127
    %v2923 = vpop.permute.xlu0 %2922
    %2924 = vrot.lane.b32.xlu0 %v2919, 127
    %v2925 = vpop.permute.xlu0 %2924
    %v2928 = vadd.f32 %v2816, %v2923
    %v2929 = vadd.f32 %v2817, %v2925
    %s2930 = sld [smem:[#allocation4 + $0xfe]]
    %v2931 = vstv %s2930
    %v2932 = vmul.f32 %v2931, %v2412
    %v2933 = vmul.f32 %v2931, %v2413
    %2936 = vrot.lane.b32.xlu0 %v2932, 127
    %v2937 = vpop.permute.xlu0 %2936
    %2938 = vrot.lane.b32.xlu0 %v2933, 127
    %v2939 = vpop.permute.xlu0 %2938
    %v2942 = vadd.f32 %v2830, %v2937
    %v2943 = vadd.f32 %v2831, %v2939
    %s2944 = sld [smem:[#allocation4 + $0xe3]]
    %v2945 = vstv %s2944
    %v2946 = vmul.f32 %v2945, %v2414
    %v2947 = vmul.f32 %v2945, %v2415
    %2950 = vrot.lane.b32.xlu0 %v2946, 127
    %v2951 = vpop.permute.xlu0 %2950
    %2952 = vrot.lane.b32.xlu0 %v2947, 127
    %v2953 = vpop.permute.xlu0 %2952
    %v2956 = vadd.f32 %v2844, %v2951
    %v2957 = vadd.f32 %v2845, %v2953
    %s2958 = sld [smem:[#allocation4 + $0xe7]]
    %v2959 = vstv %s2958
    %v2960 = vmul.f32 %v2959, %v2414
    %v2961 = vmul.f32 %v2959, %v2415
    %2964 = vrot.lane.b32.xlu0 %v2960, 127
    %v2965 = vpop.permute.xlu0 %2964
    %2966 = vrot.lane.b32.xlu0 %v2961, 127
    %v2967 = vpop.permute.xlu0 %2966
    %v2970 = vadd.f32 %v2858, %v2965
    %v2971 = vadd.f32 %v2859, %v2967
    %s2972 = sld [smem:[#allocation4 + $0xeb]]
    %v2973 = vstv %s2972
    %v2974 = vmul.f32 %v2973, %v2414
    %v2975 = vmul.f32 %v2973, %v2415
    %2978 = vrot.lane.b32.xlu0 %v2974, 127
    %v2979 = vpop.permute.xlu0 %2978
    %2980 = vrot.lane.b32.xlu0 %v2975, 127
    %v2981 = vpop.permute.xlu0 %2980
    %v2984 = vadd.f32 %v2872, %v2979
    %v2985 = vadd.f32 %v2873, %v2981
    %s2986 = sld [smem:[#allocation4 + $0xef]]
    %v2987 = vstv %s2986
    %v2988 = vmul.f32 %v2987, %v2414
    %v2989 = vmul.f32 %v2987, %v2415
    %2992 = vrot.lane.b32.xlu0 %v2988, 127
    %v2993 = vpop.permute.xlu0 %2992
    %2994 = vrot.lane.b32.xlu0 %v2989, 127
    %v2995 = vpop.permute.xlu0 %2994
    %v2998 = vadd.f32 %v2886, %v2993
    %v2999 = vadd.f32 %v2887, %v2995
    %s3000 = sld [smem:[#allocation4 + $0xf3]]
    %v3001 = vstv %s3000
    %v3002 = vmul.f32 %v3001, %v2414
    %v3003 = vmul.f32 %v3001, %v2415
    %3006 = vrot.lane.b32.xlu0 %v3002, 127
    %v3007 = vpop.permute.xlu0 %3006
    %3008 = vrot.lane.b32.xlu0 %v3003, 127
    %v3009 = vpop.permute.xlu0 %3008
    %v3012 = vadd.f32 %v2900, %v3007
    %v3013 = vadd.f32 %v2901, %v3009
    %s3014 = sld [smem:[#allocation4 + $0xf7]]
    %v3015 = vstv %s3014
    %v3016 = vmul.f32 %v3015, %v2414
    %v3017 = vmul.f32 %v3015, %v2415
    %3020 = vrot.lane.b32.xlu0 %v3016, 127
    %v3021 = vpop.permute.xlu0 %3020
    %3022 = vrot.lane.b32.xlu0 %v3017, 127
    %v3023 = vpop.permute.xlu0 %3022
    %v3026 = vadd.f32 %v2914, %v3021
    %v3027 = vadd.f32 %v2915, %v3023
    %s3028 = sld [smem:[#allocation4 + $0xfb]]
    %v3029 = vstv %s3028
    %v3030 = vmul.f32 %v3029, %v2414
    %v3031 = vmul.f32 %v3029, %v2415
    %3034 = vrot.lane.b32.xlu0 %v3030, 127
    %v3035 = vpop.permute.xlu0 %3034
    %3036 = vrot.lane.b32.xlu0 %v3031, 127
    %v3037 = vpop.permute.xlu0 %3036
    %v3040 = vadd.f32 %v2928, %v3035
    %v3041 = vadd.f32 %v2929, %v3037
    %s3042 = sld [smem:[#allocation4 + $0xff]]
    %v3043 = vstv %s3042
    %v3044 = vmul.f32 %v3043, %v2414
    %v3045 = vmul.f32 %v3043, %v2415
    %3048 = vrot.lane.b32.xlu0 %v3044, 127
    %v3049 = vpop.permute.xlu0 %3048
    %3050 = vrot.lane.b32.xlu0 %v3045, 127
    %v3051 = vpop.permute.xlu0 %3050
    %v3054 = vadd.f32 %v2942, %v3049
    %v3055 = vadd.f32 %v2943, %v3051
    %s3056 = sld [smem:[#allocation4 + $0x100]]
    %v3057 = vstv %s3056
    %v3058 = vmul.f32 %v3057, %v2408
    %v3059 = vmul.f32 %v3057, %v2409
    %3062 = vrot.lane.b32.xlu0 %v3058, 126
    %v3063 = vpop.permute.xlu0 %3062
    %3064 = vrot.lane.b32.xlu0 %v3059, 126
    %v3065 = vpop.permute.xlu0 %3064
    %v3068 = vadd.f32 %v2956, %v3063
    %v3069 = vadd.f32 %v2957, %v3065
    %s3070 = sld [smem:[#allocation4 + $0x104]]
    %v3071 = vstv %s3070
    %v3072 = vmul.f32 %v3071, %v2408
    %v3073 = vmul.f32 %v3071, %v2409
    %3076 = vrot.lane.b32.xlu0 %v3072, 126
    %v3077 = vpop.permute.xlu0 %3076
    %3078 = vrot.lane.b32.xlu0 %v3073, 126
    %v3079 = vpop.permute.xlu0 %3078
    %v3082 = vadd.f32 %v2970, %v3077
    %v3083 = vadd.f32 %v2971, %v3079
    %s3084 = sld [smem:[#allocation4 + $0x108]]
    %v3085 = vstv %s3084
    %v3086 = vmul.f32 %v3085, %v2408
    %v3087 = vmul.f32 %v3085, %v2409
    %3090 = vrot.lane.b32.xlu0 %v3086, 126
    %v3091 = vpop.permute.xlu0 %3090
    %3092 = vrot.lane.b32.xlu0 %v3087, 126
    %v3093 = vpop.permute.xlu0 %3092
    %v3096 = vadd.f32 %v2984, %v3091
    %v3097 = vadd.f32 %v2985, %v3093
    %s3098 = sld [smem:[#allocation4 + $0x10c]]
    %v3099 = vstv %s3098
    %v3100 = vmul.f32 %v3099, %v2408
    %v3101 = vmul.f32 %v3099, %v2409
    %3104 = vrot.lane.b32.xlu0 %v3100, 126
    %v3105 = vpop.permute.xlu0 %3104
    %3106 = vrot.lane.b32.xlu0 %v3101, 126
    %v3107 = vpop.permute.xlu0 %3106
    %v3110 = vadd.f32 %v2998, %v3105
    %v3111 = vadd.f32 %v2999, %v3107
    %s3112 = sld [smem:[#allocation4 + $0x110]]
    %v3113 = vstv %s3112
    %v3114 = vmul.f32 %v3113, %v2408
    %v3115 = vmul.f32 %v3113, %v2409
    %3118 = vrot.lane.b32.xlu0 %v3114, 126
    %v3119 = vpop.permute.xlu0 %3118
    %3120 = vrot.lane.b32.xlu0 %v3115, 126
    %v3121 = vpop.permute.xlu0 %3120
    %v3124 = vadd.f32 %v3012, %v3119
    %v3125 = vadd.f32 %v3013, %v3121
    %s3126 = sld [smem:[#allocation4 + $0x114]]
    %v3127 = vstv %s3126
    %v3128 = vmul.f32 %v3127, %v2408
    %v3129 = vmul.f32 %v3127, %v2409
    %3132 = vrot.lane.b32.xlu0 %v3128, 126
    %v3133 = vpop.permute.xlu0 %3132
    %3134 = vrot.lane.b32.xlu0 %v3129, 126
    %v3135 = vpop.permute.xlu0 %3134
    %v3138 = vadd.f32 %v3026, %v3133
    %v3139 = vadd.f32 %v3027, %v3135
    %s3140 = sld [smem:[#allocation4 + $0x118]]
    %v3141 = vstv %s3140
    %v3142 = vmul.f32 %v3141, %v2408
    %v3143 = vmul.f32 %v3141, %v2409
    %3146 = vrot.lane.b32.xlu0 %v3142, 126
    %v3147 = vpop.permute.xlu0 %3146
    %3148 = vrot.lane.b32.xlu0 %v3143, 126
    %v3149 = vpop.permute.xlu0 %3148
    %v3152 = vadd.f32 %v3040, %v3147
    %v3153 = vadd.f32 %v3041, %v3149
    %s3154 = sld [smem:[#allocation4 + $0x11c]]
    %v3155 = vstv %s3154
    %v3156 = vmul.f32 %v3155, %v2408
    %v3157 = vmul.f32 %v3155, %v2409
    %3160 = vrot.lane.b32.xlu0 %v3156, 126
    %v3161 = vpop.permute.xlu0 %3160
    %3162 = vrot.lane.b32.xlu0 %v3157, 126
    %v3163 = vpop.permute.xlu0 %3162
    %v3166 = vadd.f32 %v3054, %v3161
    %v3167 = vadd.f32 %v3055, %v3163
    %s3168 = sld [smem:[#allocation4 + $0x101]]
    %v3169 = vstv %s3168
    %v3170 = vmul.f32 %v3169, %v2410
    %v3171 = vmul.f32 %v3169, %v2411
    %3174 = vrot.lane.b32.xlu0 %v3170, 126
    %v3175 = vpop.permute.xlu0 %3174
    %3176 = vrot.lane.b32.xlu0 %v3171, 126
    %v3177 = vpop.permute.xlu0 %3176
    %v3180 = vadd.f32 %v3068, %v3175
    %v3181 = vadd.f32 %v3069, %v3177
    %s3182 = sld [smem:[#allocation4 + $0x105]]
    %v3183 = vstv %s3182
    %v3184 = vmul.f32 %v3183, %v2410
    %v3185 = vmul.f32 %v3183, %v2411
    %3188 = vrot.lane.b32.xlu0 %v3184, 126
    %v3189 = vpop.permute.xlu0 %3188
    %3190 = vrot.lane.b32.xlu0 %v3185, 126
    %v3191 = vpop.permute.xlu0 %3190
    %v3194 = vadd.f32 %v3082, %v3189
    %v3195 = vadd.f32 %v3083, %v3191
    %s3196 = sld [smem:[#allocation4 + $0x109]]
    %v3197 = vstv %s3196
    %v3198 = vmul.f32 %v3197, %v2410
    %v3199 = vmul.f32 %v3197, %v2411
    %3202 = vrot.lane.b32.xlu0 %v3198, 126
    %v3203 = vpop.permute.xlu0 %3202
    %3204 = vrot.lane.b32.xlu0 %v3199, 126
    %v3205 = vpop.permute.xlu0 %3204
    %v3208 = vadd.f32 %v3096, %v3203
    %v3209 = vadd.f32 %v3097, %v3205
    %s3210 = sld [smem:[#allocation4 + $0x10d]]
    %v3211 = vstv %s3210
    %v3212 = vmul.f32 %v3211, %v2410
    %v3213 = vmul.f32 %v3211, %v2411
    %3216 = vrot.lane.b32.xlu0 %v3212, 126
    %v3217 = vpop.permute.xlu0 %3216
    %3218 = vrot.lane.b32.xlu0 %v3213, 126
    %v3219 = vpop.permute.xlu0 %3218
    %v3222 = vadd.f32 %v3110, %v3217
    %v3223 = vadd.f32 %v3111, %v3219
    %s3224 = sld [smem:[#allocation4 + $0x111]]
    %v3225 = vstv %s3224
    %v3226 = vmul.f32 %v3225, %v2410
    %v3227 = vmul.f32 %v3225, %v2411
    %3230 = vrot.lane.b32.xlu0 %v3226, 126
    %v3231 = vpop.permute.xlu0 %3230
    %3232 = vrot.lane.b32.xlu0 %v3227, 126
    %v3233 = vpop.permute.xlu0 %3232
    %v3236 = vadd.f32 %v3124, %v3231
    %v3237 = vadd.f32 %v3125, %v3233
    %s3238 = sld [smem:[#allocation4 + $0x115]]
    %v3239 = vstv %s3238
    %v3240 = vmul.f32 %v3239, %v2410
    %v3241 = vmul.f32 %v3239, %v2411
    %3244 = vrot.lane.b32.xlu0 %v3240, 126
    %v3245 = vpop.permute.xlu0 %3244
    %3246 = vrot.lane.b32.xlu0 %v3241, 126
    %v3247 = vpop.permute.xlu0 %3246
    %v3250 = vadd.f32 %v3138, %v3245
    %v3251 = vadd.f32 %v3139, %v3247
    %s3252 = sld [smem:[#allocation4 + $0x119]]
    %v3253 = vstv %s3252
    %v3254 = vmul.f32 %v3253, %v2410
    %v3255 = vmul.f32 %v3253, %v2411
    %3258 = vrot.lane.b32.xlu0 %v3254, 126
    %v3259 = vpop.permute.xlu0 %3258
    %3260 = vrot.lane.b32.xlu0 %v3255, 126
    %v3261 = vpop.permute.xlu0 %3260
    %v3264 = vadd.f32 %v3152, %v3259
    %v3265 = vadd.f32 %v3153, %v3261
    %s3266 = sld [smem:[#allocation4 + $0x11d]]
    %v3267 = vstv %s3266
    %v3268 = vmul.f32 %v3267, %v2410
    %v3269 = vmul.f32 %v3267, %v2411
    %3272 = vrot.lane.b32.xlu0 %v3268, 126
    %v3273 = vpop.permute.xlu0 %3272
    %3274 = vrot.lane.b32.xlu0 %v3269, 126
    %v3275 = vpop.permute.xlu0 %3274
    %v3278 = vadd.f32 %v3166, %v3273
    %v3279 = vadd.f32 %v3167, %v3275
    %s3280 = sld [smem:[#allocation4 + $0x102]]
    %v3281 = vstv %s3280
    %v3282 = vmul.f32 %v3281, %v2412
    %v3283 = vmul.f32 %v3281, %v2413
    %3286 = vrot.lane.b32.xlu0 %v3282, 126
    %v3287 = vpop.permute.xlu0 %3286
    %3288 = vrot.lane.b32.xlu0 %v3283, 126
    %v3289 = vpop.permute.xlu0 %3288
    %v3292 = vadd.f32 %v3180, %v3287
    %v3293 = vadd.f32 %v3181, %v3289
    %s3294 = sld [smem:[#allocation4 + $0x106]]
    %v3295 = vstv %s3294
    %v3296 = vmul.f32 %v3295, %v2412
    %v3297 = vmul.f32 %v3295, %v2413
    %3300 = vrot.lane.b32.xlu0 %v3296, 126
    %v3301 = vpop.permute.xlu0 %3300
    %3302 = vrot.lane.b32.xlu0 %v3297, 126
    %v3303 = vpop.permute.xlu0 %3302
    %v3306 = vadd.f32 %v3194, %v3301
    %v3307 = vadd.f32 %v3195, %v3303
    %s3308 = sld [smem:[#allocation4 + $0x10a]]
    %v3309 = vstv %s3308
    %v3310 = vmul.f32 %v3309, %v2412
    %v3311 = vmul.f32 %v3309, %v2413
    %3314 = vrot.lane.b32.xlu0 %v3310, 126
    %v3315 = vpop.permute.xlu0 %3314
    %3316 = vrot.lane.b32.xlu0 %v3311, 126
    %v3317 = vpop.permute.xlu0 %3316
    %v3320 = vadd.f32 %v3208, %v3315
    %v3321 = vadd.f32 %v3209, %v3317
    %s3322 = sld [smem:[#allocation4 + $0x10e]]
    %v3323 = vstv %s3322
    %v3324 = vmul.f32 %v3323, %v2412
    %v3325 = vmul.f32 %v3323, %v2413
    %3328 = vrot.lane.b32.xlu0 %v3324, 126
    %v3329 = vpop.permute.xlu0 %3328
    %3330 = vrot.lane.b32.xlu0 %v3325, 126
    %v3331 = vpop.permute.xlu0 %3330
    %v3334 = vadd.f32 %v3222, %v3329
    %v3335 = vadd.f32 %v3223, %v3331
    %s3336 = sld [smem:[#allocation4 + $0x112]]
    %v3337 = vstv %s3336
    %v3338 = vmul.f32 %v3337, %v2412
    %v3339 = vmul.f32 %v3337, %v2413
    %3342 = vrot.lane.b32.xlu0 %v3338, 126
    %v3343 = vpop.permute.xlu0 %3342
    %3344 = vrot.lane.b32.xlu0 %v3339, 126
    %v3345 = vpop.permute.xlu0 %3344
    %v3348 = vadd.f32 %v3236, %v3343
    %v3349 = vadd.f32 %v3237, %v3345
    %s3350 = sld [smem:[#allocation4 + $0x116]]
    %v3351 = vstv %s3350
    %v3352 = vmul.f32 %v3351, %v2412
    %v3353 = vmul.f32 %v3351, %v2413
    %3356 = vrot.lane.b32.xlu0 %v3352, 126
    %v3357 = vpop.permute.xlu0 %3356
    %3358 = vrot.lane.b32.xlu0 %v3353, 126
    %v3359 = vpop.permute.xlu0 %3358
    %v3362 = vadd.f32 %v3250, %v3357
    %v3363 = vadd.f32 %v3251, %v3359
    %s3364 = sld [smem:[#allocation4 + $0x11a]]
    %v3365 = vstv %s3364
    %v3366 = vmul.f32 %v3365, %v2412
    %v3367 = vmul.f32 %v3365, %v2413
    %3370 = vrot.lane.b32.xlu0 %v3366, 126
    %v3371 = vpop.permute.xlu0 %3370
    %3372 = vrot.lane.b32.xlu0 %v3367, 126
    %v3373 = vpop.permute.xlu0 %3372
    %v3376 = vadd.f32 %v3264, %v3371
    %v3377 = vadd.f32 %v3265, %v3373
    %s3378 = sld [smem:[#allocation4 + $0x11e]]
    %v3379 = vstv %s3378
    %v3380 = vmul.f32 %v3379, %v2412
    %v3381 = vmul.f32 %v3379, %v2413
    %3384 = vrot.lane.b32.xlu0 %v3380, 126
    %v3385 = vpop.permute.xlu0 %3384
    %3386 = vrot.lane.b32.xlu0 %v3381, 126
    %v3387 = vpop.permute.xlu0 %3386
    %v3390 = vadd.f32 %v3278, %v3385
    %v3391 = vadd.f32 %v3279, %v3387
    %s3392 = sld [smem:[#allocation4 + $0x103]]
    %v3393 = vstv %s3392
    %v3394 = vmul.f32 %v3393, %v2414
    %v3395 = vmul.f32 %v3393, %v2415
    %3398 = vrot.lane.b32.xlu0 %v3394, 126
    %v3399 = vpop.permute.xlu0 %3398
    %3400 = vrot.lane.b32.xlu0 %v3395, 126
    %v3401 = vpop.permute.xlu0 %3400
    %v3404 = vadd.f32 %v3292, %v3399
    %v3405 = vadd.f32 %v3293, %v3401
    %s3406 = sld [smem:[#allocation4 + $0x107]]
    %v3407 = vstv %s3406
    %v3408 = vmul.f32 %v3407, %v2414
    %v3409 = vmul.f32 %v3407, %v2415
    %3412 = vrot.lane.b32.xlu0 %v3408, 126
    %v3413 = vpop.permute.xlu0 %3412
    %3414 = vrot.lane.b32.xlu0 %v3409, 126
    %v3415 = vpop.permute.xlu0 %3414
    %v3418 = vadd.f32 %v3306, %v3413
    %v3419 = vadd.f32 %v3307, %v3415
    %s3420 = sld [smem:[#allocation4 + $0x10b]]
    %v3421 = vstv %s3420
    %v3422 = vmul.f32 %v3421, %v2414
    %v3423 = vmul.f32 %v3421, %v2415
    %3426 = vrot.lane.b32.xlu0 %v3422, 126
    %v3427 = vpop.permute.xlu0 %3426
    %3428 = vrot.lane.b32.xlu0 %v3423, 126
    %v3429 = vpop.permute.xlu0 %3428
    %v3432 = vadd.f32 %v3320, %v3427
    %v3433 = vadd.f32 %v3321, %v3429
    %s3434 = sld [smem:[#allocation4 + $0x10f]]
    %v3435 = vstv %s3434
    %v3436 = vmul.f32 %v3435, %v2414
    %v3437 = vmul.f32 %v3435, %v2415
    %3440 = vrot.lane.b32.xlu0 %v3436, 126
    %v3441 = vpop.permute.xlu0 %3440
    %3442 = vrot.lane.b32.xlu0 %v3437, 126
    %v3443 = vpop.permute.xlu0 %3442
    %v3446 = vadd.f32 %v3334, %v3441
    %v3447 = vadd.f32 %v3335, %v3443
    %s3448 = sld [smem:[#allocation4 + $0x113]]
    %v3449 = vstv %s3448
    %v3450 = vmul.f32 %v3449, %v2414
    %v3451 = vmul.f32 %v3449, %v2415
    %3454 = vrot.lane.b32.xlu0 %v3450, 126
    %v3455 = vpop.permute.xlu0 %3454
    %3456 = vrot.lane.b32.xlu0 %v3451, 126
    %v3457 = vpop.permute.xlu0 %3456
    %v3460 = vadd.f32 %v3348, %v3455
    %v3461 = vadd.f32 %v3349, %v3457
    %s3462 = sld [smem:[#allocation4 + $0x117]]
    %v3463 = vstv %s3462
    %v3464 = vmul.f32 %v3463, %v2414
    %v3465 = vmul.f32 %v3463, %v2415
    %3468 = vrot.lane.b32.xlu0 %v3464, 126
    %v3469 = vpop.permute.xlu0 %3468
    %3470 = vrot.lane.b32.xlu0 %v3465, 126
    %v3471 = vpop.permute.xlu0 %3470
    %v3474 = vadd.f32 %v3362, %v3469
    %v3475 = vadd.f32 %v3363, %v3471
    %s3476 = sld [smem:[#allocation4 + $0x11b]]
    %v3477 = vstv %s3476
    %v3478 = vmul.f32 %v3477, %v2414
    %v3479 = vmul.f32 %v3477, %v2415
    %3482 = vrot.lane.b32.xlu0 %v3478, 126
    %v3483 = vpop.permute.xlu0 %3482
    %3484 = vrot.lane.b32.xlu0 %v3479, 126
    %v3485 = vpop.permute.xlu0 %3484
    %v3488 = vadd.f32 %v3376, %v3483
    %v3489 = vadd.f32 %v3377, %v3485
    %s3490 = sld [smem:[#allocation4 + $0x11f]]
    %v3491 = vstv %s3490
    %v3492 = vmul.f32 %v3491, %v2414
    %v3493 = vmul.f32 %v3491, %v2415
    %3496 = vrot.lane.b32.xlu0 %v3492, 126
    %v3497 = vpop.permute.xlu0 %3496
    %3498 = vrot.lane.b32.xlu0 %v3493, 126
    %v3499 = vpop.permute.xlu0 %3498
    %v3502 = vadd.f32 %v3390, %v3497
    %v3503 = vadd.f32 %v3391, %v3499
    %v3504 = vmax.f32 %v3404, 0.0
    %v3505 = vmax.f32 %v3405, 0.0
    %v3506 = vsel %vm209, 0.0, %v3504
    %v3507 = vsel %vm210, 0.0, %v3505
    %3508 = vst.msk [vmem:[#allocation11] sm:$0xff] %vm213, %v3506
    %3509 = vst.msk [vmem:[#allocation11 + $0x8] sm:$0xff] %vm213, %v3507
    %v3510 = vmax.f32 %v3418, 0.0
    %v3511 = vmax.f32 %v3419, 0.0
    %v3512 = vsel %vm209, 0.0, %v3510
    %v3513 = vsel %vm210, 0.0, %v3511
    %s3514 = scalar_lea.vmem [#allocation11], 16
    %3515 = vst.msk [vmem:[%s3514] sm:$0xff] %vm213, %v3512
    %3516 = vst.msk [vmem:[%s3514 + $0x8] sm:$0xff] %vm213, %v3513
    %v3517 = vmax.f32 %v3432, 0.0
    %v3518 = vmax.f32 %v3433, 0.0
    %v3519 = vsel %vm209, 0.0, %v3517
    %v3520 = vsel %vm210, 0.0, %v3518
    %s3521 = scalar_lea.vmem [#allocation11], 32
    %3522 = vst.msk [vmem:[%s3521] sm:$0xff] %vm213, %v3519
    %3523 = vst.msk [vmem:[%s3521 + $0x8] sm:$0xff] %vm213, %v3520
    %v3524 = vmax.f32 %v3446, 0.0
    %v3525 = vmax.f32 %v3447, 0.0
    %v3526 = vsel %vm209, 0.0, %v3524
    %v3527 = vsel %vm210, 0.0, %v3525
    %s3528 = scalar_lea.vmem [#allocation11], 48
    %3529 = vst.msk [vmem:[%s3528] sm:$0xff] %vm213, %v3526
    %3530 = vst.msk [vmem:[%s3528 + $0x8] sm:$0xff] %vm213, %v3527
    %v3531 = vmax.f32 %v3460, 0.0
    %v3532 = vmax.f32 %v3461, 0.0
    %v3533 = vsel %vm209, 0.0, %v3531
    %v3534 = vsel %vm210, 0.0, %v3532
    %s3535 = scalar_lea.vmem [#allocation11], 64
    %3536 = vst.msk [vmem:[%s3535] sm:$0xff] %vm213, %v3533
    %3537 = vst.msk [vmem:[%s3535 + $0x8] sm:$0xff] %vm213, %v3534
    %v3538 = vmax.f32 %v3474, 0.0
    %v3539 = vmax.f32 %v3475, 0.0
    %v3540 = vsel %vm209, 0.0, %v3538
    %v3541 = vsel %vm210, 0.0, %v3539
    %s3542 = scalar_lea.vmem [#allocation11], 80
    %3543 = vst.msk [vmem:[%s3542] sm:$0xff] %vm213, %v3540
    %3544 = vst.msk [vmem:[%s3542 + $0x8] sm:$0xff] %vm213, %v3541
    %v3545 = vmax.f32 %v3488, 0.0
    %v3546 = vmax.f32 %v3489, 0.0
    %v3547 = vsel %vm209, 0.0, %v3545
    %v3548 = vsel %vm210, 0.0, %v3546
    %s3549 = scalar_lea.vmem [#allocation11], 96
    %3550 = vst.msk [vmem:[%s3549] sm:$0xff] %vm213, %v3547
    %3551 = vst.msk [vmem:[%s3549 + $0x8] sm:$0xff] %vm213, %v3548
    %v3552 = vmax.f32 %v3502, 0.0
    %v3553 = vmax.f32 %v3503, 0.0
    %v3554 = vsel %vm209, 0.0, %v3552
    %v3555 = vsel %vm210, 0.0, %v3553
    %s3556 = scalar_lea.vmem [#allocation11], 112
    %3557 = vst.msk [vmem:[%s3556] sm:$0xff] %vm213, %v3554
    %3558 = vst.msk [vmem:[%s3556 + $0x8] sm:$0xff] %vm213, %v3555
    %s3559 = scalar_lea.vmem [#allocation9], 16
    %v3560 = vld [vmem:[%s3559] sm:$0xff]
    %v3561 = vld [vmem:[%s3559 + $0x8] sm:$0xff]
    %s3562 = scalar_lea.vmem [#allocation8], 64
    %v3563 = vld [vmem:[%s3562] sm:$0xff]
    %v3564 = vld [vmem:[%s3562 + $0x8] sm:$0xff]
    %v3565 = vld [vmem:[%s3562 + $0x10] sm:$0xff]
    %v3566 = vld [vmem:[%s3562 + $0x18] sm:$0xff]
    %v3567 = vld [vmem:[%s3562 + $0x20] sm:$0xff]
    %v3568 = vld [vmem:[%s3562 + $0x28] sm:$0xff]
    %v3569 = vld [vmem:[%s3562 + $0x30] sm:$0xff]
    %v3570 = vld [vmem:[%s3562 + $0x38] sm:$0xff]
    %v3571 = vmul.f32 %v3563, %v3560
    %v3572 = vmul.f32 %v3564, %v3561
    %v3573 = vmul.f32 %v3565, %v3560
    %v3574 = vmul.f32 %v3566, %v3561
    %v3575 = vmul.f32 %v3567, %v3560
    %v3576 = vmul.f32 %v3568, %v3561
    %v3577 = vmul.f32 %v3569, %v3560
    %v3578 = vmul.f32 %v3570, %v3561
    %3587 = vrot.lane.b32.xlu0 %v3571, 1
    %v3588 = vpop.permute.xlu0 %3587
    %3589 = vrot.lane.b32.xlu0 %v3572, 1
    %v3590 = vpop.permute.xlu0 %3589
    %3591 = vrot.lane.b32.xlu0 %v3573, 1
    %v3592 = vpop.permute.xlu0 %3591
    %3593 = vrot.lane.b32.xlu0 %v3574, 1
    %v3594 = vpop.permute.xlu0 %3593
    %3595 = vrot.lane.b32.xlu0 %v3575, 1
    %v3596 = vpop.permute.xlu0 %3595
    %3597 = vrot.lane.b32.xlu0 %v3576, 1
    %v3598 = vpop.permute.xlu0 %3597
    %3599 = vrot.lane.b32.xlu0 %v3577, 1
    %v3600 = vpop.permute.xlu0 %3599
    %3601 = vrot.lane.b32.xlu0 %v3578, 1
    %v3602 = vpop.permute.xlu0 %3601
    %3611 = vst.msk [vmem:[#allocation2 + $0x1] sm:$0xff] %vm124, %v3588
    %3612 = vst.msk [vmem:[#allocation2 + $0x9] sm:$0xff] %vm124, %v3590
    %3613 = vst.msk [vmem:[#allocation2 + $0x19] sm:$0xff] %vm124, %v3592
    %3614 = vst.msk [vmem:[#allocation2 + $0x21] sm:$0xff] %vm124, %v3594
    %3615 = vst.msk [vmem:[#allocation2 + $0x31] sm:$0xff] %vm124, %v3596
    %3616 = vst.msk [vmem:[#allocation2 + $0x39] sm:$0xff] %vm124, %v3598
    %3617 = vst.msk [vmem:[#allocation2 + $0x49] sm:$0xff] %vm124, %v3600
    %3618 = vst.msk [vmem:[#allocation2 + $0x51] sm:$0xff] %vm124, %v3602
    %3621 = vrot.lane.b32.xlu0 %v3560, 1
    %v3622 = vpop.permute.xlu0 %3621
    %3623 = vrot.lane.b32.xlu0 %v3561, 1
    %v3624 = vpop.permute.xlu0 %3623
    %3627 = vst.msk [vmem:[#allocation3 + $0x1] sm:$0xff] %vm124, %v3622
    %3628 = vst.msk [vmem:[#allocation3 + $0x9] sm:$0xff] %vm124, %v3624
    %v3629 = vld [vmem:[#allocation3] sm:$0xff]
    %v3630 = vld [vmem:[#allocation3 + $0x8] sm:$0xff]
    %v3631 = vadd.f32 %v3629, 0.0
    %v3632 = vadd.f32 %v3630, 0.0
    %3635 = vrot.lane.b32.xlu0 %v3629, 127
    %v3636 = vpop.permute.xlu0 %3635
    %3637 = vrot.lane.b32.xlu0 %v3630, 127
    %v3638 = vpop.permute.xlu0 %3637
    %v3641 = vadd.f32 %v3631, %v3636
    %v3642 = vadd.f32 %v3632, %v3638
    %3643 = vrot.lane.b32.xlu0 %v3629, 126
    %v3644 = vpop.permute.xlu0 %3643
    %3645 = vrot.lane.b32.xlu0 %v3630, 126
    %v3646 = vpop.permute.xlu0 %3645
    %v3649 = vadd.f32 %v3641, %v3644
    %v3650 = vadd.f32 %v3642, %v3646
    %v3651 = vld [vmem:[#allocation3 + $0x1] sm:$0xff]
    %v3652 = vld [vmem:[#allocation3 + $0x9] sm:$0xff]
    %v3653 = vadd.f32 %v3649, %v3651
    %v3654 = vadd.f32 %v3650, %v3652
    %3657 = vrot.lane.b32.xlu0 %v3651, 127
    %v3658 = vpop.permute.xlu0 %3657
    %3659 = vrot.lane.b32.xlu0 %v3652, 127
    %v3660 = vpop.permute.xlu0 %3659
    %v3663 = vadd.f32 %v3653, %v3658
    %v3664 = vadd.f32 %v3654, %v3660
    %3665 = vrot.lane.b32.xlu0 %v3651, 126
    %v3666 = vpop.permute.xlu0 %3665
    %3667 = vrot.lane.b32.xlu0 %v3652, 126
    %v3668 = vpop.permute.xlu0 %3667
    %v3671 = vadd.f32 %v3663, %v3666
    %v3672 = vadd.f32 %v3664, %v3668
    %v3673 = vld [vmem:[#allocation3 + $0x2] sm:$0xff]
    %v3674 = vld [vmem:[#allocation3 + $0xa] sm:$0xff]
    %v3675 = vadd.f32 %v3671, %v3673
    %v3676 = vadd.f32 %v3672, %v3674
    %3679 = vrot.lane.b32.xlu0 %v3673, 127
    %v3680 = vpop.permute.xlu0 %3679
    %3681 = vrot.lane.b32.xlu0 %v3674, 127
    %v3682 = vpop.permute.xlu0 %3681
    %v3685 = vadd.f32 %v3675, %v3680
    %v3686 = vadd.f32 %v3676, %v3682
    %3687 = vrot.lane.b32.xlu0 %v3673, 126
    %v3688 = vpop.permute.xlu0 %3687
    %3689 = vrot.lane.b32.xlu0 %v3674, 126
    %v3690 = vpop.permute.xlu0 %3689
    %v3693 = vadd.f32 %v3685, %v3688
    %v3694 = vadd.f32 %v3686, %v3690
    %vm3695 = vcmp.eq.f32.partialorder %v3693, 0.0
    %vm3696 = vcmp.eq.f32.partialorder %v3694, 0.0
    %v3697 = vsel %vm3695, 0.0, 1.0
    %v3698 = vsel %vm3696, 0.0, 1.0
    %s3699 = scalar_lea.vmem [#allocation12], 16
    %3700 = vst.msk [vmem:[%s3699] sm:$0xff] %vm213, %v3697
    %3701 = vst.msk [vmem:[%s3699 + $0x8] sm:$0xff] %vm213, %v3698
    %v3702 = vld [vmem:[#allocation2] sm:$0xff]
    %v3703 = vld [vmem:[#allocation2 + $0x8] sm:$0xff]
    %v3704 = vld [vmem:[#allocation2 + $0x18] sm:$0xff]
    %v3705 = vld [vmem:[#allocation2 + $0x20] sm:$0xff]
    %v3706 = vld [vmem:[#allocation2 + $0x30] sm:$0xff]
    %v3707 = vld [vmem:[#allocation2 + $0x38] sm:$0xff]
    %v3708 = vld [vmem:[#allocation2 + $0x48] sm:$0xff]
    %v3709 = vld [vmem:[#allocation2 + $0x50] sm:$0xff]
    %s3710 = sld [smem:[#allocation4]]
    %v3711 = vstv %s3710
    %v3712 = vmul.f32 %v3711, %v3702
    %v3713 = vmul.f32 %v3711, %v3703
    %v3714 = vadd.f32 %v3712, 0.0
    %v3715 = vadd.f32 %v3713, 0.0
    %s3716 = sld [smem:[#allocation4 + $0x4]]
    %v3717 = vstv %s3716
    %v3718 = vmul.f32 %v3717, %v3702
    %v3719 = vmul.f32 %v3717, %v3703
    %v3720 = vadd.f32 %v3718, 0.0
    %v3721 = vadd.f32 %v3719, 0.0
    %s3722 = sld [smem:[#allocation4 + $0x8]]
    %v3723 = vstv %s3722
    %v3724 = vmul.f32 %v3723, %v3702
    %v3725 = vmul.f32 %v3723, %v3703
    %v3726 = vadd.f32 %v3724, 0.0
    %v3727 = vadd.f32 %v3725, 0.0
    %s3728 = sld [smem:[#allocation4 + $0xc]]
    %v3729 = vstv %s3728
    %v3730 = vmul.f32 %v3729, %v3702
    %v3731 = vmul.f32 %v3729, %v3703
    %v3732 = vadd.f32 %v3730, 0.0
    %v3733 = vadd.f32 %v3731, 0.0
    %s3734 = sld [smem:[#allocation4 + $0x10]]
    %v3735 = vstv %s3734
    %v3736 = vmul.f32 %v3735, %v3702
    %v3737 = vmul.f32 %v3735, %v3703
    %v3738 = vadd.f32 %v3736, 0.0
    %v3739 = vadd.f32 %v3737, 0.0
    %s3740 = sld [smem:[#allocation4 + $0x14]]
    %v3741 = vstv %s3740
    %v3742 = vmul.f32 %v3741, %v3702
    %v3743 = vmul.f32 %v3741, %v3703
    %v3744 = vadd.f32 %v3742, 0.0
    %v3745 = vadd.f32 %v3743, 0.0
    %s3746 = sld [smem:[#allocation4 + $0x18]]
    %v3747 = vstv %s3746
    %v3748 = vmul.f32 %v3747, %v3702
    %v3749 = vmul.f32 %v3747, %v3703
    %v3750 = vadd.f32 %v3748, 0.0
    %v3751 = vadd.f32 %v3749, 0.0
    %s3752 = sld [smem:[#allocation4 + $0x1c]]
    %v3753 = vstv %s3752
    %v3754 = vmul.f32 %v3753, %v3702
    %v3755 = vmul.f32 %v3753, %v3703
    %v3756 = vadd.f32 %v3754, 0.0
    %v3757 = vadd.f32 %v3755, 0.0
    %s3758 = sld [smem:[#allocation4 + $0x1]]
    %v3759 = vstv %s3758
    %v3760 = vmul.f32 %v3759, %v3704
    %v3761 = vmul.f32 %v3759, %v3705
    %v3762 = vadd.f32 %v3714, %v3760
    %v3763 = vadd.f32 %v3715, %v3761
    %s3764 = sld [smem:[#allocation4 + $0x5]]
    %v3765 = vstv %s3764
    %v3766 = vmul.f32 %v3765, %v3704
    %v3767 = vmul.f32 %v3765, %v3705
    %v3768 = vadd.f32 %v3720, %v3766
    %v3769 = vadd.f32 %v3721, %v3767
    %s3770 = sld [smem:[#allocation4 + $0x9]]
    %v3771 = vstv %s3770
    %v3772 = vmul.f32 %v3771, %v3704
    %v3773 = vmul.f32 %v3771, %v3705
    %v3774 = vadd.f32 %v3726, %v3772
    %v3775 = vadd.f32 %v3727, %v3773
    %s3776 = sld [smem:[#allocation4 + $0xd]]
    %v3777 = vstv %s3776
    %v3778 = vmul.f32 %v3777, %v3704
    %v3779 = vmul.f32 %v3777, %v3705
    %v3780 = vadd.f32 %v3732, %v3778
    %v3781 = vadd.f32 %v3733, %v3779
    %s3782 = sld [smem:[#allocation4 + $0x11]]
    %v3783 = vstv %s3782
    %v3784 = vmul.f32 %v3783, %v3704
    %v3785 = vmul.f32 %v3783, %v3705
    %v3786 = vadd.f32 %v3738, %v3784
    %v3787 = vadd.f32 %v3739, %v3785
    %s3788 = sld [smem:[#allocation4 + $0x15]]
    %v3789 = vstv %s3788
    %v3790 = vmul.f32 %v3789, %v3704
    %v3791 = vmul.f32 %v3789, %v3705
    %v3792 = vadd.f32 %v3744, %v3790
    %v3793 = vadd.f32 %v3745, %v3791
    %s3794 = sld [smem:[#allocation4 + $0x19]]
    %v3795 = vstv %s3794
    %v3796 = vmul.f32 %v3795, %v3704
    %v3797 = vmul.f32 %v3795, %v3705
    %v3798 = vadd.f32 %v3750, %v3796
    %v3799 = vadd.f32 %v3751, %v3797
    %s3800 = sld [smem:[#allocation4 + $0x1d]]
    %v3801 = vstv %s3800
    %v3802 = vmul.f32 %v3801, %v3704
    %v3803 = vmul.f32 %v3801, %v3705
    %v3804 = vadd.f32 %v3756, %v3802
    %v3805 = vadd.f32 %v3757, %v3803
    %s3806 = sld [smem:[#allocation4 + $0x2]]
    %v3807 = vstv %s3806
    %v3808 = vmul.f32 %v3807, %v3706
    %v3809 = vmul.f32 %v3807, %v3707
    %v3810 = vadd.f32 %v3762, %v3808
    %v3811 = vadd.f32 %v3763, %v3809
    %s3812 = sld [smem:[#allocation4 + $0x6]]
    %v3813 = vstv %s3812
    %v3814 = vmul.f32 %v3813, %v3706
    %v3815 = vmul.f32 %v3813, %v3707
    %v3816 = vadd.f32 %v3768, %v3814
    %v3817 = vadd.f32 %v3769, %v3815
    %s3818 = sld [smem:[#allocation4 + $0xa]]
    %v3819 = vstv %s3818
    %v3820 = vmul.f32 %v3819, %v3706
    %v3821 = vmul.f32 %v3819, %v3707
    %v3822 = vadd.f32 %v3774, %v3820
    %v3823 = vadd.f32 %v3775, %v3821
    %s3824 = sld [smem:[#allocation4 + $0xe]]
    %v3825 = vstv %s3824
    %v3826 = vmul.f32 %v3825, %v3706
    %v3827 = vmul.f32 %v3825, %v3707
    %v3828 = vadd.f32 %v3780, %v3826
    %v3829 = vadd.f32 %v3781, %v3827
    %s3830 = sld [smem:[#allocation4 + $0x12]]
    %v3831 = vstv %s3830
    %v3832 = vmul.f32 %v3831, %v3706
    %v3833 = vmul.f32 %v3831, %v3707
    %v3834 = vadd.f32 %v3786, %v3832
    %v3835 = vadd.f32 %v3787, %v3833
    %s3836 = sld [smem:[#allocation4 + $0x16]]
    %v3837 = vstv %s3836
    %v3838 = vmul.f32 %v3837, %v3706
    %v3839 = vmul.f32 %v3837, %v3707
    %v3840 = vadd.f32 %v3792, %v3838
    %v3841 = vadd.f32 %v3793, %v3839
    %s3842 = sld [smem:[#allocation4 + $0x1a]]
    %v3843 = vstv %s3842
    %v3844 = vmul.f32 %v3843, %v3706
    %v3845 = vmul.f32 %v3843, %v3707
    %v3846 = vadd.f32 %v3798, %v3844
    %v3847 = vadd.f32 %v3799, %v3845
    %s3848 = sld [smem:[#allocation4 + $0x1e]]
    %v3849 = vstv %s3848
    %v3850 = vmul.f32 %v3849, %v3706
    %v3851 = vmul.f32 %v3849, %v3707
    %v3852 = vadd.f32 %v3804, %v3850
    %v3853 = vadd.f32 %v3805, %v3851
    %s3854 = sld [smem:[#allocation4 + $0x3]]
    %v3855 = vstv %s3854
    %v3856 = vmul.f32 %v3855, %v3708
    %v3857 = vmul.f32 %v3855, %v3709
    %v3858 = vadd.f32 %v3810, %v3856
    %v3859 = vadd.f32 %v3811, %v3857
    %s3860 = sld [smem:[#allocation4 + $0x7]]
    %v3861 = vstv %s3860
    %v3862 = vmul.f32 %v3861, %v3708
    %v3863 = vmul.f32 %v3861, %v3709
    %v3864 = vadd.f32 %v3816, %v3862
    %v3865 = vadd.f32 %v3817, %v3863
    %s3866 = sld [smem:[#allocation4 + $0xb]]
    %v3867 = vstv %s3866
    %v3868 = vmul.f32 %v3867, %v3708
    %v3869 = vmul.f32 %v3867, %v3709
    %v3870 = vadd.f32 %v3822, %v3868
    %v3871 = vadd.f32 %v3823, %v3869
    %s3872 = sld [smem:[#allocation4 + $0xf]]
    %v3873 = vstv %s3872
    %v3874 = vmul.f32 %v3873, %v3708
    %v3875 = vmul.f32 %v3873, %v3709
    %v3876 = vadd.f32 %v3828, %v3874
    %v3877 = vadd.f32 %v3829, %v3875
    %s3878 = sld [smem:[#allocation4 + $0x13]]
    %v3879 = vstv %s3878
    %v3880 = vmul.f32 %v3879, %v3708
    %v3881 = vmul.f32 %v3879, %v3709
    %v3882 = vadd.f32 %v3834, %v3880
    %v3883 = vadd.f32 %v3835, %v3881
    %s3884 = sld [smem:[#allocation4 + $0x17]]
    %v3885 = vstv %s3884
    %v3886 = vmul.f32 %v3885, %v3708
    %v3887 = vmul.f32 %v3885, %v3709
    %v3888 = vadd.f32 %v3840, %v3886
    %v3889 = vadd.f32 %v3841, %v3887
    %s3890 = sld [smem:[#allocation4 + $0x1b]]
    %v3891 = vstv %s3890
    %v3892 = vmul.f32 %v3891, %v3708
    %v3893 = vmul.f32 %v3891, %v3709
    %v3894 = vadd.f32 %v3846, %v3892
    %v3895 = vadd.f32 %v3847, %v3893
    %s3896 = sld [smem:[#allocation4 + $0x1f]]
    %v3897 = vstv %s3896
    %v3898 = vmul.f32 %v3897, %v3708
    %v3899 = vmul.f32 %v3897, %v3709
    %v3900 = vadd.f32 %v3852, %v3898
    %v3901 = vadd.f32 %v3853, %v3899
    %s3902 = sld [smem:[#allocation4 + $0x20]]
    %v3903 = vstv %s3902
    %v3904 = vmul.f32 %v3903, %v3702
    %v3905 = vmul.f32 %v3903, %v3703
    %3908 = vrot.lane.b32.xlu0 %v3904, 127
    %v3909 = vpop.permute.xlu0 %3908
    %3910 = vrot.lane.b32.xlu0 %v3905, 127
    %v3911 = vpop.permute.xlu0 %3910
    %v3914 = vadd.f32 %v3858, %v3909
    %v3915 = vadd.f32 %v3859, %v3911
    %s3916 = sld [smem:[#allocation4 + $0x24]]
    %v3917 = vstv %s3916
    %v3918 = vmul.f32 %v3917, %v3702
    %v3919 = vmul.f32 %v3917, %v3703
    %3922 = vrot.lane.b32.xlu0 %v3918, 127
    %v3923 = vpop.permute.xlu0 %3922
    %3924 = vrot.lane.b32.xlu0 %v3919, 127
    %v3925 = vpop.permute.xlu0 %3924
    %v3928 = vadd.f32 %v3864, %v3923
    %v3929 = vadd.f32 %v3865, %v3925
    %s3930 = sld [smem:[#allocation4 + $0x28]]
    %v3931 = vstv %s3930
    %v3932 = vmul.f32 %v3931, %v3702
    %v3933 = vmul.f32 %v3931, %v3703
    %3936 = vrot.lane.b32.xlu0 %v3932, 127
    %v3937 = vpop.permute.xlu0 %3936
    %3938 = vrot.lane.b32.xlu0 %v3933, 127
    %v3939 = vpop.permute.xlu0 %3938
    %v3942 = vadd.f32 %v3870, %v3937
    %v3943 = vadd.f32 %v3871, %v3939
    %s3944 = sld [smem:[#allocation4 + $0x2c]]
    %v3945 = vstv %s3944
    %v3946 = vmul.f32 %v3945, %v3702
    %v3947 = vmul.f32 %v3945, %v3703
    %3950 = vrot.lane.b32.xlu0 %v3946, 127
    %v3951 = vpop.permute.xlu0 %3950
    %3952 = vrot.lane.b32.xlu0 %v3947, 127
    %v3953 = vpop.permute.xlu0 %3952
    %v3956 = vadd.f32 %v3876, %v3951
    %v3957 = vadd.f32 %v3877, %v3953
    %s3958 = sld [smem:[#allocation4 + $0x30]]
    %v3959 = vstv %s3958
    %v3960 = vmul.f32 %v3959, %v3702
    %v3961 = vmul.f32 %v3959, %v3703
    %3964 = vrot.lane.b32.xlu0 %v3960, 127
    %v3965 = vpop.permute.xlu0 %3964
    %3966 = vrot.lane.b32.xlu0 %v3961, 127
    %v3967 = vpop.permute.xlu0 %3966
    %v3970 = vadd.f32 %v3882, %v3965
    %v3971 = vadd.f32 %v3883, %v3967
    %s3972 = sld [smem:[#allocation4 + $0x34]]
    %v3973 = vstv %s3972
    %v3974 = vmul.f32 %v3973, %v3702
    %v3975 = vmul.f32 %v3973, %v3703
    %3978 = vrot.lane.b32.xlu0 %v3974, 127
    %v3979 = vpop.permute.xlu0 %3978
    %3980 = vrot.lane.b32.xlu0 %v3975, 127
    %v3981 = vpop.permute.xlu0 %3980
    %v3984 = vadd.f32 %v3888, %v3979
    %v3985 = vadd.f32 %v3889, %v3981
    %s3986 = sld [smem:[#allocation4 + $0x38]]
    %v3987 = vstv %s3986
    %v3988 = vmul.f32 %v3987, %v3702
    %v3989 = vmul.f32 %v3987, %v3703
    %3992 = vrot.lane.b32.xlu0 %v3988, 127
    %v3993 = vpop.permute.xlu0 %3992
    %3994 = vrot.lane.b32.xlu0 %v3989, 127
    %v3995 = vpop.permute.xlu0 %3994
    %v3998 = vadd.f32 %v3894, %v3993
    %v3999 = vadd.f32 %v3895, %v3995
    %s4000 = sld [smem:[#allocation4 + $0x3c]]
    %v4001 = vstv %s4000
    %v4002 = vmul.f32 %v4001, %v3702
    %v4003 = vmul.f32 %v4001, %v3703
    %4006 = vrot.lane.b32.xlu0 %v4002, 127
    %v4007 = vpop.permute.xlu0 %4006
    %4008 = vrot.lane.b32.xlu0 %v4003, 127
    %v4009 = vpop.permute.xlu0 %4008
    %v4012 = vadd.f32 %v3900, %v4007
    %v4013 = vadd.f32 %v3901, %v4009
    %s4014 = sld [smem:[#allocation4 + $0x21]]
    %v4015 = vstv %s4014
    %v4016 = vmul.f32 %v4015, %v3704
    %v4017 = vmul.f32 %v4015, %v3705
    %4020 = vrot.lane.b32.xlu0 %v4016, 127
    %v4021 = vpop.permute.xlu0 %4020
    %4022 = vrot.lane.b32.xlu0 %v4017, 127
    %v4023 = vpop.permute.xlu0 %4022
    %v4026 = vadd.f32 %v3914, %v4021
    %v4027 = vadd.f32 %v3915, %v4023
    %s4028 = sld [smem:[#allocation4 + $0x25]]
    %v4029 = vstv %s4028
    %v4030 = vmul.f32 %v4029, %v3704
    %v4031 = vmul.f32 %v4029, %v3705
    %4034 = vrot.lane.b32.xlu0 %v4030, 127
    %v4035 = vpop.permute.xlu0 %4034
    %4036 = vrot.lane.b32.xlu0 %v4031, 127
    %v4037 = vpop.permute.xlu0 %4036
    %v4040 = vadd.f32 %v3928, %v4035
    %v4041 = vadd.f32 %v3929, %v4037
    %s4042 = sld [smem:[#allocation4 + $0x29]]
    %v4043 = vstv %s4042
    %v4044 = vmul.f32 %v4043, %v3704
    %v4045 = vmul.f32 %v4043, %v3705
    %4048 = vrot.lane.b32.xlu0 %v4044, 127
    %v4049 = vpop.permute.xlu0 %4048
    %4050 = vrot.lane.b32.xlu0 %v4045, 127
    %v4051 = vpop.permute.xlu0 %4050
    %v4054 = vadd.f32 %v3942, %v4049
    %v4055 = vadd.f32 %v3943, %v4051
    %s4056 = sld [smem:[#allocation4 + $0x2d]]
    %v4057 = vstv %s4056
    %v4058 = vmul.f32 %v4057, %v3704
    %v4059 = vmul.f32 %v4057, %v3705
    %4062 = vrot.lane.b32.xlu0 %v4058, 127
    %v4063 = vpop.permute.xlu0 %4062
    %4064 = vrot.lane.b32.xlu0 %v4059, 127
    %v4065 = vpop.permute.xlu0 %4064
    %v4068 = vadd.f32 %v3956, %v4063
    %v4069 = vadd.f32 %v3957, %v4065
    %s4070 = sld [smem:[#allocation4 + $0x31]]
    %v4071 = vstv %s4070
    %v4072 = vmul.f32 %v4071, %v3704
    %v4073 = vmul.f32 %v4071, %v3705
    %4076 = vrot.lane.b32.xlu0 %v4072, 127
    %v4077 = vpop.permute.xlu0 %4076
    %4078 = vrot.lane.b32.xlu0 %v4073, 127
    %v4079 = vpop.permute.xlu0 %4078
    %v4082 = vadd.f32 %v3970, %v4077
    %v4083 = vadd.f32 %v3971, %v4079
    %s4084 = sld [smem:[#allocation4 + $0x35]]
    %v4085 = vstv %s4084
    %v4086 = vmul.f32 %v4085, %v3704
    %v4087 = vmul.f32 %v4085, %v3705
    %4090 = vrot.lane.b32.xlu0 %v4086, 127
    %v4091 = vpop.permute.xlu0 %4090
    %4092 = vrot.lane.b32.xlu0 %v4087, 127
    %v4093 = vpop.permute.xlu0 %4092
    %v4096 = vadd.f32 %v3984, %v4091
    %v4097 = vadd.f32 %v3985, %v4093
    %s4098 = sld [smem:[#allocation4 + $0x39]]
    %v4099 = vstv %s4098
    %v4100 = vmul.f32 %v4099, %v3704
    %v4101 = vmul.f32 %v4099, %v3705
    %4104 = vrot.lane.b32.xlu0 %v4100, 127
    %v4105 = vpop.permute.xlu0 %4104
    %4106 = vrot.lane.b32.xlu0 %v4101, 127
    %v4107 = vpop.permute.xlu0 %4106
    %v4110 = vadd.f32 %v3998, %v4105
    %v4111 = vadd.f32 %v3999, %v4107
    %s4112 = sld [smem:[#allocation4 + $0x3d]]
    %v4113 = vstv %s4112
    %v4114 = vmul.f32 %v4113, %v3704
    %v4115 = vmul.f32 %v4113, %v3705
    %4118 = vrot.lane.b32.xlu0 %v4114, 127
    %v4119 = vpop.permute.xlu0 %4118
    %4120 = vrot.lane.b32.xlu0 %v4115, 127
    %v4121 = vpop.permute.xlu0 %4120
    %v4124 = vadd.f32 %v4012, %v4119
    %v4125 = vadd.f32 %v4013, %v4121
    %s4126 = sld [smem:[#allocation4 + $0x22]]
    %v4127 = vstv %s4126
    %v4128 = vmul.f32 %v4127, %v3706
    %v4129 = vmul.f32 %v4127, %v3707
    %4132 = vrot.lane.b32.xlu0 %v4128, 127
    %v4133 = vpop.permute.xlu0 %4132
    %4134 = vrot.lane.b32.xlu0 %v4129, 127
    %v4135 = vpop.permute.xlu0 %4134
    %v4138 = vadd.f32 %v4026, %v4133
    %v4139 = vadd.f32 %v4027, %v4135
    %s4140 = sld [smem:[#allocation4 + $0x26]]
    %v4141 = vstv %s4140
    %v4142 = vmul.f32 %v4141, %v3706
    %v4143 = vmul.f32 %v4141, %v3707
    %4146 = vrot.lane.b32.xlu0 %v4142, 127
    %v4147 = vpop.permute.xlu0 %4146
    %4148 = vrot.lane.b32.xlu0 %v4143, 127
    %v4149 = vpop.permute.xlu0 %4148
    %v4152 = vadd.f32 %v4040, %v4147
    %v4153 = vadd.f32 %v4041, %v4149
    %s4154 = sld [smem:[#allocation4 + $0x2a]]
    %v4155 = vstv %s4154
    %v4156 = vmul.f32 %v4155, %v3706
    %v4157 = vmul.f32 %v4155, %v3707
    %4160 = vrot.lane.b32.xlu0 %v4156, 127
    %v4161 = vpop.permute.xlu0 %4160
    %4162 = vrot.lane.b32.xlu0 %v4157, 127
    %v4163 = vpop.permute.xlu0 %4162
    %v4166 = vadd.f32 %v4054, %v4161
    %v4167 = vadd.f32 %v4055, %v4163
    %s4168 = sld [smem:[#allocation4 + $0x2e]]
    %v4169 = vstv %s4168
    %v4170 = vmul.f32 %v4169, %v3706
    %v4171 = vmul.f32 %v4169, %v3707
    %4174 = vrot.lane.b32.xlu0 %v4170, 127
    %v4175 = vpop.permute.xlu0 %4174
    %4176 = vrot.lane.b32.xlu0 %v4171, 127
    %v4177 = vpop.permute.xlu0 %4176
    %v4180 = vadd.f32 %v4068, %v4175
    %v4181 = vadd.f32 %v4069, %v4177
    %s4182 = sld [smem:[#allocation4 + $0x32]]
    %v4183 = vstv %s4182
    %v4184 = vmul.f32 %v4183, %v3706
    %v4185 = vmul.f32 %v4183, %v3707
    %4188 = vrot.lane.b32.xlu0 %v4184, 127
    %v4189 = vpop.permute.xlu0 %4188
    %4190 = vrot.lane.b32.xlu0 %v4185, 127
    %v4191 = vpop.permute.xlu0 %4190
    %v4194 = vadd.f32 %v4082, %v4189
    %v4195 = vadd.f32 %v4083, %v4191
    %s4196 = sld [smem:[#allocation4 + $0x36]]
    %v4197 = vstv %s4196
    %v4198 = vmul.f32 %v4197, %v3706
    %v4199 = vmul.f32 %v4197, %v3707
    %4202 = vrot.lane.b32.xlu0 %v4198, 127
    %v4203 = vpop.permute.xlu0 %4202
    %4204 = vrot.lane.b32.xlu0 %v4199, 127
    %v4205 = vpop.permute.xlu0 %4204
    %v4208 = vadd.f32 %v4096, %v4203
    %v4209 = vadd.f32 %v4097, %v4205
    %s4210 = sld [smem:[#allocation4 + $0x3a]]
    %v4211 = vstv %s4210
    %v4212 = vmul.f32 %v4211, %v3706
    %v4213 = vmul.f32 %v4211, %v3707
    %4216 = vrot.lane.b32.xlu0 %v4212, 127
    %v4217 = vpop.permute.xlu0 %4216
    %4218 = vrot.lane.b32.xlu0 %v4213, 127
    %v4219 = vpop.permute.xlu0 %4218
    %v4222 = vadd.f32 %v4110, %v4217
    %v4223 = vadd.f32 %v4111, %v4219
    %s4224 = sld [smem:[#allocation4 + $0x3e]]
    %v4225 = vstv %s4224
    %v4226 = vmul.f32 %v4225, %v3706
    %v4227 = vmul.f32 %v4225, %v3707
    %4230 = vrot.lane.b32.xlu0 %v4226, 127
    %v4231 = vpop.permute.xlu0 %4230
    %4232 = vrot.lane.b32.xlu0 %v4227, 127
    %v4233 = vpop.permute.xlu0 %4232
    %v4236 = vadd.f32 %v4124, %v4231
    %v4237 = vadd.f32 %v4125, %v4233
    %s4238 = sld [smem:[#allocation4 + $0x23]]
    %v4239 = vstv %s4238
    %v4240 = vmul.f32 %v4239, %v3708
    %v4241 = vmul.f32 %v4239, %v3709
    %4244 = vrot.lane.b32.xlu0 %v4240, 127
    %v4245 = vpop.permute.xlu0 %4244
    %4246 = vrot.lane.b32.xlu0 %v4241, 127
    %v4247 = vpop.permute.xlu0 %4246
    %v4250 = vadd.f32 %v4138, %v4245
    %v4251 = vadd.f32 %v4139, %v4247
    %s4252 = sld [smem:[#allocation4 + $0x27]]
    %v4253 = vstv %s4252
    %v4254 = vmul.f32 %v4253, %v3708
    %v4255 = vmul.f32 %v4253, %v3709
    %4258 = vrot.lane.b32.xlu0 %v4254, 127
    %v4259 = vpop.permute.xlu0 %4258
    %4260 = vrot.lane.b32.xlu0 %v4255, 127
    %v4261 = vpop.permute.xlu0 %4260
    %v4264 = vadd.f32 %v4152, %v4259
    %v4265 = vadd.f32 %v4153, %v4261
    %s4266 = sld [smem:[#allocation4 + $0x2b]]
    %v4267 = vstv %s4266
    %v4268 = vmul.f32 %v4267, %v3708
    %v4269 = vmul.f32 %v4267, %v3709
    %4272 = vrot.lane.b32.xlu0 %v4268, 127
    %v4273 = vpop.permute.xlu0 %4272
    %4274 = vrot.lane.b32.xlu0 %v4269, 127
    %v4275 = vpop.permute.xlu0 %4274
    %v4278 = vadd.f32 %v4166, %v4273
    %v4279 = vadd.f32 %v4167, %v4275
    %s4280 = sld [smem:[#allocation4 + $0x2f]]
    %v4281 = vstv %s4280
    %v4282 = vmul.f32 %v4281, %v3708
    %v4283 = vmul.f32 %v4281, %v3709
    %4286 = vrot.lane.b32.xlu0 %v4282, 127
    %v4287 = vpop.permute.xlu0 %4286
    %4288 = vrot.lane.b32.xlu0 %v4283, 127
    %v4289 = vpop.permute.xlu0 %4288
    %v4292 = vadd.f32 %v4180, %v4287
    %v4293 = vadd.f32 %v4181, %v4289
    %s4294 = sld [smem:[#allocation4 + $0x33]]
    %v4295 = vstv %s4294
    %v4296 = vmul.f32 %v4295, %v3708
    %v4297 = vmul.f32 %v4295, %v3709
    %4300 = vrot.lane.b32.xlu0 %v4296, 127
    %v4301 = vpop.permute.xlu0 %4300
    %4302 = vrot.lane.b32.xlu0 %v4297, 127
    %v4303 = vpop.permute.xlu0 %4302
    %v4306 = vadd.f32 %v4194, %v4301
    %v4307 = vadd.f32 %v4195, %v4303
    %s4308 = sld [smem:[#allocation4 + $0x37]]
    %v4309 = vstv %s4308
    %v4310 = vmul.f32 %v4309, %v3708
    %v4311 = vmul.f32 %v4309, %v3709
    %4314 = vrot.lane.b32.xlu0 %v4310, 127
    %v4315 = vpop.permute.xlu0 %4314
    %4316 = vrot.lane.b32.xlu0 %v4311, 127
    %v4317 = vpop.permute.xlu0 %4316
    %v4320 = vadd.f32 %v4208, %v4315
    %v4321 = vadd.f32 %v4209, %v4317
    %s4322 = sld [smem:[#allocation4 + $0x3b]]
    %v4323 = vstv %s4322
    %v4324 = vmul.f32 %v4323, %v3708
    %v4325 = vmul.f32 %v4323, %v3709
    %4328 = vrot.lane.b32.xlu0 %v4324, 127
    %v4329 = vpop.permute.xlu0 %4328
    %4330 = vrot.lane.b32.xlu0 %v4325, 127
    %v4331 = vpop.permute.xlu0 %4330
    %v4334 = vadd.f32 %v4222, %v4329
    %v4335 = vadd.f32 %v4223, %v4331
    %s4336 = sld [smem:[#allocation4 + $0x3f]]
    %v4337 = vstv %s4336
    %v4338 = vmul.f32 %v4337, %v3708
    %v4339 = vmul.f32 %v4337, %v3709
    %4342 = vrot.lane.b32.xlu0 %v4338, 127
    %v4343 = vpop.permute.xlu0 %4342
    %4344 = vrot.lane.b32.xlu0 %v4339, 127
    %v4345 = vpop.permute.xlu0 %4344
    %v4348 = vadd.f32 %v4236, %v4343
    %v4349 = vadd.f32 %v4237, %v4345
    %s4350 = sld [smem:[#allocation4 + $0x40]]
    %v4351 = vstv %s4350
    %v4352 = vmul.f32 %v4351, %v3702
    %v4353 = vmul.f32 %v4351, %v3703
    %4356 = vrot.lane.b32.xlu0 %v4352, 126
    %v4357 = vpop.permute.xlu0 %4356
    %4358 = vrot.lane.b32.xlu0 %v4353, 126
    %v4359 = vpop.permute.xlu0 %4358
    %v4362 = vadd.f32 %v4250, %v4357
    %v4363 = vadd.f32 %v4251, %v4359
    %s4364 = sld [smem:[#allocation4 + $0x44]]
    %v4365 = vstv %s4364
    %v4366 = vmul.f32 %v4365, %v3702
    %v4367 = vmul.f32 %v4365, %v3703
    %4370 = vrot.lane.b32.xlu0 %v4366, 126
    %v4371 = vpop.permute.xlu0 %4370
    %4372 = vrot.lane.b32.xlu0 %v4367, 126
    %v4373 = vpop.permute.xlu0 %4372
    %v4376 = vadd.f32 %v4264, %v4371
    %v4377 = vadd.f32 %v4265, %v4373
    %s4378 = sld [smem:[#allocation4 + $0x48]]
    %v4379 = vstv %s4378
    %v4380 = vmul.f32 %v4379, %v3702
    %v4381 = vmul.f32 %v4379, %v3703
    %4384 = vrot.lane.b32.xlu0 %v4380, 126
    %v4385 = vpop.permute.xlu0 %4384
    %4386 = vrot.lane.b32.xlu0 %v4381, 126
    %v4387 = vpop.permute.xlu0 %4386
    %v4390 = vadd.f32 %v4278, %v4385
    %v4391 = vadd.f32 %v4279, %v4387
    %s4392 = sld [smem:[#allocation4 + $0x4c]]
    %v4393 = vstv %s4392
    %v4394 = vmul.f32 %v4393, %v3702
    %v4395 = vmul.f32 %v4393, %v3703
    %4398 = vrot.lane.b32.xlu0 %v4394, 126
    %v4399 = vpop.permute.xlu0 %4398
    %4400 = vrot.lane.b32.xlu0 %v4395, 126
    %v4401 = vpop.permute.xlu0 %4400
    %v4404 = vadd.f32 %v4292, %v4399
    %v4405 = vadd.f32 %v4293, %v4401
    %s4406 = sld [smem:[#allocation4 + $0x50]]
    %v4407 = vstv %s4406
    %v4408 = vmul.f32 %v4407, %v3702
    %v4409 = vmul.f32 %v4407, %v3703
    %4412 = vrot.lane.b32.xlu0 %v4408, 126
    %v4413 = vpop.permute.xlu0 %4412
    %4414 = vrot.lane.b32.xlu0 %v4409, 126
    %v4415 = vpop.permute.xlu0 %4414
    %v4418 = vadd.f32 %v4306, %v4413
    %v4419 = vadd.f32 %v4307, %v4415
    %s4420 = sld [smem:[#allocation4 + $0x54]]
    %v4421 = vstv %s4420
    %v4422 = vmul.f32 %v4421, %v3702
    %v4423 = vmul.f32 %v4421, %v3703
    %4426 = vrot.lane.b32.xlu0 %v4422, 126
    %v4427 = vpop.permute.xlu0 %4426
    %4428 = vrot.lane.b32.xlu0 %v4423, 126
    %v4429 = vpop.permute.xlu0 %4428
    %v4432 = vadd.f32 %v4320, %v4427
    %v4433 = vadd.f32 %v4321, %v4429
    %s4434 = sld [smem:[#allocation4 + $0x58]]
    %v4435 = vstv %s4434
    %v4436 = vmul.f32 %v4435, %v3702
    %v4437 = vmul.f32 %v4435, %v3703
    %4440 = vrot.lane.b32.xlu0 %v4436, 126
    %v4441 = vpop.permute.xlu0 %4440
    %4442 = vrot.lane.b32.xlu0 %v4437, 126
    %v4443 = vpop.permute.xlu0 %4442
    %v4446 = vadd.f32 %v4334, %v4441
    %v4447 = vadd.f32 %v4335, %v4443
    %s4448 = sld [smem:[#allocation4 + $0x5c]]
    %v4449 = vstv %s4448
    %v4450 = vmul.f32 %v4449, %v3702
    %v4451 = vmul.f32 %v4449, %v3703
    %4454 = vrot.lane.b32.xlu0 %v4450, 126
    %v4455 = vpop.permute.xlu0 %4454
    %4456 = vrot.lane.b32.xlu0 %v4451, 126
    %v4457 = vpop.permute.xlu0 %4456
    %v4460 = vadd.f32 %v4348, %v4455
    %v4461 = vadd.f32 %v4349, %v4457
    %s4462 = sld [smem:[#allocation4 + $0x41]]
    %v4463 = vstv %s4462
    %v4464 = vmul.f32 %v4463, %v3704
    %v4465 = vmul.f32 %v4463, %v3705
    %4468 = vrot.lane.b32.xlu0 %v4464, 126
    %v4469 = vpop.permute.xlu0 %4468
    %4470 = vrot.lane.b32.xlu0 %v4465, 126
    %v4471 = vpop.permute.xlu0 %4470
    %v4474 = vadd.f32 %v4362, %v4469
    %v4475 = vadd.f32 %v4363, %v4471
    %s4476 = sld [smem:[#allocation4 + $0x45]]
    %v4477 = vstv %s4476
    %v4478 = vmul.f32 %v4477, %v3704
    %v4479 = vmul.f32 %v4477, %v3705
    %4482 = vrot.lane.b32.xlu0 %v4478, 126
    %v4483 = vpop.permute.xlu0 %4482
    %4484 = vrot.lane.b32.xlu0 %v4479, 126
    %v4485 = vpop.permute.xlu0 %4484
    %v4488 = vadd.f32 %v4376, %v4483
    %v4489 = vadd.f32 %v4377, %v4485
    %s4490 = sld [smem:[#allocation4 + $0x49]]
    %v4491 = vstv %s4490
    %v4492 = vmul.f32 %v4491, %v3704
    %v4493 = vmul.f32 %v4491, %v3705
    %4496 = vrot.lane.b32.xlu0 %v4492, 126
    %v4497 = vpop.permute.xlu0 %4496
    %4498 = vrot.lane.b32.xlu0 %v4493, 126
    %v4499 = vpop.permute.xlu0 %4498
    %v4502 = vadd.f32 %v4390, %v4497
    %v4503 = vadd.f32 %v4391, %v4499
    %s4504 = sld [smem:[#allocation4 + $0x4d]]
    %v4505 = vstv %s4504
    %v4506 = vmul.f32 %v4505, %v3704
    %v4507 = vmul.f32 %v4505, %v3705
    %4510 = vrot.lane.b32.xlu0 %v4506, 126
    %v4511 = vpop.permute.xlu0 %4510
    %4512 = vrot.lane.b32.xlu0 %v4507, 126
    %v4513 = vpop.permute.xlu0 %4512
    %v4516 = vadd.f32 %v4404, %v4511
    %v4517 = vadd.f32 %v4405, %v4513
    %s4518 = sld [smem:[#allocation4 + $0x51]]
    %v4519 = vstv %s4518
    %v4520 = vmul.f32 %v4519, %v3704
    %v4521 = vmul.f32 %v4519, %v3705
    %4524 = vrot.lane.b32.xlu0 %v4520, 126
    %v4525 = vpop.permute.xlu0 %4524
    %4526 = vrot.lane.b32.xlu0 %v4521, 126
    %v4527 = vpop.permute.xlu0 %4526
    %v4530 = vadd.f32 %v4418, %v4525
    %v4531 = vadd.f32 %v4419, %v4527
    %s4532 = sld [smem:[#allocation4 + $0x55]]
    %v4533 = vstv %s4532
    %v4534 = vmul.f32 %v4533, %v3704
    %v4535 = vmul.f32 %v4533, %v3705
    %4538 = vrot.lane.b32.xlu0 %v4534, 126
    %v4539 = vpop.permute.xlu0 %4538
    %4540 = vrot.lane.b32.xlu0 %v4535, 126
    %v4541 = vpop.permute.xlu0 %4540
    %v4544 = vadd.f32 %v4432, %v4539
    %v4545 = vadd.f32 %v4433, %v4541
    %s4546 = sld [smem:[#allocation4 + $0x59]]
    %v4547 = vstv %s4546
    %v4548 = vmul.f32 %v4547, %v3704
    %v4549 = vmul.f32 %v4547, %v3705
    %4552 = vrot.lane.b32.xlu0 %v4548, 126
    %v4553 = vpop.permute.xlu0 %4552
    %4554 = vrot.lane.b32.xlu0 %v4549, 126
    %v4555 = vpop.permute.xlu0 %4554
    %v4558 = vadd.f32 %v4446, %v4553
    %v4559 = vadd.f32 %v4447, %v4555
    %s4560 = sld [smem:[#allocation4 + $0x5d]]
    %v4561 = vstv %s4560
    %v4562 = vmul.f32 %v4561, %v3704
    %v4563 = vmul.f32 %v4561, %v3705
    %4566 = vrot.lane.b32.xlu0 %v4562, 126
    %v4567 = vpop.permute.xlu0 %4566
    %4568 = vrot.lane.b32.xlu0 %v4563, 126
    %v4569 = vpop.permute.xlu0 %4568
    %v4572 = vadd.f32 %v4460, %v4567
    %v4573 = vadd.f32 %v4461, %v4569
    %s4574 = sld [smem:[#allocation4 + $0x42]]
    %v4575 = vstv %s4574
    %v4576 = vmul.f32 %v4575, %v3706
    %v4577 = vmul.f32 %v4575, %v3707
    %4580 = vrot.lane.b32.xlu0 %v4576, 126
    %v4581 = vpop.permute.xlu0 %4580
    %4582 = vrot.lane.b32.xlu0 %v4577, 126
    %v4583 = vpop.permute.xlu0 %4582
    %v4586 = vadd.f32 %v4474, %v4581
    %v4587 = vadd.f32 %v4475, %v4583
    %s4588 = sld [smem:[#allocation4 + $0x46]]
    %v4589 = vstv %s4588
    %v4590 = vmul.f32 %v4589, %v3706
    %v4591 = vmul.f32 %v4589, %v3707
    %4594 = vrot.lane.b32.xlu0 %v4590, 126
    %v4595 = vpop.permute.xlu0 %4594
    %4596 = vrot.lane.b32.xlu0 %v4591, 126
    %v4597 = vpop.permute.xlu0 %4596
    %v4600 = vadd.f32 %v4488, %v4595
    %v4601 = vadd.f32 %v4489, %v4597
    %s4602 = sld [smem:[#allocation4 + $0x4a]]
    %v4603 = vstv %s4602
    %v4604 = vmul.f32 %v4603, %v3706
    %v4605 = vmul.f32 %v4603, %v3707
    %4608 = vrot.lane.b32.xlu0 %v4604, 126
    %v4609 = vpop.permute.xlu0 %4608
    %4610 = vrot.lane.b32.xlu0 %v4605, 126
    %v4611 = vpop.permute.xlu0 %4610
    %v4614 = vadd.f32 %v4502, %v4609
    %v4615 = vadd.f32 %v4503, %v4611
    %s4616 = sld [smem:[#allocation4 + $0x4e]]
    %v4617 = vstv %s4616
    %v4618 = vmul.f32 %v4617, %v3706
    %v4619 = vmul.f32 %v4617, %v3707
    %4622 = vrot.lane.b32.xlu0 %v4618, 126
    %v4623 = vpop.permute.xlu0 %4622
    %4624 = vrot.lane.b32.xlu0 %v4619, 126
    %v4625 = vpop.permute.xlu0 %4624
    %v4628 = vadd.f32 %v4516, %v4623
    %v4629 = vadd.f32 %v4517, %v4625
    %s4630 = sld [smem:[#allocation4 + $0x52]]
    %v4631 = vstv %s4630
    %v4632 = vmul.f32 %v4631, %v3706
    %v4633 = vmul.f32 %v4631, %v3707
    %4636 = vrot.lane.b32.xlu0 %v4632, 126
    %v4637 = vpop.permute.xlu0 %4636
    %4638 = vrot.lane.b32.xlu0 %v4633, 126
    %v4639 = vpop.permute.xlu0 %4638
    %v4642 = vadd.f32 %v4530, %v4637
    %v4643 = vadd.f32 %v4531, %v4639
    %s4644 = sld [smem:[#allocation4 + $0x56]]
    %v4645 = vstv %s4644
    %v4646 = vmul.f32 %v4645, %v3706
    %v4647 = vmul.f32 %v4645, %v3707
    %4650 = vrot.lane.b32.xlu0 %v4646, 126
    %v4651 = vpop.permute.xlu0 %4650
    %4652 = vrot.lane.b32.xlu0 %v4647, 126
    %v4653 = vpop.permute.xlu0 %4652
    %v4656 = vadd.f32 %v4544, %v4651
    %v4657 = vadd.f32 %v4545, %v4653
    %s4658 = sld [smem:[#allocation4 + $0x5a]]
    %v4659 = vstv %s4658
    %v4660 = vmul.f32 %v4659, %v3706
    %v4661 = vmul.f32 %v4659, %v3707
    %4664 = vrot.lane.b32.xlu0 %v4660, 126
    %v4665 = vpop.permute.xlu0 %4664
    %4666 = vrot.lane.b32.xlu0 %v4661, 126
    %v4667 = vpop.permute.xlu0 %4666
    %v4670 = vadd.f32 %v4558, %v4665
    %v4671 = vadd.f32 %v4559, %v4667
    %s4672 = sld [smem:[#allocation4 + $0x5e]]
    %v4673 = vstv %s4672
    %v4674 = vmul.f32 %v4673, %v3706
    %v4675 = vmul.f32 %v4673, %v3707
    %4678 = vrot.lane.b32.xlu0 %v4674, 126
    %v4679 = vpop.permute.xlu0 %4678
    %4680 = vrot.lane.b32.xlu0 %v4675, 126
    %v4681 = vpop.permute.xlu0 %4680
    %v4684 = vadd.f32 %v4572, %v4679
    %v4685 = vadd.f32 %v4573, %v4681
    %s4686 = sld [smem:[#allocation4 + $0x43]]
    %v4687 = vstv %s4686
    %v4688 = vmul.f32 %v4687, %v3708
    %v4689 = vmul.f32 %v4687, %v3709
    %4692 = vrot.lane.b32.xlu0 %v4688, 126
    %v4693 = vpop.permute.xlu0 %4692
    %4694 = vrot.lane.b32.xlu0 %v4689, 126
    %v4695 = vpop.permute.xlu0 %4694
    %v4698 = vadd.f32 %v4586, %v4693
    %v4699 = vadd.f32 %v4587, %v4695
    %s4700 = sld [smem:[#allocation4 + $0x47]]
    %v4701 = vstv %s4700
    %v4702 = vmul.f32 %v4701, %v3708
    %v4703 = vmul.f32 %v4701, %v3709
    %4706 = vrot.lane.b32.xlu0 %v4702, 126
    %v4707 = vpop.permute.xlu0 %4706
    %4708 = vrot.lane.b32.xlu0 %v4703, 126
    %v4709 = vpop.permute.xlu0 %4708
    %v4712 = vadd.f32 %v4600, %v4707
    %v4713 = vadd.f32 %v4601, %v4709
    %s4714 = sld [smem:[#allocation4 + $0x4b]]
    %v4715 = vstv %s4714
    %v4716 = vmul.f32 %v4715, %v3708
    %v4717 = vmul.f32 %v4715, %v3709
    %4720 = vrot.lane.b32.xlu0 %v4716, 126
    %v4721 = vpop.permute.xlu0 %4720
    %4722 = vrot.lane.b32.xlu0 %v4717, 126
    %v4723 = vpop.permute.xlu0 %4722
    %v4726 = vadd.f32 %v4614, %v4721
    %v4727 = vadd.f32 %v4615, %v4723
    %s4728 = sld [smem:[#allocation4 + $0x4f]]
    %v4729 = vstv %s4728
    %v4730 = vmul.f32 %v4729, %v3708
    %v4731 = vmul.f32 %v4729, %v3709
    %4734 = vrot.lane.b32.xlu0 %v4730, 126
    %v4735 = vpop.permute.xlu0 %4734
    %4736 = vrot.lane.b32.xlu0 %v4731, 126
    %v4737 = vpop.permute.xlu0 %4736
    %v4740 = vadd.f32 %v4628, %v4735
    %v4741 = vadd.f32 %v4629, %v4737
    %s4742 = sld [smem:[#allocation4 + $0x53]]
    %v4743 = vstv %s4742
    %v4744 = vmul.f32 %v4743, %v3708
    %v4745 = vmul.f32 %v4743, %v3709
    %4748 = vrot.lane.b32.xlu0 %v4744, 126
    %v4749 = vpop.permute.xlu0 %4748
    %4750 = vrot.lane.b32.xlu0 %v4745, 126
    %v4751 = vpop.permute.xlu0 %4750
    %v4754 = vadd.f32 %v4642, %v4749
    %v4755 = vadd.f32 %v4643, %v4751
    %s4756 = sld [smem:[#allocation4 + $0x57]]
    %v4757 = vstv %s4756
    %v4758 = vmul.f32 %v4757, %v3708
    %v4759 = vmul.f32 %v4757, %v3709
    %4762 = vrot.lane.b32.xlu0 %v4758, 126
    %v4763 = vpop.permute.xlu0 %4762
    %4764 = vrot.lane.b32.xlu0 %v4759, 126
    %v4765 = vpop.permute.xlu0 %4764
    %v4768 = vadd.f32 %v4656, %v4763
    %v4769 = vadd.f32 %v4657, %v4765
    %s4770 = sld [smem:[#allocation4 + $0x5b]]
    %v4771 = vstv %s4770
    %v4772 = vmul.f32 %v4771, %v3708
    %v4773 = vmul.f32 %v4771, %v3709
    %4776 = vrot.lane.b32.xlu0 %v4772, 126
    %v4777 = vpop.permute.xlu0 %4776
    %4778 = vrot.lane.b32.xlu0 %v4773, 126
    %v4779 = vpop.permute.xlu0 %4778
    %v4782 = vadd.f32 %v4670, %v4777
    %v4783 = vadd.f32 %v4671, %v4779
    %s4784 = sld [smem:[#allocation4 + $0x5f]]
    %v4785 = vstv %s4784
    %v4786 = vmul.f32 %v4785, %v3708
    %v4787 = vmul.f32 %v4785, %v3709
    %4790 = vrot.lane.b32.xlu0 %v4786, 126
    %v4791 = vpop.permute.xlu0 %4790
    %4792 = vrot.lane.b32.xlu0 %v4787, 126
    %v4793 = vpop.permute.xlu0 %4792
    %v4796 = vadd.f32 %v4684, %v4791
    %v4797 = vadd.f32 %v4685, %v4793
    %v4798 = vld [vmem:[#allocation2 + $0x1] sm:$0xff]
    %v4799 = vld [vmem:[#allocation2 + $0x9] sm:$0xff]
    %v4800 = vld [vmem:[#allocation2 + $0x19] sm:$0xff]
    %v4801 = vld [vmem:[#allocation2 + $0x21] sm:$0xff]
    %v4802 = vld [vmem:[#allocation2 + $0x31] sm:$0xff]
    %v4803 = vld [vmem:[#allocation2 + $0x39] sm:$0xff]
    %v4804 = vld [vmem:[#allocation2 + $0x49] sm:$0xff]
    %v4805 = vld [vmem:[#allocation2 + $0x51] sm:$0xff]
    %s4806 = sld [smem:[#allocation4 + $0x60]]
    %v4807 = vstv %s4806
    %v4808 = vmul.f32 %v4807, %v4798
    %v4809 = vmul.f32 %v4807, %v4799
    %v4810 = vadd.f32 %v4698, %v4808
    %v4811 = vadd.f32 %v4699, %v4809
    %s4812 = sld [smem:[#allocation4 + $0x64]]
    %v4813 = vstv %s4812
    %v4814 = vmul.f32 %v4813, %v4798
    %v4815 = vmul.f32 %v4813, %v4799
    %v4816 = vadd.f32 %v4712, %v4814
    %v4817 = vadd.f32 %v4713, %v4815
    %s4818 = sld [smem:[#allocation4 + $0x68]]
    %v4819 = vstv %s4818
    %v4820 = vmul.f32 %v4819, %v4798
    %v4821 = vmul.f32 %v4819, %v4799
    %v4822 = vadd.f32 %v4726, %v4820
    %v4823 = vadd.f32 %v4727, %v4821
    %s4824 = sld [smem:[#allocation4 + $0x6c]]
    %v4825 = vstv %s4824
    %v4826 = vmul.f32 %v4825, %v4798
    %v4827 = vmul.f32 %v4825, %v4799
    %v4828 = vadd.f32 %v4740, %v4826
    %v4829 = vadd.f32 %v4741, %v4827
    %s4830 = sld [smem:[#allocation4 + $0x70]]
    %v4831 = vstv %s4830
    %v4832 = vmul.f32 %v4831, %v4798
    %v4833 = vmul.f32 %v4831, %v4799
    %v4834 = vadd.f32 %v4754, %v4832
    %v4835 = vadd.f32 %v4755, %v4833
    %s4836 = sld [smem:[#allocation4 + $0x74]]
    %v4837 = vstv %s4836
    %v4838 = vmul.f32 %v4837, %v4798
    %v4839 = vmul.f32 %v4837, %v4799
    %v4840 = vadd.f32 %v4768, %v4838
    %v4841 = vadd.f32 %v4769, %v4839
    %s4842 = sld [smem:[#allocation4 + $0x78]]
    %v4843 = vstv %s4842
    %v4844 = vmul.f32 %v4843, %v4798
    %v4845 = vmul.f32 %v4843, %v4799
    %v4846 = vadd.f32 %v4782, %v4844
    %v4847 = vadd.f32 %v4783, %v4845
    %s4848 = sld [smem:[#allocation4 + $0x7c]]
    %v4849 = vstv %s4848
    %v4850 = vmul.f32 %v4849, %v4798
    %v4851 = vmul.f32 %v4849, %v4799
    %v4852 = vadd.f32 %v4796, %v4850
    %v4853 = vadd.f32 %v4797, %v4851
    %s4854 = sld [smem:[#allocation4 + $0x61]]
    %v4855 = vstv %s4854
    %v4856 = vmul.f32 %v4855, %v4800
    %v4857 = vmul.f32 %v4855, %v4801
    %v4858 = vadd.f32 %v4810, %v4856
    %v4859 = vadd.f32 %v4811, %v4857
    %s4860 = sld [smem:[#allocation4 + $0x65]]
    %v4861 = vstv %s4860
    %v4862 = vmul.f32 %v4861, %v4800
    %v4863 = vmul.f32 %v4861, %v4801
    %v4864 = vadd.f32 %v4816, %v4862
    %v4865 = vadd.f32 %v4817, %v4863
    %s4866 = sld [smem:[#allocation4 + $0x69]]
    %v4867 = vstv %s4866
    %v4868 = vmul.f32 %v4867, %v4800
    %v4869 = vmul.f32 %v4867, %v4801
    %v4870 = vadd.f32 %v4822, %v4868
    %v4871 = vadd.f32 %v4823, %v4869
    %s4872 = sld [smem:[#allocation4 + $0x6d]]
    %v4873 = vstv %s4872
    %v4874 = vmul.f32 %v4873, %v4800
    %v4875 = vmul.f32 %v4873, %v4801
    %v4876 = vadd.f32 %v4828, %v4874
    %v4877 = vadd.f32 %v4829, %v4875
    %s4878 = sld [smem:[#allocation4 + $0x71]]
    %v4879 = vstv %s4878
    %v4880 = vmul.f32 %v4879, %v4800
    %v4881 = vmul.f32 %v4879, %v4801
    %v4882 = vadd.f32 %v4834, %v4880
    %v4883 = vadd.f32 %v4835, %v4881
    %s4884 = sld [smem:[#allocation4 + $0x75]]
    %v4885 = vstv %s4884
    %v4886 = vmul.f32 %v4885, %v4800
    %v4887 = vmul.f32 %v4885, %v4801
    %v4888 = vadd.f32 %v4840, %v4886
    %v4889 = vadd.f32 %v4841, %v4887
    %s4890 = sld [smem:[#allocation4 + $0x79]]
    %v4891 = vstv %s4890
    %v4892 = vmul.f32 %v4891, %v4800
    %v4893 = vmul.f32 %v4891, %v4801
    %v4894 = vadd.f32 %v4846, %v4892
    %v4895 = vadd.f32 %v4847, %v4893
    %s4896 = sld [smem:[#allocation4 + $0x7d]]
    %v4897 = vstv %s4896
    %v4898 = vmul.f32 %v4897, %v4800
    %v4899 = vmul.f32 %v4897, %v4801
    %v4900 = vadd.f32 %v4852, %v4898
    %v4901 = vadd.f32 %v4853, %v4899
    %s4902 = sld [smem:[#allocation4 + $0x62]]
    %v4903 = vstv %s4902
    %v4904 = vmul.f32 %v4903, %v4802
    %v4905 = vmul.f32 %v4903, %v4803
    %v4906 = vadd.f32 %v4858, %v4904
    %v4907 = vadd.f32 %v4859, %v4905
    %s4908 = sld [smem:[#allocation4 + $0x66]]
    %v4909 = vstv %s4908
    %v4910 = vmul.f32 %v4909, %v4802
    %v4911 = vmul.f32 %v4909, %v4803
    %v4912 = vadd.f32 %v4864, %v4910
    %v4913 = vadd.f32 %v4865, %v4911
    %s4914 = sld [smem:[#allocation4 + $0x6a]]
    %v4915 = vstv %s4914
    %v4916 = vmul.f32 %v4915, %v4802
    %v4917 = vmul.f32 %v4915, %v4803
    %v4918 = vadd.f32 %v4870, %v4916
    %v4919 = vadd.f32 %v4871, %v4917
    %s4920 = sld [smem:[#allocation4 + $0x6e]]
    %v4921 = vstv %s4920
    %v4922 = vmul.f32 %v4921, %v4802
    %v4923 = vmul.f32 %v4921, %v4803
    %v4924 = vadd.f32 %v4876, %v4922
    %v4925 = vadd.f32 %v4877, %v4923
    %s4926 = sld [smem:[#allocation4 + $0x72]]
    %v4927 = vstv %s4926
    %v4928 = vmul.f32 %v4927, %v4802
    %v4929 = vmul.f32 %v4927, %v4803
    %v4930 = vadd.f32 %v4882, %v4928
    %v4931 = vadd.f32 %v4883, %v4929
    %s4932 = sld [smem:[#allocation4 + $0x76]]
    %v4933 = vstv %s4932
    %v4934 = vmul.f32 %v4933, %v4802
    %v4935 = vmul.f32 %v4933, %v4803
    %v4936 = vadd.f32 %v4888, %v4934
    %v4937 = vadd.f32 %v4889, %v4935
    %s4938 = sld [smem:[#allocation4 + $0x7a]]
    %v4939 = vstv %s4938
    %v4940 = vmul.f32 %v4939, %v4802
    %v4941 = vmul.f32 %v4939, %v4803
    %v4942 = vadd.f32 %v4894, %v4940
    %v4943 = vadd.f32 %v4895, %v4941
    %s4944 = sld [smem:[#allocation4 + $0x7e]]
    %v4945 = vstv %s4944
    %v4946 = vmul.f32 %v4945, %v4802
    %v4947 = vmul.f32 %v4945, %v4803
    %v4948 = vadd.f32 %v4900, %v4946
    %v4949 = vadd.f32 %v4901, %v4947
    %s4950 = sld [smem:[#allocation4 + $0x63]]
    %v4951 = vstv %s4950
    %v4952 = vmul.f32 %v4951, %v4804
    %v4953 = vmul.f32 %v4951, %v4805
    %v4954 = vadd.f32 %v4906, %v4952
    %v4955 = vadd.f32 %v4907, %v4953
    %s4956 = sld [smem:[#allocation4 + $0x67]]
    %v4957 = vstv %s4956
    %v4958 = vmul.f32 %v4957, %v4804
    %v4959 = vmul.f32 %v4957, %v4805
    %v4960 = vadd.f32 %v4912, %v4958
    %v4961 = vadd.f32 %v4913, %v4959
    %s4962 = sld [smem:[#allocation4 + $0x6b]]
    %v4963 = vstv %s4962
    %v4964 = vmul.f32 %v4963, %v4804
    %v4965 = vmul.f32 %v4963, %v4805
    %v4966 = vadd.f32 %v4918, %v4964
    %v4967 = vadd.f32 %v4919, %v4965
    %s4968 = sld [smem:[#allocation4 + $0x6f]]
    %v4969 = vstv %s4968
    %v4970 = vmul.f32 %v4969, %v4804
    %v4971 = vmul.f32 %v4969, %v4805
    %v4972 = vadd.f32 %v4924, %v4970
    %v4973 = vadd.f32 %v4925, %v4971
    %s4974 = sld [smem:[#allocation4 + $0x73]]
    %v4975 = vstv %s4974
    %v4976 = vmul.f32 %v4975, %v4804
    %v4977 = vmul.f32 %v4975, %v4805
    %v4978 = vadd.f32 %v4930, %v4976
    %v4979 = vadd.f32 %v4931, %v4977
    %s4980 = sld [smem:[#allocation4 + $0x77]]
    %v4981 = vstv %s4980
    %v4982 = vmul.f32 %v4981, %v4804
    %v4983 = vmul.f32 %v4981, %v4805
    %v4984 = vadd.f32 %v4936, %v4982
    %v4985 = vadd.f32 %v4937, %v4983
    %s4986 = sld [smem:[#allocation4 + $0x7b]]
    %v4987 = vstv %s4986
    %v4988 = vmul.f32 %v4987, %v4804
    %v4989 = vmul.f32 %v4987, %v4805
    %v4990 = vadd.f32 %v4942, %v4988
    %v4991 = vadd.f32 %v4943, %v4989
    %s4992 = sld [smem:[#allocation4 + $0x7f]]
    %v4993 = vstv %s4992
    %v4994 = vmul.f32 %v4993, %v4804
    %v4995 = vmul.f32 %v4993, %v4805
    %v4996 = vadd.f32 %v4948, %v4994
    %v4997 = vadd.f32 %v4949, %v4995
    %s4998 = sld [smem:[#allocation4 + $0x80]]
    %v4999 = vstv %s4998
    %v5000 = vmul.f32 %v4999, %v4798
    %v5001 = vmul.f32 %v4999, %v4799
    %5004 = vrot.lane.b32.xlu0 %v5000, 127
    %v5005 = vpop.permute.xlu0 %5004
    %5006 = vrot.lane.b32.xlu0 %v5001, 127
    %v5007 = vpop.permute.xlu0 %5006
    %v5010 = vadd.f32 %v4954, %v5005
    %v5011 = vadd.f32 %v4955, %v5007
    %s5012 = sld [smem:[#allocation4 + $0x84]]
    %v5013 = vstv %s5012
    %v5014 = vmul.f32 %v5013, %v4798
    %v5015 = vmul.f32 %v5013, %v4799
    %5018 = vrot.lane.b32.xlu0 %v5014, 127
    %v5019 = vpop.permute.xlu0 %5018
    %5020 = vrot.lane.b32.xlu0 %v5015, 127
    %v5021 = vpop.permute.xlu0 %5020
    %v5024 = vadd.f32 %v4960, %v5019
    %v5025 = vadd.f32 %v4961, %v5021
    %s5026 = sld [smem:[#allocation4 + $0x88]]
    %v5027 = vstv %s5026
    %v5028 = vmul.f32 %v5027, %v4798
    %v5029 = vmul.f32 %v5027, %v4799
    %5032 = vrot.lane.b32.xlu0 %v5028, 127
    %v5033 = vpop.permute.xlu0 %5032
    %5034 = vrot.lane.b32.xlu0 %v5029, 127
    %v5035 = vpop.permute.xlu0 %5034
    %v5038 = vadd.f32 %v4966, %v5033
    %v5039 = vadd.f32 %v4967, %v5035
    %s5040 = sld [smem:[#allocation4 + $0x8c]]
    %v5041 = vstv %s5040
    %v5042 = vmul.f32 %v5041, %v4798
    %v5043 = vmul.f32 %v5041, %v4799
    %5046 = vrot.lane.b32.xlu0 %v5042, 127
    %v5047 = vpop.permute.xlu0 %5046
    %5048 = vrot.lane.b32.xlu0 %v5043, 127
    %v5049 = vpop.permute.xlu0 %5048
    %v5052 = vadd.f32 %v4972, %v5047
    %v5053 = vadd.f32 %v4973, %v5049
    %s5054 = sld [smem:[#allocation4 + $0x90]]
    %v5055 = vstv %s5054
    %v5056 = vmul.f32 %v5055, %v4798
    %v5057 = vmul.f32 %v5055, %v4799
    %5060 = vrot.lane.b32.xlu0 %v5056, 127
    %v5061 = vpop.permute.xlu0 %5060
    %5062 = vrot.lane.b32.xlu0 %v5057, 127
    %v5063 = vpop.permute.xlu0 %5062
    %v5066 = vadd.f32 %v4978, %v5061
    %v5067 = vadd.f32 %v4979, %v5063
    %s5068 = sld [smem:[#allocation4 + $0x94]]
    %v5069 = vstv %s5068
    %v5070 = vmul.f32 %v5069, %v4798
    %v5071 = vmul.f32 %v5069, %v4799
    %5074 = vrot.lane.b32.xlu0 %v5070, 127
    %v5075 = vpop.permute.xlu0 %5074
    %5076 = vrot.lane.b32.xlu0 %v5071, 127
    %v5077 = vpop.permute.xlu0 %5076
    %v5080 = vadd.f32 %v4984, %v5075
    %v5081 = vadd.f32 %v4985, %v5077
    %s5082 = sld [smem:[#allocation4 + $0x98]]
    %v5083 = vstv %s5082
    %v5084 = vmul.f32 %v5083, %v4798
    %v5085 = vmul.f32 %v5083, %v4799
    %5088 = vrot.lane.b32.xlu0 %v5084, 127
    %v5089 = vpop.permute.xlu0 %5088
    %5090 = vrot.lane.b32.xlu0 %v5085, 127
    %v5091 = vpop.permute.xlu0 %5090
    %v5094 = vadd.f32 %v4990, %v5089
    %v5095 = vadd.f32 %v4991, %v5091
    %s5096 = sld [smem:[#allocation4 + $0x9c]]
    %v5097 = vstv %s5096
    %v5098 = vmul.f32 %v5097, %v4798
    %v5099 = vmul.f32 %v5097, %v4799
    %5102 = vrot.lane.b32.xlu0 %v5098, 127
    %v5103 = vpop.permute.xlu0 %5102
    %5104 = vrot.lane.b32.xlu0 %v5099, 127
    %v5105 = vpop.permute.xlu0 %5104
    %v5108 = vadd.f32 %v4996, %v5103
    %v5109 = vadd.f32 %v4997, %v5105
    %s5110 = sld [smem:[#allocation4 + $0x81]]
    %v5111 = vstv %s5110
    %v5112 = vmul.f32 %v5111, %v4800
    %v5113 = vmul.f32 %v5111, %v4801
    %5116 = vrot.lane.b32.xlu0 %v5112, 127
    %v5117 = vpop.permute.xlu0 %5116
    %5118 = vrot.lane.b32.xlu0 %v5113, 127
    %v5119 = vpop.permute.xlu0 %5118
    %v5122 = vadd.f32 %v5010, %v5117
    %v5123 = vadd.f32 %v5011, %v5119
    %s5124 = sld [smem:[#allocation4 + $0x85]]
    %v5125 = vstv %s5124
    %v5126 = vmul.f32 %v5125, %v4800
    %v5127 = vmul.f32 %v5125, %v4801
    %5130 = vrot.lane.b32.xlu0 %v5126, 127
    %v5131 = vpop.permute.xlu0 %5130
    %5132 = vrot.lane.b32.xlu0 %v5127, 127
    %v5133 = vpop.permute.xlu0 %5132
    %v5136 = vadd.f32 %v5024, %v5131
    %v5137 = vadd.f32 %v5025, %v5133
    %s5138 = sld [smem:[#allocation4 + $0x89]]
    %v5139 = vstv %s5138
    %v5140 = vmul.f32 %v5139, %v4800
    %v5141 = vmul.f32 %v5139, %v4801
    %5144 = vrot.lane.b32.xlu0 %v5140, 127
    %v5145 = vpop.permute.xlu0 %5144
    %5146 = vrot.lane.b32.xlu0 %v5141, 127
    %v5147 = vpop.permute.xlu0 %5146
    %v5150 = vadd.f32 %v5038, %v5145
    %v5151 = vadd.f32 %v5039, %v5147
    %s5152 = sld [smem:[#allocation4 + $0x8d]]
    %v5153 = vstv %s5152
    %v5154 = vmul.f32 %v5153, %v4800
    %v5155 = vmul.f32 %v5153, %v4801
    %5158 = vrot.lane.b32.xlu0 %v5154, 127
    %v5159 = vpop.permute.xlu0 %5158
    %5160 = vrot.lane.b32.xlu0 %v5155, 127
    %v5161 = vpop.permute.xlu0 %5160
    %v5164 = vadd.f32 %v5052, %v5159
    %v5165 = vadd.f32 %v5053, %v5161
    %s5166 = sld [smem:[#allocation4 + $0x91]]
    %v5167 = vstv %s5166
    %v5168 = vmul.f32 %v5167, %v4800
    %v5169 = vmul.f32 %v5167, %v4801
    %5172 = vrot.lane.b32.xlu0 %v5168, 127
    %v5173 = vpop.permute.xlu0 %5172
    %5174 = vrot.lane.b32.xlu0 %v5169, 127
    %v5175 = vpop.permute.xlu0 %5174
    %v5178 = vadd.f32 %v5066, %v5173
    %v5179 = vadd.f32 %v5067, %v5175
    %s5180 = sld [smem:[#allocation4 + $0x95]]
    %v5181 = vstv %s5180
    %v5182 = vmul.f32 %v5181, %v4800
    %v5183 = vmul.f32 %v5181, %v4801
    %5186 = vrot.lane.b32.xlu0 %v5182, 127
    %v5187 = vpop.permute.xlu0 %5186
    %5188 = vrot.lane.b32.xlu0 %v5183, 127
    %v5189 = vpop.permute.xlu0 %5188
    %v5192 = vadd.f32 %v5080, %v5187
    %v5193 = vadd.f32 %v5081, %v5189
    %s5194 = sld [smem:[#allocation4 + $0x99]]
    %v5195 = vstv %s5194
    %v5196 = vmul.f32 %v5195, %v4800
    %v5197 = vmul.f32 %v5195, %v4801
    %5200 = vrot.lane.b32.xlu0 %v5196, 127
    %v5201 = vpop.permute.xlu0 %5200
    %5202 = vrot.lane.b32.xlu0 %v5197, 127
    %v5203 = vpop.permute.xlu0 %5202
    %v5206 = vadd.f32 %v5094, %v5201
    %v5207 = vadd.f32 %v5095, %v5203
    %s5208 = sld [smem:[#allocation4 + $0x9d]]
    %v5209 = vstv %s5208
    %v5210 = vmul.f32 %v5209, %v4800
    %v5211 = vmul.f32 %v5209, %v4801
    %5214 = vrot.lane.b32.xlu0 %v5210, 127
    %v5215 = vpop.permute.xlu0 %5214
    %5216 = vrot.lane.b32.xlu0 %v5211, 127
    %v5217 = vpop.permute.xlu0 %5216
    %v5220 = vadd.f32 %v5108, %v5215
    %v5221 = vadd.f32 %v5109, %v5217
    %s5222 = sld [smem:[#allocation4 + $0x82]]
    %v5223 = vstv %s5222
    %v5224 = vmul.f32 %v5223, %v4802
    %v5225 = vmul.f32 %v5223, %v4803
    %5228 = vrot.lane.b32.xlu0 %v5224, 127
    %v5229 = vpop.permute.xlu0 %5228
    %5230 = vrot.lane.b32.xlu0 %v5225, 127
    %v5231 = vpop.permute.xlu0 %5230
    %v5234 = vadd.f32 %v5122, %v5229
    %v5235 = vadd.f32 %v5123, %v5231
    %s5236 = sld [smem:[#allocation4 + $0x86]]
    %v5237 = vstv %s5236
    %v5238 = vmul.f32 %v5237, %v4802
    %v5239 = vmul.f32 %v5237, %v4803
    %5242 = vrot.lane.b32.xlu0 %v5238, 127
    %v5243 = vpop.permute.xlu0 %5242
    %5244 = vrot.lane.b32.xlu0 %v5239, 127
    %v5245 = vpop.permute.xlu0 %5244
    %v5248 = vadd.f32 %v5136, %v5243
    %v5249 = vadd.f32 %v5137, %v5245
    %s5250 = sld [smem:[#allocation4 + $0x8a]]
    %v5251 = vstv %s5250
    %v5252 = vmul.f32 %v5251, %v4802
    %v5253 = vmul.f32 %v5251, %v4803
    %5256 = vrot.lane.b32.xlu0 %v5252, 127
    %v5257 = vpop.permute.xlu0 %5256
    %5258 = vrot.lane.b32.xlu0 %v5253, 127
    %v5259 = vpop.permute.xlu0 %5258
    %v5262 = vadd.f32 %v5150, %v5257
    %v5263 = vadd.f32 %v5151, %v5259
    %s5264 = sld [smem:[#allocation4 + $0x8e]]
    %v5265 = vstv %s5264
    %v5266 = vmul.f32 %v5265, %v4802
    %v5267 = vmul.f32 %v5265, %v4803
    %5270 = vrot.lane.b32.xlu0 %v5266, 127
    %v5271 = vpop.permute.xlu0 %5270
    %5272 = vrot.lane.b32.xlu0 %v5267, 127
    %v5273 = vpop.permute.xlu0 %5272
    %v5276 = vadd.f32 %v5164, %v5271
    %v5277 = vadd.f32 %v5165, %v5273
    %s5278 = sld [smem:[#allocation4 + $0x92]]
    %v5279 = vstv %s5278
    %v5280 = vmul.f32 %v5279, %v4802
    %v5281 = vmul.f32 %v5279, %v4803
    %5284 = vrot.lane.b32.xlu0 %v5280, 127
    %v5285 = vpop.permute.xlu0 %5284
    %5286 = vrot.lane.b32.xlu0 %v5281, 127
    %v5287 = vpop.permute.xlu0 %5286
    %v5290 = vadd.f32 %v5178, %v5285
    %v5291 = vadd.f32 %v5179, %v5287
    %s5292 = sld [smem:[#allocation4 + $0x96]]
    %v5293 = vstv %s5292
    %v5294 = vmul.f32 %v5293, %v4802
    %v5295 = vmul.f32 %v5293, %v4803
    %5298 = vrot.lane.b32.xlu0 %v5294, 127
    %v5299 = vpop.permute.xlu0 %5298
    %5300 = vrot.lane.b32.xlu0 %v5295, 127
    %v5301 = vpop.permute.xlu0 %5300
    %v5304 = vadd.f32 %v5192, %v5299
    %v5305 = vadd.f32 %v5193, %v5301
    %s5306 = sld [smem:[#allocation4 + $0x9a]]
    %v5307 = vstv %s5306
    %v5308 = vmul.f32 %v5307, %v4802
    %v5309 = vmul.f32 %v5307, %v4803
    %5312 = vrot.lane.b32.xlu0 %v5308, 127
    %v5313 = vpop.permute.xlu0 %5312
    %5314 = vrot.lane.b32.xlu0 %v5309, 127
    %v5315 = vpop.permute.xlu0 %5314
    %v5318 = vadd.f32 %v5206, %v5313
    %v5319 = vadd.f32 %v5207, %v5315
    %s5320 = sld [smem:[#allocation4 + $0x9e]]
    %v5321 = vstv %s5320
    %v5322 = vmul.f32 %v5321, %v4802
    %v5323 = vmul.f32 %v5321, %v4803
    %5326 = vrot.lane.b32.xlu0 %v5322, 127
    %v5327 = vpop.permute.xlu0 %5326
    %5328 = vrot.lane.b32.xlu0 %v5323, 127
    %v5329 = vpop.permute.xlu0 %5328
    %v5332 = vadd.f32 %v5220, %v5327
    %v5333 = vadd.f32 %v5221, %v5329
    %s5334 = sld [smem:[#allocation4 + $0x83]]
    %v5335 = vstv %s5334
    %v5336 = vmul.f32 %v5335, %v4804
    %v5337 = vmul.f32 %v5335, %v4805
    %5340 = vrot.lane.b32.xlu0 %v5336, 127
    %v5341 = vpop.permute.xlu0 %5340
    %5342 = vrot.lane.b32.xlu0 %v5337, 127
    %v5343 = vpop.permute.xlu0 %5342
    %v5346 = vadd.f32 %v5234, %v5341
    %v5347 = vadd.f32 %v5235, %v5343
    %s5348 = sld [smem:[#allocation4 + $0x87]]
    %v5349 = vstv %s5348
    %v5350 = vmul.f32 %v5349, %v4804
    %v5351 = vmul.f32 %v5349, %v4805
    %5354 = vrot.lane.b32.xlu0 %v5350, 127
    %v5355 = vpop.permute.xlu0 %5354
    %5356 = vrot.lane.b32.xlu0 %v5351, 127
    %v5357 = vpop.permute.xlu0 %5356
    %v5360 = vadd.f32 %v5248, %v5355
    %v5361 = vadd.f32 %v5249, %v5357
    %s5362 = sld [smem:[#allocation4 + $0x8b]]
    %v5363 = vstv %s5362
    %v5364 = vmul.f32 %v5363, %v4804
    %v5365 = vmul.f32 %v5363, %v4805
    %5368 = vrot.lane.b32.xlu0 %v5364, 127
    %v5369 = vpop.permute.xlu0 %5368
    %5370 = vrot.lane.b32.xlu0 %v5365, 127
    %v5371 = vpop.permute.xlu0 %5370
    %v5374 = vadd.f32 %v5262, %v5369
    %v5375 = vadd.f32 %v5263, %v5371
    %s5376 = sld [smem:[#allocation4 + $0x8f]]
    %v5377 = vstv %s5376
    %v5378 = vmul.f32 %v5377, %v4804
    %v5379 = vmul.f32 %v5377, %v4805
    %5382 = vrot.lane.b32.xlu0 %v5378, 127
    %v5383 = vpop.permute.xlu0 %5382
    %5384 = vrot.lane.b32.xlu0 %v5379, 127
    %v5385 = vpop.permute.xlu0 %5384
    %v5388 = vadd.f32 %v5276, %v5383
    %v5389 = vadd.f32 %v5277, %v5385
    %s5390 = sld [smem:[#allocation4 + $0x93]]
    %v5391 = vstv %s5390
    %v5392 = vmul.f32 %v5391, %v4804
    %v5393 = vmul.f32 %v5391, %v4805
    %5396 = vrot.lane.b32.xlu0 %v5392, 127
    %v5397 = vpop.permute.xlu0 %5396
    %5398 = vrot.lane.b32.xlu0 %v5393, 127
    %v5399 = vpop.permute.xlu0 %5398
    %v5402 = vadd.f32 %v5290, %v5397
    %v5403 = vadd.f32 %v5291, %v5399
    %s5404 = sld [smem:[#allocation4 + $0x97]]
    %v5405 = vstv %s5404
    %v5406 = vmul.f32 %v5405, %v4804
    %v5407 = vmul.f32 %v5405, %v4805
    %5410 = vrot.lane.b32.xlu0 %v5406, 127
    %v5411 = vpop.permute.xlu0 %5410
    %5412 = vrot.lane.b32.xlu0 %v5407, 127
    %v5413 = vpop.permute.xlu0 %5412
    %v5416 = vadd.f32 %v5304, %v5411
    %v5417 = vadd.f32 %v5305, %v5413
    %s5418 = sld [smem:[#allocation4 + $0x9b]]
    %v5419 = vstv %s5418
    %v5420 = vmul.f32 %v5419, %v4804
    %v5421 = vmul.f32 %v5419, %v4805
    %5424 = vrot.lane.b32.xlu0 %v5420, 127
    %v5425 = vpop.permute.xlu0 %5424
    %5426 = vrot.lane.b32.xlu0 %v5421, 127
    %v5427 = vpop.permute.xlu0 %5426
    %v5430 = vadd.f32 %v5318, %v5425
    %v5431 = vadd.f32 %v5319, %v5427
    %s5432 = sld [smem:[#allocation4 + $0x9f]]
    %v5433 = vstv %s5432
    %v5434 = vmul.f32 %v5433, %v4804
    %v5435 = vmul.f32 %v5433, %v4805
    %5438 = vrot.lane.b32.xlu0 %v5434, 127
    %v5439 = vpop.permute.xlu0 %5438
    %5440 = vrot.lane.b32.xlu0 %v5435, 127
    %v5441 = vpop.permute.xlu0 %5440
    %v5444 = vadd.f32 %v5332, %v5439
    %v5445 = vadd.f32 %v5333, %v5441
    %s5446 = sld [smem:[#allocation4 + $0xa0]]
    %v5447 = vstv %s5446
    %v5448 = vmul.f32 %v5447, %v4798
    %v5449 = vmul.f32 %v5447, %v4799
    %5452 = vrot.lane.b32.xlu0 %v5448, 126
    %v5453 = vpop.permute.xlu0 %5452
    %5454 = vrot.lane.b32.xlu0 %v5449, 126
    %v5455 = vpop.permute.xlu0 %5454
    %v5458 = vadd.f32 %v5346, %v5453
    %v5459 = vadd.f32 %v5347, %v5455
    %s5460 = sld [smem:[#allocation4 + $0xa4]]
    %v5461 = vstv %s5460
    %v5462 = vmul.f32 %v5461, %v4798
    %v5463 = vmul.f32 %v5461, %v4799
    %5466 = vrot.lane.b32.xlu0 %v5462, 126
    %v5467 = vpop.permute.xlu0 %5466
    %5468 = vrot.lane.b32.xlu0 %v5463, 126
    %v5469 = vpop.permute.xlu0 %5468
    %v5472 = vadd.f32 %v5360, %v5467
    %v5473 = vadd.f32 %v5361, %v5469
    %s5474 = sld [smem:[#allocation4 + $0xa8]]
    %v5475 = vstv %s5474
    %v5476 = vmul.f32 %v5475, %v4798
    %v5477 = vmul.f32 %v5475, %v4799
    %5480 = vrot.lane.b32.xlu0 %v5476, 126
    %v5481 = vpop.permute.xlu0 %5480
    %5482 = vrot.lane.b32.xlu0 %v5477, 126
    %v5483 = vpop.permute.xlu0 %5482
    %v5486 = vadd.f32 %v5374, %v5481
    %v5487 = vadd.f32 %v5375, %v5483
    %s5488 = sld [smem:[#allocation4 + $0xac]]
    %v5489 = vstv %s5488
    %v5490 = vmul.f32 %v5489, %v4798
    %v5491 = vmul.f32 %v5489, %v4799
    %5494 = vrot.lane.b32.xlu0 %v5490, 126
    %v5495 = vpop.permute.xlu0 %5494
    %5496 = vrot.lane.b32.xlu0 %v5491, 126
    %v5497 = vpop.permute.xlu0 %5496
    %v5500 = vadd.f32 %v5388, %v5495
    %v5501 = vadd.f32 %v5389, %v5497
    %s5502 = sld [smem:[#allocation4 + $0xb0]]
    %v5503 = vstv %s5502
    %v5504 = vmul.f32 %v5503, %v4798
    %v5505 = vmul.f32 %v5503, %v4799
    %5508 = vrot.lane.b32.xlu0 %v5504, 126
    %v5509 = vpop.permute.xlu0 %5508
    %5510 = vrot.lane.b32.xlu0 %v5505, 126
    %v5511 = vpop.permute.xlu0 %5510
    %v5514 = vadd.f32 %v5402, %v5509
    %v5515 = vadd.f32 %v5403, %v5511
    %s5516 = sld [smem:[#allocation4 + $0xb4]]
    %v5517 = vstv %s5516
    %v5518 = vmul.f32 %v5517, %v4798
    %v5519 = vmul.f32 %v5517, %v4799
    %5522 = vrot.lane.b32.xlu0 %v5518, 126
    %v5523 = vpop.permute.xlu0 %5522
    %5524 = vrot.lane.b32.xlu0 %v5519, 126
    %v5525 = vpop.permute.xlu0 %5524
    %v5528 = vadd.f32 %v5416, %v5523
    %v5529 = vadd.f32 %v5417, %v5525
    %s5530 = sld [smem:[#allocation4 + $0xb8]]
    %v5531 = vstv %s5530
    %v5532 = vmul.f32 %v5531, %v4798
    %v5533 = vmul.f32 %v5531, %v4799
    %5536 = vrot.lane.b32.xlu0 %v5532, 126
    %v5537 = vpop.permute.xlu0 %5536
    %5538 = vrot.lane.b32.xlu0 %v5533, 126
    %v5539 = vpop.permute.xlu0 %5538
    %v5542 = vadd.f32 %v5430, %v5537
    %v5543 = vadd.f32 %v5431, %v5539
    %s5544 = sld [smem:[#allocation4 + $0xbc]]
    %v5545 = vstv %s5544
    %v5546 = vmul.f32 %v5545, %v4798
    %v5547 = vmul.f32 %v5545, %v4799
    %5550 = vrot.lane.b32.xlu0 %v5546, 126
    %v5551 = vpop.permute.xlu0 %5550
    %5552 = vrot.lane.b32.xlu0 %v5547, 126
    %v5553 = vpop.permute.xlu0 %5552
    %v5556 = vadd.f32 %v5444, %v5551
    %v5557 = vadd.f32 %v5445, %v5553
    %s5558 = sld [smem:[#allocation4 + $0xa1]]
    %v5559 = vstv %s5558
    %v5560 = vmul.f32 %v5559, %v4800
    %v5561 = vmul.f32 %v5559, %v4801
    %5564 = vrot.lane.b32.xlu0 %v5560, 126
    %v5565 = vpop.permute.xlu0 %5564
    %5566 = vrot.lane.b32.xlu0 %v5561, 126
    %v5567 = vpop.permute.xlu0 %5566
    %v5570 = vadd.f32 %v5458, %v5565
    %v5571 = vadd.f32 %v5459, %v5567
    %s5572 = sld [smem:[#allocation4 + $0xa5]]
    %v5573 = vstv %s5572
    %v5574 = vmul.f32 %v5573, %v4800
    %v5575 = vmul.f32 %v5573, %v4801
    %5578 = vrot.lane.b32.xlu0 %v5574, 126
    %v5579 = vpop.permute.xlu0 %5578
    %5580 = vrot.lane.b32.xlu0 %v5575, 126
    %v5581 = vpop.permute.xlu0 %5580
    %v5584 = vadd.f32 %v5472, %v5579
    %v5585 = vadd.f32 %v5473, %v5581
    %s5586 = sld [smem:[#allocation4 + $0xa9]]
    %v5587 = vstv %s5586
    %v5588 = vmul.f32 %v5587, %v4800
    %v5589 = vmul.f32 %v5587, %v4801
    %5592 = vrot.lane.b32.xlu0 %v5588, 126
    %v5593 = vpop.permute.xlu0 %5592
    %5594 = vrot.lane.b32.xlu0 %v5589, 126
    %v5595 = vpop.permute.xlu0 %5594
    %v5598 = vadd.f32 %v5486, %v5593
    %v5599 = vadd.f32 %v5487, %v5595
    %s5600 = sld [smem:[#allocation4 + $0xad]]
    %v5601 = vstv %s5600
    %v5602 = vmul.f32 %v5601, %v4800
    %v5603 = vmul.f32 %v5601, %v4801
    %5606 = vrot.lane.b32.xlu0 %v5602, 126
    %v5607 = vpop.permute.xlu0 %5606
    %5608 = vrot.lane.b32.xlu0 %v5603, 126
    %v5609 = vpop.permute.xlu0 %5608
    %v5612 = vadd.f32 %v5500, %v5607
    %v5613 = vadd.f32 %v5501, %v5609
    %s5614 = sld [smem:[#allocation4 + $0xb1]]
    %v5615 = vstv %s5614
    %v5616 = vmul.f32 %v5615, %v4800
    %v5617 = vmul.f32 %v5615, %v4801
    %5620 = vrot.lane.b32.xlu0 %v5616, 126
    %v5621 = vpop.permute.xlu0 %5620
    %5622 = vrot.lane.b32.xlu0 %v5617, 126
    %v5623 = vpop.permute.xlu0 %5622
    %v5626 = vadd.f32 %v5514, %v5621
    %v5627 = vadd.f32 %v5515, %v5623
    %s5628 = sld [smem:[#allocation4 + $0xb5]]
    %v5629 = vstv %s5628
    %v5630 = vmul.f32 %v5629, %v4800
    %v5631 = vmul.f32 %v5629, %v4801
    %5634 = vrot.lane.b32.xlu0 %v5630, 126
    %v5635 = vpop.permute.xlu0 %5634
    %5636 = vrot.lane.b32.xlu0 %v5631, 126
    %v5637 = vpop.permute.xlu0 %5636
    %v5640 = vadd.f32 %v5528, %v5635
    %v5641 = vadd.f32 %v5529, %v5637
    %s5642 = sld [smem:[#allocation4 + $0xb9]]
    %v5643 = vstv %s5642
    %v5644 = vmul.f32 %v5643, %v4800
    %v5645 = vmul.f32 %v5643, %v4801
    %5648 = vrot.lane.b32.xlu0 %v5644, 126
    %v5649 = vpop.permute.xlu0 %5648
    %5650 = vrot.lane.b32.xlu0 %v5645, 126
    %v5651 = vpop.permute.xlu0 %5650
    %v5654 = vadd.f32 %v5542, %v5649
    %v5655 = vadd.f32 %v5543, %v5651
    %s5656 = sld [smem:[#allocation4 + $0xbd]]
    %v5657 = vstv %s5656
    %v5658 = vmul.f32 %v5657, %v4800
    %v5659 = vmul.f32 %v5657, %v4801
    %5662 = vrot.lane.b32.xlu0 %v5658, 126
    %v5663 = vpop.permute.xlu0 %5662
    %5664 = vrot.lane.b32.xlu0 %v5659, 126
    %v5665 = vpop.permute.xlu0 %5664
    %v5668 = vadd.f32 %v5556, %v5663
    %v5669 = vadd.f32 %v5557, %v5665
    %s5670 = sld [smem:[#allocation4 + $0xa2]]
    %v5671 = vstv %s5670
    %v5672 = vmul.f32 %v5671, %v4802
    %v5673 = vmul.f32 %v5671, %v4803
    %5676 = vrot.lane.b32.xlu0 %v5672, 126
    %v5677 = vpop.permute.xlu0 %5676
    %5678 = vrot.lane.b32.xlu0 %v5673, 126
    %v5679 = vpop.permute.xlu0 %5678
    %v5682 = vadd.f32 %v5570, %v5677
    %v5683 = vadd.f32 %v5571, %v5679
    %s5684 = sld [smem:[#allocation4 + $0xa6]]
    %v5685 = vstv %s5684
    %v5686 = vmul.f32 %v5685, %v4802
    %v5687 = vmul.f32 %v5685, %v4803
    %5690 = vrot.lane.b32.xlu0 %v5686, 126
    %v5691 = vpop.permute.xlu0 %5690
    %5692 = vrot.lane.b32.xlu0 %v5687, 126
    %v5693 = vpop.permute.xlu0 %5692
    %v5696 = vadd.f32 %v5584, %v5691
    %v5697 = vadd.f32 %v5585, %v5693
    %s5698 = sld [smem:[#allocation4 + $0xaa]]
    %v5699 = vstv %s5698
    %v5700 = vmul.f32 %v5699, %v4802
    %v5701 = vmul.f32 %v5699, %v4803
    %5704 = vrot.lane.b32.xlu0 %v5700, 126
    %v5705 = vpop.permute.xlu0 %5704
    %5706 = vrot.lane.b32.xlu0 %v5701, 126
    %v5707 = vpop.permute.xlu0 %5706
    %v5710 = vadd.f32 %v5598, %v5705
    %v5711 = vadd.f32 %v5599, %v5707
    %s5712 = sld [smem:[#allocation4 + $0xae]]
    %v5713 = vstv %s5712
    %v5714 = vmul.f32 %v5713, %v4802
    %v5715 = vmul.f32 %v5713, %v4803
    %5718 = vrot.lane.b32.xlu0 %v5714, 126
    %v5719 = vpop.permute.xlu0 %5718
    %5720 = vrot.lane.b32.xlu0 %v5715, 126
    %v5721 = vpop.permute.xlu0 %5720
    %v5724 = vadd.f32 %v5612, %v5719
    %v5725 = vadd.f32 %v5613, %v5721
    %s5726 = sld [smem:[#allocation4 + $0xb2]]
    %v5727 = vstv %s5726
    %v5728 = vmul.f32 %v5727, %v4802
    %v5729 = vmul.f32 %v5727, %v4803
    %5732 = vrot.lane.b32.xlu0 %v5728, 126
    %v5733 = vpop.permute.xlu0 %5732
    %5734 = vrot.lane.b32.xlu0 %v5729, 126
    %v5735 = vpop.permute.xlu0 %5734
    %v5738 = vadd.f32 %v5626, %v5733
    %v5739 = vadd.f32 %v5627, %v5735
    %s5740 = sld [smem:[#allocation4 + $0xb6]]
    %v5741 = vstv %s5740
    %v5742 = vmul.f32 %v5741, %v4802
    %v5743 = vmul.f32 %v5741, %v4803
    %5746 = vrot.lane.b32.xlu0 %v5742, 126
    %v5747 = vpop.permute.xlu0 %5746
    %5748 = vrot.lane.b32.xlu0 %v5743, 126
    %v5749 = vpop.permute.xlu0 %5748
    %v5752 = vadd.f32 %v5640, %v5747
    %v5753 = vadd.f32 %v5641, %v5749
    %s5754 = sld [smem:[#allocation4 + $0xba]]
    %v5755 = vstv %s5754
    %v5756 = vmul.f32 %v5755, %v4802
    %v5757 = vmul.f32 %v5755, %v4803
    %5760 = vrot.lane.b32.xlu0 %v5756, 126
    %v5761 = vpop.permute.xlu0 %5760
    %5762 = vrot.lane.b32.xlu0 %v5757, 126
    %v5763 = vpop.permute.xlu0 %5762
    %v5766 = vadd.f32 %v5654, %v5761
    %v5767 = vadd.f32 %v5655, %v5763
    %s5768 = sld [smem:[#allocation4 + $0xbe]]
    %v5769 = vstv %s5768
    %v5770 = vmul.f32 %v5769, %v4802
    %v5771 = vmul.f32 %v5769, %v4803
    %5774 = vrot.lane.b32.xlu0 %v5770, 126
    %v5775 = vpop.permute.xlu0 %5774
    %5776 = vrot.lane.b32.xlu0 %v5771, 126
    %v5777 = vpop.permute.xlu0 %5776
    %v5780 = vadd.f32 %v5668, %v5775
    %v5781 = vadd.f32 %v5669, %v5777
    %s5782 = sld [smem:[#allocation4 + $0xa3]]
    %v5783 = vstv %s5782
    %v5784 = vmul.f32 %v5783, %v4804
    %v5785 = vmul.f32 %v5783, %v4805
    %5788 = vrot.lane.b32.xlu0 %v5784, 126
    %v5789 = vpop.permute.xlu0 %5788
    %5790 = vrot.lane.b32.xlu0 %v5785, 126
    %v5791 = vpop.permute.xlu0 %5790
    %v5794 = vadd.f32 %v5682, %v5789
    %v5795 = vadd.f32 %v5683, %v5791
    %s5796 = sld [smem:[#allocation4 + $0xa7]]
    %v5797 = vstv %s5796
    %v5798 = vmul.f32 %v5797, %v4804
    %v5799 = vmul.f32 %v5797, %v4805
    %5802 = vrot.lane.b32.xlu0 %v5798, 126
    %v5803 = vpop.permute.xlu0 %5802
    %5804 = vrot.lane.b32.xlu0 %v5799, 126
    %v5805 = vpop.permute.xlu0 %5804
    %v5808 = vadd.f32 %v5696, %v5803
    %v5809 = vadd.f32 %v5697, %v5805
    %s5810 = sld [smem:[#allocation4 + $0xab]]
    %v5811 = vstv %s5810
    %v5812 = vmul.f32 %v5811, %v4804
    %v5813 = vmul.f32 %v5811, %v4805
    %5816 = vrot.lane.b32.xlu0 %v5812, 126
    %v5817 = vpop.permute.xlu0 %5816
    %5818 = vrot.lane.b32.xlu0 %v5813, 126
    %v5819 = vpop.permute.xlu0 %5818
    %v5822 = vadd.f32 %v5710, %v5817
    %v5823 = vadd.f32 %v5711, %v5819
    %s5824 = sld [smem:[#allocation4 + $0xaf]]
    %v5825 = vstv %s5824
    %v5826 = vmul.f32 %v5825, %v4804
    %v5827 = vmul.f32 %v5825, %v4805
    %5830 = vrot.lane.b32.xlu0 %v5826, 126
    %v5831 = vpop.permute.xlu0 %5830
    %5832 = vrot.lane.b32.xlu0 %v5827, 126
    %v5833 = vpop.permute.xlu0 %5832
    %v5836 = vadd.f32 %v5724, %v5831
    %v5837 = vadd.f32 %v5725, %v5833
    %s5838 = sld [smem:[#allocation4 + $0xb3]]
    %v5839 = vstv %s5838
    %v5840 = vmul.f32 %v5839, %v4804
    %v5841 = vmul.f32 %v5839, %v4805
    %5844 = vrot.lane.b32.xlu0 %v5840, 126
    %v5845 = vpop.permute.xlu0 %5844
    %5846 = vrot.lane.b32.xlu0 %v5841, 126
    %v5847 = vpop.permute.xlu0 %5846
    %v5850 = vadd.f32 %v5738, %v5845
    %v5851 = vadd.f32 %v5739, %v5847
    %s5852 = sld [smem:[#allocation4 + $0xb7]]
    %v5853 = vstv %s5852
    %v5854 = vmul.f32 %v5853, %v4804
    %v5855 = vmul.f32 %v5853, %v4805
    %5858 = vrot.lane.b32.xlu0 %v5854, 126
    %v5859 = vpop.permute.xlu0 %5858
    %5860 = vrot.lane.b32.xlu0 %v5855, 126
    %v5861 = vpop.permute.xlu0 %5860
    %v5864 = vadd.f32 %v5752, %v5859
    %v5865 = vadd.f32 %v5753, %v5861
    %s5866 = sld [smem:[#allocation4 + $0xbb]]
    %v5867 = vstv %s5866
    %v5868 = vmul.f32 %v5867, %v4804
    %v5869 = vmul.f32 %v5867, %v4805
    %5872 = vrot.lane.b32.xlu0 %v5868, 126
    %v5873 = vpop.permute.xlu0 %5872
    %5874 = vrot.lane.b32.xlu0 %v5869, 126
    %v5875 = vpop.permute.xlu0 %5874
    %v5878 = vadd.f32 %v5766, %v5873
    %v5879 = vadd.f32 %v5767, %v5875
    %s5880 = sld [smem:[#allocation4 + $0xbf]]
    %v5881 = vstv %s5880
    %v5882 = vmul.f32 %v5881, %v4804
    %v5883 = vmul.f32 %v5881, %v4805
    %5886 = vrot.lane.b32.xlu0 %v5882, 126
    %v5887 = vpop.permute.xlu0 %5886
    %5888 = vrot.lane.b32.xlu0 %v5883, 126
    %v5889 = vpop.permute.xlu0 %5888
    %v5892 = vadd.f32 %v5780, %v5887
    %v5893 = vadd.f32 %v5781, %v5889
    %v5894 = vld [vmem:[#allocation2 + $0x2] sm:$0xff]
    %v5895 = vld [vmem:[#allocation2 + $0xa] sm:$0xff]
    %v5896 = vld [vmem:[#allocation2 + $0x1a] sm:$0xff]
    %v5897 = vld [vmem:[#allocation2 + $0x22] sm:$0xff]
    %v5898 = vld [vmem:[#allocation2 + $0x32] sm:$0xff]
    %v5899 = vld [vmem:[#allocation2 + $0x3a] sm:$0xff]
    %v5900 = vld [vmem:[#allocation2 + $0x4a] sm:$0xff]
    %v5901 = vld [vmem:[#allocation2 + $0x52] sm:$0xff]
    %s5902 = sld [smem:[#allocation4 + $0xc0]]
    %v5903 = vstv %s5902
    %v5904 = vmul.f32 %v5903, %v5894
    %v5905 = vmul.f32 %v5903, %v5895
    %v5906 = vadd.f32 %v5794, %v5904
    %v5907 = vadd.f32 %v5795, %v5905
    %s5908 = sld [smem:[#allocation4 + $0xc4]]
    %v5909 = vstv %s5908
    %v5910 = vmul.f32 %v5909, %v5894
    %v5911 = vmul.f32 %v5909, %v5895
    %v5912 = vadd.f32 %v5808, %v5910
    %v5913 = vadd.f32 %v5809, %v5911
    %s5914 = sld [smem:[#allocation4 + $0xc8]]
    %v5915 = vstv %s5914
    %v5916 = vmul.f32 %v5915, %v5894
    %v5917 = vmul.f32 %v5915, %v5895
    %v5918 = vadd.f32 %v5822, %v5916
    %v5919 = vadd.f32 %v5823, %v5917
    %s5920 = sld [smem:[#allocation4 + $0xcc]]
    %v5921 = vstv %s5920
    %v5922 = vmul.f32 %v5921, %v5894
    %v5923 = vmul.f32 %v5921, %v5895
    %v5924 = vadd.f32 %v5836, %v5922
    %v5925 = vadd.f32 %v5837, %v5923
    %s5926 = sld [smem:[#allocation4 + $0xd0]]
    %v5927 = vstv %s5926
    %v5928 = vmul.f32 %v5927, %v5894
    %v5929 = vmul.f32 %v5927, %v5895
    %v5930 = vadd.f32 %v5850, %v5928
    %v5931 = vadd.f32 %v5851, %v5929
    %s5932 = sld [smem:[#allocation4 + $0xd4]]
    %v5933 = vstv %s5932
    %v5934 = vmul.f32 %v5933, %v5894
    %v5935 = vmul.f32 %v5933, %v5895
    %v5936 = vadd.f32 %v5864, %v5934
    %v5937 = vadd.f32 %v5865, %v5935
    %s5938 = sld [smem:[#allocation4 + $0xd8]]
    %v5939 = vstv %s5938
    %v5940 = vmul.f32 %v5939, %v5894
    %v5941 = vmul.f32 %v5939, %v5895
    %v5942 = vadd.f32 %v5878, %v5940
    %v5943 = vadd.f32 %v5879, %v5941
    %s5944 = sld [smem:[#allocation4 + $0xdc]]
    %v5945 = vstv %s5944
    %v5946 = vmul.f32 %v5945, %v5894
    %v5947 = vmul.f32 %v5945, %v5895
    %v5948 = vadd.f32 %v5892, %v5946
    %v5949 = vadd.f32 %v5893, %v5947
    %s5950 = sld [smem:[#allocation4 + $0xc1]]
    %v5951 = vstv %s5950
    %v5952 = vmul.f32 %v5951, %v5896
    %v5953 = vmul.f32 %v5951, %v5897
    %v5954 = vadd.f32 %v5906, %v5952
    %v5955 = vadd.f32 %v5907, %v5953
    %s5956 = sld [smem:[#allocation4 + $0xc5]]
    %v5957 = vstv %s5956
    %v5958 = vmul.f32 %v5957, %v5896
    %v5959 = vmul.f32 %v5957, %v5897
    %v5960 = vadd.f32 %v5912, %v5958
    %v5961 = vadd.f32 %v5913, %v5959
    %s5962 = sld [smem:[#allocation4 + $0xc9]]
    %v5963 = vstv %s5962
    %v5964 = vmul.f32 %v5963, %v5896
    %v5965 = vmul.f32 %v5963, %v5897
    %v5966 = vadd.f32 %v5918, %v5964
    %v5967 = vadd.f32 %v5919, %v5965
    %s5968 = sld [smem:[#allocation4 + $0xcd]]
    %v5969 = vstv %s5968
    %v5970 = vmul.f32 %v5969, %v5896
    %v5971 = vmul.f32 %v5969, %v5897
    %v5972 = vadd.f32 %v5924, %v5970
    %v5973 = vadd.f32 %v5925, %v5971
    %s5974 = sld [smem:[#allocation4 + $0xd1]]
    %v5975 = vstv %s5974
    %v5976 = vmul.f32 %v5975, %v5896
    %v5977 = vmul.f32 %v5975, %v5897
    %v5978 = vadd.f32 %v5930, %v5976
    %v5979 = vadd.f32 %v5931, %v5977
    %s5980 = sld [smem:[#allocation4 + $0xd5]]
    %v5981 = vstv %s5980
    %v5982 = vmul.f32 %v5981, %v5896
    %v5983 = vmul.f32 %v5981, %v5897
    %v5984 = vadd.f32 %v5936, %v5982
    %v5985 = vadd.f32 %v5937, %v5983
    %s5986 = sld [smem:[#allocation4 + $0xd9]]
    %v5987 = vstv %s5986
    %v5988 = vmul.f32 %v5987, %v5896
    %v5989 = vmul.f32 %v5987, %v5897
    %v5990 = vadd.f32 %v5942, %v5988
    %v5991 = vadd.f32 %v5943, %v5989
    %s5992 = sld [smem:[#allocation4 + $0xdd]]
    %v5993 = vstv %s5992
    %v5994 = vmul.f32 %v5993, %v5896
    %v5995 = vmul.f32 %v5993, %v5897
    %v5996 = vadd.f32 %v5948, %v5994
    %v5997 = vadd.f32 %v5949, %v5995
    %s5998 = sld [smem:[#allocation4 + $0xc2]]
    %v5999 = vstv %s5998
    %v6000 = vmul.f32 %v5999, %v5898
    %v6001 = vmul.f32 %v5999, %v5899
    %v6002 = vadd.f32 %v5954, %v6000
    %v6003 = vadd.f32 %v5955, %v6001
    %s6004 = sld [smem:[#allocation4 + $0xc6]]
    %v6005 = vstv %s6004
    %v6006 = vmul.f32 %v6005, %v5898
    %v6007 = vmul.f32 %v6005, %v5899
    %v6008 = vadd.f32 %v5960, %v6006
    %v6009 = vadd.f32 %v5961, %v6007
    %s6010 = sld [smem:[#allocation4 + $0xca]]
    %v6011 = vstv %s6010
    %v6012 = vmul.f32 %v6011, %v5898
    %v6013 = vmul.f32 %v6011, %v5899
    %v6014 = vadd.f32 %v5966, %v6012
    %v6015 = vadd.f32 %v5967, %v6013
    %s6016 = sld [smem:[#allocation4 + $0xce]]
    %v6017 = vstv %s6016
    %v6018 = vmul.f32 %v6017, %v5898
    %v6019 = vmul.f32 %v6017, %v5899
    %v6020 = vadd.f32 %v5972, %v6018
    %v6021 = vadd.f32 %v5973, %v6019
    %s6022 = sld [smem:[#allocation4 + $0xd2]]
    %v6023 = vstv %s6022
    %v6024 = vmul.f32 %v6023, %v5898
    %v6025 = vmul.f32 %v6023, %v5899
    %v6026 = vadd.f32 %v5978, %v6024
    %v6027 = vadd.f32 %v5979, %v6025
    %s6028 = sld [smem:[#allocation4 + $0xd6]]
    %v6029 = vstv %s6028
    %v6030 = vmul.f32 %v6029, %v5898
    %v6031 = vmul.f32 %v6029, %v5899
    %v6032 = vadd.f32 %v5984, %v6030
    %v6033 = vadd.f32 %v5985, %v6031
    %s6034 = sld [smem:[#allocation4 + $0xda]]
    %v6035 = vstv %s6034
    %v6036 = vmul.f32 %v6035, %v5898
    %v6037 = vmul.f32 %v6035, %v5899
    %v6038 = vadd.f32 %v5990, %v6036
    %v6039 = vadd.f32 %v5991, %v6037
    %s6040 = sld [smem:[#allocation4 + $0xde]]
    %v6041 = vstv %s6040
    %v6042 = vmul.f32 %v6041, %v5898
    %v6043 = vmul.f32 %v6041, %v5899
    %v6044 = vadd.f32 %v5996, %v6042
    %v6045 = vadd.f32 %v5997, %v6043
    %s6046 = sld [smem:[#allocation4 + $0xc3]]
    %v6047 = vstv %s6046
    %v6048 = vmul.f32 %v6047, %v5900
    %v6049 = vmul.f32 %v6047, %v5901
    %v6050 = vadd.f32 %v6002, %v6048
    %v6051 = vadd.f32 %v6003, %v6049
    %s6052 = sld [smem:[#allocation4 + $0xc7]]
    %v6053 = vstv %s6052
    %v6054 = vmul.f32 %v6053, %v5900
    %v6055 = vmul.f32 %v6053, %v5901
    %v6056 = vadd.f32 %v6008, %v6054
    %v6057 = vadd.f32 %v6009, %v6055
    %s6058 = sld [smem:[#allocation4 + $0xcb]]
    %v6059 = vstv %s6058
    %v6060 = vmul.f32 %v6059, %v5900
    %v6061 = vmul.f32 %v6059, %v5901
    %v6062 = vadd.f32 %v6014, %v6060
    %v6063 = vadd.f32 %v6015, %v6061
    %s6064 = sld [smem:[#allocation4 + $0xcf]]
    %v6065 = vstv %s6064
    %v6066 = vmul.f32 %v6065, %v5900
    %v6067 = vmul.f32 %v6065, %v5901
    %v6068 = vadd.f32 %v6020, %v6066
    %v6069 = vadd.f32 %v6021, %v6067
    %s6070 = sld [smem:[#allocation4 + $0xd3]]
    %v6071 = vstv %s6070
    %v6072 = vmul.f32 %v6071, %v5900
    %v6073 = vmul.f32 %v6071, %v5901
    %v6074 = vadd.f32 %v6026, %v6072
    %v6075 = vadd.f32 %v6027, %v6073
    %s6076 = sld [smem:[#allocation4 + $0xd7]]
    %v6077 = vstv %s6076
    %v6078 = vmul.f32 %v6077, %v5900
    %v6079 = vmul.f32 %v6077, %v5901
    %v6080 = vadd.f32 %v6032, %v6078
    %v6081 = vadd.f32 %v6033, %v6079
    %s6082 = sld [smem:[#allocation4 + $0xdb]]
    %v6083 = vstv %s6082
    %v6084 = vmul.f32 %v6083, %v5900
    %v6085 = vmul.f32 %v6083, %v5901
    %v6086 = vadd.f32 %v6038, %v6084
    %v6087 = vadd.f32 %v6039, %v6085
    %s6088 = sld [smem:[#allocation4 + $0xdf]]
    %v6089 = vstv %s6088
    %v6090 = vmul.f32 %v6089, %v5900
    %v6091 = vmul.f32 %v6089, %v5901
    %v6092 = vadd.f32 %v6044, %v6090
    %v6093 = vadd.f32 %v6045, %v6091
    %s6094 = sld [smem:[#allocation4 + $0xe0]]
    %v6095 = vstv %s6094
    %v6096 = vmul.f32 %v6095, %v5894
    %v6097 = vmul.f32 %v6095, %v5895
    %6100 = vrot.lane.b32.xlu0 %v6096, 127
    %v6101 = vpop.permute.xlu0 %6100
    %6102 = vrot.lane.b32.xlu0 %v6097, 127
    %v6103 = vpop.permute.xlu0 %6102
    %v6106 = vadd.f32 %v6050, %v6101
    %v6107 = vadd.f32 %v6051, %v6103
    %s6108 = sld [smem:[#allocation4 + $0xe4]]
    %v6109 = vstv %s6108
    %v6110 = vmul.f32 %v6109, %v5894
    %v6111 = vmul.f32 %v6109, %v5895
    %6114 = vrot.lane.b32.xlu0 %v6110, 127
    %v6115 = vpop.permute.xlu0 %6114
    %6116 = vrot.lane.b32.xlu0 %v6111, 127
    %v6117 = vpop.permute.xlu0 %6116
    %v6120 = vadd.f32 %v6056, %v6115
    %v6121 = vadd.f32 %v6057, %v6117
    %s6122 = sld [smem:[#allocation4 + $0xe8]]
    %v6123 = vstv %s6122
    %v6124 = vmul.f32 %v6123, %v5894
    %v6125 = vmul.f32 %v6123, %v5895
    %6128 = vrot.lane.b32.xlu0 %v6124, 127
    %v6129 = vpop.permute.xlu0 %6128
    %6130 = vrot.lane.b32.xlu0 %v6125, 127
    %v6131 = vpop.permute.xlu0 %6130
    %v6134 = vadd.f32 %v6062, %v6129
    %v6135 = vadd.f32 %v6063, %v6131
    %s6136 = sld [smem:[#allocation4 + $0xec]]
    %v6137 = vstv %s6136
    %v6138 = vmul.f32 %v6137, %v5894
    %v6139 = vmul.f32 %v6137, %v5895
    %6142 = vrot.lane.b32.xlu0 %v6138, 127
    %v6143 = vpop.permute.xlu0 %6142
    %6144 = vrot.lane.b32.xlu0 %v6139, 127
    %v6145 = vpop.permute.xlu0 %6144
    %v6148 = vadd.f32 %v6068, %v6143
    %v6149 = vadd.f32 %v6069, %v6145
    %s6150 = sld [smem:[#allocation4 + $0xf0]]
    %v6151 = vstv %s6150
    %v6152 = vmul.f32 %v6151, %v5894
    %v6153 = vmul.f32 %v6151, %v5895
    %6156 = vrot.lane.b32.xlu0 %v6152, 127
    %v6157 = vpop.permute.xlu0 %6156
    %6158 = vrot.lane.b32.xlu0 %v6153, 127
    %v6159 = vpop.permute.xlu0 %6158
    %v6162 = vadd.f32 %v6074, %v6157
    %v6163 = vadd.f32 %v6075, %v6159
    %s6164 = sld [smem:[#allocation4 + $0xf4]]
    %v6165 = vstv %s6164
    %v6166 = vmul.f32 %v6165, %v5894
    %v6167 = vmul.f32 %v6165, %v5895
    %6170 = vrot.lane.b32.xlu0 %v6166, 127
    %v6171 = vpop.permute.xlu0 %6170
    %6172 = vrot.lane.b32.xlu0 %v6167, 127
    %v6173 = vpop.permute.xlu0 %6172
    %v6176 = vadd.f32 %v6080, %v6171
    %v6177 = vadd.f32 %v6081, %v6173
    %s6178 = sld [smem:[#allocation4 + $0xf8]]
    %v6179 = vstv %s6178
    %v6180 = vmul.f32 %v6179, %v5894
    %v6181 = vmul.f32 %v6179, %v5895
    %6184 = vrot.lane.b32.xlu0 %v6180, 127
    %v6185 = vpop.permute.xlu0 %6184
    %6186 = vrot.lane.b32.xlu0 %v6181, 127
    %v6187 = vpop.permute.xlu0 %6186
    %v6190 = vadd.f32 %v6086, %v6185
    %v6191 = vadd.f32 %v6087, %v6187
    %s6192 = sld [smem:[#allocation4 + $0xfc]]
    %v6193 = vstv %s6192
    %v6194 = vmul.f32 %v6193, %v5894
    %v6195 = vmul.f32 %v6193, %v5895
    %6198 = vrot.lane.b32.xlu0 %v6194, 127
    %v6199 = vpop.permute.xlu0 %6198
    %6200 = vrot.lane.b32.xlu0 %v6195, 127
    %v6201 = vpop.permute.xlu0 %6200
    %v6204 = vadd.f32 %v6092, %v6199
    %v6205 = vadd.f32 %v6093, %v6201
    %s6206 = sld [smem:[#allocation4 + $0xe1]]
    %v6207 = vstv %s6206
    %v6208 = vmul.f32 %v6207, %v5896
    %v6209 = vmul.f32 %v6207, %v5897
    %6212 = vrot.lane.b32.xlu0 %v6208, 127
    %v6213 = vpop.permute.xlu0 %6212
    %6214 = vrot.lane.b32.xlu0 %v6209, 127
    %v6215 = vpop.permute.xlu0 %6214
    %v6218 = vadd.f32 %v6106, %v6213
    %v6219 = vadd.f32 %v6107, %v6215
    %s6220 = sld [smem:[#allocation4 + $0xe5]]
    %v6221 = vstv %s6220
    %v6222 = vmul.f32 %v6221, %v5896
    %v6223 = vmul.f32 %v6221, %v5897
    %6226 = vrot.lane.b32.xlu0 %v6222, 127
    %v6227 = vpop.permute.xlu0 %6226
    %6228 = vrot.lane.b32.xlu0 %v6223, 127
    %v6229 = vpop.permute.xlu0 %6228
    %v6232 = vadd.f32 %v6120, %v6227
    %v6233 = vadd.f32 %v6121, %v6229
    %s6234 = sld [smem:[#allocation4 + $0xe9]]
    %v6235 = vstv %s6234
    %v6236 = vmul.f32 %v6235, %v5896
    %v6237 = vmul.f32 %v6235, %v5897
    %6240 = vrot.lane.b32.xlu0 %v6236, 127
    %v6241 = vpop.permute.xlu0 %6240
    %6242 = vrot.lane.b32.xlu0 %v6237, 127
    %v6243 = vpop.permute.xlu0 %6242
    %v6246 = vadd.f32 %v6134, %v6241
    %v6247 = vadd.f32 %v6135, %v6243
    %s6248 = sld [smem:[#allocation4 + $0xed]]
    %v6249 = vstv %s6248
    %v6250 = vmul.f32 %v6249, %v5896
    %v6251 = vmul.f32 %v6249, %v5897
    %6254 = vrot.lane.b32.xlu0 %v6250, 127
    %v6255 = vpop.permute.xlu0 %6254
    %6256 = vrot.lane.b32.xlu0 %v6251, 127
    %v6257 = vpop.permute.xlu0 %6256
    %v6260 = vadd.f32 %v6148, %v6255
    %v6261 = vadd.f32 %v6149, %v6257
    %s6262 = sld [smem:[#allocation4 + $0xf1]]
    %v6263 = vstv %s6262
    %v6264 = vmul.f32 %v6263, %v5896
    %v6265 = vmul.f32 %v6263, %v5897
    %6268 = vrot.lane.b32.xlu0 %v6264, 127
    %v6269 = vpop.permute.xlu0 %6268
    %6270 = vrot.lane.b32.xlu0 %v6265, 127
    %v6271 = vpop.permute.xlu0 %6270
    %v6274 = vadd.f32 %v6162, %v6269
    %v6275 = vadd.f32 %v6163, %v6271
    %s6276 = sld [smem:[#allocation4 + $0xf5]]
    %v6277 = vstv %s6276
    %v6278 = vmul.f32 %v6277, %v5896
    %v6279 = vmul.f32 %v6277, %v5897
    %6282 = vrot.lane.b32.xlu0 %v6278, 127
    %v6283 = vpop.permute.xlu0 %6282
    %6284 = vrot.lane.b32.xlu0 %v6279, 127
    %v6285 = vpop.permute.xlu0 %6284
    %v6288 = vadd.f32 %v6176, %v6283
    %v6289 = vadd.f32 %v6177, %v6285
    %s6290 = sld [smem:[#allocation4 + $0xf9]]
    %v6291 = vstv %s6290
    %v6292 = vmul.f32 %v6291, %v5896
    %v6293 = vmul.f32 %v6291, %v5897
    %6296 = vrot.lane.b32.xlu0 %v6292, 127
    %v6297 = vpop.permute.xlu0 %6296
    %6298 = vrot.lane.b32.xlu0 %v6293, 127
    %v6299 = vpop.permute.xlu0 %6298
    %v6302 = vadd.f32 %v6190, %v6297
    %v6303 = vadd.f32 %v6191, %v6299
    %s6304 = sld [smem:[#allocation4 + $0xfd]]
    %v6305 = vstv %s6304
    %v6306 = vmul.f32 %v6305, %v5896
    %v6307 = vmul.f32 %v6305, %v5897
    %6310 = vrot.lane.b32.xlu0 %v6306, 127
    %v6311 = vpop.permute.xlu0 %6310
    %6312 = vrot.lane.b32.xlu0 %v6307, 127
    %v6313 = vpop.permute.xlu0 %6312
    %v6316 = vadd.f32 %v6204, %v6311
    %v6317 = vadd.f32 %v6205, %v6313
    %s6318 = sld [smem:[#allocation4 + $0xe2]]
    %v6319 = vstv %s6318
    %v6320 = vmul.f32 %v6319, %v5898
    %v6321 = vmul.f32 %v6319, %v5899
    %6324 = vrot.lane.b32.xlu0 %v6320, 127
    %v6325 = vpop.permute.xlu0 %6324
    %6326 = vrot.lane.b32.xlu0 %v6321, 127
    %v6327 = vpop.permute.xlu0 %6326
    %v6330 = vadd.f32 %v6218, %v6325
    %v6331 = vadd.f32 %v6219, %v6327
    %s6332 = sld [smem:[#allocation4 + $0xe6]]
    %v6333 = vstv %s6332
    %v6334 = vmul.f32 %v6333, %v5898
    %v6335 = vmul.f32 %v6333, %v5899
    %6338 = vrot.lane.b32.xlu0 %v6334, 127
    %v6339 = vpop.permute.xlu0 %6338
    %6340 = vrot.lane.b32.xlu0 %v6335, 127
    %v6341 = vpop.permute.xlu0 %6340
    %v6344 = vadd.f32 %v6232, %v6339
    %v6345 = vadd.f32 %v6233, %v6341
    %s6346 = sld [smem:[#allocation4 + $0xea]]
    %v6347 = vstv %s6346
    %v6348 = vmul.f32 %v6347, %v5898
    %v6349 = vmul.f32 %v6347, %v5899
    %6352 = vrot.lane.b32.xlu0 %v6348, 127
    %v6353 = vpop.permute.xlu0 %6352
    %6354 = vrot.lane.b32.xlu0 %v6349, 127
    %v6355 = vpop.permute.xlu0 %6354
    %v6358 = vadd.f32 %v6246, %v6353
    %v6359 = vadd.f32 %v6247, %v6355
    %s6360 = sld [smem:[#allocation4 + $0xee]]
    %v6361 = vstv %s6360
    %v6362 = vmul.f32 %v6361, %v5898
    %v6363 = vmul.f32 %v6361, %v5899
    %6366 = vrot.lane.b32.xlu0 %v6362, 127
    %v6367 = vpop.permute.xlu0 %6366
    %6368 = vrot.lane.b32.xlu0 %v6363, 127
    %v6369 = vpop.permute.xlu0 %6368
    %v6372 = vadd.f32 %v6260, %v6367
    %v6373 = vadd.f32 %v6261, %v6369
    %s6374 = sld [smem:[#allocation4 + $0xf2]]
    %v6375 = vstv %s6374
    %v6376 = vmul.f32 %v6375, %v5898
    %v6377 = vmul.f32 %v6375, %v5899
    %6380 = vrot.lane.b32.xlu0 %v6376, 127
    %v6381 = vpop.permute.xlu0 %6380
    %6382 = vrot.lane.b32.xlu0 %v6377, 127
    %v6383 = vpop.permute.xlu0 %6382
    %v6386 = vadd.f32 %v6274, %v6381
    %v6387 = vadd.f32 %v6275, %v6383
    %s6388 = sld [smem:[#allocation4 + $0xf6]]
    %v6389 = vstv %s6388
    %v6390 = vmul.f32 %v6389, %v5898
    %v6391 = vmul.f32 %v6389, %v5899
    %6394 = vrot.lane.b32.xlu0 %v6390, 127
    %v6395 = vpop.permute.xlu0 %6394
    %6396 = vrot.lane.b32.xlu0 %v6391, 127
    %v6397 = vpop.permute.xlu0 %6396
    %v6400 = vadd.f32 %v6288, %v6395
    %v6401 = vadd.f32 %v6289, %v6397
    %s6402 = sld [smem:[#allocation4 + $0xfa]]
    %v6403 = vstv %s6402
    %v6404 = vmul.f32 %v6403, %v5898
    %v6405 = vmul.f32 %v6403, %v5899
    %6408 = vrot.lane.b32.xlu0 %v6404, 127
    %v6409 = vpop.permute.xlu0 %6408
    %6410 = vrot.lane.b32.xlu0 %v6405, 127
    %v6411 = vpop.permute.xlu0 %6410
    %v6414 = vadd.f32 %v6302, %v6409
    %v6415 = vadd.f32 %v6303, %v6411
    %s6416 = sld [smem:[#allocation4 + $0xfe]]
    %v6417 = vstv %s6416
    %v6418 = vmul.f32 %v6417, %v5898
    %v6419 = vmul.f32 %v6417, %v5899
    %6422 = vrot.lane.b32.xlu0 %v6418, 127
    %v6423 = vpop.permute.xlu0 %6422
    %6424 = vrot.lane.b32.xlu0 %v6419, 127
    %v6425 = vpop.permute.xlu0 %6424
    %v6428 = vadd.f32 %v6316, %v6423
    %v6429 = vadd.f32 %v6317, %v6425
    %s6430 = sld [smem:[#allocation4 + $0xe3]]
    %v6431 = vstv %s6430
    %v6432 = vmul.f32 %v6431, %v5900
    %v6433 = vmul.f32 %v6431, %v5901
    %6436 = vrot.lane.b32.xlu0 %v6432, 127
    %v6437 = vpop.permute.xlu0 %6436
    %6438 = vrot.lane.b32.xlu0 %v6433, 127
    %v6439 = vpop.permute.xlu0 %6438
    %v6442 = vadd.f32 %v6330, %v6437
    %v6443 = vadd.f32 %v6331, %v6439
    %s6444 = sld [smem:[#allocation4 + $0xe7]]
    %v6445 = vstv %s6444
    %v6446 = vmul.f32 %v6445, %v5900
    %v6447 = vmul.f32 %v6445, %v5901
    %6450 = vrot.lane.b32.xlu0 %v6446, 127
    %v6451 = vpop.permute.xlu0 %6450
    %6452 = vrot.lane.b32.xlu0 %v6447, 127
    %v6453 = vpop.permute.xlu0 %6452
    %v6456 = vadd.f32 %v6344, %v6451
    %v6457 = vadd.f32 %v6345, %v6453
    %s6458 = sld [smem:[#allocation4 + $0xeb]]
    %v6459 = vstv %s6458
    %v6460 = vmul.f32 %v6459, %v5900
    %v6461 = vmul.f32 %v6459, %v5901
    %6464 = vrot.lane.b32.xlu0 %v6460, 127
    %v6465 = vpop.permute.xlu0 %6464
    %6466 = vrot.lane.b32.xlu0 %v6461, 127
    %v6467 = vpop.permute.xlu0 %6466
    %v6470 = vadd.f32 %v6358, %v6465
    %v6471 = vadd.f32 %v6359, %v6467
    %s6472 = sld [smem:[#allocation4 + $0xef]]
    %v6473 = vstv %s6472
    %v6474 = vmul.f32 %v6473, %v5900
    %v6475 = vmul.f32 %v6473, %v5901
    %6478 = vrot.lane.b32.xlu0 %v6474, 127
    %v6479 = vpop.permute.xlu0 %6478
    %6480 = vrot.lane.b32.xlu0 %v6475, 127
    %v6481 = vpop.permute.xlu0 %6480
    %v6484 = vadd.f32 %v6372, %v6479
    %v6485 = vadd.f32 %v6373, %v6481
    %s6486 = sld [smem:[#allocation4 + $0xf3]]
    %v6487 = vstv %s6486
    %v6488 = vmul.f32 %v6487, %v5900
    %v6489 = vmul.f32 %v6487, %v5901
    %6492 = vrot.lane.b32.xlu0 %v6488, 127
    %v6493 = vpop.permute.xlu0 %6492
    %6494 = vrot.lane.b32.xlu0 %v6489, 127
    %v6495 = vpop.permute.xlu0 %6494
    %v6498 = vadd.f32 %v6386, %v6493
    %v6499 = vadd.f32 %v6387, %v6495
    %s6500 = sld [smem:[#allocation4 + $0xf7]]
    %v6501 = vstv %s6500
    %v6502 = vmul.f32 %v6501, %v5900
    %v6503 = vmul.f32 %v6501, %v5901
    %6506 = vrot.lane.b32.xlu0 %v6502, 127
    %v6507 = vpop.permute.xlu0 %6506
    %6508 = vrot.lane.b32.xlu0 %v6503, 127
    %v6509 = vpop.permute.xlu0 %6508
    %v6512 = vadd.f32 %v6400, %v6507
    %v6513 = vadd.f32 %v6401, %v6509
    %s6514 = sld [smem:[#allocation4 + $0xfb]]
    %v6515 = vstv %s6514
    %v6516 = vmul.f32 %v6515, %v5900
    %v6517 = vmul.f32 %v6515, %v5901
    %6520 = vrot.lane.b32.xlu0 %v6516, 127
    %v6521 = vpop.permute.xlu0 %6520
    %6522 = vrot.lane.b32.xlu0 %v6517, 127
    %v6523 = vpop.permute.xlu0 %6522
    %v6526 = vadd.f32 %v6414, %v6521
    %v6527 = vadd.f32 %v6415, %v6523
    %s6528 = sld [smem:[#allocation4 + $0xff]]
    %v6529 = vstv %s6528
    %v6530 = vmul.f32 %v6529, %v5900
    %v6531 = vmul.f32 %v6529, %v5901
    %6534 = vrot.lane.b32.xlu0 %v6530, 127
    %v6535 = vpop.permute.xlu0 %6534
    %6536 = vrot.lane.b32.xlu0 %v6531, 127
    %v6537 = vpop.permute.xlu0 %6536
    %v6540 = vadd.f32 %v6428, %v6535
    %v6541 = vadd.f32 %v6429, %v6537
    %s6542 = sld [smem:[#allocation4 + $0x100]]
    %v6543 = vstv %s6542
    %v6544 = vmul.f32 %v6543, %v5894
    %v6545 = vmul.f32 %v6543, %v5895
    %6548 = vrot.lane.b32.xlu0 %v6544, 126
    %v6549 = vpop.permute.xlu0 %6548
    %6550 = vrot.lane.b32.xlu0 %v6545, 126
    %v6551 = vpop.permute.xlu0 %6550
    %v6554 = vadd.f32 %v6442, %v6549
    %v6555 = vadd.f32 %v6443, %v6551
    %s6556 = sld [smem:[#allocation4 + $0x104]]
    %v6557 = vstv %s6556
    %v6558 = vmul.f32 %v6557, %v5894
    %v6559 = vmul.f32 %v6557, %v5895
    %6562 = vrot.lane.b32.xlu0 %v6558, 126
    %v6563 = vpop.permute.xlu0 %6562
    %6564 = vrot.lane.b32.xlu0 %v6559, 126
    %v6565 = vpop.permute.xlu0 %6564
    %v6568 = vadd.f32 %v6456, %v6563
    %v6569 = vadd.f32 %v6457, %v6565
    %s6570 = sld [smem:[#allocation4 + $0x108]]
    %v6571 = vstv %s6570
    %v6572 = vmul.f32 %v6571, %v5894
    %v6573 = vmul.f32 %v6571, %v5895
    %6576 = vrot.lane.b32.xlu0 %v6572, 126
    %v6577 = vpop.permute.xlu0 %6576
    %6578 = vrot.lane.b32.xlu0 %v6573, 126
    %v6579 = vpop.permute.xlu0 %6578
    %v6582 = vadd.f32 %v6470, %v6577
    %v6583 = vadd.f32 %v6471, %v6579
    %s6584 = sld [smem:[#allocation4 + $0x10c]]
    %v6585 = vstv %s6584
    %v6586 = vmul.f32 %v6585, %v5894
    %v6587 = vmul.f32 %v6585, %v5895
    %6590 = vrot.lane.b32.xlu0 %v6586, 126
    %v6591 = vpop.permute.xlu0 %6590
    %6592 = vrot.lane.b32.xlu0 %v6587, 126
    %v6593 = vpop.permute.xlu0 %6592
    %v6596 = vadd.f32 %v6484, %v6591
    %v6597 = vadd.f32 %v6485, %v6593
    %s6598 = sld [smem:[#allocation4 + $0x110]]
    %v6599 = vstv %s6598
    %v6600 = vmul.f32 %v6599, %v5894
    %v6601 = vmul.f32 %v6599, %v5895
    %6604 = vrot.lane.b32.xlu0 %v6600, 126
    %v6605 = vpop.permute.xlu0 %6604
    %6606 = vrot.lane.b32.xlu0 %v6601, 126
    %v6607 = vpop.permute.xlu0 %6606
    %v6610 = vadd.f32 %v6498, %v6605
    %v6611 = vadd.f32 %v6499, %v6607
    %s6612 = sld [smem:[#allocation4 + $0x114]]
    %v6613 = vstv %s6612
    %v6614 = vmul.f32 %v6613, %v5894
    %v6615 = vmul.f32 %v6613, %v5895
    %6618 = vrot.lane.b32.xlu0 %v6614, 126
    %v6619 = vpop.permute.xlu0 %6618
    %6620 = vrot.lane.b32.xlu0 %v6615, 126
    %v6621 = vpop.permute.xlu0 %6620
    %v6624 = vadd.f32 %v6512, %v6619
    %v6625 = vadd.f32 %v6513, %v6621
    %s6626 = sld [smem:[#allocation4 + $0x118]]
    %v6627 = vstv %s6626
    %v6628 = vmul.f32 %v6627, %v5894
    %v6629 = vmul.f32 %v6627, %v5895
    %6632 = vrot.lane.b32.xlu0 %v6628, 126
    %v6633 = vpop.permute.xlu0 %6632
    %6634 = vrot.lane.b32.xlu0 %v6629, 126
    %v6635 = vpop.permute.xlu0 %6634
    %v6638 = vadd.f32 %v6526, %v6633
    %v6639 = vadd.f32 %v6527, %v6635
    %s6640 = sld [smem:[#allocation4 + $0x11c]]
    %v6641 = vstv %s6640
    %v6642 = vmul.f32 %v6641, %v5894
    %v6643 = vmul.f32 %v6641, %v5895
    %6646 = vrot.lane.b32.xlu0 %v6642, 126
    %v6647 = vpop.permute.xlu0 %6646
    %6648 = vrot.lane.b32.xlu0 %v6643, 126
    %v6649 = vpop.permute.xlu0 %6648
    %v6652 = vadd.f32 %v6540, %v6647
    %v6653 = vadd.f32 %v6541, %v6649
    %s6654 = sld [smem:[#allocation4 + $0x101]]
    %v6655 = vstv %s6654
    %v6656 = vmul.f32 %v6655, %v5896
    %v6657 = vmul.f32 %v6655, %v5897
    %6660 = vrot.lane.b32.xlu0 %v6656, 126
    %v6661 = vpop.permute.xlu0 %6660
    %6662 = vrot.lane.b32.xlu0 %v6657, 126
    %v6663 = vpop.permute.xlu0 %6662
    %v6666 = vadd.f32 %v6554, %v6661
    %v6667 = vadd.f32 %v6555, %v6663
    %s6668 = sld [smem:[#allocation4 + $0x105]]
    %v6669 = vstv %s6668
    %v6670 = vmul.f32 %v6669, %v5896
    %v6671 = vmul.f32 %v6669, %v5897
    %6674 = vrot.lane.b32.xlu0 %v6670, 126
    %v6675 = vpop.permute.xlu0 %6674
    %6676 = vrot.lane.b32.xlu0 %v6671, 126
    %v6677 = vpop.permute.xlu0 %6676
    %v6680 = vadd.f32 %v6568, %v6675
    %v6681 = vadd.f32 %v6569, %v6677
    %s6682 = sld [smem:[#allocation4 + $0x109]]
    %v6683 = vstv %s6682
    %v6684 = vmul.f32 %v6683, %v5896
    %v6685 = vmul.f32 %v6683, %v5897
    %6688 = vrot.lane.b32.xlu0 %v6684, 126
    %v6689 = vpop.permute.xlu0 %6688
    %6690 = vrot.lane.b32.xlu0 %v6685, 126
    %v6691 = vpop.permute.xlu0 %6690
    %v6694 = vadd.f32 %v6582, %v6689
    %v6695 = vadd.f32 %v6583, %v6691
    %s6696 = sld [smem:[#allocation4 + $0x10d]]
    %v6697 = vstv %s6696
    %v6698 = vmul.f32 %v6697, %v5896
    %v6699 = vmul.f32 %v6697, %v5897
    %6702 = vrot.lane.b32.xlu0 %v6698, 126
    %v6703 = vpop.permute.xlu0 %6702
    %6704 = vrot.lane.b32.xlu0 %v6699, 126
    %v6705 = vpop.permute.xlu0 %6704
    %v6708 = vadd.f32 %v6596, %v6703
    %v6709 = vadd.f32 %v6597, %v6705
    %s6710 = sld [smem:[#allocation4 + $0x111]]
    %v6711 = vstv %s6710
    %v6712 = vmul.f32 %v6711, %v5896
    %v6713 = vmul.f32 %v6711, %v5897
    %6716 = vrot.lane.b32.xlu0 %v6712, 126
    %v6717 = vpop.permute.xlu0 %6716
    %6718 = vrot.lane.b32.xlu0 %v6713, 126
    %v6719 = vpop.permute.xlu0 %6718
    %v6722 = vadd.f32 %v6610, %v6717
    %v6723 = vadd.f32 %v6611, %v6719
    %s6724 = sld [smem:[#allocation4 + $0x115]]
    %v6725 = vstv %s6724
    %v6726 = vmul.f32 %v6725, %v5896
    %v6727 = vmul.f32 %v6725, %v5897
    %6730 = vrot.lane.b32.xlu0 %v6726, 126
    %v6731 = vpop.permute.xlu0 %6730
    %6732 = vrot.lane.b32.xlu0 %v6727, 126
    %v6733 = vpop.permute.xlu0 %6732
    %v6736 = vadd.f32 %v6624, %v6731
    %v6737 = vadd.f32 %v6625, %v6733
    %s6738 = sld [smem:[#allocation4 + $0x119]]
    %v6739 = vstv %s6738
    %v6740 = vmul.f32 %v6739, %v5896
    %v6741 = vmul.f32 %v6739, %v5897
    %6744 = vrot.lane.b32.xlu0 %v6740, 126
    %v6745 = vpop.permute.xlu0 %6744
    %6746 = vrot.lane.b32.xlu0 %v6741, 126
    %v6747 = vpop.permute.xlu0 %6746
    %v6750 = vadd.f32 %v6638, %v6745
    %v6751 = vadd.f32 %v6639, %v6747
    %s6752 = sld [smem:[#allocation4 + $0x11d]]
    %v6753 = vstv %s6752
    %v6754 = vmul.f32 %v6753, %v5896
    %v6755 = vmul.f32 %v6753, %v5897
    %6758 = vrot.lane.b32.xlu0 %v6754, 126
    %v6759 = vpop.permute.xlu0 %6758
    %6760 = vrot.lane.b32.xlu0 %v6755, 126
    %v6761 = vpop.permute.xlu0 %6760
    %v6764 = vadd.f32 %v6652, %v6759
    %v6765 = vadd.f32 %v6653, %v6761
    %s6766 = sld [smem:[#allocation4 + $0x102]]
    %v6767 = vstv %s6766
    %v6768 = vmul.f32 %v6767, %v5898
    %v6769 = vmul.f32 %v6767, %v5899
    %6772 = vrot.lane.b32.xlu0 %v6768, 126
    %v6773 = vpop.permute.xlu0 %6772
    %6774 = vrot.lane.b32.xlu0 %v6769, 126
    %v6775 = vpop.permute.xlu0 %6774
    %v6778 = vadd.f32 %v6666, %v6773
    %v6779 = vadd.f32 %v6667, %v6775
    %s6780 = sld [smem:[#allocation4 + $0x106]]
    %v6781 = vstv %s6780
    %v6782 = vmul.f32 %v6781, %v5898
    %v6783 = vmul.f32 %v6781, %v5899
    %6786 = vrot.lane.b32.xlu0 %v6782, 126
    %v6787 = vpop.permute.xlu0 %6786
    %6788 = vrot.lane.b32.xlu0 %v6783, 126
    %v6789 = vpop.permute.xlu0 %6788
    %v6792 = vadd.f32 %v6680, %v6787
    %v6793 = vadd.f32 %v6681, %v6789
    %s6794 = sld [smem:[#allocation4 + $0x10a]]
    %v6795 = vstv %s6794
    %v6796 = vmul.f32 %v6795, %v5898
    %v6797 = vmul.f32 %v6795, %v5899
    %6800 = vrot.lane.b32.xlu0 %v6796, 126
    %v6801 = vpop.permute.xlu0 %6800
    %6802 = vrot.lane.b32.xlu0 %v6797, 126
    %v6803 = vpop.permute.xlu0 %6802
    %v6806 = vadd.f32 %v6694, %v6801
    %v6807 = vadd.f32 %v6695, %v6803
    %s6808 = sld [smem:[#allocation4 + $0x10e]]
    %v6809 = vstv %s6808
    %v6810 = vmul.f32 %v6809, %v5898
    %v6811 = vmul.f32 %v6809, %v5899
    %6814 = vrot.lane.b32.xlu0 %v6810, 126
    %v6815 = vpop.permute.xlu0 %6814
    %6816 = vrot.lane.b32.xlu0 %v6811, 126
    %v6817 = vpop.permute.xlu0 %6816
    %v6820 = vadd.f32 %v6708, %v6815
    %v6821 = vadd.f32 %v6709, %v6817
    %s6822 = sld [smem:[#allocation4 + $0x112]]
    %v6823 = vstv %s6822
    %v6824 = vmul.f32 %v6823, %v5898
    %v6825 = vmul.f32 %v6823, %v5899
    %6828 = vrot.lane.b32.xlu0 %v6824, 126
    %v6829 = vpop.permute.xlu0 %6828
    %6830 = vrot.lane.b32.xlu0 %v6825, 126
    %v6831 = vpop.permute.xlu0 %6830
    %v6834 = vadd.f32 %v6722, %v6829
    %v6835 = vadd.f32 %v6723, %v6831
    %s6836 = sld [smem:[#allocation4 + $0x116]]
    %v6837 = vstv %s6836
    %v6838 = vmul.f32 %v6837, %v5898
    %v6839 = vmul.f32 %v6837, %v5899
    %6842 = vrot.lane.b32.xlu0 %v6838, 126
    %v6843 = vpop.permute.xlu0 %6842
    %6844 = vrot.lane.b32.xlu0 %v6839, 126
    %v6845 = vpop.permute.xlu0 %6844
    %v6848 = vadd.f32 %v6736, %v6843
    %v6849 = vadd.f32 %v6737, %v6845
    %s6850 = sld [smem:[#allocation4 + $0x11a]]
    %v6851 = vstv %s6850
    %v6852 = vmul.f32 %v6851, %v5898
    %v6853 = vmul.f32 %v6851, %v5899
    %6856 = vrot.lane.b32.xlu0 %v6852, 126
    %v6857 = vpop.permute.xlu0 %6856
    %6858 = vrot.lane.b32.xlu0 %v6853, 126
    %v6859 = vpop.permute.xlu0 %6858
    %v6862 = vadd.f32 %v6750, %v6857
    %v6863 = vadd.f32 %v6751, %v6859
    %s6864 = sld [smem:[#allocation4 + $0x11e]]
    %v6865 = vstv %s6864
    %v6866 = vmul.f32 %v6865, %v5898
    %v6867 = vmul.f32 %v6865, %v5899
    %6870 = vrot.lane.b32.xlu0 %v6866, 126
    %v6871 = vpop.permute.xlu0 %6870
    %6872 = vrot.lane.b32.xlu0 %v6867, 126
    %v6873 = vpop.permute.xlu0 %6872
    %v6876 = vadd.f32 %v6764, %v6871
    %v6877 = vadd.f32 %v6765, %v6873
    %s6878 = sld [smem:[#allocation4 + $0x103]]
    %v6879 = vstv %s6878
    %v6880 = vmul.f32 %v6879, %v5900
    %v6881 = vmul.f32 %v6879, %v5901
    %6884 = vrot.lane.b32.xlu0 %v6880, 126
    %v6885 = vpop.permute.xlu0 %6884
    %6886 = vrot.lane.b32.xlu0 %v6881, 126
    %v6887 = vpop.permute.xlu0 %6886
    %v6890 = vadd.f32 %v6778, %v6885
    %v6891 = vadd.f32 %v6779, %v6887
    %s6892 = sld [smem:[#allocation4 + $0x107]]
    %v6893 = vstv %s6892
    %v6894 = vmul.f32 %v6893, %v5900
    %v6895 = vmul.f32 %v6893, %v5901
    %6898 = vrot.lane.b32.xlu0 %v6894, 126
    %v6899 = vpop.permute.xlu0 %6898
    %6900 = vrot.lane.b32.xlu0 %v6895, 126
    %v6901 = vpop.permute.xlu0 %6900
    %v6904 = vadd.f32 %v6792, %v6899
    %v6905 = vadd.f32 %v6793, %v6901
    %s6906 = sld [smem:[#allocation4 + $0x10b]]
    %v6907 = vstv %s6906
    %v6908 = vmul.f32 %v6907, %v5900
    %v6909 = vmul.f32 %v6907, %v5901
    %6912 = vrot.lane.b32.xlu0 %v6908, 126
    %v6913 = vpop.permute.xlu0 %6912
    %6914 = vrot.lane.b32.xlu0 %v6909, 126
    %v6915 = vpop.permute.xlu0 %6914
    %v6918 = vadd.f32 %v6806, %v6913
    %v6919 = vadd.f32 %v6807, %v6915
    %s6920 = sld [smem:[#allocation4 + $0x10f]]
    %v6921 = vstv %s6920
    %v6922 = vmul.f32 %v6921, %v5900
    %v6923 = vmul.f32 %v6921, %v5901
    %6926 = vrot.lane.b32.xlu0 %v6922, 126
    %v6927 = vpop.permute.xlu0 %6926
    %6928 = vrot.lane.b32.xlu0 %v6923, 126
    %v6929 = vpop.permute.xlu0 %6928
    %v6932 = vadd.f32 %v6820, %v6927
    %v6933 = vadd.f32 %v6821, %v6929
    %s6934 = sld [smem:[#allocation4 + $0x113]]
    %v6935 = vstv %s6934
    %v6936 = vmul.f32 %v6935, %v5900
    %v6937 = vmul.f32 %v6935, %v5901
    %6940 = vrot.lane.b32.xlu0 %v6936, 126
    %v6941 = vpop.permute.xlu0 %6940
    %6942 = vrot.lane.b32.xlu0 %v6937, 126
    %v6943 = vpop.permute.xlu0 %6942
    %v6946 = vadd.f32 %v6834, %v6941
    %v6947 = vadd.f32 %v6835, %v6943
    %s6948 = sld [smem:[#allocation4 + $0x117]]
    %v6949 = vstv %s6948
    %v6950 = vmul.f32 %v6949, %v5900
    %v6951 = vmul.f32 %v6949, %v5901
    %6954 = vrot.lane.b32.xlu0 %v6950, 126
    %v6955 = vpop.permute.xlu0 %6954
    %6956 = vrot.lane.b32.xlu0 %v6951, 126
    %v6957 = vpop.permute.xlu0 %6956
    %v6960 = vadd.f32 %v6848, %v6955
    %v6961 = vadd.f32 %v6849, %v6957
    %s6962 = sld [smem:[#allocation4 + $0x11b]]
    %v6963 = vstv %s6962
    %v6964 = vmul.f32 %v6963, %v5900
    %v6965 = vmul.f32 %v6963, %v5901
    %6968 = vrot.lane.b32.xlu0 %v6964, 126
    %v6969 = vpop.permute.xlu0 %6968
    %6970 = vrot.lane.b32.xlu0 %v6965, 126
    %v6971 = vpop.permute.xlu0 %6970
    %v6974 = vadd.f32 %v6862, %v6969
    %v6975 = vadd.f32 %v6863, %v6971
    %s6976 = sld [smem:[#allocation4 + $0x11f]]
    %v6977 = vstv %s6976
    %v6978 = vmul.f32 %v6977, %v5900
    %v6979 = vmul.f32 %v6977, %v5901
    %6982 = vrot.lane.b32.xlu0 %v6978, 126
    %v6983 = vpop.permute.xlu0 %6982
    %6984 = vrot.lane.b32.xlu0 %v6979, 126
    %v6985 = vpop.permute.xlu0 %6984
    %v6988 = vadd.f32 %v6876, %v6983
    %v6989 = vadd.f32 %v6877, %v6985
    %v6990 = vmax.f32 %v6890, 0.0
    %v6991 = vmax.f32 %v6891, 0.0
    %v6992 = vsel %vm3695, 0.0, %v6990
    %v6993 = vsel %vm3696, 0.0, %v6991
    %s6994 = scalar_lea.vmem [#allocation11], 128
    %6995 = vst.msk [vmem:[%s6994] sm:$0xff] %vm213, %v6992
    %6996 = vst.msk [vmem:[%s6994 + $0x8] sm:$0xff] %vm213, %v6993
    %v6997 = vmax.f32 %v6904, 0.0
    %v6998 = vmax.f32 %v6905, 0.0
    %v6999 = vsel %vm3695, 0.0, %v6997
    %v7000 = vsel %vm3696, 0.0, %v6998
    %s7001 = scalar_lea.vmem [#allocation11], 144
    %7002 = vst.msk [vmem:[%s7001] sm:$0xff] %vm213, %v6999
    %7003 = vst.msk [vmem:[%s7001 + $0x8] sm:$0xff] %vm213, %v7000
    %v7004 = vmax.f32 %v6918, 0.0
    %v7005 = vmax.f32 %v6919, 0.0
    %v7006 = vsel %vm3695, 0.0, %v7004
    %v7007 = vsel %vm3696, 0.0, %v7005
    %s7008 = scalar_lea.vmem [#allocation11], 160
    %7009 = vst.msk [vmem:[%s7008] sm:$0xff] %vm213, %v7006
    %7010 = vst.msk [vmem:[%s7008 + $0x8] sm:$0xff] %vm213, %v7007
    %v7011 = vmax.f32 %v6932, 0.0
    %v7012 = vmax.f32 %v6933, 0.0
    %v7013 = vsel %vm3695, 0.0, %v7011
    %v7014 = vsel %vm3696, 0.0, %v7012
    %s7015 = scalar_lea.vmem [#allocation11], 176
    %7016 = vst.msk [vmem:[%s7015] sm:$0xff] %vm213, %v7013
    %7017 = vst.msk [vmem:[%s7015 + $0x8] sm:$0xff] %vm213, %v7014
    %v7018 = vmax.f32 %v6946, 0.0
    %v7019 = vmax.f32 %v6947, 0.0
    %v7020 = vsel %vm3695, 0.0, %v7018
    %v7021 = vsel %vm3696, 0.0, %v7019
    %s7022 = scalar_lea.vmem [#allocation11], 192
    %7023 = vst.msk [vmem:[%s7022] sm:$0xff] %vm213, %v7020
    %7024 = vst.msk [vmem:[%s7022 + $0x8] sm:$0xff] %vm213, %v7021
    %v7025 = vmax.f32 %v6960, 0.0
    %v7026 = vmax.f32 %v6961, 0.0
    %v7027 = vsel %vm3695, 0.0, %v7025
    %v7028 = vsel %vm3696, 0.0, %v7026
    %s7029 = scalar_lea.vmem [#allocation11], 208
    %7030 = vst.msk [vmem:[%s7029] sm:$0xff] %vm213, %v7027
    %7031 = vst.msk [vmem:[%s7029 + $0x8] sm:$0xff] %vm213, %v7028
    %v7032 = vmax.f32 %v6974, 0.0
    %v7033 = vmax.f32 %v6975, 0.0
    %v7034 = vsel %vm3695, 0.0, %v7032
    %v7035 = vsel %vm3696, 0.0, %v7033
    %s7036 = scalar_lea.vmem [#allocation11], 224
    %7037 = vst.msk [vmem:[%s7036] sm:$0xff] %vm213, %v7034
    %7038 = vst.msk [vmem:[%s7036 + $0x8] sm:$0xff] %vm213, %v7035
    %v7039 = vmax.f32 %v6988, 0.0
    %v7040 = vmax.f32 %v6989, 0.0
    %v7041 = vsel %vm3695, 0.0, %v7039
    %v7042 = vsel %vm3696, 0.0, %v7040
    %s7043 = scalar_lea.vmem [#allocation11], 240
    %7044 = vst.msk [vmem:[%s7043] sm:$0xff] %vm213, %v7041
    %7045 = vst.msk [vmem:[%s7043 + $0x8] sm:$0xff] %vm213, %v7042
    // Predicated region
    $region26: #{tpu_custom_call.1} parent=1 // pred_check
      _
    $region27: #{tpu_custom_call.1} parent=1 // pred_check_branch
      %7047 = sbr.rel (0) target = $region29
    $region28: #{tpu_custom_call.1} parent=1 // pred_region
      %s7049 = ssub.s32 4096, 4096
      %7050 = vsyncadd [#allocation6], %s7049
      %s7051 = sshll.u32 [#allocation11], 4
      %s7052 = int_to_ptr.vmem [resolvable:$true] %s7051
      %7057 = dma.vmem_to_hbm [thread:$0]  %s7052, 4096, %s3, [#allocation6], 128, 128, 8
    $region29: #{tpu_custom_call.1} parent=1 // pred_fallthru
      _
    // Predicated region
    $region30: #{tpu_custom_call.1} parent=1 // pred_check
      _
    $region31: #{tpu_custom_call.1} parent=1 // pred_check_branch
      %7059 = sbr.rel (0) target = $region33
    $region32: #{tpu_custom_call.1} parent=1 // pred_region
      %s7061 = ssub.s32 512, 512
      %7062 = vsyncadd [#allocation13], %s7061
      %s7063 = sshll.u32 [#allocation12], 4
      %s7064 = int_to_ptr.vmem [resolvable:$true] %s7063
      %7069 = dma.vmem_to_hbm [thread:$0]  %s7064, 512, %s4, [#allocation13], 128, 128, 8
    $region33: #{tpu_custom_call.1} parent=1 // pred_fallthru
      _
    // Predicated region
    $region34: #{tpu_custom_call.1} parent=1 // pred_check
      _
    $region35: #{tpu_custom_call.1} parent=1 // pred_check_branch
      %7071 = sbr.rel (0) target = $region37
    $region36: #{tpu_custom_call.1} parent=1 // pred_region
      %7072 = dma.done [#allocation6], 4096
    $region37: #{tpu_custom_call.1} parent=1 // pred_fallthru
      _
    // Predicated region
    $region38: #{tpu_custom_call.1} parent=1 // pred_check
      _
    $region39: #{tpu_custom_call.1} parent=1 // pred_check_branch
      %7074 = sbr.rel (0) target = $region41
    $region40: #{tpu_custom_call.1} parent=1 // pred_region
      %7075 = dma.done [#allocation13], 512
    $region41: #{tpu_custom_call.1} parent=1 // pred_fallthru
      _
    %7076 = vsyncpa [#allocation5], 1
    %7077 = vsyncpa [#allocation10], 1
    %7078 = vsyncpa [#allocation6], 1
    %7079 = vsyncpa [#allocation13], 1
    %7080 = vsyncpa [#allocation7], 1

</llo_original>
